<compile_context>
chip_gen: v7x
topology: tpu7x:2x2x1
jax: 0.10.0
libtpu: 0.0.40
codegen_flags: <defaults>
</compile_context>

<pallas_src>
import jax
import jax.numpy as jnp
from jax.experimental import pallas as pl
from jax.experimental.pallas import tpu as pltpu

NGF = 64
NOISE_SIZE = 100
BN_EPS = 1e-5
VMEM_LIMIT = 32 * 1024 * 1024  # explicit; safe on v5e/v6e (128 MiB) and v7x (64 MiB)

_LAYER_SPECS = [  # (Cin, Cout, k, stride, pad, has_bn)
    (NOISE_SIZE, NGF * 8, 4, 1, 0, True),
    (NGF * 8,    NGF * 4, 4, 2, 1, True),
    (NGF * 4,    NGF * 2, 4, 2, 1, True),
    (NGF * 2,    NGF,     4, 2, 1, True),
    (NGF,        3,       5, 3, 1, False),
]


def _round_up(x, m):
    return (x + m - 1) // m * m


def _pick_tile(dim, candidates, min_tiles=1):
    for c in candidates:
        if c <= dim and dim % c == 0 and dim // c >= min_tiles:
            return c
    for c in candidates:
        if c <= dim and dim % c == 0:
            return c
    return dim  # full-extent block (always legal)


# ------------------------------ Pallas kernels ------------------------------

def _matmul_kernel(a_ref, b_ref, o_ref):
    # bf16 x bf16 -> f32 on the MXU. Full K per block => no accumulator needed.
    o_ref[...] = jnp.dot(a_ref[...], b_ref[...], preferred_element_type=jnp.float32)


def pallas_matmul(a, b):
    """(M, K) @ (K, N) -> (M, N) f32.  K, N are 128-multiples here (weights are
    pre-padded at init); M uses a full-extent or 8-aligned row tile."""
    M, K = a.shape
    K2, N = b.shape
    assert K == K2
    a = a.astype(jnp.bfloat16)
    b = b.astype(jnp.bfloat16)
    tm = _pick_tile(M, (256, 128, 64, 32, 16, 8))
    # Keep >= 2 tiles along a parallel axis so v7x's 2nd TensorCore gets work.
    min_n_tiles = 1 if M // tm >= 2 else 2
    tn = _pick_tile(N, (2048, 1024, 512, 256, 128), min_tiles=min_n_tiles)
    grid = (M // tm, N // tn)
    return pl.pallas_call(
        _matmul_kernel,
        out_shape=jax.ShapeDtypeStruct((M, N), jnp.float32),
        grid_spec=pltpu.PrefetchScalarGridSpec(
            num_scalar_prefetch=0,
            grid=grid,
            in_specs=[pl.BlockSpec((tm, K), lambda i, j: (i, 0)),
                      pl.BlockSpec((K, tn), lambda i, j: (0, j))],
            out_specs=pl.BlockSpec((tm, tn), lambda i, j: (i, j))),
        compiler_params=pltpu.CompilerParams(
            dimension_semantics=("parallel", "parallel"),
            vmem_limit_bytes=VMEM_LIMIT),
    )(a, b)


def _bn_relu_kernel(x_ref, scale_ref, shift_ref, o_ref):
    o_ref[...] = jnp.maximum(x_ref[...] * scale_ref[...] + shift_ref[...], 0.0)


def _tanh_kernel(x_ref, o_ref):
    o_ref[...] = jnp.tanh(x_ref[...])


def _row_tiled_ew(kernel, x, bcast=(), max_tile_bytes=2 * 1024 * 1024):
    """Row-tiled elementwise launch over a 2-D (R, C) array.
    `bcast` holds (1, C) per-channel operands broadcast across rows."""
    R, C = x.shape
    row_bytes = C * x.dtype.itemsize
    br = min(512, max(8, (max_tile_bytes // row_bytes) // 8 * 8))
    if R <= br:
        br, Rp = R, R
    else:
        Rp = _round_up(R, br)
    xp = jnp.pad(x, ((0, Rp - R), (0, 0))) if Rp != R else x
    out = pl.pallas_call(
        kernel,
        out_shape=jax.ShapeDtypeStruct((Rp, C), x.dtype),
        grid_spec=pltpu.PrefetchScalarGridSpec(
            num_scalar_prefetch=0,
            grid=(Rp // br,),
            in_specs=[pl.BlockSpec((br, C), lambda i: (i, 0))]
                     + [pl.BlockSpec((1, C), lambda i: (0, 0)) for _ in bcast],
            out_specs=pl.BlockSpec((br, C), lambda i: (i, 0))),
        compiler_params=pltpu.CompilerParams(
            dimension_semantics=("parallel",),
            vmem_limit_bytes=VMEM_LIMIT),
    )(xp, *bcast)
    return out[:R] if Rp != R else out


def bn_relu(x, scale, shift):
    """x: (R, C) f32; scale/shift: (C,) f32.  Narrow channel dims are reshaped
    to 128-wide lane-dense rows (with tiled scale/shift) to avoid masked stores."""
    R, C = x.shape
    scale = scale.reshape(1, C).astype(x.dtype)
    shift = shift.reshape(1, C).astype(x.dtype)
    if C < 128 and 128 % C == 0 and R % (128 // C) == 0:
        rep = 128 // C
        out = _row_tiled_ew(_bn_relu_kernel, x.reshape(R // rep, C * rep),
                            (jnp.tile(scale, (1, rep)), jnp.tile(shift, (1, rep))))
        return out.reshape(R, C)
    return _row_tiled_ew(_bn_relu_kernel, x, (scale, shift))


def tanh_op(x):
    """x: (R, C) f32; flattened to a lane-dense (rows, 128) slab when possible."""
    R, C = x.shape
    if (R * C) % 128 == 0:
        out = _row_tiled_ew(_tanh_kernel, x.reshape((R * C) // 128, 128))
        return out.reshape(R, C)
    return _row_tiled_ew(_tanh_kernel, x)


# ---------------------------- ConvTranspose2d -------------------------------

def _col2im(cols, k, stride, padding, OH, OW):
    """Scatter-free col2im: cols[n,h,w,kh,kw,c] contributes to output position
    (h*stride + kh - padding, w*stride + kw - padding).  Implemented as a
    per-phase sum of padded slices, then phase interleave via stack+reshape."""
    # TODO(synk): col2im assembly stays in XLA glue (pure pad/add/reshape); a
    # polyphase-gather Pallas kernel could fold this into the matmul epilogue.
    N, H, W, _, _, C = cols.shape
    q = (k + stride - 1) // stride          # ceil(k / stride)
    Qh, Qw = H - 1 + q, W - 1 + q
    rows = []
    for rh in range(stride):
        row = []
        for rw in range(stride):
            acc = jnp.zeros((N, Qh, Qw, C), jnp.float32)
            for kh in range(rh, k, stride):
                dh = kh // stride
                for kw in range(rw, k, stride):
                    dw = kw // stride
                    acc = acc + jnp.pad(
                        cols[:, :, :, kh, kw, :],
                        ((0, 0), (dh, Qh - H - dh), (dw, Qw - W - dw), (0, 0)))
            row.append(acc)
        rows.append(jnp.stack(row, axis=3))          # (N, Qh, Qw, s, C)
    full = jnp.stack(rows, axis=2)                   # (N, Qh, s, Qw, s, C)
    full = full.reshape(N, Qh * stride, Qw * stride, C)
    return full[:, padding:padding + OH, padding:padding + OW, :]


def conv_transpose2d(x_nhwc, w_flat, cin, cout, k, stride, padding):
    """PyTorch-semantics ConvTranspose2d (no bias, output_padding=0), computed as
    an input-space matmul (Pallas/MXU) + col2im (XLA glue)."""
    N, H, W, _ = x_nhwc.shape
    a = x_nhwc.reshape(N * H * W, cin)
    Kp = w_flat.shape[0]
    if Kp != cin:                                    # tiny pad to the 128-aligned K
        a = jnp.pad(a, ((0, 0), (0, Kp - cin)))
    cols = pallas_matmul(a, w_flat)                  # (N*H*W, Np) f32 — hot path
    ncols = k * k * cout
    if cols.shape[1] != ncols:
        cols = cols[:, :ncols]
    cols = cols.reshape(N, H, W, k, k, cout)
    OH = (H - 1) * stride - 2 * padding + k
    OW = (W - 1) * stride - 2 * padding + k
    return _col2im(cols, k, stride, padding, OH, OW)


# ---------------------------------- NetG ------------------------------------

def init_params(key):
    params = []
    for cin, cout, k, _s, _p, has_bn in _LAYER_SPECS:
        key, wk = jax.random.split(key)
        w = 0.05 * jax.random.normal(wk, (cin, cout, k, k), jnp.float32)  # PyTorch layout
        # Precompute the matmul-layout weight once (outside the forward):
        # (Cin,Cout,kh,kw) -> (Cin,kh,kw,Cout) -> (Cin, k*k*Cout), padded to
        # 128-multiples and cast to bf16 for the MXU.
        wf = jnp.transpose(w, (0, 2, 3, 1)).reshape(cin, k * k * cout)
        wf = jnp.pad(wf, ((0, _round_up(cin, 128) - cin),
                          (0, _round_up(k * k * cout, 128) - k * k * cout)))
        wf = wf.astype(jnp.bfloat16)
        if has_bn:
            params.append((wf, jnp.ones((cout,), jnp.float32),
                           jnp.zeros((cout,), jnp.float32)))
        else:
            params.append((wf, None, None))
    return params


def netg_forward(params, z_nchw):
    x = jnp.transpose(z_nchw, (0, 2, 3, 1)).astype(jnp.float32)   # NCHW -> NHWC
    for (wf, gamma, beta), (cin, cout, k, stride, pad, has_bn) in zip(params, _LAYER_SPECS):
        y = conv_transpose2d(x, wf, cin, cout, k, stride, pad)    # (N, OH, OW, Cout) f32
        N, OH, OW, _ = y.shape
        yf = y.reshape(N * OH * OW, cout)
        if has_bn:
            # BatchNorm2d (training mode): biased batch stats over (N, H, W), in f32.
            # TODO(synk): stat reductions kept as XLA glue (tiny); normalize+ReLU is Pallas.
            mean = jnp.mean(yf, axis=0)
            var = jnp.mean(jnp.square(yf - mean[None, :]), axis=0)
            inv = jax.lax.rsqrt(var + BN_EPS)
            scale = gamma * inv
            shift = beta - mean * scale
            yf = bn_relu(yf, scale, shift)
        else:
            yf = tanh_op(yf)
        x = yf.reshape(N, OH, OW, cout)
    return jnp.transpose(x, (0, 3, 1, 2))                          # NHWC -> NCHW


if __name__ == "__main__":
    key = jax.random.PRNGKey(0)
    pkey, zkey = jax.random.split(key)
    params = init_params(pkey)
    z = jax.random.normal(zkey, (2, NOISE_SIZE, 1, 1), jnp.float32)

    out = jax.jit(netg_forward)(params, z)
    out = jax.block_until_ready(out)

    assert out.shape == (2, 3, 96, 96), out.shape
    assert bool(jnp.all(jnp.isfinite(out)))
    assert bool(jnp.all(jnp.abs(out) <= 1.0))  # tanh range
    print("KERNEL_OK")
</pallas_src>

<mosaic_0001>
module attributes {stable_mosaic.version = 11 : i64} {
  func.func @_matmul_kernel(%arg0: i32, %arg1: i32, %arg2: memref<2x128xbf16, #tpu.memory_space<vmem>>, %arg3: memref<128x2048xbf16, #tpu.memory_space<vmem>>, %arg4: memref<2x2048xf32, #tpu.memory_space<vmem>>) attributes {dimension_semantics = [#tpu.dimension_semantics<parallel>, #tpu.dimension_semantics<parallel>], iteration_bounds = array<i64: 1, 4>, scalar_prefetch = 0 : i64, scratch_operands = 0 : i64, tpu.core_type = #tpu.core_type<tc>, window_params = [{transform_indices = @transform_0, window_bounds = array<i64: 2, 128>}, {transform_indices = @transform_1, window_bounds = array<i64: 128, 2048>}, {transform_indices = @transform_2, window_bounds = array<i64: 2, 2048>}]} {
    %c0 = arith.constant 0 : index
    %c0_0 = arith.constant 0 : index
    %0 = vector.load %arg2[%c0, %c0_0] : memref<2x128xbf16, #tpu.memory_space<vmem>>, vector<2x128xbf16>
    %c0_1 = arith.constant 0 : index
    %c0_2 = arith.constant 0 : index
    %1 = vector.load %arg3[%c0_1, %c0_2] : memref<128x2048xbf16, #tpu.memory_space<vmem>>, vector<128x2048xbf16>
    %cst = arith.constant dense<0.000000e+00> : vector<2x2048xf32>
    %2 = tpu.matmul %0, %1, %cst {dimension_numbers = #tpu.dot_dimension_numbers<[1], [0], [0], [1], [0, 0, 1, 1], [], []>} : vector<2x128xbf16>, vector<128x2048xbf16>, vector<2x2048xf32> -> vector<2x2048xf32>
    %c0_3 = arith.constant 0 : index
    %c0_4 = arith.constant 0 : index
    %3 = vector.load %arg4[%c0_3, %c0_4] : memref<2x2048xf32, #tpu.memory_space<vmem>>, vector<2x2048xf32>
    tpu.vector_store %arg4[%c0_3, %c0_4], %2 {strides = array<i32>} : memref<2x2048xf32, #tpu.memory_space<vmem>>, vector<2x2048xf32>,
    return
  }
  func.func @transform_0(%arg0: i32, %arg1: i32) -> (i32, i32) {
    %c0_i32 = arith.constant 0 : i32
    %c0_i32_0 = arith.constant 0 : i32
    return %arg0, %c0_i32 : i32, i32
  }
  func.func @transform_1(%arg0: i32, %arg1: i32) -> (i32, i32) {
    %c0_i32 = arith.constant 0 : i32
    %c0_i32_0 = arith.constant 0 : i32
    return %c0_i32, %arg1 : i32, i32
  }
  func.func @transform_2(%arg0: i32, %arg1: i32) -> (i32, i32) {
    %c0_i32 = arith.constant 0 : i32
    return %arg0, %arg1 : i32, i32
  }
}

module attributes {stable_mosaic.version = 11 : i64} {
  func.func @_bn_relu_kernel(%arg0: i32, %arg1: memref<32x512xf32, #tpu.memory_space<vmem>>, %arg2: memref<1x512xf32, #tpu.memory_space<vmem>>, %arg3: memref<1x512xf32, #tpu.memory_space<vmem>>, %arg4: memref<32x512xf32, #tpu.memory_space<vmem>>) attributes {dimension_semantics = [#tpu.dimension_semantics<parallel>], iteration_bounds = array<i64: 1>, scalar_prefetch = 0 : i64, scratch_operands = 0 : i64, tpu.core_type = #tpu.core_type<tc>, window_params = [{transform_indices = @transform_0, window_bounds = array<i64: 32, 512>}, {pipeline_mode = #tpu.pipeline_mode<synchronous>, transform_indices = @transform_1, window_bounds = array<i64: 1, 512>}, {pipeline_mode = #tpu.pipeline_mode<synchronous>, transform_indices = @transform_2, window_bounds = array<i64: 1, 512>}, {transform_indices = @transform_3, window_bounds = array<i64: 32, 512>}]} {
    %c0 = arith.constant 0 : index
    %c0_0 = arith.constant 0 : index
    %0 = vector.load %arg1[%c0, %c0_0] : memref<32x512xf32, #tpu.memory_space<vmem>>, vector<32x512xf32>
    %c0_1 = arith.constant 0 : index
    %c0_2 = arith.constant 0 : index
    %1 = vector.load %arg2[%c0_1, %c0_2] : memref<1x512xf32, #tpu.memory_space<vmem>>, vector<1x512xf32>
    %2 = vector.broadcast %1 : vector<1x512xf32> to vector<32x512xf32>
    %3 = arith.mulf %0, %2 : vector<32x512xf32>
    %c0_3 = arith.constant 0 : index
    %c0_4 = arith.constant 0 : index
    %4 = vector.load %arg3[%c0_3, %c0_4] : memref<1x512xf32, #tpu.memory_space<vmem>>, vector<1x512xf32>
    %5 = vector.broadcast %4 : vector<1x512xf32> to vector<32x512xf32>
    %6 = arith.addf %3, %5 : vector<32x512xf32>
    %cst = arith.constant 0.000000e+00 : f32
    %7 = vector.broadcast %cst : f32 to vector<32x512xf32>
    %8 = arith.maximumf %6, %7 : vector<32x512xf32>
    %c0_5 = arith.constant 0 : index
    %c0_6 = arith.constant 0 : index
    %9 = vector.load %arg4[%c0_5, %c0_6] : memref<32x512xf32, #tpu.memory_space<vmem>>, vector<32x512xf32>
    tpu.vector_store %arg4[%c0_5, %c0_6], %8 {strides = array<i32>} : memref<32x512xf32, #tpu.memory_space<vmem>>, vector<32x512xf32>,
    return
  }
  func.func @transform_0(%arg0: i32) -> (i32, i32) {
    %c0_i32 = arith.constant 0 : i32
    %c0_i32_0 = arith.constant 0 : i32
    return %arg0, %c0_i32 : i32, i32
  }
  func.func @transform_1(%arg0: i32) -> (i32, i32) {
    %c0_i32 = arith.constant 0 : i32
    %c0_i32_0 = arith.constant 0 : i32
    %c0_i32_1 = arith.constant 0 : i32
    return %c0_i32, %c0_i32_0 : i32, i32
  }
  func.func @transform_2(%arg0: i32) -> (i32, i32) {
    %c0_i32 = arith.constant 0 : i32
    %c0_i32_0 = arith.constant 0 : i32
    %c0_i32_1 = arith.constant 0 : i32
    return %c0_i32, %c0_i32_0 : i32, i32
  }
  func.func @transform_3(%arg0: i32) -> (i32, i32) {
    %c0_i32 = arith.constant 0 : i32
    %c0_i32_0 = arith.constant 0 : i32
    return %arg0, %c0_i32 : i32, i32
  }
}

module attributes {stable_mosaic.version = 11 : i64} {
  func.func @_matmul_kernel(%arg0: i32, %arg1: i32, %arg2: memref<32x512xbf16, #tpu.memory_space<vmem>>, %arg3: memref<512x2048xbf16, #tpu.memory_space<vmem>>, %arg4: memref<32x2048xf32, #tpu.memory_space<vmem>>) attributes {dimension_semantics = [#tpu.dimension_semantics<parallel>, #tpu.dimension_semantics<parallel>], iteration_bounds = array<i64: 1, 2>, scalar_prefetch = 0 : i64, scratch_operands = 0 : i64, tpu.core_type = #tpu.core_type<tc>, window_params = [{transform_indices = @transform_0, window_bounds = array<i64: 32, 512>}, {transform_indices = @transform_1, window_bounds = array<i64: 512, 2048>}, {transform_indices = @transform_2, window_bounds = array<i64: 32, 2048>}]} {
    %c0 = arith.constant 0 : index
    %c0_0 = arith.constant 0 : index
    %0 = vector.load %arg2[%c0, %c0_0] : memref<32x512xbf16, #tpu.memory_space<vmem>>, vector<32x512xbf16>
    %c0_1 = arith.constant 0 : index
    %c0_2 = arith.constant 0 : index
    %1 = vector.load %arg3[%c0_1, %c0_2] : memref<512x2048xbf16, #tpu.memory_space<vmem>>, vector<512x2048xbf16>
    %cst = arith.constant dense<0.000000e+00> : vector<32x2048xf32>
    %2 = tpu.matmul %0, %1, %cst {dimension_numbers = #tpu.dot_dimension_numbers<[1], [0], [0], [1], [0, 0, 1, 1], [], []>} : vector<32x512xbf16>, vector<512x2048xbf16>, vector<32x2048xf32> -> vector<32x2048xf32>
    %c0_3 = arith.constant 0 : index
    %c0_4 = arith.constant 0 : index
    %3 = vector.load %arg4[%c0_3, %c0_4] : memref<32x2048xf32, #tpu.memory_space<vmem>>, vector<32x2048xf32>
    tpu.vector_store %arg4[%c0_3, %c0_4], %2 {strides = array<i32>} : memref<32x2048xf32, #tpu.memory_space<vmem>>, vector<32x2048xf32>,
    return
  }
  func.func @transform_0(%arg0: i32, %arg1: i32) -> (i32, i32) {
    %c0_i32 = arith.constant 0 : i32
    %c0_i32_0 = arith.constant 0 : i32
    return %arg0, %c0_i32 : i32, i32
  }
  func.func @transform_1(%arg0: i32, %arg1: i32) -> (i32, i32) {
    %c0_i32 = arith.constant 0 : i32
    %c0_i32_0 = arith.constant 0 : i32
    return %c0_i32, %arg1 : i32, i32
  }
  func.func @transform_2(%arg0: i32, %arg1: i32) -> (i32, i32) {
    %c0_i32 = arith.constant 0 : i32
    return %arg0, %arg1 : i32, i32
  }
}

module attributes {stable_mosaic.version = 11 : i64} {
  func.func @_bn_relu_kernel(%arg0: i32, %arg1: memref<128x256xf32, #tpu.memory_space<vmem>>, %arg2: memref<1x256xf32, #tpu.memory_space<vmem>>, %arg3: memref<1x256xf32, #tpu.memory_space<vmem>>, %arg4: memref<128x256xf32, #tpu.memory_space<vmem>>) attributes {dimension_semantics = [#tpu.dimension_semantics<parallel>], iteration_bounds = array<i64: 1>, scalar_prefetch = 0 : i64, scratch_operands = 0 : i64, tpu.core_type = #tpu.core_type<tc>, window_params = [{transform_indices = @transform_0, window_bounds = array<i64: 128, 256>}, {pipeline_mode = #tpu.pipeline_mode<synchronous>, transform_indices = @transform_1, window_bounds = array<i64: 1, 256>}, {pipeline_mode = #tpu.pipeline_mode<synchronous>, transform_indices = @transform_2, window_bounds = array<i64: 1, 256>}, {transform_indices = @transform_3, window_bounds = array<i64: 128, 256>}]} {
    %c0 = arith.constant 0 : index
    %c0_0 = arith.constant 0 : index
    %0 = vector.load %arg1[%c0, %c0_0] : memref<128x256xf32, #tpu.memory_space<vmem>>, vector<128x256xf32>
    %c0_1 = arith.constant 0 : index
    %c0_2 = arith.constant 0 : index
    %1 = vector.load %arg2[%c0_1, %c0_2] : memref<1x256xf32, #tpu.memory_space<vmem>>, vector<1x256xf32>
    %2 = vector.broadcast %1 : vector<1x256xf32> to vector<128x256xf32>
    %3 = arith.mulf %0, %2 : vector<128x256xf32>
    %c0_3 = arith.constant 0 : index
    %c0_4 = arith.constant 0 : index
    %4 = vector.load %arg3[%c0_3, %c0_4] : memref<1x256xf32, #tpu.memory_space<vmem>>, vector<1x256xf32>
    %5 = vector.broadcast %4 : vector<1x256xf32> to vector<128x256xf32>
    %6 = arith.addf %3, %5 : vector<128x256xf32>
    %cst = arith.constant 0.000000e+00 : f32
    %7 = vector.broadcast %cst : f32 to vector<128x256xf32>
    %8 = arith.maximumf %6, %7 : vector<128x256xf32>
    %c0_5 = arith.constant 0 : index
    %c0_6 = arith.constant 0 : index
    %9 = vector.load %arg4[%c0_5, %c0_6] : memref<128x256xf32, #tpu.memory_space<vmem>>, vector<128x256xf32>
    tpu.vector_store %arg4[%c0_5, %c0_6], %8 {strides = array<i32>} : memref<128x256xf32, #tpu.memory_space<vmem>>, vector<128x256xf32>,
    return
  }
  func.func @transform_0(%arg0: i32) -> (i32, i32) {
    %c0_i32 = arith.constant 0 : i32
    %c0_i32_0 = arith.constant 0 : i32
    return %arg0, %c0_i32 : i32, i32
  }
  func.func @transform_1(%arg0: i32) -> (i32, i32) {
    %c0_i32 = arith.constant 0 : i32
    %c0_i32_0 = arith.constant 0 : i32
    %c0_i32_1 = arith.constant 0 : i32
    return %c0_i32, %c0_i32_0 : i32, i32
  }
  func.func @transform_2(%arg0: i32) -> (i32, i32) {
    %c0_i32 = arith.constant 0 : i32
    %c0_i32_0 = arith.constant 0 : i32
    %c0_i32_1 = arith.constant 0 : i32
    return %c0_i32, %c0_i32_0 : i32, i32
  }
  func.func @transform_3(%arg0: i32) -> (i32, i32) {
    %c0_i32 = arith.constant 0 : i32
    %c0_i32_0 = arith.constant 0 : i32
    return %arg0, %c0_i32 : i32, i32
  }
}

module attributes {stable_mosaic.version = 11 : i64} {
  func.func @_matmul_kernel(%arg0: i32, %arg1: i32, %arg2: memref<128x256xbf16, #tpu.memory_space<vmem>>, %arg3: memref<256x1024xbf16, #tpu.memory_space<vmem>>, %arg4: memref<128x1024xf32, #tpu.memory_space<vmem>>) attributes {dimension_semantics = [#tpu.dimension_semantics<parallel>, #tpu.dimension_semantics<parallel>], iteration_bounds = array<i64: 1, 2>, scalar_prefetch = 0 : i64, scratch_operands = 0 : i64, tpu.core_type = #tpu.core_type<tc>, window_params = [{transform_indices = @transform_0, window_bounds = array<i64: 128, 256>}, {transform_indices = @transform_1, window_bounds = array<i64: 256, 1024>}, {transform_indices = @transform_2, window_bounds = array<i64: 128, 1024>}]} {
    %c0 = arith.constant 0 : index
    %c0_0 = arith.constant 0 : index
    %0 = vector.load %arg2[%c0, %c0_0] : memref<128x256xbf16, #tpu.memory_space<vmem>>, vector<128x256xbf16>
    %c0_1 = arith.constant 0 : index
    %c0_2 = arith.constant 0 : index
    %1 = vector.load %arg3[%c0_1, %c0_2] : memref<256x1024xbf16, #tpu.memory_space<vmem>>, vector<256x1024xbf16>
    %cst = arith.constant dense<0.000000e+00> : vector<128x1024xf32>
    %2 = tpu.matmul %0, %1, %cst {dimension_numbers = #tpu.dot_dimension_numbers<[1], [0], [0], [1], [0, 0, 1, 1], [], []>} : vector<128x256xbf16>, vector<256x1024xbf16>, vector<128x1024xf32> -> vector<128x1024xf32>
    %c0_3 = arith.constant 0 : index
    %c0_4 = arith.constant 0 : index
    %3 = vector.load %arg4[%c0_3, %c0_4] : memref<128x1024xf32, #tpu.memory_space<vmem>>, vector<128x1024xf32>
    tpu.vector_store %arg4[%c0_3, %c0_4], %2 {strides = array<i32>} : memref<128x1024xf32, #tpu.memory_space<vmem>>, vector<128x1024xf32>,
    return
  }
  func.func @transform_0(%arg0: i32, %arg1: i32) -> (i32, i32) {
    %c0_i32 = arith.constant 0 : i32
    %c0_i32_0 = arith.constant 0 : i32
    return %arg0, %c0_i32 : i32, i32
  }
  func.func @transform_1(%arg0: i32, %arg1: i32) -> (i32, i32) {
    %c0_i32 = arith.constant 0 : i32
    %c0_i32_0 = arith.constant 0 : i32
    return %c0_i32, %arg1 : i32, i32
  }
  func.func @transform_2(%arg0: i32, %arg1: i32) -> (i32, i32) {
    %c0_i32 = arith.constant 0 : i32
    return %arg0, %arg1 : i32, i32
  }
}

module attributes {stable_mosaic.version = 11 : i64} {
  func.func @_bn_relu_kernel(%arg0: i32, %arg1: memref<512x128xf32, #tpu.memory_space<vmem>>, %arg2: memref<1x128xf32, #tpu.memory_space<vmem>>, %arg3: memref<1x128xf32, #tpu.memory_space<vmem>>, %arg4: memref<512x128xf32, #tpu.memory_space<vmem>>) attributes {dimension_semantics = [#tpu.dimension_semantics<parallel>], iteration_bounds = array<i64: 1>, scalar_prefetch = 0 : i64, scratch_operands = 0 : i64, tpu.core_type = #tpu.core_type<tc>, window_params = [{transform_indices = @transform_0, window_bounds = array<i64: 512, 128>}, {pipeline_mode = #tpu.pipeline_mode<synchronous>, transform_indices = @transform_1, window_bounds = array<i64: 1, 128>}, {pipeline_mode = #tpu.pipeline_mode<synchronous>, transform_indices = @transform_2, window_bounds = array<i64: 1, 128>}, {transform_indices = @transform_3, window_bounds = array<i64: 512, 128>}]} {
    %c0 = arith.constant 0 : index
    %c0_0 = arith.constant 0 : index
    %0 = vector.load %arg1[%c0, %c0_0] : memref<512x128xf32, #tpu.memory_space<vmem>>, vector<512x128xf32>
    %c0_1 = arith.constant 0 : index
    %c0_2 = arith.constant 0 : index
    %1 = vector.load %arg2[%c0_1, %c0_2] : memref<1x128xf32, #tpu.memory_space<vmem>>, vector<1x128xf32>
    %2 = vector.broadcast %1 : vector<1x128xf32> to vector<512x128xf32>
    %3 = arith.mulf %0, %2 : vector<512x128xf32>
    %c0_3 = arith.constant 0 : index
    %c0_4 = arith.constant 0 : index
    %4 = vector.load %arg3[%c0_3, %c0_4] : memref<1x128xf32, #tpu.memory_space<vmem>>, vector<1x128xf32>
    %5 = vector.broadcast %4 : vector<1x128xf32> to vector<512x128xf32>
    %6 = arith.addf %3, %5 : vector<512x128xf32>
    %cst = arith.constant 0.000000e+00 : f32
    %7 = vector.broadcast %cst : f32 to vector<512x128xf32>
    %8 = arith.maximumf %6, %7 : vector<512x128xf32>
    %c0_5 = arith.constant 0 : index
    %c0_6 = arith.constant 0 : index
    %9 = vector.load %arg4[%c0_5, %c0_6] : memref<512x128xf32, #tpu.memory_space<vmem>>, vector<512x128xf32>
    tpu.vector_store %arg4[%c0_5, %c0_6], %8 {strides = array<i32>} : memref<512x128xf32, #tpu.memory_space<vmem>>, vector<512x128xf32>,
    return
  }
  func.func @transform_0(%arg0: i32) -> (i32, i32) {
    %c0_i32 = arith.constant 0 : i32
    %c0_i32_0 = arith.constant 0 : i32
    return %arg0, %c0_i32 : i32, i32
  }
  func.func @transform_1(%arg0: i32) -> (i32, i32) {
    %c0_i32 = arith.constant 0 : i32
    %c0_i32_0 = arith.constant 0 : i32
    %c0_i32_1 = arith.constant 0 : i32
    return %c0_i32, %c0_i32_0 : i32, i32
  }
  func.func @transform_2(%arg0: i32) -> (i32, i32) {
    %c0_i32 = arith.constant 0 : i32
    %c0_i32_0 = arith.constant 0 : i32
    %c0_i32_1 = arith.constant 0 : i32
    return %c0_i32, %c0_i32_0 : i32, i32
  }
  func.func @transform_3(%arg0: i32) -> (i32, i32) {
    %c0_i32 = arith.constant 0 : i32
    %c0_i32_0 = arith.constant 0 : i32
    return %arg0, %c0_i32 : i32, i32
  }
}

module attributes {stable_mosaic.version = 11 : i64} {
  func.func @_matmul_kernel(%arg0: i32, %arg1: i32, %arg2: memref<256x128xbf16, #tpu.memory_space<vmem>>, %arg3: memref<128x1024xbf16, #tpu.memory_space<vmem>>, %arg4: memref<256x1024xf32, #tpu.memory_space<vmem>>) attributes {dimension_semantics = [#tpu.dimension_semantics<parallel>, #tpu.dimension_semantics<parallel>], iteration_bounds = array<i64: 2, 1>, scalar_prefetch = 0 : i64, scratch_operands = 0 : i64, tpu.core_type = #tpu.core_type<tc>, window_params = [{transform_indices = @transform_0, window_bounds = array<i64: 256, 128>}, {transform_indices = @transform_1, window_bounds = array<i64: 128, 1024>}, {transform_indices = @transform_2, window_bounds = array<i64: 256, 1024>}]} {
    %c0 = arith.constant 0 : index
    %c0_0 = arith.constant 0 : index
    %0 = vector.load %arg2[%c0, %c0_0] : memref<256x128xbf16, #tpu.memory_space<vmem>>, vector<256x128xbf16>
    %c0_1 = arith.constant 0 : index
    %c0_2 = arith.constant 0 : index
    %1 = vector.load %arg3[%c0_1, %c0_2] : memref<128x1024xbf16, #tpu.memory_space<vmem>>, vector<128x1024xbf16>
    %cst = arith.constant dense<0.000000e+00> : vector<256x1024xf32>
    %2 = tpu.matmul %0, %1, %cst {dimension_numbers = #tpu.dot_dimension_numbers<[1], [0], [0], [1], [0, 0, 1, 1], [], []>} : vector<256x128xbf16>, vector<128x1024xbf16>, vector<256x1024xf32> -> vector<256x1024xf32>
    %c0_3 = arith.constant 0 : index
    %c0_4 = arith.constant 0 : index
    %3 = vector.load %arg4[%c0_3, %c0_4] : memref<256x1024xf32, #tpu.memory_space<vmem>>, vector<256x1024xf32>
    tpu.vector_store %arg4[%c0_3, %c0_4], %2 {strides = array<i32>} : memref<256x1024xf32, #tpu.memory_space<vmem>>, vector<256x1024xf32>,
    return
  }
  func.func @transform_0(%arg0: i32, %arg1: i32) -> (i32, i32) {
    %c0_i32 = arith.constant 0 : i32
    %c0_i32_0 = arith.constant 0 : i32
    return %arg0, %c0_i32 : i32, i32
  }
  func.func @transform_1(%arg0: i32, %arg1: i32) -> (i32, i32) {
    %c0_i32 = arith.constant 0 : i32
    %c0_i32_0 = arith.constant 0 : i32
    return %c0_i32, %arg1 : i32, i32
  }
  func.func @transform_2(%arg0: i32, %arg1: i32) -> (i32, i32) {
    %c0_i32 = arith.constant 0 : i32
    return %arg0, %arg1 : i32, i32
  }
}

module attributes {stable_mosaic.version = 11 : i64} {
  func.func @_bn_relu_kernel(%arg0: i32, %arg1: memref<512x128xf32, #tpu.memory_space<vmem>>, %arg2: memref<1x128xf32, #tpu.memory_space<vmem>>, %arg3: memref<1x128xf32, #tpu.memory_space<vmem>>, %arg4: memref<512x128xf32, #tpu.memory_space<vmem>>) attributes {dimension_semantics = [#tpu.dimension_semantics<parallel>], iteration_bounds = array<i64: 2>, scalar_prefetch = 0 : i64, scratch_operands = 0 : i64, tpu.core_type = #tpu.core_type<tc>, window_params = [{transform_indices = @transform_0, window_bounds = array<i64: 512, 128>}, {pipeline_mode = #tpu.pipeline_mode<synchronous>, transform_indices = @transform_1, window_bounds = array<i64: 1, 128>}, {pipeline_mode = #tpu.pipeline_mode<synchronous>, transform_indices = @transform_2, window_bounds = array<i64: 1, 128>}, {transform_indices = @transform_3, window_bounds = array<i64: 512, 128>}]} {
    %c0 = arith.constant 0 : index
    %c0_0 = arith.constant 0 : index
    %0 = vector.load %arg1[%c0, %c0_0] : memref<512x128xf32, #tpu.memory_space<vmem>>, vector<512x128xf32>
    %c0_1 = arith.constant 0 : index
    %c0_2 = arith.constant 0 : index
    %1 = vector.load %arg2[%c0_1, %c0_2] : memref<1x128xf32, #tpu.memory_space<vmem>>, vector<1x128xf32>
    %2 = vector.broadcast %1 : vector<1x128xf32> to vector<512x128xf32>
    %3 = arith.mulf %0, %2 : vector<512x128xf32>
    %c0_3 = arith.constant 0 : index
    %c0_4 = arith.constant 0 : index
    %4 = vector.load %arg3[%c0_3, %c0_4] : memref<1x128xf32, #tpu.memory_space<vmem>>, vector<1x128xf32>
    %5 = vector.broadcast %4 : vector<1x128xf32> to vector<512x128xf32>
    %6 = arith.addf %3, %5 : vector<512x128xf32>
    %cst = arith.constant 0.000000e+00 : f32
    %7 = vector.broadcast %cst : f32 to vector<512x128xf32>
    %8 = arith.maximumf %6, %7 : vector<512x128xf32>
    %c0_5 = arith.constant 0 : index
    %c0_6 = arith.constant 0 : index
    %9 = vector.load %arg4[%c0_5, %c0_6] : memref<512x128xf32, #tpu.memory_space<vmem>>, vector<512x128xf32>
    tpu.vector_store %arg4[%c0_5, %c0_6], %8 {strides = array<i32>} : memref<512x128xf32, #tpu.memory_space<vmem>>, vector<512x128xf32>,
    return
  }
  func.func @transform_0(%arg0: i32) -> (i32, i32) {
    %c0_i32 = arith.constant 0 : i32
    %c0_i32_0 = arith.constant 0 : i32
    return %arg0, %c0_i32 : i32, i32
  }
  func.func @transform_1(%arg0: i32) -> (i32, i32) {
    %c0_i32 = arith.constant 0 : i32
    %c0_i32_0 = arith.constant 0 : i32
    %c0_i32_1 = arith.constant 0 : i32
    return %c0_i32, %c0_i32_0 : i32, i32
  }
  func.func @transform_2(%arg0: i32) -> (i32, i32) {
    %c0_i32 = arith.constant 0 : i32
    %c0_i32_0 = arith.constant 0 : i32
    %c0_i32_1 = arith.constant 0 : i32
    return %c0_i32, %c0_i32_0 : i32, i32
  }
  func.func @transform_3(%arg0: i32) -> (i32, i32) {
    %c0_i32 = arith.constant 0 : i32
    %c0_i32_0 = arith.constant 0 : i32
    return %arg0, %c0_i32 : i32, i32
  }
}

module attributes {stable_mosaic.version = 11 : i64} {
  func.func @_matmul_kernel(%arg0: i32, %arg1: i32, %arg2: memref<256x128xbf16, #tpu.memory_space<vmem>>, %arg3: memref<128x128xbf16, #tpu.memory_space<vmem>>, %arg4: memref<256x128xf32, #tpu.memory_space<vmem>>) attributes {dimension_semantics = [#tpu.dimension_semantics<parallel>, #tpu.dimension_semantics<parallel>], iteration_bounds = array<i64: 8, 1>, scalar_prefetch = 0 : i64, scratch_operands = 0 : i64, tpu.core_type = #tpu.core_type<tc>, window_params = [{transform_indices = @transform_0, window_bounds = array<i64: 256, 128>}, {transform_indices = @transform_1, window_bounds = array<i64: 128, 128>}, {transform_indices = @transform_2, window_bounds = array<i64: 256, 128>}]} {
    %c0 = arith.constant 0 : index
    %c0_0 = arith.constant 0 : index
    %0 = vector.load %arg2[%c0, %c0_0] : memref<256x128xbf16, #tpu.memory_space<vmem>>, vector<256x128xbf16>
    %c0_1 = arith.constant 0 : index
    %c0_2 = arith.constant 0 : index
    %1 = vector.load %arg3[%c0_1, %c0_2] : memref<128x128xbf16, #tpu.memory_space<vmem>>, vector<128x128xbf16>
    %cst = arith.constant dense<0.000000e+00> : vector<256x128xf32>
    %2 = tpu.matmul %0, %1, %cst {dimension_numbers = #tpu.dot_dimension_numbers<[1], [0], [0], [1], [0, 0, 1, 1], [], []>} : vector<256x128xbf16>, vector<128x128xbf16>, vector<256x128xf32> -> vector<256x128xf32>
    %c0_3 = arith.constant 0 : index
    %c0_4 = arith.constant 0 : index
    %3 = vector.load %arg4[%c0_3, %c0_4] : memref<256x128xf32, #tpu.memory_space<vmem>>, vector<256x128xf32>
    tpu.vector_store %arg4[%c0_3, %c0_4], %2 {strides = array<i32>} : memref<256x128xf32, #tpu.memory_space<vmem>>, vector<256x128xf32>,
    return
  }
  func.func @transform_0(%arg0: i32, %arg1: i32) -> (i32, i32) {
    %c0_i32 = arith.constant 0 : i32
    %c0_i32_0 = arith.constant 0 : i32
    return %arg0, %c0_i32 : i32, i32
  }
  func.func @transform_1(%arg0: i32, %arg1: i32) -> (i32, i32) {
    %c0_i32 = arith.constant 0 : i32
    %c0_i32_0 = arith.constant 0 : i32
    return %c0_i32, %arg1 : i32, i32
  }
  func.func @transform_2(%arg0: i32, %arg1: i32) -> (i32, i32) {
    %c0_i32 = arith.constant 0 : i32
    return %arg0, %arg1 : i32, i32
  }
}

module attributes {stable_mosaic.version = 11 : i64} {
  func.func @_tanh_kernel(%arg0: i32, %arg1: memref<432x128xf32, #tpu.memory_space<vmem>>, %arg2: memref<432x128xf32, #tpu.memory_space<vmem>>) attributes {dimension_semantics = [#tpu.dimension_semantics<parallel>], iteration_bounds = array<i64: 1>, scalar_prefetch = 0 : i64, scratch_operands = 0 : i64, tpu.core_type = #tpu.core_type<tc>, window_params = [{transform_indices = @transform_0, window_bounds = array<i64: 432, 128>}, {transform_indices = @transform_1, window_bounds = array<i64: 432, 128>}]} {
    %c0 = arith.constant 0 : index
    %c0_0 = arith.constant 0 : index
    %0 = vector.load %arg1[%c0, %c0_0] : memref<432x128xf32, #tpu.memory_space<vmem>>, vector<432x128xf32>
    %1 = math.tanh %0 : vector<432x128xf32>
    %c0_1 = arith.constant 0 : index
    %c0_2 = arith.constant 0 : index
    %2 = vector.load %arg2[%c0_1, %c0_2] : memref<432x128xf32, #tpu.memory_space<vmem>>, vector<432x128xf32>
    tpu.vector_store %arg2[%c0_1, %c0_2], %1 {strides = array<i32>} : memref<432x128xf32, #tpu.memory_space<vmem>>, vector<432x128xf32>,
    return
  }
  func.func @transform_0(%arg0: i32) -> (i32, i32) {
    %c0_i32 = arith.constant 0 : i32
    %c0_i32_0 = arith.constant 0 : i32
    return %arg0, %c0_i32 : i32, i32
  }
  func.func @transform_1(%arg0: i32) -> (i32, i32) {
    %c0_i32 = arith.constant 0 : i32
    %c0_i32_0 = arith.constant 0 : i32
    return %arg0, %c0_i32 : i32, i32
  }
}

</mosaic_0001>

<llo_original>
// kernel: netg_forward.11
$region0: #{netg_forward.11}
  #allocation0 [shape = 'u32[]', space=smem, size = 0x4, offset = 0x4, fixed_abs, tag = 'smem constant byte address 0x4 - core index']
  #allocation1 [shape = 'u32[144,128]{1,0:T(1,128)}', space=vmem, size = 0x12000, scoped, tag = 'internal scratch']
  %s0 = inlined_call_operand.vmem [shape: f32[32,512], index: 0, kind: input, shape index: {}]
  %s1 = inlined_call_operand.vmem [shape: f32[1,512], index: 1, kind: input, shape index: {}]
  %s2 = inlined_call_operand.vmem [shape: f32[1,512], index: 2, kind: input, shape index: {}]
  %s3 = inlined_call_operand.vmem [shape: f32[32,512], index: 3, kind: output, shape index: {}]
  %s4 = sld [smem:[#allocation0]]
  $region22: #{netg_forward.11} parent=0
    _
  %s6 = ssub.s32 1, %s4
  %s7 = scalar_select 0, %s6, %s4
  // Predicated region
  $region2: #{netg_forward.11} parent=0 // pred_check
    _
  $region3: #{netg_forward.11} parent=0 // pred_check_branch
    %9 = sbr.rel (0) target = $region5
  $region4: #{netg_forward.11} parent=0 // pred_region
    _
  $region5: #{netg_forward.11} parent=0 // pred_fallthru
    _
  // Predicated region
  $region6: #{netg_forward.11} parent=0 // pred_check
    _
  $region7: #{netg_forward.11} parent=0 // pred_check_branch
    %11 = sbr.rel (0) target = $region9
  $region8: #{netg_forward.11} parent=0 // pred_region
    _
  $region9: #{netg_forward.11} parent=0 // pred_fallthru
    _
  // Predicated region
  $region10: #{netg_forward.11} parent=0 // pred_check
    _
  $region11: #{netg_forward.11} parent=0 // pred_check_branch
    %13 = sbr.rel (0) target = $region13
  $region12: #{netg_forward.11} parent=0 // pred_region
    _
  $region13: #{netg_forward.11} parent=0 // pred_fallthru
    _
  %v14 = vld [vmem:[%s0] sm:$0xff]
  %v15 = vld [vmem:[%s0 + $0x8] sm:$0xff]
  %v16 = vld [vmem:[%s0 + $0x10] sm:$0xff]
  %v17 = vld [vmem:[%s0 + $0x18] sm:$0xff]
  %v18 = vld [vmem:[%s0 + $0x20] sm:$0xff]
  %v19 = vld [vmem:[%s0 + $0x28] sm:$0xff]
  %v20 = vld [vmem:[%s0 + $0x30] sm:$0xff]
  %v21 = vld [vmem:[%s0 + $0x38] sm:$0xff]
  %v22 = vld [vmem:[%s0 + $0x40] sm:$0xff]
  %v23 = vld [vmem:[%s0 + $0x48] sm:$0xff]
  %v24 = vld [vmem:[%s0 + $0x50] sm:$0xff]
  %v25 = vld [vmem:[%s0 + $0x58] sm:$0xff]
  %v26 = vld [vmem:[%s0 + $0x60] sm:$0xff]
  %v27 = vld [vmem:[%s0 + $0x68] sm:$0xff]
  %v28 = vld [vmem:[%s0 + $0x70] sm:$0xff]
  %v29 = vld [vmem:[%s0 + $0x78] sm:$0xff]
  %v30 = vld [vmem:[%s1] sm:$0xf]
  %v32 = vlaneseq
  %v33 = vshrl.u32 %v32, 7
  %v34 = vsub.s32 0, %v33
  %v35 = vrot.slane %v30, %v34
  %v36 = vlaneseq
  %v37 = vshrl.u32 %v36, 7
  %v38 = vsub.s32 1, %v37
  %v39 = vrot.slane %v30, %v38
  %v40 = vlaneseq
  %v41 = vshrl.u32 %v40, 7
  %v42 = vsub.s32 2, %v41
  %v43 = vrot.slane %v30, %v42
  %v44 = vlaneseq
  %v45 = vshrl.u32 %v44, 7
  %v46 = vsub.s32 3, %v45
  %v47 = vrot.slane %v30, %v46
  %v52 = vmul.f32 %v14, %v35
  %v53 = vmul.f32 %v15, %v39
  %v54 = vmul.f32 %v16, %v43
  %v55 = vmul.f32 %v17, %v47
  %v56 = vmul.f32 %v18, %v35
  %v57 = vmul.f32 %v19, %v39
  %v58 = vmul.f32 %v20, %v43
  %v59 = vmul.f32 %v21, %v47
  %v60 = vmul.f32 %v22, %v35
  %v61 = vmul.f32 %v23, %v39
  %v62 = vmul.f32 %v24, %v43
  %v63 = vmul.f32 %v25, %v47
  %v64 = vmul.f32 %v26, %v35
  %v65 = vmul.f32 %v27, %v39
  %v66 = vmul.f32 %v28, %v43
  %v67 = vmul.f32 %v29, %v47
  %v68 = vld [vmem:[%s2] sm:$0xf]
  %v70 = vlaneseq
  %v71 = vshrl.u32 %v70, 7
  %v72 = vsub.s32 0, %v71
  %v73 = vrot.slane %v68, %v72
  %v74 = vlaneseq
  %v75 = vshrl.u32 %v74, 7
  %v76 = vsub.s32 1, %v75
  %v77 = vrot.slane %v68, %v76
  %v78 = vlaneseq
  %v79 = vshrl.u32 %v78, 7
  %v80 = vsub.s32 2, %v79
  %v81 = vrot.slane %v68, %v80
  %v82 = vlaneseq
  %v83 = vshrl.u32 %v82, 7
  %v84 = vsub.s32 3, %v83
  %v85 = vrot.slane %v68, %v84
  %v90 = vadd.f32 %v52, %v73
  %v91 = vadd.f32 %v53, %v77
  %v92 = vadd.f32 %v54, %v81
  %v93 = vadd.f32 %v55, %v85
  %v94 = vadd.f32 %v56, %v73
  %v95 = vadd.f32 %v57, %v77
  %v96 = vadd.f32 %v58, %v81
  %v97 = vadd.f32 %v59, %v85
  %v98 = vadd.f32 %v60, %v73
  %v99 = vadd.f32 %v61, %v77
  %v100 = vadd.f32 %v62, %v81
  %v101 = vadd.f32 %v63, %v85
  %v102 = vadd.f32 %v64, %v73
  %v103 = vadd.f32 %v65, %v77
  %v104 = vadd.f32 %v66, %v81
  %v105 = vadd.f32 %v67, %v85
  %v106 = vmax.f32 %v90, 0.0
  %v107 = vmax.f32 %v91, 0.0
  %v108 = vmax.f32 %v92, 0.0
  %v109 = vmax.f32 %v93, 0.0
  %v110 = vmax.f32 %v94, 0.0
  %v111 = vmax.f32 %v95, 0.0
  %v112 = vmax.f32 %v96, 0.0
  %v113 = vmax.f32 %v97, 0.0
  %v114 = vmax.f32 %v98, 0.0
  %v115 = vmax.f32 %v99, 0.0
  %v116 = vmax.f32 %v100, 0.0
  %v117 = vmax.f32 %v101, 0.0
  %v118 = vmax.f32 %v102, 0.0
  %v119 = vmax.f32 %v103, 0.0
  %v120 = vmax.f32 %v104, 0.0
  %v121 = vmax.f32 %v105, 0.0
  %122 = vst [vmem:[%s3] sm:$0xff] %v106
  %123 = vst [vmem:[%s3 + $0x8] sm:$0xff] %v107
  %124 = vst [vmem:[%s3 + $0x10] sm:$0xff] %v108
  %125 = vst [vmem:[%s3 + $0x18] sm:$0xff] %v109
  %126 = vst [vmem:[%s3 + $0x20] sm:$0xff] %v110
  %127 = vst [vmem:[%s3 + $0x28] sm:$0xff] %v111
  %128 = vst [vmem:[%s3 + $0x30] sm:$0xff] %v112
  %129 = vst [vmem:[%s3 + $0x38] sm:$0xff] %v113
  %130 = vst [vmem:[%s3 + $0x40] sm:$0xff] %v114
  %131 = vst [vmem:[%s3 + $0x48] sm:$0xff] %v115
  %132 = vst [vmem:[%s3 + $0x50] sm:$0xff] %v116
  %133 = vst [vmem:[%s3 + $0x58] sm:$0xff] %v117
  %134 = vst [vmem:[%s3 + $0x60] sm:$0xff] %v118
  %135 = vst [vmem:[%s3 + $0x68] sm:$0xff] %v119
  %136 = vst [vmem:[%s3 + $0x70] sm:$0xff] %v120
  %137 = vst [vmem:[%s3 + $0x78] sm:$0xff] %v121
  // Predicated region
  $region14: #{netg_forward.11} parent=0 // pred_check
    _
  $region15: #{netg_forward.11} parent=0 // pred_check_branch
    %139 = sbr.rel (0) target = $region17
  $region16: #{netg_forward.11} parent=0 // pred_region
    _
  $region17: #{netg_forward.11} parent=0 // pred_fallthru
    _
  // Predicated region
  $region18: #{netg_forward.11} parent=0 // pred_check
    _
  $region19: #{netg_forward.11} parent=0 // pred_check_branch
    %141 = sbr.rel (0) target = $region21
  $region20: #{netg_forward.11} parent=0 // pred_region
    _
  $region21: #{netg_forward.11} parent=0 // pred_fallthru
    _

// kernel: netg_forward.10
$region0: #{netg_forward.10}
  #allocation0 [shape = 'u32[]', space=smem, size = 0x4, offset = 0x4, fixed_abs, tag = 'smem constant byte address 0x4 - core index']
  #allocation1 [shape = 'u32[144,128]{1,0:T(1,128)}', space=vmem, size = 0x12000, scoped, tag = 'internal scratch']
  %s0 = inlined_call_operand.vmem [shape: bf16[2,128], index: 0, kind: input, shape index: {}]
  %s1 = inlined_call_operand.hbm [shape: bf16[128,8192], index: 1, kind: input, shape index: {}]
  %s2 = inlined_call_operand.vmem [shape: f32[2,8192], index: 2, kind: output, shape index: {}]
  %s3 = sld [smem:[#allocation0]]
  $region45: #{netg_forward.10} parent=0
    _
  %s5 = ssub.s32 1, %s3
  %s6 = scalar_select 0, %s5, %s3
  $region1: #{netg_forward.10} parent=0
    #allocation2 [shape = 'u8[1048576]{0}', space=vmem, size = 0x100000, scoped, tag = 'input window, operand 1']
    #allocation3 [shape = 's32[2]{0}', space=sflag, size = 0x8, scoped, tag = 'scoped memory for netg_forward.10']
    %7 = vsyncpa [#allocation3], 0
    %s8 = scalar_lea.sflag [#allocation3], 1
    %9 = vsyncpa %s8, 0
    loop: start=0, step=1, limit=6
    $region2: #{netg_forward.10} parent=1 // loop_pre_header
      _
    $region3: #{netg_forward.10} parent=1 // loop_header
      %s11 = sphi 0, %s15
      %p12 = scmp.ge.s32.totalorder %s11, 6
      %s18 = sphi 0, %s30
      %s19 = sphi 0, %s26
      %s20 = sphi 0, %s18
      %s21 = sphi 0, %s19
      %s22 = sphi 0, %s20
      %s23 = sphi 0, %s21
      %s33 = sphi 0, %s35
      %s36 = sphi 0, %s33
      %s37 = sphi 0, %s36
      %s53 = sphi 0, %s37
      %s59 = sphi 0, %s61
      %s62 = sphi 0, %s59
      %s63 = sphi 0, %s62
      %s79 = sphi 0, %s63
      %s87 = sphi 0, %s89
      %s90 = sphi 0, %s87
      %s91 = sphi 0, %s90
      %s107 = sphi 0, %s91
    $region4: #{netg_forward.10} parent=1 // loop_header_branch
      %14 = sbr.rel (%p12) target = $region8
    $region5: #{netg_forward.10} parent=1 // loop_body
      %s16 = ssub.s32 %s11, 1
      %s17 = ssub.s32 %s11, 2
      %s24 = sadd.s32 1, %s19
      %p25 = scmp.ge.s32.totalorder %s24, 4
      %s26 = scalar_select %p25, 0, %s24
      %s27 = sadd.s32 1, %s18
      %s28 = scalar_select %p25, %s27, %s18
      %p29 = scmp.ge.s32.totalorder %s28, 1
      %s30 = scalar_select %p29, 0, %s28
      %s31 = ssub.s32 %s18, %s30
      %p32 = scmp.eq.s32.totalorder %s31, 0
      %s34 = sadd.s32 %s33, 1
      %s35 = scalar_select %p32, %s33, %s34
      %p38 = pneg %p32
      %p39 = scmp.eq.s32.totalorder %s11, 3
      %p40 = por %p38, %p39
      %p41 = scmp.ne.s32.totalorder %s33, %s36
      %p42 = scmp.eq.s32.totalorder %s11, 0
      %p43 = por %p41, %p42
      %p44 = scmp.ne.s32.totalorder %s33, %s36
      %p45 = scmp.eq.s32.totalorder %s16, 3
      %p46 = por %p44, %p45
      %p47 = scmp.ne.s32.totalorder %s36, %s37
      %p48 = scmp.eq.s32.totalorder %s16, 0
      %p49 = por %p47, %p48
      %p50 = scmp.ne.s32.totalorder %s36, %s37
      %p51 = scmp.eq.s32.totalorder %s17, 3
      %p52 = por %p50, %p51
      %p54 = scmp.ne.s32.totalorder %s37, %s53
      %p55 = scmp.eq.s32.totalorder %s17, 0
      %p56 = por %p54, %p55
      %s57 = ssub.s32 %s19, %s26
      %p58 = scmp.eq.s32.totalorder %s57, 0
      %s60 = sadd.s32 %s59, 1
      %s61 = scalar_select %p58, %s59, %s60
      %p64 = pneg %p58
      %p65 = scmp.eq.s32.totalorder %s11, 3
      %p66 = por %p64, %p65
      %p67 = scmp.ne.s32.totalorder %s59, %s62
      %p68 = scmp.eq.s32.totalorder %s11, 0
      %p69 = por %p67, %p68
      %p70 = scmp.ne.s32.totalorder %s59, %s62
      %p71 = scmp.eq.s32.totalorder %s16, 3
      %p72 = por %p70, %p71
      %p73 = scmp.ne.s32.totalorder %s62, %s63
      %p74 = scmp.eq.s32.totalorder %s16, 0
      %p75 = por %p73, %p74
      %p76 = scmp.ne.s32.totalorder %s62, %s63
      %p77 = scmp.eq.s32.totalorder %s17, 3
      %p78 = por %p76, %p77
      %p80 = scmp.ne.s32.totalorder %s63, %s79
      %p81 = scmp.eq.s32.totalorder %s17, 0
      %p82 = por %p80, %p81
      %s83 = ssub.s32 %s18, %s30
      %s84 = ssub.s32 %s19, %s26
      %s85 = sor.u32 %s83, %s84
      %p86 = scmp.eq.s32.totalorder %s85, 0
      %s88 = sadd.s32 %s87, 1
      %s89 = scalar_select %p86, %s87, %s88
      %p92 = pneg %p86
      %p93 = scmp.eq.s32.totalorder %s11, 3
      %p94 = por %p92, %p93
      %p95 = scmp.ne.s32.totalorder %s87, %s90
      %p96 = scmp.eq.s32.totalorder %s11, 0
      %p97 = por %p95, %p96
      %p98 = scmp.ne.s32.totalorder %s87, %s90
      %p99 = scmp.eq.s32.totalorder %s16, 3
      %p100 = por %p98, %p99
      %p101 = scmp.ne.s32.totalorder %s90, %s91
      %p102 = scmp.eq.s32.totalorder %s16, 0
      %p103 = por %p101, %p102
      %p104 = scmp.ne.s32.totalorder %s90, %s91
      %p105 = scmp.eq.s32.totalorder %s17, 3
      %p106 = por %p104, %p105
      %p108 = scmp.ne.s32.totalorder %s91, %s107
      %p109 = scmp.eq.s32.totalorder %s17, 0
      %p110 = por %p108, %p109
      %p111 = scmp.le.s32.totalorder 1, %s11
      %p112 = scmp.lt.s32.totalorder %s11, 5
      %p113 = pnand %p111, %p112
      %p114 = pneg %p113
      // Predicated region
      $region9: #{netg_forward.10} parent=5 // pred_check
        _
      $region10: #{netg_forward.10} parent=5 // pred_check_branch
        %116 = sbr.rel (%p113) target = $region12
      $region11: #{netg_forward.10} parent=5 // pred_region
        %s117 = ssub.s32 %s11, 1
        // Predicated region
        $region13: #{netg_forward.10} parent=11 // pred_check
          %p118 = pneg %p49
        $region14: #{netg_forward.10} parent=11 // pred_check_branch
          %120 = sbr.rel (%p118) target = $region16
        $region15: #{netg_forward.10} parent=11 // pred_region
          %p121 = scmp.lt.s32.totalorder %s20, 0
          %s122 = scalar_select %p121, %s20, 0
          %s123 = scalar_lea.vmem %s0, %s122
        $region16: #{netg_forward.10} parent=11 // pred_fallthru
          _
      $region12: #{netg_forward.10} parent=5 // pred_fallthru
        _
      %p124 = scmp.lt.s32.totalorder %s11, 4
      // Predicated region
      $region17: #{netg_forward.10} parent=5 // pred_check
        %p125 = pneg %p124
      $region18: #{netg_forward.10} parent=5 // pred_check_branch
        %127 = sbr.rel (%p125) target = $region20
      $region19: #{netg_forward.10} parent=5 // pred_region
        // Predicated region
        $region21: #{netg_forward.10} parent=19 // pred_check
          %p128 = pneg %p69
        $region22: #{netg_forward.10} parent=19 // pred_check_branch
          %130 = sbr.rel (%p128) target = $region24
        $region23: #{netg_forward.10} parent=19 // pred_region
          %s131 = sand.u32 %s59, 1
          %s132 = scalar_lea.sflag [#allocation3], %s131
          %s133 = sand.u32 %s59, 1
          %s134 = smul.addr %s133, 1024
          %s135 = scalar_lea.vmem [#allocation2], %s134
          %s136 = smul.u32 16, %s19
          %s138 = ssub.s32 16384, 16384
          %139 = vsyncadd %s132, %s138
          %s140 = smul.addr %s136, 64
          %s141 = scalar_lea.hbm %s1, %s140
          %s142 = sshll.u32 %s135, 4
          %s143 = int_to_ptr.vmem [resolvable:$true] %s142
          %148 = dma.hbm_to_vmem [thread:$0]  %s141, 16384, %s143, %s132, 4096, 1024, 64
        $region24: #{netg_forward.10} parent=19 // pred_fallthru
          _
      $region20: #{netg_forward.10} parent=5 // pred_fallthru
        _
      %p149 = scmp.le.s32.totalorder 1, %s11
      %p150 = scmp.lt.s32.totalorder %s11, 5
      %p151 = pnand %p149, %p150
      %p152 = pneg %p151
      // Predicated region
      $region25: #{netg_forward.10} parent=5 // pred_check
        _
      $region26: #{netg_forward.10} parent=5 // pred_check_branch
        %154 = sbr.rel (%p151) target = $region28
      $region27: #{netg_forward.10} parent=5 // pred_region
        %s155 = ssub.s32 %s11, 1
        %s156 = sand.u32 %s62, 1
        %s157 = scalar_lea.sflag [#allocation3], %s156
        %s158 = sand.u32 %s62, 1
        %s159 = smul.addr %s158, 1024
        %s160 = scalar_lea.vmem [#allocation2], %s159
        // Predicated region
        $region29: #{netg_forward.10} parent=27 // pred_check
          %p161 = pneg %p75
        $region30: #{netg_forward.10} parent=27 // pred_check_branch
          %163 = sbr.rel (%p161) target = $region32
        $region31: #{netg_forward.10} parent=27 // pred_region
          %164 = dma.done %s157, 16384
        $region32: #{netg_forward.10} parent=27 // pred_fallthru
          _
        %p165 = scmp.lt.s32.totalorder %s20, 0
        %s166 = scalar_select %p165, %s20, 0
        %s167 = scalar_lea.vmem %s0, %s166
        %p168 = pneg %p49
        %p169 = pneg %p46
        %s170 = sand.u32 %s62, 1
        %s171 = scalar_lea.sflag [#allocation3], %s170
        %s172 = sand.u32 %s62, 1
        %s173 = smul.addr %s172, 1024
        %s174 = scalar_lea.vmem [#allocation2], %s173
        %p175 = pneg %p75
        %p176 = pneg %p72
        %p177 = pneg %p103
        %p178 = pneg %p100
        %s179 = smul.u32 16, %s21
        %p180 = scmp.lt.s32.totalorder %s20, 0
        %s181 = scalar_select %p180, %s20, 0
        %p182 = scmp.lt.s32.totalorder %s179, 63
        %s183 = scalar_select %p182, %s179, 63
        %s184 = smul.addr %s181, 64
        %s185 = sadd.s32 %s183, %s184
        %s186 = smul.addr %s185, 2
        %s187 = scalar_lea.vmem %s2, %s186
        %p188 = scmp.lt.s32.totalorder %s20, 0
        %s189 = scalar_select %p188, %s20, 0
        %s190 = scalar_lea.vmem %s0, %s189
        %s191 = smul.u32 16, %s21
        %s192 = smul.u32 16, %s21
        %p193 = scmp.lt.s32.totalorder %s20, 0
        %s194 = scalar_select %p193, %s20, 0
        %p195 = scmp.lt.s32.totalorder %s192, 63
        %s196 = scalar_select %p195, %s192, 63
        %s197 = smul.addr %s194, 64
        %s198 = sadd.s32 %s196, %s197
        %s199 = smul.addr %s198, 2
        %s200 = scalar_lea.vmem %s2, %s199
        %s201 = smul.u32 16, %s21
        %v203 = vld [vmem:[%s190] sm:$0x1]
        %v204 = vld [vmem:[%s160] sm:$0xff]
        %v205 = vld [vmem:[%s160 + $0x8] sm:$0xff]
        %v206 = vld [vmem:[%s160 + $0x10] sm:$0xff]
        %v207 = vld [vmem:[%s160 + $0x18] sm:$0xff]
        %v208 = vld [vmem:[%s160 + $0x20] sm:$0xff]
        %v209 = vld [vmem:[%s160 + $0x28] sm:$0xff]
        %v210 = vld [vmem:[%s160 + $0x30] sm:$0xff]
        %v211 = vld [vmem:[%s160 + $0x38] sm:$0xff]
        %v212 = vld [vmem:[%s160 + $0x40] sm:$0xff]
        %v213 = vld [vmem:[%s160 + $0x48] sm:$0xff]
        %v214 = vld [vmem:[%s160 + $0x50] sm:$0xff]
        %v215 = vld [vmem:[%s160 + $0x58] sm:$0xff]
        %v216 = vld [vmem:[%s160 + $0x60] sm:$0xff]
        %v217 = vld [vmem:[%s160 + $0x68] sm:$0xff]
        %v218 = vld [vmem:[%s160 + $0x70] sm:$0xff]
        %v219 = vld [vmem:[%s160 + $0x78] sm:$0xff]
        %v220 = vld [vmem:[%s160 + $0x80] sm:$0xff]
        %v221 = vld [vmem:[%s160 + $0x88] sm:$0xff]
        %v222 = vld [vmem:[%s160 + $0x90] sm:$0xff]
        %v223 = vld [vmem:[%s160 + $0x98] sm:$0xff]
        %v224 = vld [vmem:[%s160 + $0xa0] sm:$0xff]
        %v225 = vld [vmem:[%s160 + $0xa8] sm:$0xff]
        %v226 = vld [vmem:[%s160 + $0xb0] sm:$0xff]
        %v227 = vld [vmem:[%s160 + $0xb8] sm:$0xff]
        %v228 = vld [vmem:[%s160 + $0xc0] sm:$0xff]
        %v229 = vld [vmem:[%s160 + $0xc8] sm:$0xff]
        %v230 = vld [vmem:[%s160 + $0xd0] sm:$0xff]
        %v231 = vld [vmem:[%s160 + $0xd8] sm:$0xff]
        %v232 = vld [vmem:[%s160 + $0xe0] sm:$0xff]
        %v233 = vld [vmem:[%s160 + $0xe8] sm:$0xff]
        %v234 = vld [vmem:[%s160 + $0xf0] sm:$0xff]
        %v235 = vld [vmem:[%s160 + $0xf8] sm:$0xff]
        %v236 = vld [vmem:[%s160 + $0x100] sm:$0xff]
        %v237 = vld [vmem:[%s160 + $0x108] sm:$0xff]
        %v238 = vld [vmem:[%s160 + $0x110] sm:$0xff]
        %v239 = vld [vmem:[%s160 + $0x118] sm:$0xff]
        %v240 = vld [vmem:[%s160 + $0x120] sm:$0xff]
        %v241 = vld [vmem:[%s160 + $0x128] sm:$0xff]
        %v242 = vld [vmem:[%s160 + $0x130] sm:$0xff]
        %v243 = vld [vmem:[%s160 + $0x138] sm:$0xff]
        %v244 = vld [vmem:[%s160 + $0x140] sm:$0xff]
        %v245 = vld [vmem:[%s160 + $0x148] sm:$0xff]
        %v246 = vld [vmem:[%s160 + $0x150] sm:$0xff]
        %v247 = vld [vmem:[%s160 + $0x158] sm:$0xff]
        %v248 = vld [vmem:[%s160 + $0x160] sm:$0xff]
        %v249 = vld [vmem:[%s160 + $0x168] sm:$0xff]
        %v250 = vld [vmem:[%s160 + $0x170] sm:$0xff]
        %v251 = vld [vmem:[%s160 + $0x178] sm:$0xff]
        %v252 = vld [vmem:[%s160 + $0x180] sm:$0xff]
        %v253 = vld [vmem:[%s160 + $0x188] sm:$0xff]
        %v254 = vld [vmem:[%s160 + $0x190] sm:$0xff]
        %v255 = vld [vmem:[%s160 + $0x198] sm:$0xff]
        %v256 = vld [vmem:[%s160 + $0x1a0] sm:$0xff]
        %v257 = vld [vmem:[%s160 + $0x1a8] sm:$0xff]
        %v258 = vld [vmem:[%s160 + $0x1b0] sm:$0xff]
        %v259 = vld [vmem:[%s160 + $0x1b8] sm:$0xff]
        %v260 = vld [vmem:[%s160 + $0x1c0] sm:$0xff]
        %v261 = vld [vmem:[%s160 + $0x1c8] sm:$0xff]
        %v262 = vld [vmem:[%s160 + $0x1d0] sm:$0xff]
        %v263 = vld [vmem:[%s160 + $0x1d8] sm:$0xff]
        %v264 = vld [vmem:[%s160 + $0x1e0] sm:$0xff]
        %v265 = vld [vmem:[%s160 + $0x1e8] sm:$0xff]
        %v266 = vld [vmem:[%s160 + $0x1f0] sm:$0xff]
        %v267 = vld [vmem:[%s160 + $0x1f8] sm:$0xff]
        %v268 = vld [vmem:[%s160 + $0x200] sm:$0xff]
        %v269 = vld [vmem:[%s160 + $0x208] sm:$0xff]
        %v270 = vld [vmem:[%s160 + $0x210] sm:$0xff]
        %v271 = vld [vmem:[%s160 + $0x218] sm:$0xff]
        %v272 = vld [vmem:[%s160 + $0x220] sm:$0xff]
        %v273 = vld [vmem:[%s160 + $0x228] sm:$0xff]
        %v274 = vld [vmem:[%s160 + $0x230] sm:$0xff]
        %v275 = vld [vmem:[%s160 + $0x238] sm:$0xff]
        %v276 = vld [vmem:[%s160 + $0x240] sm:$0xff]
        %v277 = vld [vmem:[%s160 + $0x248] sm:$0xff]
        %v278 = vld [vmem:[%s160 + $0x250] sm:$0xff]
        %v279 = vld [vmem:[%s160 + $0x258] sm:$0xff]
        %v280 = vld [vmem:[%s160 + $0x260] sm:$0xff]
        %v281 = vld [vmem:[%s160 + $0x268] sm:$0xff]
        %v282 = vld [vmem:[%s160 + $0x270] sm:$0xff]
        %v283 = vld [vmem:[%s160 + $0x278] sm:$0xff]
        %v284 = vld [vmem:[%s160 + $0x280] sm:$0xff]
        %v285 = vld [vmem:[%s160 + $0x288] sm:$0xff]
        %v286 = vld [vmem:[%s160 + $0x290] sm:$0xff]
        %v287 = vld [vmem:[%s160 + $0x298] sm:$0xff]
        %v288 = vld [vmem:[%s160 + $0x2a0] sm:$0xff]
        %v289 = vld [vmem:[%s160 + $0x2a8] sm:$0xff]
        %v290 = vld [vmem:[%s160 + $0x2b0] sm:$0xff]
        %v291 = vld [vmem:[%s160 + $0x2b8] sm:$0xff]
        %v292 = vld [vmem:[%s160 + $0x2c0] sm:$0xff]
        %v293 = vld [vmem:[%s160 + $0x2c8] sm:$0xff]
        %v294 = vld [vmem:[%s160 + $0x2d0] sm:$0xff]
        %v295 = vld [vmem:[%s160 + $0x2d8] sm:$0xff]
        %v296 = vld [vmem:[%s160 + $0x2e0] sm:$0xff]
        %v297 = vld [vmem:[%s160 + $0x2e8] sm:$0xff]
        %v298 = vld [vmem:[%s160 + $0x2f0] sm:$0xff]
        %v299 = vld [vmem:[%s160 + $0x2f8] sm:$0xff]
        %v300 = vld [vmem:[%s160 + $0x300] sm:$0xff]
        %v301 = vld [vmem:[%s160 + $0x308] sm:$0xff]
        %v302 = vld [vmem:[%s160 + $0x310] sm:$0xff]
        %v303 = vld [vmem:[%s160 + $0x318] sm:$0xff]
        %v304 = vld [vmem:[%s160 + $0x320] sm:$0xff]
        %v305 = vld [vmem:[%s160 + $0x328] sm:$0xff]
        %v306 = vld [vmem:[%s160 + $0x330] sm:$0xff]
        %v307 = vld [vmem:[%s160 + $0x338] sm:$0xff]
        %v308 = vld [vmem:[%s160 + $0x340] sm:$0xff]
        %v309 = vld [vmem:[%s160 + $0x348] sm:$0xff]
        %v310 = vld [vmem:[%s160 + $0x350] sm:$0xff]
        %v311 = vld [vmem:[%s160 + $0x358] sm:$0xff]
        %v312 = vld [vmem:[%s160 + $0x360] sm:$0xff]
        %v313 = vld [vmem:[%s160 + $0x368] sm:$0xff]
        %v314 = vld [vmem:[%s160 + $0x370] sm:$0xff]
        %v315 = vld [vmem:[%s160 + $0x378] sm:$0xff]
        %v316 = vld [vmem:[%s160 + $0x380] sm:$0xff]
        %v317 = vld [vmem:[%s160 + $0x388] sm:$0xff]
        %v318 = vld [vmem:[%s160 + $0x390] sm:$0xff]
        %v319 = vld [vmem:[%s160 + $0x398] sm:$0xff]
        %v320 = vld [vmem:[%s160 + $0x3a0] sm:$0xff]
        %v321 = vld [vmem:[%s160 + $0x3a8] sm:$0xff]
        %v322 = vld [vmem:[%s160 + $0x3b0] sm:$0xff]
        %v323 = vld [vmem:[%s160 + $0x3b8] sm:$0xff]
        %v324 = vld [vmem:[%s160 + $0x3c0] sm:$0xff]
        %v325 = vld [vmem:[%s160 + $0x3c8] sm:$0xff]
        %v326 = vld [vmem:[%s160 + $0x3d0] sm:$0xff]
        %v327 = vld [vmem:[%s160 + $0x3d8] sm:$0xff]
        %v328 = vld [vmem:[%s160 + $0x3e0] sm:$0xff]
        %v329 = vld [vmem:[%s160 + $0x3e8] sm:$0xff]
        %v330 = vld [vmem:[%s160 + $0x3f0] sm:$0xff]
        %v331 = vld [vmem:[%s160 + $0x3f8] sm:$0xff]
        %v460 = vunpack.c.l.b16 %v204
        %v461 = vunpack.c.h.b16 %v204
        %v462 = vunpack.c.l.b16 %v205
        %v463 = vunpack.c.h.b16 %v205
        %v464 = vunpack.c.l.b16 %v206
        %v465 = vunpack.c.h.b16 %v206
        %v466 = vunpack.c.l.b16 %v207
        %v467 = vunpack.c.h.b16 %v207
        %v468 = vunpack.c.l.b16 %v208
        %v469 = vunpack.c.h.b16 %v208
        %v470 = vunpack.c.l.b16 %v209
        %v471 = vunpack.c.h.b16 %v209
        %v472 = vunpack.c.l.b16 %v210
        %v473 = vunpack.c.h.b16 %v210
        %v474 = vunpack.c.l.b16 %v211
        %v475 = vunpack.c.h.b16 %v211
        %v476 = vunpack.c.l.b16 %v212
        %v477 = vunpack.c.h.b16 %v212
        %v478 = vunpack.c.l.b16 %v213
        %v479 = vunpack.c.h.b16 %v213
        %v480 = vunpack.c.l.b16 %v214
        %v481 = vunpack.c.h.b16 %v214
        %v482 = vunpack.c.l.b16 %v215
        %v483 = vunpack.c.h.b16 %v215
        %v484 = vunpack.c.l.b16 %v216
        %v485 = vunpack.c.h.b16 %v216
        %v486 = vunpack.c.l.b16 %v217
        %v487 = vunpack.c.h.b16 %v217
        %v488 = vunpack.c.l.b16 %v218
        %v489 = vunpack.c.h.b16 %v218
        %v490 = vunpack.c.l.b16 %v219
        %v491 = vunpack.c.h.b16 %v219
        %v492 = vunpack.c.l.b16 %v220
        %v493 = vunpack.c.h.b16 %v220
        %v494 = vunpack.c.l.b16 %v221
        %v495 = vunpack.c.h.b16 %v221
        %v496 = vunpack.c.l.b16 %v222
        %v497 = vunpack.c.h.b16 %v222
        %v498 = vunpack.c.l.b16 %v223
        %v499 = vunpack.c.h.b16 %v223
        %v500 = vunpack.c.l.b16 %v224
        %v501 = vunpack.c.h.b16 %v224
        %v502 = vunpack.c.l.b16 %v225
        %v503 = vunpack.c.h.b16 %v225
        %v504 = vunpack.c.l.b16 %v226
        %v505 = vunpack.c.h.b16 %v226
        %v506 = vunpack.c.l.b16 %v227
        %v507 = vunpack.c.h.b16 %v227
        %v508 = vunpack.c.l.b16 %v228
        %v509 = vunpack.c.h.b16 %v228
        %v510 = vunpack.c.l.b16 %v229
        %v511 = vunpack.c.h.b16 %v229
        %v512 = vunpack.c.l.b16 %v230
        %v513 = vunpack.c.h.b16 %v230
        %v514 = vunpack.c.l.b16 %v231
        %v515 = vunpack.c.h.b16 %v231
        %v516 = vunpack.c.l.b16 %v232
        %v517 = vunpack.c.h.b16 %v232
        %v518 = vunpack.c.l.b16 %v233
        %v519 = vunpack.c.h.b16 %v233
        %v520 = vunpack.c.l.b16 %v234
        %v521 = vunpack.c.h.b16 %v234
        %v522 = vunpack.c.l.b16 %v235
        %v523 = vunpack.c.h.b16 %v235
        %v524 = vunpack.c.l.b16 %v236
        %v525 = vunpack.c.h.b16 %v236
        %v526 = vunpack.c.l.b16 %v237
        %v527 = vunpack.c.h.b16 %v237
        %v528 = vunpack.c.l.b16 %v238
        %v529 = vunpack.c.h.b16 %v238
        %v530 = vunpack.c.l.b16 %v239
        %v531 = vunpack.c.h.b16 %v239
        %v532 = vunpack.c.l.b16 %v240
        %v533 = vunpack.c.h.b16 %v240
        %v534 = vunpack.c.l.b16 %v241
        %v535 = vunpack.c.h.b16 %v241
        %v536 = vunpack.c.l.b16 %v242
        %v537 = vunpack.c.h.b16 %v242
        %v538 = vunpack.c.l.b16 %v243
        %v539 = vunpack.c.h.b16 %v243
        %v540 = vunpack.c.l.b16 %v244
        %v541 = vunpack.c.h.b16 %v244
        %v542 = vunpack.c.l.b16 %v245
        %v543 = vunpack.c.h.b16 %v245
        %v544 = vunpack.c.l.b16 %v246
        %v545 = vunpack.c.h.b16 %v246
        %v546 = vunpack.c.l.b16 %v247
        %v547 = vunpack.c.h.b16 %v247
        %v548 = vunpack.c.l.b16 %v248
        %v549 = vunpack.c.h.b16 %v248
        %v550 = vunpack.c.l.b16 %v249
        %v551 = vunpack.c.h.b16 %v249
        %v552 = vunpack.c.l.b16 %v250
        %v553 = vunpack.c.h.b16 %v250
        %v554 = vunpack.c.l.b16 %v251
        %v555 = vunpack.c.h.b16 %v251
        %v556 = vunpack.c.l.b16 %v252
        %v557 = vunpack.c.h.b16 %v252
        %v558 = vunpack.c.l.b16 %v253
        %v559 = vunpack.c.h.b16 %v253
        %v560 = vunpack.c.l.b16 %v254
        %v561 = vunpack.c.h.b16 %v254
        %v562 = vunpack.c.l.b16 %v255
        %v563 = vunpack.c.h.b16 %v255
        %v564 = vunpack.c.l.b16 %v256
        %v565 = vunpack.c.h.b16 %v256
        %v566 = vunpack.c.l.b16 %v257
        %v567 = vunpack.c.h.b16 %v257
        %v568 = vunpack.c.l.b16 %v258
        %v569 = vunpack.c.h.b16 %v258
        %v570 = vunpack.c.l.b16 %v259
        %v571 = vunpack.c.h.b16 %v259
        %v572 = vunpack.c.l.b16 %v260
        %v573 = vunpack.c.h.b16 %v260
        %v574 = vunpack.c.l.b16 %v261
        %v575 = vunpack.c.h.b16 %v261
        %v576 = vunpack.c.l.b16 %v262
        %v577 = vunpack.c.h.b16 %v262
        %v578 = vunpack.c.l.b16 %v263
        %v579 = vunpack.c.h.b16 %v263
        %v580 = vunpack.c.l.b16 %v264
        %v581 = vunpack.c.h.b16 %v264
        %v582 = vunpack.c.l.b16 %v265
        %v583 = vunpack.c.h.b16 %v265
        %v584 = vunpack.c.l.b16 %v266
        %v585 = vunpack.c.h.b16 %v266
        %v586 = vunpack.c.l.b16 %v267
        %v587 = vunpack.c.h.b16 %v267
        %v588 = vunpack.c.l.b16 %v268
        %v589 = vunpack.c.h.b16 %v268
        %v590 = vunpack.c.l.b16 %v269
        %v591 = vunpack.c.h.b16 %v269
        %v592 = vunpack.c.l.b16 %v270
        %v593 = vunpack.c.h.b16 %v270
        %v594 = vunpack.c.l.b16 %v271
        %v595 = vunpack.c.h.b16 %v271
        %v596 = vunpack.c.l.b16 %v272
        %v597 = vunpack.c.h.b16 %v272
        %v598 = vunpack.c.l.b16 %v273
        %v599 = vunpack.c.h.b16 %v273
        %v600 = vunpack.c.l.b16 %v274
        %v601 = vunpack.c.h.b16 %v274
        %v602 = vunpack.c.l.b16 %v275
        %v603 = vunpack.c.h.b16 %v275
        %v604 = vunpack.c.l.b16 %v276
        %v605 = vunpack.c.h.b16 %v276
        %v606 = vunpack.c.l.b16 %v277
        %v607 = vunpack.c.h.b16 %v277
        %v608 = vunpack.c.l.b16 %v278
        %v609 = vunpack.c.h.b16 %v278
        %v610 = vunpack.c.l.b16 %v279
        %v611 = vunpack.c.h.b16 %v279
        %v612 = vunpack.c.l.b16 %v280
        %v613 = vunpack.c.h.b16 %v280
        %v614 = vunpack.c.l.b16 %v281
        %v615 = vunpack.c.h.b16 %v281
        %v616 = vunpack.c.l.b16 %v282
        %v617 = vunpack.c.h.b16 %v282
        %v618 = vunpack.c.l.b16 %v283
        %v619 = vunpack.c.h.b16 %v283
        %v620 = vunpack.c.l.b16 %v284
        %v621 = vunpack.c.h.b16 %v284
        %v622 = vunpack.c.l.b16 %v285
        %v623 = vunpack.c.h.b16 %v285
        %v624 = vunpack.c.l.b16 %v286
        %v625 = vunpack.c.h.b16 %v286
        %v626 = vunpack.c.l.b16 %v287
        %v627 = vunpack.c.h.b16 %v287
        %v628 = vunpack.c.l.b16 %v288
        %v629 = vunpack.c.h.b16 %v288
        %v630 = vunpack.c.l.b16 %v289
        %v631 = vunpack.c.h.b16 %v289
        %v632 = vunpack.c.l.b16 %v290
        %v633 = vunpack.c.h.b16 %v290
        %v634 = vunpack.c.l.b16 %v291
        %v635 = vunpack.c.h.b16 %v291
        %v636 = vunpack.c.l.b16 %v292
        %v637 = vunpack.c.h.b16 %v292
        %v638 = vunpack.c.l.b16 %v293
        %v639 = vunpack.c.h.b16 %v293
        %v640 = vunpack.c.l.b16 %v294
        %v641 = vunpack.c.h.b16 %v294
        %v642 = vunpack.c.l.b16 %v295
        %v643 = vunpack.c.h.b16 %v295
        %v644 = vunpack.c.l.b16 %v296
        %v645 = vunpack.c.h.b16 %v296
        %v646 = vunpack.c.l.b16 %v297
        %v647 = vunpack.c.h.b16 %v297
        %v648 = vunpack.c.l.b16 %v298
        %v649 = vunpack.c.h.b16 %v298
        %v650 = vunpack.c.l.b16 %v299
        %v651 = vunpack.c.h.b16 %v299
        %v652 = vunpack.c.l.b16 %v300
        %v653 = vunpack.c.h.b16 %v300
        %v654 = vunpack.c.l.b16 %v301
        %v655 = vunpack.c.h.b16 %v301
        %v656 = vunpack.c.l.b16 %v302
        %v657 = vunpack.c.h.b16 %v302
        %v658 = vunpack.c.l.b16 %v303
        %v659 = vunpack.c.h.b16 %v303
        %v660 = vunpack.c.l.b16 %v304
        %v661 = vunpack.c.h.b16 %v304
        %v662 = vunpack.c.l.b16 %v305
        %v663 = vunpack.c.h.b16 %v305
        %v664 = vunpack.c.l.b16 %v306
        %v665 = vunpack.c.h.b16 %v306
        %v666 = vunpack.c.l.b16 %v307
        %v667 = vunpack.c.h.b16 %v307
        %v668 = vunpack.c.l.b16 %v308
        %v669 = vunpack.c.h.b16 %v308
        %v670 = vunpack.c.l.b16 %v309
        %v671 = vunpack.c.h.b16 %v309
        %v672 = vunpack.c.l.b16 %v310
        %v673 = vunpack.c.h.b16 %v310
        %v674 = vunpack.c.l.b16 %v311
        %v675 = vunpack.c.h.b16 %v311
        %v676 = vunpack.c.l.b16 %v312
        %v677 = vunpack.c.h.b16 %v312
        %v678 = vunpack.c.l.b16 %v313
        %v679 = vunpack.c.h.b16 %v313
        %v680 = vunpack.c.l.b16 %v314
        %v681 = vunpack.c.h.b16 %v314
        %v682 = vunpack.c.l.b16 %v315
        %v683 = vunpack.c.h.b16 %v315
        %v684 = vunpack.c.l.b16 %v316
        %v685 = vunpack.c.h.b16 %v316
        %v686 = vunpack.c.l.b16 %v317
        %v687 = vunpack.c.h.b16 %v317
        %v688 = vunpack.c.l.b16 %v318
        %v689 = vunpack.c.h.b16 %v318
        %v690 = vunpack.c.l.b16 %v319
        %v691 = vunpack.c.h.b16 %v319
        %v692 = vunpack.c.l.b16 %v320
        %v693 = vunpack.c.h.b16 %v320
        %v694 = vunpack.c.l.b16 %v321
        %v695 = vunpack.c.h.b16 %v321
        %v696 = vunpack.c.l.b16 %v322
        %v697 = vunpack.c.h.b16 %v322
        %v698 = vunpack.c.l.b16 %v323
        %v699 = vunpack.c.h.b16 %v323
        %v700 = vunpack.c.l.b16 %v324
        %v701 = vunpack.c.h.b16 %v324
        %v702 = vunpack.c.l.b16 %v325
        %v703 = vunpack.c.h.b16 %v325
        %v704 = vunpack.c.l.b16 %v326
        %v705 = vunpack.c.h.b16 %v326
        %v706 = vunpack.c.l.b16 %v327
        %v707 = vunpack.c.h.b16 %v327
        %v708 = vunpack.c.l.b16 %v328
        %v709 = vunpack.c.h.b16 %v328
        %v710 = vunpack.c.l.b16 %v329
        %v711 = vunpack.c.h.b16 %v329
        %v712 = vunpack.c.l.b16 %v330
        %v713 = vunpack.c.h.b16 %v330
        %v714 = vunpack.c.l.b16 %v331
        %v715 = vunpack.c.h.b16 %v331
        %v716 = vpack.c.b16 %v476, %v460
        %v717 = vpack.c.b16 %v477, %v461
        %v718 = vpack.c.b16 %v478, %v462
        %v719 = vpack.c.b16 %v479, %v463
        %v720 = vpack.c.b16 %v480, %v464
        %v721 = vpack.c.b16 %v481, %v465
        %v722 = vpack.c.b16 %v482, %v466
        %v723 = vpack.c.b16 %v483, %v467
        %v724 = vpack.c.b16 %v484, %v468
        %v725 = vpack.c.b16 %v485, %v469
        %v726 = vpack.c.b16 %v486, %v470
        %v727 = vpack.c.b16 %v487, %v471
        %v728 = vpack.c.b16 %v488, %v472
        %v729 = vpack.c.b16 %v489, %v473
        %v730 = vpack.c.b16 %v490, %v474
        %v731 = vpack.c.b16 %v491, %v475
        %v732 = vpack.c.b16 %v508, %v492
        %v733 = vpack.c.b16 %v509, %v493
        %v734 = vpack.c.b16 %v510, %v494
        %v735 = vpack.c.b16 %v511, %v495
        %v736 = vpack.c.b16 %v512, %v496
        %v737 = vpack.c.b16 %v513, %v497
        %v738 = vpack.c.b16 %v514, %v498
        %v739 = vpack.c.b16 %v515, %v499
        %v740 = vpack.c.b16 %v516, %v500
        %v741 = vpack.c.b16 %v517, %v501
        %v742 = vpack.c.b16 %v518, %v502
        %v743 = vpack.c.b16 %v519, %v503
        %v744 = vpack.c.b16 %v520, %v504
        %v745 = vpack.c.b16 %v521, %v505
        %v746 = vpack.c.b16 %v522, %v506
        %v747 = vpack.c.b16 %v523, %v507
        %v748 = vpack.c.b16 %v540, %v524
        %v749 = vpack.c.b16 %v541, %v525
        %v750 = vpack.c.b16 %v542, %v526
        %v751 = vpack.c.b16 %v543, %v527
        %v752 = vpack.c.b16 %v544, %v528
        %v753 = vpack.c.b16 %v545, %v529
        %v754 = vpack.c.b16 %v546, %v530
        %v755 = vpack.c.b16 %v547, %v531
        %v756 = vpack.c.b16 %v548, %v532
        %v757 = vpack.c.b16 %v549, %v533
        %v758 = vpack.c.b16 %v550, %v534
        %v759 = vpack.c.b16 %v551, %v535
        %v760 = vpack.c.b16 %v552, %v536
        %v761 = vpack.c.b16 %v553, %v537
        %v762 = vpack.c.b16 %v554, %v538
        %v763 = vpack.c.b16 %v555, %v539
        %v764 = vpack.c.b16 %v572, %v556
        %v765 = vpack.c.b16 %v573, %v557
        %v766 = vpack.c.b16 %v574, %v558
        %v767 = vpack.c.b16 %v575, %v559
        %v768 = vpack.c.b16 %v576, %v560
        %v769 = vpack.c.b16 %v577, %v561
        %v770 = vpack.c.b16 %v578, %v562
        %v771 = vpack.c.b16 %v579, %v563
        %v772 = vpack.c.b16 %v580, %v564
        %v773 = vpack.c.b16 %v581, %v565
        %v774 = vpack.c.b16 %v582, %v566
        %v775 = vpack.c.b16 %v583, %v567
        %v776 = vpack.c.b16 %v584, %v568
        %v777 = vpack.c.b16 %v585, %v569
        %v778 = vpack.c.b16 %v586, %v570
        %v779 = vpack.c.b16 %v587, %v571
        %v780 = vpack.c.b16 %v604, %v588
        %v781 = vpack.c.b16 %v605, %v589
        %v782 = vpack.c.b16 %v606, %v590
        %v783 = vpack.c.b16 %v607, %v591
        %v784 = vpack.c.b16 %v608, %v592
        %v785 = vpack.c.b16 %v609, %v593
        %v786 = vpack.c.b16 %v610, %v594
        %v787 = vpack.c.b16 %v611, %v595
        %v788 = vpack.c.b16 %v612, %v596
        %v789 = vpack.c.b16 %v613, %v597
        %v790 = vpack.c.b16 %v614, %v598
        %v791 = vpack.c.b16 %v615, %v599
        %v792 = vpack.c.b16 %v616, %v600
        %v793 = vpack.c.b16 %v617, %v601
        %v794 = vpack.c.b16 %v618, %v602
        %v795 = vpack.c.b16 %v619, %v603
        %v796 = vpack.c.b16 %v636, %v620
        %v797 = vpack.c.b16 %v637, %v621
        %v798 = vpack.c.b16 %v638, %v622
        %v799 = vpack.c.b16 %v639, %v623
        %v800 = vpack.c.b16 %v640, %v624
        %v801 = vpack.c.b16 %v641, %v625
        %v802 = vpack.c.b16 %v642, %v626
        %v803 = vpack.c.b16 %v643, %v627
        %v804 = vpack.c.b16 %v644, %v628
        %v805 = vpack.c.b16 %v645, %v629
        %v806 = vpack.c.b16 %v646, %v630
        %v807 = vpack.c.b16 %v647, %v631
        %v808 = vpack.c.b16 %v648, %v632
        %v809 = vpack.c.b16 %v649, %v633
        %v810 = vpack.c.b16 %v650, %v634
        %v811 = vpack.c.b16 %v651, %v635
        %v812 = vpack.c.b16 %v668, %v652
        %v813 = vpack.c.b16 %v669, %v653
        %v814 = vpack.c.b16 %v670, %v654
        %v815 = vpack.c.b16 %v671, %v655
        %v816 = vpack.c.b16 %v672, %v656
        %v817 = vpack.c.b16 %v673, %v657
        %v818 = vpack.c.b16 %v674, %v658
        %v819 = vpack.c.b16 %v675, %v659
        %v820 = vpack.c.b16 %v676, %v660
        %v821 = vpack.c.b16 %v677, %v661
        %v822 = vpack.c.b16 %v678, %v662
        %v823 = vpack.c.b16 %v679, %v663
        %v824 = vpack.c.b16 %v680, %v664
        %v825 = vpack.c.b16 %v681, %v665
        %v826 = vpack.c.b16 %v682, %v666
        %v827 = vpack.c.b16 %v683, %v667
        %v828 = vpack.c.b16 %v700, %v684
        %v829 = vpack.c.b16 %v701, %v685
        %v830 = vpack.c.b16 %v702, %v686
        %v831 = vpack.c.b16 %v703, %v687
        %v832 = vpack.c.b16 %v704, %v688
        %v833 = vpack.c.b16 %v705, %v689
        %v834 = vpack.c.b16 %v706, %v690
        %v835 = vpack.c.b16 %v707, %v691
        %v836 = vpack.c.b16 %v708, %v692
        %v837 = vpack.c.b16 %v709, %v693
        %v838 = vpack.c.b16 %v710, %v694
        %v839 = vpack.c.b16 %v711, %v695
        %v840 = vpack.c.b16 %v712, %v696
        %v841 = vpack.c.b16 %v713, %v697
        %v842 = vpack.c.b16 %v714, %v698
        %v843 = vpack.c.b16 %v715, %v699
        %972 = vmatprep.subr.bf16.mxu0 %v717
        %973 = vmatpush1.bf16.msra.mxu0 %v716
        %974 = vmatprep.subr.bf16.mxu0 %v733
        %975 = vmatpush1.bf16.msra.mxu0 %v732
        %976 = vmatprep.subr.bf16.mxu0 %v749
        %977 = vmatpush1.bf16.msra.mxu0 %v748
        %978 = vmatprep.subr.bf16.mxu0 %v765
        %979 = vmatpush1.bf16.msra.mxu0 %v764
        %980 = vmatprep.subr.bf16.mxu0 %v781
        %981 = vmatpush1.bf16.msra.mxu0 %v780
        %982 = vmatprep.subr.bf16.mxu0 %v797
        %983 = vmatpush1.bf16.msra.mxu0 %v796
        %984 = vmatprep.subr.bf16.mxu0 %v813
        %985 = vmatpush1.bf16.msra.mxu0 %v812
        %986 = vmatprep.subr.bf16.mxu0 %v829
        %987 = vmatpush1.bf16.msra.mxu0 %v828
        %988 = vmatprep.subr.bf16.mxu0 0
        %989 = vmatpush1.bf16.msra.mxu0 0
        %990 = vmatprep.subr.bf16.mxu0 0
        %991 = vmatpush1.bf16.msra.mxu0 0
        %992 = vmatprep.subr.bf16.mxu0 0
        %993 = vmatpush1.bf16.msra.mxu0 0
        %994 = vmatprep.subr.bf16.mxu0 0
        %995 = vmatpush1.bf16.msra.mxu0 0
        %996 = vmatprep.subr.bf16.mxu0 0
        %997 = vmatpush1.bf16.msra.mxu0 0
        %998 = vmatprep.subr.bf16.mxu0 0
        %999 = vmatpush1.bf16.msra.mxu0 0
        %1000 = vmatprep.subr.bf16.mxu0 0
        %1001 = vmatpush1.bf16.msra.mxu0 0
        %1002 = vmatprep.subr.bf16.mxu0 0
        %1003 = vmatpush1.bf16.msra.mxu0 0
        %1004 = vmatprep.mubr.bf16.mxu0 0
        %1005 = vmatmul.mubr.bf16.gmra.mrb[0].mxu0 %v203
        %v1006 = vpop.f32.mrb[0].mxu0
        %v1007 = vadd.f32 0.0, %v1006
        %v1008 = vpop.f32.mrb[0].mxu0
        %v1009 = vadd.f32 0.0, %v1008
        %v1010 = vpop.f32.mrb[0].mxu0
        %v1011 = vpop.f32.mrb[0].mxu0
        %1012 = vdwg.mxu0
        %1013 = vmatprep.subr.bf16.mxu0 %v719
        %1014 = vmatpush1.bf16.msra.mxu0 %v718
        %1015 = vmatprep.subr.bf16.mxu0 %v735
        %1016 = vmatpush1.bf16.msra.mxu0 %v734
        %1017 = vmatprep.subr.bf16.mxu0 %v751
        %1018 = vmatpush1.bf16.msra.mxu0 %v750
        %1019 = vmatprep.subr.bf16.mxu0 %v767
        %1020 = vmatpush1.bf16.msra.mxu0 %v766
        %1021 = vmatprep.subr.bf16.mxu0 %v783
        %1022 = vmatpush1.bf16.msra.mxu0 %v782
        %1023 = vmatprep.subr.bf16.mxu0 %v799
        %1024 = vmatpush1.bf16.msra.mxu0 %v798
        %1025 = vmatprep.subr.bf16.mxu0 %v815
        %1026 = vmatpush1.bf16.msra.mxu0 %v814
        %1027 = vmatprep.subr.bf16.mxu0 %v831
        %1028 = vmatpush1.bf16.msra.mxu0 %v830
        %1029 = vmatprep.subr.bf16.mxu0 0
        %1030 = vmatpush1.bf16.msra.mxu0 0
        %1031 = vmatprep.subr.bf16.mxu0 0
        %1032 = vmatpush1.bf16.msra.mxu0 0
        %1033 = vmatprep.subr.bf16.mxu0 0
        %1034 = vmatpush1.bf16.msra.mxu0 0
        %1035 = vmatprep.subr.bf16.mxu0 0
        %1036 = vmatpush1.bf16.msra.mxu0 0
        %1037 = vmatprep.subr.bf16.mxu0 0
        %1038 = vmatpush1.bf16.msra.mxu0 0
        %1039 = vmatprep.subr.bf16.mxu0 0
        %1040 = vmatpush1.bf16.msra.mxu0 0
        %1041 = vmatprep.subr.bf16.mxu0 0
        %1042 = vmatpush1.bf16.msra.mxu0 0
        %1043 = vmatprep.subr.bf16.mxu0 0
        %1044 = vmatpush1.bf16.msra.mxu0 0
        %1045 = vmatprep.mubr.bf16.mxu0 0
        %1046 = vmatmul.mubr.bf16.gmra.mrb[0].mxu0 %v203
        %v1047 = vpop.f32.mrb[0].mxu0
        %v1048 = vadd.f32 0.0, %v1047
        %v1049 = vpop.f32.mrb[0].mxu0
        %v1050 = vadd.f32 0.0, %v1049
        %v1051 = vpop.f32.mrb[0].mxu0
        %v1052 = vpop.f32.mrb[0].mxu0
        %1053 = vdwg.mxu0
        %1054 = vmatprep.subr.bf16.mxu0 %v721
        %1055 = vmatpush1.bf16.msra.mxu0 %v720
        %1056 = vmatprep.subr.bf16.mxu0 %v737
        %1057 = vmatpush1.bf16.msra.mxu0 %v736
        %1058 = vmatprep.subr.bf16.mxu0 %v753
        %1059 = vmatpush1.bf16.msra.mxu0 %v752
        %1060 = vmatprep.subr.bf16.mxu0 %v769
        %1061 = vmatpush1.bf16.msra.mxu0 %v768
        %1062 = vmatprep.subr.bf16.mxu0 %v785
        %1063 = vmatpush1.bf16.msra.mxu0 %v784
        %1064 = vmatprep.subr.bf16.mxu0 %v801
        %1065 = vmatpush1.bf16.msra.mxu0 %v800
        %1066 = vmatprep.subr.bf16.mxu0 %v817
        %1067 = vmatpush1.bf16.msra.mxu0 %v816
        %1068 = vmatprep.subr.bf16.mxu0 %v833
        %1069 = vmatpush1.bf16.msra.mxu0 %v832
        %1070 = vmatprep.subr.bf16.mxu0 0
        %1071 = vmatpush1.bf16.msra.mxu0 0
        %1072 = vmatprep.subr.bf16.mxu0 0
        %1073 = vmatpush1.bf16.msra.mxu0 0
        %1074 = vmatprep.subr.bf16.mxu0 0
        %1075 = vmatpush1.bf16.msra.mxu0 0
        %1076 = vmatprep.subr.bf16.mxu0 0
        %1077 = vmatpush1.bf16.msra.mxu0 0
        %1078 = vmatprep.subr.bf16.mxu0 0
        %1079 = vmatpush1.bf16.msra.mxu0 0
        %1080 = vmatprep.subr.bf16.mxu0 0
        %1081 = vmatpush1.bf16.msra.mxu0 0
        %1082 = vmatprep.subr.bf16.mxu0 0
        %1083 = vmatpush1.bf16.msra.mxu0 0
        %1084 = vmatprep.subr.bf16.mxu0 0
        %1085 = vmatpush1.bf16.msra.mxu0 0
        %1086 = vmatprep.mubr.bf16.mxu0 0
        %1087 = vmatmul.mubr.bf16.gmra.mrb[0].mxu0 %v203
        %v1088 = vpop.f32.mrb[0].mxu0
        %v1089 = vadd.f32 0.0, %v1088
        %v1090 = vpop.f32.mrb[0].mxu0
        %v1091 = vadd.f32 0.0, %v1090
        %v1092 = vpop.f32.mrb[0].mxu0
        %v1093 = vpop.f32.mrb[0].mxu0
        %1094 = vdwg.mxu0
        %1095 = vmatprep.subr.bf16.mxu0 %v723
        %1096 = vmatpush1.bf16.msra.mxu0 %v722
        %1097 = vmatprep.subr.bf16.mxu0 %v739
        %1098 = vmatpush1.bf16.msra.mxu0 %v738
        %1099 = vmatprep.subr.bf16.mxu0 %v755
        %1100 = vmatpush1.bf16.msra.mxu0 %v754
        %1101 = vmatprep.subr.bf16.mxu0 %v771
        %1102 = vmatpush1.bf16.msra.mxu0 %v770
        %1103 = vmatprep.subr.bf16.mxu0 %v787
        %1104 = vmatpush1.bf16.msra.mxu0 %v786
        %1105 = vmatprep.subr.bf16.mxu0 %v803
        %1106 = vmatpush1.bf16.msra.mxu0 %v802
        %1107 = vmatprep.subr.bf16.mxu0 %v819
        %1108 = vmatpush1.bf16.msra.mxu0 %v818
        %1109 = vmatprep.subr.bf16.mxu0 %v835
        %1110 = vmatpush1.bf16.msra.mxu0 %v834
        %1111 = vmatprep.subr.bf16.mxu0 0
        %1112 = vmatpush1.bf16.msra.mxu0 0
        %1113 = vmatprep.subr.bf16.mxu0 0
        %1114 = vmatpush1.bf16.msra.mxu0 0
        %1115 = vmatprep.subr.bf16.mxu0 0
        %1116 = vmatpush1.bf16.msra.mxu0 0
        %1117 = vmatprep.subr.bf16.mxu0 0
        %1118 = vmatpush1.bf16.msra.mxu0 0
        %1119 = vmatprep.subr.bf16.mxu0 0
        %1120 = vmatpush1.bf16.msra.mxu0 0
        %1121 = vmatprep.subr.bf16.mxu0 0
        %1122 = vmatpush1.bf16.msra.mxu0 0
        %1123 = vmatprep.subr.bf16.mxu0 0
        %1124 = vmatpush1.bf16.msra.mxu0 0
        %1125 = vmatprep.subr.bf16.mxu0 0
        %1126 = vmatpush1.bf16.msra.mxu0 0
        %1127 = vmatprep.mubr.bf16.mxu0 0
        %1128 = vmatmul.mubr.bf16.gmra.mrb[0].mxu0 %v203
        %v1129 = vpop.f32.mrb[0].mxu0
        %v1130 = vadd.f32 0.0, %v1129
        %v1131 = vpop.f32.mrb[0].mxu0
        %v1132 = vadd.f32 0.0, %v1131
        %v1133 = vpop.f32.mrb[0].mxu0
        %v1134 = vpop.f32.mrb[0].mxu0
        %1135 = vdwg.mxu0
        %1136 = vmatprep.subr.bf16.mxu0 %v725
        %1137 = vmatpush1.bf16.msra.mxu0 %v724
        %1138 = vmatprep.subr.bf16.mxu0 %v741
        %1139 = vmatpush1.bf16.msra.mxu0 %v740
        %1140 = vmatprep.subr.bf16.mxu0 %v757
        %1141 = vmatpush1.bf16.msra.mxu0 %v756
        %1142 = vmatprep.subr.bf16.mxu0 %v773
        %1143 = vmatpush1.bf16.msra.mxu0 %v772
        %1144 = vmatprep.subr.bf16.mxu0 %v789
        %1145 = vmatpush1.bf16.msra.mxu0 %v788
        %1146 = vmatprep.subr.bf16.mxu0 %v805
        %1147 = vmatpush1.bf16.msra.mxu0 %v804
        %1148 = vmatprep.subr.bf16.mxu0 %v821
        %1149 = vmatpush1.bf16.msra.mxu0 %v820
        %1150 = vmatprep.subr.bf16.mxu0 %v837
        %1151 = vmatpush1.bf16.msra.mxu0 %v836
        %1152 = vmatprep.subr.bf16.mxu0 0
        %1153 = vmatpush1.bf16.msra.mxu0 0
        %1154 = vmatprep.subr.bf16.mxu0 0
        %1155 = vmatpush1.bf16.msra.mxu0 0
        %1156 = vmatprep.subr.bf16.mxu0 0
        %1157 = vmatpush1.bf16.msra.mxu0 0
        %1158 = vmatprep.subr.bf16.mxu0 0
        %1159 = vmatpush1.bf16.msra.mxu0 0
        %1160 = vmatprep.subr.bf16.mxu0 0
        %1161 = vmatpush1.bf16.msra.mxu0 0
        %1162 = vmatprep.subr.bf16.mxu0 0
        %1163 = vmatpush1.bf16.msra.mxu0 0
        %1164 = vmatprep.subr.bf16.mxu0 0
        %1165 = vmatpush1.bf16.msra.mxu0 0
        %1166 = vmatprep.subr.bf16.mxu0 0
        %1167 = vmatpush1.bf16.msra.mxu0 0
        %1168 = vmatprep.mubr.bf16.mxu0 0
        %1169 = vmatmul.mubr.bf16.gmra.mrb[0].mxu0 %v203
        %v1170 = vpop.f32.mrb[0].mxu0
        %v1171 = vadd.f32 0.0, %v1170
        %v1172 = vpop.f32.mrb[0].mxu0
        %v1173 = vadd.f32 0.0, %v1172
        %v1174 = vpop.f32.mrb[0].mxu0
        %v1175 = vpop.f32.mrb[0].mxu0
        %1176 = vdwg.mxu0
        %1177 = vmatprep.subr.bf16.mxu0 %v727
        %1178 = vmatpush1.bf16.msra.mxu0 %v726
        %1179 = vmatprep.subr.bf16.mxu0 %v743
        %1180 = vmatpush1.bf16.msra.mxu0 %v742
        %1181 = vmatprep.subr.bf16.mxu0 %v759
        %1182 = vmatpush1.bf16.msra.mxu0 %v758
        %1183 = vmatprep.subr.bf16.mxu0 %v775
        %1184 = vmatpush1.bf16.msra.mxu0 %v774
        %1185 = vmatprep.subr.bf16.mxu0 %v791
        %1186 = vmatpush1.bf16.msra.mxu0 %v790
        %1187 = vmatprep.subr.bf16.mxu0 %v807
        %1188 = vmatpush1.bf16.msra.mxu0 %v806
        %1189 = vmatprep.subr.bf16.mxu0 %v823
        %1190 = vmatpush1.bf16.msra.mxu0 %v822
        %1191 = vmatprep.subr.bf16.mxu0 %v839
        %1192 = vmatpush1.bf16.msra.mxu0 %v838
        %1193 = vmatprep.subr.bf16.mxu0 0
        %1194 = vmatpush1.bf16.msra.mxu0 0
        %1195 = vmatprep.subr.bf16.mxu0 0
        %1196 = vmatpush1.bf16.msra.mxu0 0
        %1197 = vmatprep.subr.bf16.mxu0 0
        %1198 = vmatpush1.bf16.msra.mxu0 0
        %1199 = vmatprep.subr.bf16.mxu0 0
        %1200 = vmatpush1.bf16.msra.mxu0 0
        %1201 = vmatprep.subr.bf16.mxu0 0
        %1202 = vmatpush1.bf16.msra.mxu0 0
        %1203 = vmatprep.subr.bf16.mxu0 0
        %1204 = vmatpush1.bf16.msra.mxu0 0
        %1205 = vmatprep.subr.bf16.mxu0 0
        %1206 = vmatpush1.bf16.msra.mxu0 0
        %1207 = vmatprep.subr.bf16.mxu0 0
        %1208 = vmatpush1.bf16.msra.mxu0 0
        %1209 = vmatprep.mubr.bf16.mxu0 0
        %1210 = vmatmul.mubr.bf16.gmra.mrb[0].mxu0 %v203
        %v1211 = vpop.f32.mrb[0].mxu0
        %v1212 = vadd.f32 0.0, %v1211
        %v1213 = vpop.f32.mrb[0].mxu0
        %v1214 = vadd.f32 0.0, %v1213
        %v1215 = vpop.f32.mrb[0].mxu0
        %v1216 = vpop.f32.mrb[0].mxu0
        %1217 = vdwg.mxu0
        %1218 = vmatprep.subr.bf16.mxu0 %v729
        %1219 = vmatpush1.bf16.msra.mxu0 %v728
        %1220 = vmatprep.subr.bf16.mxu0 %v745
        %1221 = vmatpush1.bf16.msra.mxu0 %v744
        %1222 = vmatprep.subr.bf16.mxu0 %v761
        %1223 = vmatpush1.bf16.msra.mxu0 %v760
        %1224 = vmatprep.subr.bf16.mxu0 %v777
        %1225 = vmatpush1.bf16.msra.mxu0 %v776
        %1226 = vmatprep.subr.bf16.mxu0 %v793
        %1227 = vmatpush1.bf16.msra.mxu0 %v792
        %1228 = vmatprep.subr.bf16.mxu0 %v809
        %1229 = vmatpush1.bf16.msra.mxu0 %v808
        %1230 = vmatprep.subr.bf16.mxu0 %v825
        %1231 = vmatpush1.bf16.msra.mxu0 %v824
        %1232 = vmatprep.subr.bf16.mxu0 %v841
        %1233 = vmatpush1.bf16.msra.mxu0 %v840
        %1234 = vmatprep.subr.bf16.mxu0 0
        %1235 = vmatpush1.bf16.msra.mxu0 0
        %1236 = vmatprep.subr.bf16.mxu0 0
        %1237 = vmatpush1.bf16.msra.mxu0 0
        %1238 = vmatprep.subr.bf16.mxu0 0
        %1239 = vmatpush1.bf16.msra.mxu0 0
        %1240 = vmatprep.subr.bf16.mxu0 0
        %1241 = vmatpush1.bf16.msra.mxu0 0
        %1242 = vmatprep.subr.bf16.mxu0 0
        %1243 = vmatpush1.bf16.msra.mxu0 0
        %1244 = vmatprep.subr.bf16.mxu0 0
        %1245 = vmatpush1.bf16.msra.mxu0 0
        %1246 = vmatprep.subr.bf16.mxu0 0
        %1247 = vmatpush1.bf16.msra.mxu0 0
        %1248 = vmatprep.subr.bf16.mxu0 0
        %1249 = vmatpush1.bf16.msra.mxu0 0
        %1250 = vmatprep.mubr.bf16.mxu0 0
        %1251 = vmatmul.mubr.bf16.gmra.mrb[0].mxu0 %v203
        %v1252 = vpop.f32.mrb[0].mxu0
        %v1253 = vadd.f32 0.0, %v1252
        %v1254 = vpop.f32.mrb[0].mxu0
        %v1255 = vadd.f32 0.0, %v1254
        %v1256 = vpop.f32.mrb[0].mxu0
        %v1257 = vpop.f32.mrb[0].mxu0
        %1258 = vdwg.mxu0
        %1259 = vmatprep.subr.bf16.mxu0 %v731
        %1260 = vmatpush1.bf16.msra.mxu0 %v730
        %1261 = vmatprep.subr.bf16.mxu0 %v747
        %1262 = vmatpush1.bf16.msra.mxu0 %v746
        %1263 = vmatprep.subr.bf16.mxu0 %v763
        %1264 = vmatpush1.bf16.msra.mxu0 %v762
        %1265 = vmatprep.subr.bf16.mxu0 %v779
        %1266 = vmatpush1.bf16.msra.mxu0 %v778
        %1267 = vmatprep.subr.bf16.mxu0 %v795
        %1268 = vmatpush1.bf16.msra.mxu0 %v794
        %1269 = vmatprep.subr.bf16.mxu0 %v811
        %1270 = vmatpush1.bf16.msra.mxu0 %v810
        %1271 = vmatprep.subr.bf16.mxu0 %v827
        %1272 = vmatpush1.bf16.msra.mxu0 %v826
        %1273 = vmatprep.subr.bf16.mxu0 %v843
        %1274 = vmatpush1.bf16.msra.mxu0 %v842
        %1275 = vmatprep.subr.bf16.mxu0 0
        %1276 = vmatpush1.bf16.msra.mxu0 0
        %1277 = vmatprep.subr.bf16.mxu0 0
        %1278 = vmatpush1.bf16.msra.mxu0 0
        %1279 = vmatprep.subr.bf16.mxu0 0
        %1280 = vmatpush1.bf16.msra.mxu0 0
        %1281 = vmatprep.subr.bf16.mxu0 0
        %1282 = vmatpush1.bf16.msra.mxu0 0
        %1283 = vmatprep.subr.bf16.mxu0 0
        %1284 = vmatpush1.bf16.msra.mxu0 0
        %1285 = vmatprep.subr.bf16.mxu0 0
        %1286 = vmatpush1.bf16.msra.mxu0 0
        %1287 = vmatprep.subr.bf16.mxu0 0
        %1288 = vmatpush1.bf16.msra.mxu0 0
        %1289 = vmatprep.subr.bf16.mxu0 0
        %1290 = vmatpush1.bf16.msra.mxu0 0
        %1291 = vmatprep.mubr.bf16.mxu0 0
        %1292 = vmatmul.mubr.bf16.gmra.mrb[0].mxu0 %v203
        %v1293 = vpop.f32.mrb[0].mxu0
        %v1294 = vadd.f32 0.0, %v1293
        %v1295 = vpop.f32.mrb[0].mxu0
        %v1296 = vadd.f32 0.0, %v1295
        %v1297 = vpop.f32.mrb[0].mxu0
        %v1298 = vpop.f32.mrb[0].mxu0
        %1299 = vdwg.mxu0
        %v1316 = vcombine.low %v1007, %v1009
        %v1317 = vcombine.low %v1048, %v1050
        %v1319 = vunpack.c.l.s4 1983009808
        %v1320 = vunpack.c.0.s8 %v1319
        %v1321 = vlaneseq
        %v1322 = vshrl.u32 %v1321, 7
        %v1323 = vsub.s32 %v1320, %v1322
        %v1324 = vrot.slane %v1316, %v1323
        %v1326 = vunpack.c.l.s4 1983009808
        %v1327 = vunpack.c.0.s8 %v1326
        %v1328 = vlaneseq
        %v1329 = vshrl.u32 %v1328, 7
        %v1330 = vsub.s32 %v1327, %v1329
        %v1331 = vrot.slane %v1317, %v1330
        %v1332 = vcombine.low %v1324, %v1331
        %v1333 = vcombine.low %v1089, %v1091
        %v1334 = vcombine.low %v1130, %v1132
        %v1336 = vunpack.c.l.s4 1983009808
        %v1337 = vunpack.c.0.s8 %v1336
        %v1338 = vlaneseq
        %v1339 = vshrl.u32 %v1338, 7
        %v1340 = vsub.s32 %v1337, %v1339
        %v1341 = vrot.slane %v1333, %v1340
        %v1343 = vunpack.c.l.s4 1983009808
        %v1344 = vunpack.c.0.s8 %v1343
        %v1345 = vlaneseq
        %v1346 = vshrl.u32 %v1345, 7
        %v1347 = vsub.s32 %v1344, %v1346
        %v1348 = vrot.slane %v1334, %v1347
        %v1349 = vcombine.low %v1341, %v1348
        %v1350 = vcombine.low %v1171, %v1173
        %v1351 = vcombine.low %v1212, %v1214
        %v1353 = vunpack.c.l.s4 1983009808
        %v1354 = vunpack.c.0.s8 %v1353
        %v1355 = vlaneseq
        %v1356 = vshrl.u32 %v1355, 7
        %v1357 = vsub.s32 %v1354, %v1356
        %v1358 = vrot.slane %v1350, %v1357
        %v1360 = vunpack.c.l.s4 1983009808
        %v1361 = vunpack.c.0.s8 %v1360
        %v1362 = vlaneseq
        %v1363 = vshrl.u32 %v1362, 7
        %v1364 = vsub.s32 %v1361, %v1363
        %v1365 = vrot.slane %v1351, %v1364
        %v1366 = vcombine.low %v1358, %v1365
        %v1367 = vcombine.low %v1253, %v1255
        %v1368 = vcombine.low %v1294, %v1296
        %v1370 = vunpack.c.l.s4 1983009808
        %v1371 = vunpack.c.0.s8 %v1370
        %v1372 = vlaneseq
        %v1373 = vshrl.u32 %v1372, 7
        %v1374 = vsub.s32 %v1371, %v1373
        %v1375 = vrot.slane %v1367, %v1374
        %v1377 = vunpack.c.l.s4 1983009808
        %v1378 = vunpack.c.0.s8 %v1377
        %v1379 = vlaneseq
        %v1380 = vshrl.u32 %v1379, 7
        %v1381 = vsub.s32 %v1378, %v1380
        %v1382 = vrot.slane %v1368, %v1381
        %v1383 = vcombine.low %v1375, %v1382
        %1388 = vst [vmem:[%s200] sm:$0xff] %v1332
        %1389 = vst [vmem:[%s200 + $0x8] sm:$0xff] %v1349
        %1390 = vst [vmem:[%s200 + $0x10] sm:$0xff] %v1366
        %1391 = vst [vmem:[%s200 + $0x18] sm:$0xff] %v1383
        %s1392 = smul.u32 16, %s21
        %p1393 = scmp.lt.s32.totalorder %s20, 0
        %s1394 = scalar_select %p1393, %s20, 0
        %p1395 = scmp.lt.s32.totalorder %s1392, 63
        %s1396 = scalar_select %p1395, %s1392, 63
        %s1397 = smul.addr %s1394, 64
        %s1398 = sadd.s32 %s1396, %s1397
        %s1399 = smul.addr %s1398, 2
        %s1400 = scalar_lea.vmem %s2, %s1399
        // Predicated region
        $region33: #{netg_forward.10} parent=27 // pred_check
          %p1401 = pneg %p100
        $region34: #{netg_forward.10} parent=27 // pred_check_branch
          %1403 = sbr.rel (%p1401) target = $region36
        $region35: #{netg_forward.10} parent=27 // pred_region
          %s1404 = smul.u32 16, %s21
        $region36: #{netg_forward.10} parent=27 // pred_fallthru
          _
      $region28: #{netg_forward.10} parent=5 // pred_fallthru
        _
      %p1405 = scmp.le.s32.totalorder 2, %s11
      // Predicated region
      $region37: #{netg_forward.10} parent=5 // pred_check
        %p1406 = pneg %p1405
      $region38: #{netg_forward.10} parent=5 // pred_check_branch
        %1408 = sbr.rel (%p1406) target = $region40
      $region39: #{netg_forward.10} parent=5 // pred_region
        %s1409 = ssub.s32 %s11, 2
        // Predicated region
        $region41: #{netg_forward.10} parent=39 // pred_check
          %p1410 = pneg %p106
        $region42: #{netg_forward.10} parent=39 // pred_check_branch
          %1412 = sbr.rel (%p1410) target = $region44
        $region43: #{netg_forward.10} parent=39 // pred_region
          %s1413 = smul.u32 16, %s23
          %p1414 = scmp.lt.s32.totalorder %s22, 0
          %s1415 = scalar_select %p1414, %s22, 0
          %p1416 = scmp.lt.s32.totalorder %s1413, 63
          %s1417 = scalar_select %p1416, %s1413, 63
          %s1418 = smul.addr %s1415, 64
          %s1419 = sadd.s32 %s1417, %s1418
          %s1420 = smul.addr %s1419, 2
          %s1421 = scalar_lea.vmem %s2, %s1420
        $region44: #{netg_forward.10} parent=39 // pred_fallthru
          _
      $region40: #{netg_forward.10} parent=5 // pred_fallthru
        _
    $region6: #{netg_forward.10} parent=1 // loop_footer
      %s15 = sadd.s32 1, %s11
    $region7: #{netg_forward.10} parent=1 // loop_footer_branch
      %10 = sbr.rel target = $region3
    $region8: #{netg_forward.10} parent=1 // loop_exit
      _
    %1422 = vsyncpa [#allocation3], 1
    %s1423 = scalar_lea.sflag [#allocation3], 1
    %1424 = vsyncpa %s1423, 1

// kernel: netg_forward.12
$region0: #{netg_forward.12}
  #allocation0 [shape = 'u32[]', space=smem, size = 0x4, offset = 0x4, fixed_abs, tag = 'smem constant byte address 0x4 - core index']
  #allocation1 [shape = 'u32[144,128]{1,0:T(1,128)}', space=vmem, size = 0x12000, scoped, tag = 'internal scratch']
  %s0 = inlined_call_operand.vmem [shape: bf16[32,512], index: 0, kind: input, shape index: {}]
  %s1 = inlined_call_operand.hbm [shape: bf16[512,4096], index: 1, kind: input, shape index: {}]
  %s2 = inlined_call_operand.vmem [shape: f32[32,4096], index: 2, kind: output, shape index: {}]
  %s3 = sld [smem:[#allocation0]]
  $region64: #{netg_forward.12} parent=0
    _
  %s5 = ssub.s32 1, %s3
  %s6 = scalar_select 0, %s5, %s3
  $region1: #{netg_forward.12} parent=0
    #allocation2 [shape = 'u8[4194304]{0}', space=vmem, size = 0x400000, scoped, tag = 'input window, operand 1']
    #allocation3 [shape = 's32[2]{0}', space=sflag, size = 0x8, scoped, tag = 'scoped memory for netg_forward.12']
    #allocation4 [shape = 'u8[524288]{0}', space=vmem, size = 0x80000, scoped, tag = 'output window, operand 0']
    %7 = vsyncpa [#allocation3], 0
    %s8 = scalar_lea.sflag [#allocation3], 1
    %9 = vsyncpa %s8, 0
    loop: start=0, step=1, limit=4
    $region2: #{netg_forward.12} parent=1 // loop_pre_header
      _
    $region3: #{netg_forward.12} parent=1 // loop_header
      %s11 = sphi 0, %s15
      %p12 = scmp.ge.s32.totalorder %s11, 4
      %s18 = sphi 0, %s30
      %s19 = sphi 0, %s26
      %s20 = sphi 0, %s18
      %s21 = sphi 0, %s19
      %s22 = sphi 0, %s20
      %s23 = sphi 0, %s21
      %s33 = sphi 0, %s35
      %s36 = sphi 0, %s33
      %s37 = sphi 0, %s36
      %s53 = sphi 0, %s37
      %s59 = sphi 0, %s61
      %s62 = sphi 0, %s59
      %s63 = sphi 0, %s62
      %s79 = sphi 0, %s63
      %s87 = sphi 0, %s89
      %s90 = sphi 0, %s87
      %s91 = sphi 0, %s90
      %s107 = sphi 0, %s91
    $region4: #{netg_forward.12} parent=1 // loop_header_branch
      %14 = sbr.rel (%p12) target = $region8
    $region5: #{netg_forward.12} parent=1 // loop_body
      %s16 = ssub.s32 %s11, 1
      %s17 = ssub.s32 %s11, 2
      %s24 = sadd.s32 1, %s19
      %p25 = scmp.ge.s32.totalorder %s24, 2
      %s26 = scalar_select %p25, 0, %s24
      %s27 = sadd.s32 1, %s18
      %s28 = scalar_select %p25, %s27, %s18
      %p29 = scmp.ge.s32.totalorder %s28, 1
      %s30 = scalar_select %p29, 0, %s28
      %s31 = ssub.s32 %s18, %s30
      %p32 = scmp.eq.s32.totalorder %s31, 0
      %s34 = sadd.s32 %s33, 1
      %s35 = scalar_select %p32, %s33, %s34
      %p38 = pneg %p32
      %p39 = scmp.eq.s32.totalorder %s11, 1
      %p40 = por %p38, %p39
      %p41 = scmp.ne.s32.totalorder %s33, %s36
      %p42 = scmp.eq.s32.totalorder %s11, 0
      %p43 = por %p41, %p42
      %p44 = scmp.ne.s32.totalorder %s33, %s36
      %p45 = scmp.eq.s32.totalorder %s16, 1
      %p46 = por %p44, %p45
      %p47 = scmp.ne.s32.totalorder %s36, %s37
      %p48 = scmp.eq.s32.totalorder %s16, 0
      %p49 = por %p47, %p48
      %p50 = scmp.ne.s32.totalorder %s36, %s37
      %p51 = scmp.eq.s32.totalorder %s17, 1
      %p52 = por %p50, %p51
      %p54 = scmp.ne.s32.totalorder %s37, %s53
      %p55 = scmp.eq.s32.totalorder %s17, 0
      %p56 = por %p54, %p55
      %s57 = ssub.s32 %s19, %s26
      %p58 = scmp.eq.s32.totalorder %s57, 0
      %s60 = sadd.s32 %s59, 1
      %s61 = scalar_select %p58, %s59, %s60
      %p64 = pneg %p58
      %p65 = scmp.eq.s32.totalorder %s11, 1
      %p66 = por %p64, %p65
      %p67 = scmp.ne.s32.totalorder %s59, %s62
      %p68 = scmp.eq.s32.totalorder %s11, 0
      %p69 = por %p67, %p68
      %p70 = scmp.ne.s32.totalorder %s59, %s62
      %p71 = scmp.eq.s32.totalorder %s16, 1
      %p72 = por %p70, %p71
      %p73 = scmp.ne.s32.totalorder %s62, %s63
      %p74 = scmp.eq.s32.totalorder %s16, 0
      %p75 = por %p73, %p74
      %p76 = scmp.ne.s32.totalorder %s62, %s63
      %p77 = scmp.eq.s32.totalorder %s17, 1
      %p78 = por %p76, %p77
      %p80 = scmp.ne.s32.totalorder %s63, %s79
      %p81 = scmp.eq.s32.totalorder %s17, 0
      %p82 = por %p80, %p81
      %s83 = ssub.s32 %s18, %s30
      %s84 = ssub.s32 %s19, %s26
      %s85 = sor.u32 %s83, %s84
      %p86 = scmp.eq.s32.totalorder %s85, 0
      %s88 = sadd.s32 %s87, 1
      %s89 = scalar_select %p86, %s87, %s88
      %p92 = pneg %p86
      %p93 = scmp.eq.s32.totalorder %s11, 1
      %p94 = por %p92, %p93
      %p95 = scmp.ne.s32.totalorder %s87, %s90
      %p96 = scmp.eq.s32.totalorder %s11, 0
      %p97 = por %p95, %p96
      %p98 = scmp.ne.s32.totalorder %s87, %s90
      %p99 = scmp.eq.s32.totalorder %s16, 1
      %p100 = por %p98, %p99
      %p101 = scmp.ne.s32.totalorder %s90, %s91
      %p102 = scmp.eq.s32.totalorder %s16, 0
      %p103 = por %p101, %p102
      %p104 = scmp.ne.s32.totalorder %s90, %s91
      %p105 = scmp.eq.s32.totalorder %s17, 1
      %p106 = por %p104, %p105
      %p108 = scmp.ne.s32.totalorder %s91, %s107
      %p109 = scmp.eq.s32.totalorder %s17, 0
      %p110 = por %p108, %p109
      %p111 = scmp.le.s32.totalorder 1, %s11
      %p112 = scmp.lt.s32.totalorder %s11, 3
      %p113 = pnand %p111, %p112
      %p114 = pneg %p113
      // Predicated region
      $region9: #{netg_forward.12} parent=5 // pred_check
        _
      $region10: #{netg_forward.12} parent=5 // pred_check_branch
        %116 = sbr.rel (%p113) target = $region12
      $region11: #{netg_forward.12} parent=5 // pred_region
        %s117 = ssub.s32 %s11, 1
        // Predicated region
        $region13: #{netg_forward.12} parent=11 // pred_check
          %p118 = pneg %p49
        $region14: #{netg_forward.12} parent=11 // pred_check_branch
          %120 = sbr.rel (%p118) target = $region16
        $region15: #{netg_forward.12} parent=11 // pred_region
          %s121 = smul.u32 4, %s20
          %p122 = scmp.lt.s32.totalorder %s121, 3
          %s123 = scalar_select %p122, %s121, 3
          %s124 = smul.addr %s123, 4
          %s125 = smul.addr %s124, 4
          %s126 = scalar_lea.vmem %s0, %s125
          %s127 = smul.u32 4, %s20
        $region16: #{netg_forward.12} parent=11 // pred_fallthru
          _
      $region12: #{netg_forward.12} parent=5 // pred_fallthru
        _
      %p128 = scmp.lt.s32.totalorder %s11, 2
      // Predicated region
      $region17: #{netg_forward.12} parent=5 // pred_check
        %p129 = pneg %p128
      $region18: #{netg_forward.12} parent=5 // pred_check_branch
        %131 = sbr.rel (%p129) target = $region20
      $region19: #{netg_forward.12} parent=5 // pred_region
        // Predicated region
        $region21: #{netg_forward.12} parent=19 // pred_check
          %p132 = pneg %p69
        $region22: #{netg_forward.12} parent=19 // pred_check_branch
          %134 = sbr.rel (%p132) target = $region24
        $region23: #{netg_forward.12} parent=19 // pred_region
          %s135 = sand.u32 %s59, 1
          %s136 = scalar_lea.sflag [#allocation3], %s135
          %s137 = sand.u32 %s59, 1
          %s138 = smul.addr %s137, 4096
          %s139 = scalar_lea.vmem [#allocation2], %s138
          %s140 = smul.u32 16, %s19
          %s142 = ssub.s32 65536, 65536
          %143 = vsyncadd %s136, %s142
          %s144 = smul.addr %s140, 64
          %s145 = scalar_lea.hbm %s1, %s144
          %s146 = sshll.u32 %s139, 4
          %s147 = int_to_ptr.vmem [resolvable:$true] %s146
          %152 = dma.hbm_to_vmem [thread:$0]  %s145, 65536, %s147, %s136, 2048, 1024, 64
        $region24: #{netg_forward.12} parent=19 // pred_fallthru
          _
      $region20: #{netg_forward.12} parent=5 // pred_fallthru
        _
      %p153 = scmp.le.s32.totalorder 1, %s11
      %p154 = scmp.lt.s32.totalorder %s11, 3
      %p155 = pnand %p153, %p154
      %p156 = pneg %p155
      // Predicated region
      $region25: #{netg_forward.12} parent=5 // pred_check
        _
      $region26: #{netg_forward.12} parent=5 // pred_check_branch
        %158 = sbr.rel (%p155) target = $region28
      $region27: #{netg_forward.12} parent=5 // pred_region
        %s159 = ssub.s32 %s11, 1
        %s160 = sand.u32 %s62, 1
        %s161 = scalar_lea.sflag [#allocation3], %s160
        %s162 = sand.u32 %s62, 1
        %s163 = smul.addr %s162, 4096
        %s164 = scalar_lea.vmem [#allocation2], %s163
        // Predicated region
        $region29: #{netg_forward.12} parent=27 // pred_check
          %p165 = pneg %p75
        $region30: #{netg_forward.12} parent=27 // pred_check_branch
          %167 = sbr.rel (%p165) target = $region32
        $region31: #{netg_forward.12} parent=27 // pred_region
          %168 = dma.done %s161, 65536
        $region32: #{netg_forward.12} parent=27 // pred_fallthru
          _
        %s169 = smul.u32 4, %s20
        %p170 = scmp.lt.s32.totalorder %s169, 3
        %s171 = scalar_select %p170, %s169, 3
        %s172 = smul.addr %s171, 4
        %s173 = smul.addr %s172, 4
        %s174 = scalar_lea.vmem %s0, %s173
        %p175 = pneg %p49
        %p176 = pneg %p46
        %s177 = sand.u32 %s62, 1
        %s178 = scalar_lea.sflag [#allocation3], %s177
        %s179 = sand.u32 %s62, 1
        %s180 = smul.addr %s179, 4096
        %s181 = scalar_lea.vmem [#allocation2], %s180
        %p182 = pneg %p75
        %p183 = pneg %p72
        %p184 = pneg %p103
        %p185 = pneg %p100
        %s186 = sand.u32 %s90, 1
        %s187 = sand.u32 %s90, 1
        %s188 = smul.addr %s187, 512
        %s189 = scalar_lea.vmem [#allocation4], %s188
        %s190 = smul.u32 4, %s20
        %p191 = scmp.lt.s32.totalorder %s190, 3
        %s192 = scalar_select %p191, %s190, 3
        %s193 = smul.addr %s192, 4
        %s194 = smul.addr %s193, 4
        %s195 = scalar_lea.vmem %s0, %s194
        %s196 = smul.u32 4, %s20
        %s197 = smul.u32 16, %s21
        %s198 = smul.u32 4, %s20
        %s199 = smul.u32 16, %s21
        %v200 = vld [vmem:[%s195] sm:$0xff]
        %v201 = vld [vmem:[%s195 + $0x8] sm:$0xff]
        %v202 = vld [vmem:[%s195 + $0x10] sm:$0xff]
        %v203 = vld [vmem:[%s195 + $0x18] sm:$0xff]
        %v204 = vld [vmem:[%s195 + $0x20] sm:$0xff]
        %v205 = vld [vmem:[%s195 + $0x28] sm:$0xff]
        %v206 = vld [vmem:[%s195 + $0x30] sm:$0xff]
        %v207 = vld [vmem:[%s195 + $0x38] sm:$0xff]
        %v208 = vld [vmem:[%s164] sm:$0xff]
        %v209 = vld [vmem:[%s164 + $0x8] sm:$0xff]
        %v210 = vld [vmem:[%s164 + $0x10] sm:$0xff]
        %v211 = vld [vmem:[%s164 + $0x18] sm:$0xff]
        %v212 = vld [vmem:[%s164 + $0x20] sm:$0xff]
        %v213 = vld [vmem:[%s164 + $0x28] sm:$0xff]
        %v214 = vld [vmem:[%s164 + $0x30] sm:$0xff]
        %v215 = vld [vmem:[%s164 + $0x38] sm:$0xff]
        %v216 = vld [vmem:[%s164 + $0x40] sm:$0xff]
        %v217 = vld [vmem:[%s164 + $0x48] sm:$0xff]
        %v218 = vld [vmem:[%s164 + $0x50] sm:$0xff]
        %v219 = vld [vmem:[%s164 + $0x58] sm:$0xff]
        %v220 = vld [vmem:[%s164 + $0x60] sm:$0xff]
        %v221 = vld [vmem:[%s164 + $0x68] sm:$0xff]
        %v222 = vld [vmem:[%s164 + $0x70] sm:$0xff]
        %v223 = vld [vmem:[%s164 + $0x78] sm:$0xff]
        %v224 = vld [vmem:[%s164 + $0x80] sm:$0xff]
        %v225 = vld [vmem:[%s164 + $0x88] sm:$0xff]
        %v226 = vld [vmem:[%s164 + $0x90] sm:$0xff]
        %v227 = vld [vmem:[%s164 + $0x98] sm:$0xff]
        %v228 = vld [vmem:[%s164 + $0xa0] sm:$0xff]
        %v229 = vld [vmem:[%s164 + $0xa8] sm:$0xff]
        %v230 = vld [vmem:[%s164 + $0xb0] sm:$0xff]
        %v231 = vld [vmem:[%s164 + $0xb8] sm:$0xff]
        %v232 = vld [vmem:[%s164 + $0xc0] sm:$0xff]
        %v233 = vld [vmem:[%s164 + $0xc8] sm:$0xff]
        %v234 = vld [vmem:[%s164 + $0xd0] sm:$0xff]
        %v235 = vld [vmem:[%s164 + $0xd8] sm:$0xff]
        %v236 = vld [vmem:[%s164 + $0xe0] sm:$0xff]
        %v237 = vld [vmem:[%s164 + $0xe8] sm:$0xff]
        %v238 = vld [vmem:[%s164 + $0xf0] sm:$0xff]
        %v239 = vld [vmem:[%s164 + $0xf8] sm:$0xff]
        %v240 = vld [vmem:[%s164 + $0x100] sm:$0xff]
        %v241 = vld [vmem:[%s164 + $0x108] sm:$0xff]
        %v242 = vld [vmem:[%s164 + $0x110] sm:$0xff]
        %v243 = vld [vmem:[%s164 + $0x118] sm:$0xff]
        %v244 = vld [vmem:[%s164 + $0x120] sm:$0xff]
        %v245 = vld [vmem:[%s164 + $0x128] sm:$0xff]
        %v246 = vld [vmem:[%s164 + $0x130] sm:$0xff]
        %v247 = vld [vmem:[%s164 + $0x138] sm:$0xff]
        %v248 = vld [vmem:[%s164 + $0x140] sm:$0xff]
        %v249 = vld [vmem:[%s164 + $0x148] sm:$0xff]
        %v250 = vld [vmem:[%s164 + $0x150] sm:$0xff]
        %v251 = vld [vmem:[%s164 + $0x158] sm:$0xff]
        %v252 = vld [vmem:[%s164 + $0x160] sm:$0xff]
        %v253 = vld [vmem:[%s164 + $0x168] sm:$0xff]
        %v254 = vld [vmem:[%s164 + $0x170] sm:$0xff]
        %v255 = vld [vmem:[%s164 + $0x178] sm:$0xff]
        %v256 = vld [vmem:[%s164 + $0x180] sm:$0xff]
        %v257 = vld [vmem:[%s164 + $0x188] sm:$0xff]
        %v258 = vld [vmem:[%s164 + $0x190] sm:$0xff]
        %v259 = vld [vmem:[%s164 + $0x198] sm:$0xff]
        %v260 = vld [vmem:[%s164 + $0x1a0] sm:$0xff]
        %v261 = vld [vmem:[%s164 + $0x1a8] sm:$0xff]
        %v262 = vld [vmem:[%s164 + $0x1b0] sm:$0xff]
        %v263 = vld [vmem:[%s164 + $0x1b8] sm:$0xff]
        %v264 = vld [vmem:[%s164 + $0x1c0] sm:$0xff]
        %v265 = vld [vmem:[%s164 + $0x1c8] sm:$0xff]
        %v266 = vld [vmem:[%s164 + $0x1d0] sm:$0xff]
        %v267 = vld [vmem:[%s164 + $0x1d8] sm:$0xff]
        %v268 = vld [vmem:[%s164 + $0x1e0] sm:$0xff]
        %v269 = vld [vmem:[%s164 + $0x1e8] sm:$0xff]
        %v270 = vld [vmem:[%s164 + $0x1f0] sm:$0xff]
        %v271 = vld [vmem:[%s164 + $0x1f8] sm:$0xff]
        %v272 = vld [vmem:[%s164 + $0x200] sm:$0xff]
        %v273 = vld [vmem:[%s164 + $0x208] sm:$0xff]
        %v274 = vld [vmem:[%s164 + $0x210] sm:$0xff]
        %v275 = vld [vmem:[%s164 + $0x218] sm:$0xff]
        %v276 = vld [vmem:[%s164 + $0x220] sm:$0xff]
        %v277 = vld [vmem:[%s164 + $0x228] sm:$0xff]
        %v278 = vld [vmem:[%s164 + $0x230] sm:$0xff]
        %v279 = vld [vmem:[%s164 + $0x238] sm:$0xff]
        %v280 = vld [vmem:[%s164 + $0x240] sm:$0xff]
        %v281 = vld [vmem:[%s164 + $0x248] sm:$0xff]
        %v282 = vld [vmem:[%s164 + $0x250] sm:$0xff]
        %v283 = vld [vmem:[%s164 + $0x258] sm:$0xff]
        %v284 = vld [vmem:[%s164 + $0x260] sm:$0xff]
        %v285 = vld [vmem:[%s164 + $0x268] sm:$0xff]
        %v286 = vld [vmem:[%s164 + $0x270] sm:$0xff]
        %v287 = vld [vmem:[%s164 + $0x278] sm:$0xff]
        %v288 = vld [vmem:[%s164 + $0x280] sm:$0xff]
        %v289 = vld [vmem:[%s164 + $0x288] sm:$0xff]
        %v290 = vld [vmem:[%s164 + $0x290] sm:$0xff]
        %v291 = vld [vmem:[%s164 + $0x298] sm:$0xff]
        %v292 = vld [vmem:[%s164 + $0x2a0] sm:$0xff]
        %v293 = vld [vmem:[%s164 + $0x2a8] sm:$0xff]
        %v294 = vld [vmem:[%s164 + $0x2b0] sm:$0xff]
        %v295 = vld [vmem:[%s164 + $0x2b8] sm:$0xff]
        %v296 = vld [vmem:[%s164 + $0x2c0] sm:$0xff]
        %v297 = vld [vmem:[%s164 + $0x2c8] sm:$0xff]
        %v298 = vld [vmem:[%s164 + $0x2d0] sm:$0xff]
        %v299 = vld [vmem:[%s164 + $0x2d8] sm:$0xff]
        %v300 = vld [vmem:[%s164 + $0x2e0] sm:$0xff]
        %v301 = vld [vmem:[%s164 + $0x2e8] sm:$0xff]
        %v302 = vld [vmem:[%s164 + $0x2f0] sm:$0xff]
        %v303 = vld [vmem:[%s164 + $0x2f8] sm:$0xff]
        %v304 = vld [vmem:[%s164 + $0x300] sm:$0xff]
        %v305 = vld [vmem:[%s164 + $0x308] sm:$0xff]
        %v306 = vld [vmem:[%s164 + $0x310] sm:$0xff]
        %v307 = vld [vmem:[%s164 + $0x318] sm:$0xff]
        %v308 = vld [vmem:[%s164 + $0x320] sm:$0xff]
        %v309 = vld [vmem:[%s164 + $0x328] sm:$0xff]
        %v310 = vld [vmem:[%s164 + $0x330] sm:$0xff]
        %v311 = vld [vmem:[%s164 + $0x338] sm:$0xff]
        %v312 = vld [vmem:[%s164 + $0x340] sm:$0xff]
        %v313 = vld [vmem:[%s164 + $0x348] sm:$0xff]
        %v314 = vld [vmem:[%s164 + $0x350] sm:$0xff]
        %v315 = vld [vmem:[%s164 + $0x358] sm:$0xff]
        %v316 = vld [vmem:[%s164 + $0x360] sm:$0xff]
        %v317 = vld [vmem:[%s164 + $0x368] sm:$0xff]
        %v318 = vld [vmem:[%s164 + $0x370] sm:$0xff]
        %v319 = vld [vmem:[%s164 + $0x378] sm:$0xff]
        %v320 = vld [vmem:[%s164 + $0x380] sm:$0xff]
        %v321 = vld [vmem:[%s164 + $0x388] sm:$0xff]
        %v322 = vld [vmem:[%s164 + $0x390] sm:$0xff]
        %v323 = vld [vmem:[%s164 + $0x398] sm:$0xff]
        %v324 = vld [vmem:[%s164 + $0x3a0] sm:$0xff]
        %v325 = vld [vmem:[%s164 + $0x3a8] sm:$0xff]
        %v326 = vld [vmem:[%s164 + $0x3b0] sm:$0xff]
        %v327 = vld [vmem:[%s164 + $0x3b8] sm:$0xff]
        %v328 = vld [vmem:[%s164 + $0x3c0] sm:$0xff]
        %v329 = vld [vmem:[%s164 + $0x3c8] sm:$0xff]
        %v330 = vld [vmem:[%s164 + $0x3d0] sm:$0xff]
        %v331 = vld [vmem:[%s164 + $0x3d8] sm:$0xff]
        %v332 = vld [vmem:[%s164 + $0x3e0] sm:$0xff]
        %v333 = vld [vmem:[%s164 + $0x3e8] sm:$0xff]
        %v334 = vld [vmem:[%s164 + $0x3f0] sm:$0xff]
        %v335 = vld [vmem:[%s164 + $0x3f8] sm:$0xff]
        %v336 = vld [vmem:[%s164 + $0x400] sm:$0xff]
        %v337 = vld [vmem:[%s164 + $0x408] sm:$0xff]
        %v338 = vld [vmem:[%s164 + $0x410] sm:$0xff]
        %v339 = vld [vmem:[%s164 + $0x418] sm:$0xff]
        %v340 = vld [vmem:[%s164 + $0x420] sm:$0xff]
        %v341 = vld [vmem:[%s164 + $0x428] sm:$0xff]
        %v342 = vld [vmem:[%s164 + $0x430] sm:$0xff]
        %v343 = vld [vmem:[%s164 + $0x438] sm:$0xff]
        %v344 = vld [vmem:[%s164 + $0x440] sm:$0xff]
        %v345 = vld [vmem:[%s164 + $0x448] sm:$0xff]
        %v346 = vld [vmem:[%s164 + $0x450] sm:$0xff]
        %v347 = vld [vmem:[%s164 + $0x458] sm:$0xff]
        %v348 = vld [vmem:[%s164 + $0x460] sm:$0xff]
        %v349 = vld [vmem:[%s164 + $0x468] sm:$0xff]
        %v350 = vld [vmem:[%s164 + $0x470] sm:$0xff]
        %v351 = vld [vmem:[%s164 + $0x478] sm:$0xff]
        %v352 = vld [vmem:[%s164 + $0x480] sm:$0xff]
        %v353 = vld [vmem:[%s164 + $0x488] sm:$0xff]
        %v354 = vld [vmem:[%s164 + $0x490] sm:$0xff]
        %v355 = vld [vmem:[%s164 + $0x498] sm:$0xff]
        %v356 = vld [vmem:[%s164 + $0x4a0] sm:$0xff]
        %v357 = vld [vmem:[%s164 + $0x4a8] sm:$0xff]
        %v358 = vld [vmem:[%s164 + $0x4b0] sm:$0xff]
        %v359 = vld [vmem:[%s164 + $0x4b8] sm:$0xff]
        %v360 = vld [vmem:[%s164 + $0x4c0] sm:$0xff]
        %v361 = vld [vmem:[%s164 + $0x4c8] sm:$0xff]
        %v362 = vld [vmem:[%s164 + $0x4d0] sm:$0xff]
        %v363 = vld [vmem:[%s164 + $0x4d8] sm:$0xff]
        %v364 = vld [vmem:[%s164 + $0x4e0] sm:$0xff]
        %v365 = vld [vmem:[%s164 + $0x4e8] sm:$0xff]
        %v366 = vld [vmem:[%s164 + $0x4f0] sm:$0xff]
        %v367 = vld [vmem:[%s164 + $0x4f8] sm:$0xff]
        %v368 = vld [vmem:[%s164 + $0x500] sm:$0xff]
        %v369 = vld [vmem:[%s164 + $0x508] sm:$0xff]
        %v370 = vld [vmem:[%s164 + $0x510] sm:$0xff]
        %v371 = vld [vmem:[%s164 + $0x518] sm:$0xff]
        %v372 = vld [vmem:[%s164 + $0x520] sm:$0xff]
        %v373 = vld [vmem:[%s164 + $0x528] sm:$0xff]
        %v374 = vld [vmem:[%s164 + $0x530] sm:$0xff]
        %v375 = vld [vmem:[%s164 + $0x538] sm:$0xff]
        %v376 = vld [vmem:[%s164 + $0x540] sm:$0xff]
        %v377 = vld [vmem:[%s164 + $0x548] sm:$0xff]
        %v378 = vld [vmem:[%s164 + $0x550] sm:$0xff]
        %v379 = vld [vmem:[%s164 + $0x558] sm:$0xff]
        %v380 = vld [vmem:[%s164 + $0x560] sm:$0xff]
        %v381 = vld [vmem:[%s164 + $0x568] sm:$0xff]
        %v382 = vld [vmem:[%s164 + $0x570] sm:$0xff]
        %v383 = vld [vmem:[%s164 + $0x578] sm:$0xff]
        %v384 = vld [vmem:[%s164 + $0x580] sm:$0xff]
        %v385 = vld [vmem:[%s164 + $0x588] sm:$0xff]
        %v386 = vld [vmem:[%s164 + $0x590] sm:$0xff]
        %v387 = vld [vmem:[%s164 + $0x598] sm:$0xff]
        %v388 = vld [vmem:[%s164 + $0x5a0] sm:$0xff]
        %v389 = vld [vmem:[%s164 + $0x5a8] sm:$0xff]
        %v390 = vld [vmem:[%s164 + $0x5b0] sm:$0xff]
        %v391 = vld [vmem:[%s164 + $0x5b8] sm:$0xff]
        %v392 = vld [vmem:[%s164 + $0x5c0] sm:$0xff]
        %v393 = vld [vmem:[%s164 + $0x5c8] sm:$0xff]
        %v394 = vld [vmem:[%s164 + $0x5d0] sm:$0xff]
        %v395 = vld [vmem:[%s164 + $0x5d8] sm:$0xff]
        %v396 = vld [vmem:[%s164 + $0x5e0] sm:$0xff]
        %v397 = vld [vmem:[%s164 + $0x5e8] sm:$0xff]
        %v398 = vld [vmem:[%s164 + $0x5f0] sm:$0xff]
        %v399 = vld [vmem:[%s164 + $0x5f8] sm:$0xff]
        %v400 = vld [vmem:[%s164 + $0x600] sm:$0xff]
        %v401 = vld [vmem:[%s164 + $0x608] sm:$0xff]
        %v402 = vld [vmem:[%s164 + $0x610] sm:$0xff]
        %v403 = vld [vmem:[%s164 + $0x618] sm:$0xff]
        %v404 = vld [vmem:[%s164 + $0x620] sm:$0xff]
        %v405 = vld [vmem:[%s164 + $0x628] sm:$0xff]
        %v406 = vld [vmem:[%s164 + $0x630] sm:$0xff]
        %v407 = vld [vmem:[%s164 + $0x638] sm:$0xff]
        %v408 = vld [vmem:[%s164 + $0x640] sm:$0xff]
        %v409 = vld [vmem:[%s164 + $0x648] sm:$0xff]
        %v410 = vld [vmem:[%s164 + $0x650] sm:$0xff]
        %v411 = vld [vmem:[%s164 + $0x658] sm:$0xff]
        %v412 = vld [vmem:[%s164 + $0x660] sm:$0xff]
        %v413 = vld [vmem:[%s164 + $0x668] sm:$0xff]
        %v414 = vld [vmem:[%s164 + $0x670] sm:$0xff]
        %v415 = vld [vmem:[%s164 + $0x678] sm:$0xff]
        %v416 = vld [vmem:[%s164 + $0x680] sm:$0xff]
        %v417 = vld [vmem:[%s164 + $0x688] sm:$0xff]
        %v418 = vld [vmem:[%s164 + $0x690] sm:$0xff]
        %v419 = vld [vmem:[%s164 + $0x698] sm:$0xff]
        %v420 = vld [vmem:[%s164 + $0x6a0] sm:$0xff]
        %v421 = vld [vmem:[%s164 + $0x6a8] sm:$0xff]
        %v422 = vld [vmem:[%s164 + $0x6b0] sm:$0xff]
        %v423 = vld [vmem:[%s164 + $0x6b8] sm:$0xff]
        %v424 = vld [vmem:[%s164 + $0x6c0] sm:$0xff]
        %v425 = vld [vmem:[%s164 + $0x6c8] sm:$0xff]
        %v426 = vld [vmem:[%s164 + $0x6d0] sm:$0xff]
        %v427 = vld [vmem:[%s164 + $0x6d8] sm:$0xff]
        %v428 = vld [vmem:[%s164 + $0x6e0] sm:$0xff]
        %v429 = vld [vmem:[%s164 + $0x6e8] sm:$0xff]
        %v430 = vld [vmem:[%s164 + $0x6f0] sm:$0xff]
        %v431 = vld [vmem:[%s164 + $0x6f8] sm:$0xff]
        %v432 = vld [vmem:[%s164 + $0x700] sm:$0xff]
        %v433 = vld [vmem:[%s164 + $0x708] sm:$0xff]
        %v434 = vld [vmem:[%s164 + $0x710] sm:$0xff]
        %v435 = vld [vmem:[%s164 + $0x718] sm:$0xff]
        %v436 = vld [vmem:[%s164 + $0x720] sm:$0xff]
        %v437 = vld [vmem:[%s164 + $0x728] sm:$0xff]
        %v438 = vld [vmem:[%s164 + $0x730] sm:$0xff]
        %v439 = vld [vmem:[%s164 + $0x738] sm:$0xff]
        %v440 = vld [vmem:[%s164 + $0x740] sm:$0xff]
        %v441 = vld [vmem:[%s164 + $0x748] sm:$0xff]
        %v442 = vld [vmem:[%s164 + $0x750] sm:$0xff]
        %v443 = vld [vmem:[%s164 + $0x758] sm:$0xff]
        %v444 = vld [vmem:[%s164 + $0x760] sm:$0xff]
        %v445 = vld [vmem:[%s164 + $0x768] sm:$0xff]
        %v446 = vld [vmem:[%s164 + $0x770] sm:$0xff]
        %v447 = vld [vmem:[%s164 + $0x778] sm:$0xff]
        %v448 = vld [vmem:[%s164 + $0x780] sm:$0xff]
        %v449 = vld [vmem:[%s164 + $0x788] sm:$0xff]
        %v450 = vld [vmem:[%s164 + $0x790] sm:$0xff]
        %v451 = vld [vmem:[%s164 + $0x798] sm:$0xff]
        %v452 = vld [vmem:[%s164 + $0x7a0] sm:$0xff]
        %v453 = vld [vmem:[%s164 + $0x7a8] sm:$0xff]
        %v454 = vld [vmem:[%s164 + $0x7b0] sm:$0xff]
        %v455 = vld [vmem:[%s164 + $0x7b8] sm:$0xff]
        %v456 = vld [vmem:[%s164 + $0x7c0] sm:$0xff]
        %v457 = vld [vmem:[%s164 + $0x7c8] sm:$0xff]
        %v458 = vld [vmem:[%s164 + $0x7d0] sm:$0xff]
        %v459 = vld [vmem:[%s164 + $0x7d8] sm:$0xff]
        %v460 = vld [vmem:[%s164 + $0x7e0] sm:$0xff]
        %v461 = vld [vmem:[%s164 + $0x7e8] sm:$0xff]
        %v462 = vld [vmem:[%s164 + $0x7f0] sm:$0xff]
        %v463 = vld [vmem:[%s164 + $0x7f8] sm:$0xff]
        %v464 = vld [vmem:[%s164 + $0x800] sm:$0xff]
        %v465 = vld [vmem:[%s164 + $0x808] sm:$0xff]
        %v466 = vld [vmem:[%s164 + $0x810] sm:$0xff]
        %v467 = vld [vmem:[%s164 + $0x818] sm:$0xff]
        %v468 = vld [vmem:[%s164 + $0x820] sm:$0xff]
        %v469 = vld [vmem:[%s164 + $0x828] sm:$0xff]
        %v470 = vld [vmem:[%s164 + $0x830] sm:$0xff]
        %v471 = vld [vmem:[%s164 + $0x838] sm:$0xff]
        %v472 = vld [vmem:[%s164 + $0x840] sm:$0xff]
        %v473 = vld [vmem:[%s164 + $0x848] sm:$0xff]
        %v474 = vld [vmem:[%s164 + $0x850] sm:$0xff]
        %v475 = vld [vmem:[%s164 + $0x858] sm:$0xff]
        %v476 = vld [vmem:[%s164 + $0x860] sm:$0xff]
        %v477 = vld [vmem:[%s164 + $0x868] sm:$0xff]
        %v478 = vld [vmem:[%s164 + $0x870] sm:$0xff]
        %v479 = vld [vmem:[%s164 + $0x878] sm:$0xff]
        %v480 = vld [vmem:[%s164 + $0x880] sm:$0xff]
        %v481 = vld [vmem:[%s164 + $0x888] sm:$0xff]
        %v482 = vld [vmem:[%s164 + $0x890] sm:$0xff]
        %v483 = vld [vmem:[%s164 + $0x898] sm:$0xff]
        %v484 = vld [vmem:[%s164 + $0x8a0] sm:$0xff]
        %v485 = vld [vmem:[%s164 + $0x8a8] sm:$0xff]
        %v486 = vld [vmem:[%s164 + $0x8b0] sm:$0xff]
        %v487 = vld [vmem:[%s164 + $0x8b8] sm:$0xff]
        %v488 = vld [vmem:[%s164 + $0x8c0] sm:$0xff]
        %v489 = vld [vmem:[%s164 + $0x8c8] sm:$0xff]
        %v490 = vld [vmem:[%s164 + $0x8d0] sm:$0xff]
        %v491 = vld [vmem:[%s164 + $0x8d8] sm:$0xff]
        %v492 = vld [vmem:[%s164 + $0x8e0] sm:$0xff]
        %v493 = vld [vmem:[%s164 + $0x8e8] sm:$0xff]
        %v494 = vld [vmem:[%s164 + $0x8f0] sm:$0xff]
        %v495 = vld [vmem:[%s164 + $0x8f8] sm:$0xff]
        %v496 = vld [vmem:[%s164 + $0x900] sm:$0xff]
        %v497 = vld [vmem:[%s164 + $0x908] sm:$0xff]
        %v498 = vld [vmem:[%s164 + $0x910] sm:$0xff]
        %v499 = vld [vmem:[%s164 + $0x918] sm:$0xff]
        %v500 = vld [vmem:[%s164 + $0x920] sm:$0xff]
        %v501 = vld [vmem:[%s164 + $0x928] sm:$0xff]
        %v502 = vld [vmem:[%s164 + $0x930] sm:$0xff]
        %v503 = vld [vmem:[%s164 + $0x938] sm:$0xff]
        %v504 = vld [vmem:[%s164 + $0x940] sm:$0xff]
        %v505 = vld [vmem:[%s164 + $0x948] sm:$0xff]
        %v506 = vld [vmem:[%s164 + $0x950] sm:$0xff]
        %v507 = vld [vmem:[%s164 + $0x958] sm:$0xff]
        %v508 = vld [vmem:[%s164 + $0x960] sm:$0xff]
        %v509 = vld [vmem:[%s164 + $0x968] sm:$0xff]
        %v510 = vld [vmem:[%s164 + $0x970] sm:$0xff]
        %v511 = vld [vmem:[%s164 + $0x978] sm:$0xff]
        %v512 = vld [vmem:[%s164 + $0x980] sm:$0xff]
        %v513 = vld [vmem:[%s164 + $0x988] sm:$0xff]
        %v514 = vld [vmem:[%s164 + $0x990] sm:$0xff]
        %v515 = vld [vmem:[%s164 + $0x998] sm:$0xff]
        %v516 = vld [vmem:[%s164 + $0x9a0] sm:$0xff]
        %v517 = vld [vmem:[%s164 + $0x9a8] sm:$0xff]
        %v518 = vld [vmem:[%s164 + $0x9b0] sm:$0xff]
        %v519 = vld [vmem:[%s164 + $0x9b8] sm:$0xff]
        %v520 = vld [vmem:[%s164 + $0x9c0] sm:$0xff]
        %v521 = vld [vmem:[%s164 + $0x9c8] sm:$0xff]
        %v522 = vld [vmem:[%s164 + $0x9d0] sm:$0xff]
        %v523 = vld [vmem:[%s164 + $0x9d8] sm:$0xff]
        %v524 = vld [vmem:[%s164 + $0x9e0] sm:$0xff]
        %v525 = vld [vmem:[%s164 + $0x9e8] sm:$0xff]
        %v526 = vld [vmem:[%s164 + $0x9f0] sm:$0xff]
        %v527 = vld [vmem:[%s164 + $0x9f8] sm:$0xff]
        %v528 = vld [vmem:[%s164 + $0xa00] sm:$0xff]
        %v529 = vld [vmem:[%s164 + $0xa08] sm:$0xff]
        %v530 = vld [vmem:[%s164 + $0xa10] sm:$0xff]
        %v531 = vld [vmem:[%s164 + $0xa18] sm:$0xff]
        %v532 = vld [vmem:[%s164 + $0xa20] sm:$0xff]
        %v533 = vld [vmem:[%s164 + $0xa28] sm:$0xff]
        %v534 = vld [vmem:[%s164 + $0xa30] sm:$0xff]
        %v535 = vld [vmem:[%s164 + $0xa38] sm:$0xff]
        %v536 = vld [vmem:[%s164 + $0xa40] sm:$0xff]
        %v537 = vld [vmem:[%s164 + $0xa48] sm:$0xff]
        %v538 = vld [vmem:[%s164 + $0xa50] sm:$0xff]
        %v539 = vld [vmem:[%s164 + $0xa58] sm:$0xff]
        %v540 = vld [vmem:[%s164 + $0xa60] sm:$0xff]
        %v541 = vld [vmem:[%s164 + $0xa68] sm:$0xff]
        %v542 = vld [vmem:[%s164 + $0xa70] sm:$0xff]
        %v543 = vld [vmem:[%s164 + $0xa78] sm:$0xff]
        %v544 = vld [vmem:[%s164 + $0xa80] sm:$0xff]
        %v545 = vld [vmem:[%s164 + $0xa88] sm:$0xff]
        %v546 = vld [vmem:[%s164 + $0xa90] sm:$0xff]
        %v547 = vld [vmem:[%s164 + $0xa98] sm:$0xff]
        %v548 = vld [vmem:[%s164 + $0xaa0] sm:$0xff]
        %v549 = vld [vmem:[%s164 + $0xaa8] sm:$0xff]
        %v550 = vld [vmem:[%s164 + $0xab0] sm:$0xff]
        %v551 = vld [vmem:[%s164 + $0xab8] sm:$0xff]
        %v552 = vld [vmem:[%s164 + $0xac0] sm:$0xff]
        %v553 = vld [vmem:[%s164 + $0xac8] sm:$0xff]
        %v554 = vld [vmem:[%s164 + $0xad0] sm:$0xff]
        %v555 = vld [vmem:[%s164 + $0xad8] sm:$0xff]
        %v556 = vld [vmem:[%s164 + $0xae0] sm:$0xff]
        %v557 = vld [vmem:[%s164 + $0xae8] sm:$0xff]
        %v558 = vld [vmem:[%s164 + $0xaf0] sm:$0xff]
        %v559 = vld [vmem:[%s164 + $0xaf8] sm:$0xff]
        %v560 = vld [vmem:[%s164 + $0xb00] sm:$0xff]
        %v561 = vld [vmem:[%s164 + $0xb08] sm:$0xff]
        %v562 = vld [vmem:[%s164 + $0xb10] sm:$0xff]
        %v563 = vld [vmem:[%s164 + $0xb18] sm:$0xff]
        %v564 = vld [vmem:[%s164 + $0xb20] sm:$0xff]
        %v565 = vld [vmem:[%s164 + $0xb28] sm:$0xff]
        %v566 = vld [vmem:[%s164 + $0xb30] sm:$0xff]
        %v567 = vld [vmem:[%s164 + $0xb38] sm:$0xff]
        %v568 = vld [vmem:[%s164 + $0xb40] sm:$0xff]
        %v569 = vld [vmem:[%s164 + $0xb48] sm:$0xff]
        %v570 = vld [vmem:[%s164 + $0xb50] sm:$0xff]
        %v571 = vld [vmem:[%s164 + $0xb58] sm:$0xff]
        %v572 = vld [vmem:[%s164 + $0xb60] sm:$0xff]
        %v573 = vld [vmem:[%s164 + $0xb68] sm:$0xff]
        %v574 = vld [vmem:[%s164 + $0xb70] sm:$0xff]
        %v575 = vld [vmem:[%s164 + $0xb78] sm:$0xff]
        %v576 = vld [vmem:[%s164 + $0xb80] sm:$0xff]
        %v577 = vld [vmem:[%s164 + $0xb88] sm:$0xff]
        %v578 = vld [vmem:[%s164 + $0xb90] sm:$0xff]
        %v579 = vld [vmem:[%s164 + $0xb98] sm:$0xff]
        %v580 = vld [vmem:[%s164 + $0xba0] sm:$0xff]
        %v581 = vld [vmem:[%s164 + $0xba8] sm:$0xff]
        %v582 = vld [vmem:[%s164 + $0xbb0] sm:$0xff]
        %v583 = vld [vmem:[%s164 + $0xbb8] sm:$0xff]
        %v584 = vld [vmem:[%s164 + $0xbc0] sm:$0xff]
        %v585 = vld [vmem:[%s164 + $0xbc8] sm:$0xff]
        %v586 = vld [vmem:[%s164 + $0xbd0] sm:$0xff]
        %v587 = vld [vmem:[%s164 + $0xbd8] sm:$0xff]
        %v588 = vld [vmem:[%s164 + $0xbe0] sm:$0xff]
        %v589 = vld [vmem:[%s164 + $0xbe8] sm:$0xff]
        %v590 = vld [vmem:[%s164 + $0xbf0] sm:$0xff]
        %v591 = vld [vmem:[%s164 + $0xbf8] sm:$0xff]
        %v592 = vld [vmem:[%s164 + $0xc00] sm:$0xff]
        %v593 = vld [vmem:[%s164 + $0xc08] sm:$0xff]
        %v594 = vld [vmem:[%s164 + $0xc10] sm:$0xff]
        %v595 = vld [vmem:[%s164 + $0xc18] sm:$0xff]
        %v596 = vld [vmem:[%s164 + $0xc20] sm:$0xff]
        %v597 = vld [vmem:[%s164 + $0xc28] sm:$0xff]
        %v598 = vld [vmem:[%s164 + $0xc30] sm:$0xff]
        %v599 = vld [vmem:[%s164 + $0xc38] sm:$0xff]
        %v600 = vld [vmem:[%s164 + $0xc40] sm:$0xff]
        %v601 = vld [vmem:[%s164 + $0xc48] sm:$0xff]
        %v602 = vld [vmem:[%s164 + $0xc50] sm:$0xff]
        %v603 = vld [vmem:[%s164 + $0xc58] sm:$0xff]
        %v604 = vld [vmem:[%s164 + $0xc60] sm:$0xff]
        %v605 = vld [vmem:[%s164 + $0xc68] sm:$0xff]
        %v606 = vld [vmem:[%s164 + $0xc70] sm:$0xff]
        %v607 = vld [vmem:[%s164 + $0xc78] sm:$0xff]
        %v608 = vld [vmem:[%s164 + $0xc80] sm:$0xff]
        %v609 = vld [vmem:[%s164 + $0xc88] sm:$0xff]
        %v610 = vld [vmem:[%s164 + $0xc90] sm:$0xff]
        %v611 = vld [vmem:[%s164 + $0xc98] sm:$0xff]
        %v612 = vld [vmem:[%s164 + $0xca0] sm:$0xff]
        %v613 = vld [vmem:[%s164 + $0xca8] sm:$0xff]
        %v614 = vld [vmem:[%s164 + $0xcb0] sm:$0xff]
        %v615 = vld [vmem:[%s164 + $0xcb8] sm:$0xff]
        %v616 = vld [vmem:[%s164 + $0xcc0] sm:$0xff]
        %v617 = vld [vmem:[%s164 + $0xcc8] sm:$0xff]
        %v618 = vld [vmem:[%s164 + $0xcd0] sm:$0xff]
        %v619 = vld [vmem:[%s164 + $0xcd8] sm:$0xff]
        %v620 = vld [vmem:[%s164 + $0xce0] sm:$0xff]
        %v621 = vld [vmem:[%s164 + $0xce8] sm:$0xff]
        %v622 = vld [vmem:[%s164 + $0xcf0] sm:$0xff]
        %v623 = vld [vmem:[%s164 + $0xcf8] sm:$0xff]
        %v624 = vld [vmem:[%s164 + $0xd00] sm:$0xff]
        %v625 = vld [vmem:[%s164 + $0xd08] sm:$0xff]
        %v626 = vld [vmem:[%s164 + $0xd10] sm:$0xff]
        %v627 = vld [vmem:[%s164 + $0xd18] sm:$0xff]
        %v628 = vld [vmem:[%s164 + $0xd20] sm:$0xff]
        %v629 = vld [vmem:[%s164 + $0xd28] sm:$0xff]
        %v630 = vld [vmem:[%s164 + $0xd30] sm:$0xff]
        %v631 = vld [vmem:[%s164 + $0xd38] sm:$0xff]
        %v632 = vld [vmem:[%s164 + $0xd40] sm:$0xff]
        %v633 = vld [vmem:[%s164 + $0xd48] sm:$0xff]
        %v634 = vld [vmem:[%s164 + $0xd50] sm:$0xff]
        %v635 = vld [vmem:[%s164 + $0xd58] sm:$0xff]
        %v636 = vld [vmem:[%s164 + $0xd60] sm:$0xff]
        %v637 = vld [vmem:[%s164 + $0xd68] sm:$0xff]
        %v638 = vld [vmem:[%s164 + $0xd70] sm:$0xff]
        %v639 = vld [vmem:[%s164 + $0xd78] sm:$0xff]
        %v640 = vld [vmem:[%s164 + $0xd80] sm:$0xff]
        %v641 = vld [vmem:[%s164 + $0xd88] sm:$0xff]
        %v642 = vld [vmem:[%s164 + $0xd90] sm:$0xff]
        %v643 = vld [vmem:[%s164 + $0xd98] sm:$0xff]
        %v644 = vld [vmem:[%s164 + $0xda0] sm:$0xff]
        %v645 = vld [vmem:[%s164 + $0xda8] sm:$0xff]
        %v646 = vld [vmem:[%s164 + $0xdb0] sm:$0xff]
        %v647 = vld [vmem:[%s164 + $0xdb8] sm:$0xff]
        %v648 = vld [vmem:[%s164 + $0xdc0] sm:$0xff]
        %v649 = vld [vmem:[%s164 + $0xdc8] sm:$0xff]
        %v650 = vld [vmem:[%s164 + $0xdd0] sm:$0xff]
        %v651 = vld [vmem:[%s164 + $0xdd8] sm:$0xff]
        %v652 = vld [vmem:[%s164 + $0xde0] sm:$0xff]
        %v653 = vld [vmem:[%s164 + $0xde8] sm:$0xff]
        %v654 = vld [vmem:[%s164 + $0xdf0] sm:$0xff]
        %v655 = vld [vmem:[%s164 + $0xdf8] sm:$0xff]
        %v656 = vld [vmem:[%s164 + $0xe00] sm:$0xff]
        %v657 = vld [vmem:[%s164 + $0xe08] sm:$0xff]
        %v658 = vld [vmem:[%s164 + $0xe10] sm:$0xff]
        %v659 = vld [vmem:[%s164 + $0xe18] sm:$0xff]
        %v660 = vld [vmem:[%s164 + $0xe20] sm:$0xff]
        %v661 = vld [vmem:[%s164 + $0xe28] sm:$0xff]
        %v662 = vld [vmem:[%s164 + $0xe30] sm:$0xff]
        %v663 = vld [vmem:[%s164 + $0xe38] sm:$0xff]
        %v664 = vld [vmem:[%s164 + $0xe40] sm:$0xff]
        %v665 = vld [vmem:[%s164 + $0xe48] sm:$0xff]
        %v666 = vld [vmem:[%s164 + $0xe50] sm:$0xff]
        %v667 = vld [vmem:[%s164 + $0xe58] sm:$0xff]
        %v668 = vld [vmem:[%s164 + $0xe60] sm:$0xff]
        %v669 = vld [vmem:[%s164 + $0xe68] sm:$0xff]
        %v670 = vld [vmem:[%s164 + $0xe70] sm:$0xff]
        %v671 = vld [vmem:[%s164 + $0xe78] sm:$0xff]
        %v672 = vld [vmem:[%s164 + $0xe80] sm:$0xff]
        %v673 = vld [vmem:[%s164 + $0xe88] sm:$0xff]
        %v674 = vld [vmem:[%s164 + $0xe90] sm:$0xff]
        %v675 = vld [vmem:[%s164 + $0xe98] sm:$0xff]
        %v676 = vld [vmem:[%s164 + $0xea0] sm:$0xff]
        %v677 = vld [vmem:[%s164 + $0xea8] sm:$0xff]
        %v678 = vld [vmem:[%s164 + $0xeb0] sm:$0xff]
        %v679 = vld [vmem:[%s164 + $0xeb8] sm:$0xff]
        %v680 = vld [vmem:[%s164 + $0xec0] sm:$0xff]
        %v681 = vld [vmem:[%s164 + $0xec8] sm:$0xff]
        %v682 = vld [vmem:[%s164 + $0xed0] sm:$0xff]
        %v683 = vld [vmem:[%s164 + $0xed8] sm:$0xff]
        %v684 = vld [vmem:[%s164 + $0xee0] sm:$0xff]
        %v685 = vld [vmem:[%s164 + $0xee8] sm:$0xff]
        %v686 = vld [vmem:[%s164 + $0xef0] sm:$0xff]
        %v687 = vld [vmem:[%s164 + $0xef8] sm:$0xff]
        %v688 = vld [vmem:[%s164 + $0xf00] sm:$0xff]
        %v689 = vld [vmem:[%s164 + $0xf08] sm:$0xff]
        %v690 = vld [vmem:[%s164 + $0xf10] sm:$0xff]
        %v691 = vld [vmem:[%s164 + $0xf18] sm:$0xff]
        %v692 = vld [vmem:[%s164 + $0xf20] sm:$0xff]
        %v693 = vld [vmem:[%s164 + $0xf28] sm:$0xff]
        %v694 = vld [vmem:[%s164 + $0xf30] sm:$0xff]
        %v695 = vld [vmem:[%s164 + $0xf38] sm:$0xff]
        %v696 = vld [vmem:[%s164 + $0xf40] sm:$0xff]
        %v697 = vld [vmem:[%s164 + $0xf48] sm:$0xff]
        %v698 = vld [vmem:[%s164 + $0xf50] sm:$0xff]
        %v699 = vld [vmem:[%s164 + $0xf58] sm:$0xff]
        %v700 = vld [vmem:[%s164 + $0xf60] sm:$0xff]
        %v701 = vld [vmem:[%s164 + $0xf68] sm:$0xff]
        %v702 = vld [vmem:[%s164 + $0xf70] sm:$0xff]
        %v703 = vld [vmem:[%s164 + $0xf78] sm:$0xff]
        %v704 = vld [vmem:[%s164 + $0xf80] sm:$0xff]
        %v705 = vld [vmem:[%s164 + $0xf88] sm:$0xff]
        %v706 = vld [vmem:[%s164 + $0xf90] sm:$0xff]
        %v707 = vld [vmem:[%s164 + $0xf98] sm:$0xff]
        %v708 = vld [vmem:[%s164 + $0xfa0] sm:$0xff]
        %v709 = vld [vmem:[%s164 + $0xfa8] sm:$0xff]
        %v710 = vld [vmem:[%s164 + $0xfb0] sm:$0xff]
        %v711 = vld [vmem:[%s164 + $0xfb8] sm:$0xff]
        %v712 = vld [vmem:[%s164 + $0xfc0] sm:$0xff]
        %v713 = vld [vmem:[%s164 + $0xfc8] sm:$0xff]
        %v714 = vld [vmem:[%s164 + $0xfd0] sm:$0xff]
        %v715 = vld [vmem:[%s164 + $0xfd8] sm:$0xff]
        %v716 = vld [vmem:[%s164 + $0xfe0] sm:$0xff]
        %v717 = vld [vmem:[%s164 + $0xfe8] sm:$0xff]
        %v718 = vld [vmem:[%s164 + $0xff0] sm:$0xff]
        %v719 = vld [vmem:[%s164 + $0xff8] sm:$0xff]
        %v728 = vunpack.c.l.b16 %v200
        %v729 = vunpack.c.h.b16 %v200
        %v730 = vunpack.c.l.b16 %v201
        %v731 = vunpack.c.h.b16 %v201
        %v732 = vunpack.c.l.b16 %v202
        %v733 = vunpack.c.h.b16 %v202
        %v734 = vunpack.c.l.b16 %v203
        %v735 = vunpack.c.h.b16 %v203
        %v736 = vunpack.c.l.b16 %v204
        %v737 = vunpack.c.h.b16 %v204
        %v738 = vunpack.c.l.b16 %v205
        %v739 = vunpack.c.h.b16 %v205
        %v740 = vunpack.c.l.b16 %v206
        %v741 = vunpack.c.h.b16 %v206
        %v742 = vunpack.c.l.b16 %v207
        %v743 = vunpack.c.h.b16 %v207
        %v744 = vpack.c.b16 %v732, %v728
        %v745 = vpack.c.b16 %v733, %v729
        %v746 = vpack.c.b16 %v734, %v730
        %v747 = vpack.c.b16 %v735, %v731
        %v748 = vpack.c.b16 %v740, %v736
        %v749 = vpack.c.b16 %v741, %v737
        %v750 = vpack.c.b16 %v742, %v738
        %v751 = vpack.c.b16 %v743, %v739
        %v1272 = vunpack.c.l.b16 %v208
        %v1273 = vunpack.c.h.b16 %v208
        %v1274 = vunpack.c.l.b16 %v209
        %v1275 = vunpack.c.h.b16 %v209
        %v1276 = vunpack.c.l.b16 %v210
        %v1277 = vunpack.c.h.b16 %v210
        %v1278 = vunpack.c.l.b16 %v211
        %v1279 = vunpack.c.h.b16 %v211
        %v1280 = vunpack.c.l.b16 %v212
        %v1281 = vunpack.c.h.b16 %v212
        %v1282 = vunpack.c.l.b16 %v213
        %v1283 = vunpack.c.h.b16 %v213
        %v1284 = vunpack.c.l.b16 %v214
        %v1285 = vunpack.c.h.b16 %v214
        %v1286 = vunpack.c.l.b16 %v215
        %v1287 = vunpack.c.h.b16 %v215
        %v1288 = vunpack.c.l.b16 %v216
        %v1289 = vunpack.c.h.b16 %v216
        %v1290 = vunpack.c.l.b16 %v217
        %v1291 = vunpack.c.h.b16 %v217
        %v1292 = vunpack.c.l.b16 %v218
        %v1293 = vunpack.c.h.b16 %v218
        %v1294 = vunpack.c.l.b16 %v219
        %v1295 = vunpack.c.h.b16 %v219
        %v1296 = vunpack.c.l.b16 %v220
        %v1297 = vunpack.c.h.b16 %v220
        %v1298 = vunpack.c.l.b16 %v221
        %v1299 = vunpack.c.h.b16 %v221
        %v1300 = vunpack.c.l.b16 %v222
        %v1301 = vunpack.c.h.b16 %v222
        %v1302 = vunpack.c.l.b16 %v223
        %v1303 = vunpack.c.h.b16 %v223
        %v1304 = vunpack.c.l.b16 %v224
        %v1305 = vunpack.c.h.b16 %v224
        %v1306 = vunpack.c.l.b16 %v225
        %v1307 = vunpack.c.h.b16 %v225
        %v1308 = vunpack.c.l.b16 %v226
        %v1309 = vunpack.c.h.b16 %v226
        %v1310 = vunpack.c.l.b16 %v227
        %v1311 = vunpack.c.h.b16 %v227
        %v1312 = vunpack.c.l.b16 %v228
        %v1313 = vunpack.c.h.b16 %v228
        %v1314 = vunpack.c.l.b16 %v229
        %v1315 = vunpack.c.h.b16 %v229
        %v1316 = vunpack.c.l.b16 %v230
        %v1317 = vunpack.c.h.b16 %v230
        %v1318 = vunpack.c.l.b16 %v231
        %v1319 = vunpack.c.h.b16 %v231
        %v1320 = vunpack.c.l.b16 %v232
        %v1321 = vunpack.c.h.b16 %v232
        %v1322 = vunpack.c.l.b16 %v233
        %v1323 = vunpack.c.h.b16 %v233
        %v1324 = vunpack.c.l.b16 %v234
        %v1325 = vunpack.c.h.b16 %v234
        %v1326 = vunpack.c.l.b16 %v235
        %v1327 = vunpack.c.h.b16 %v235
        %v1328 = vunpack.c.l.b16 %v236
        %v1329 = vunpack.c.h.b16 %v236
        %v1330 = vunpack.c.l.b16 %v237
        %v1331 = vunpack.c.h.b16 %v237
        %v1332 = vunpack.c.l.b16 %v238
        %v1333 = vunpack.c.h.b16 %v238
        %v1334 = vunpack.c.l.b16 %v239
        %v1335 = vunpack.c.h.b16 %v239
        %v1336 = vunpack.c.l.b16 %v240
        %v1337 = vunpack.c.h.b16 %v240
        %v1338 = vunpack.c.l.b16 %v241
        %v1339 = vunpack.c.h.b16 %v241
        %v1340 = vunpack.c.l.b16 %v242
        %v1341 = vunpack.c.h.b16 %v242
        %v1342 = vunpack.c.l.b16 %v243
        %v1343 = vunpack.c.h.b16 %v243
        %v1344 = vunpack.c.l.b16 %v244
        %v1345 = vunpack.c.h.b16 %v244
        %v1346 = vunpack.c.l.b16 %v245
        %v1347 = vunpack.c.h.b16 %v245
        %v1348 = vunpack.c.l.b16 %v246
        %v1349 = vunpack.c.h.b16 %v246
        %v1350 = vunpack.c.l.b16 %v247
        %v1351 = vunpack.c.h.b16 %v247
        %v1352 = vunpack.c.l.b16 %v248
        %v1353 = vunpack.c.h.b16 %v248
        %v1354 = vunpack.c.l.b16 %v249
        %v1355 = vunpack.c.h.b16 %v249
        %v1356 = vunpack.c.l.b16 %v250
        %v1357 = vunpack.c.h.b16 %v250
        %v1358 = vunpack.c.l.b16 %v251
        %v1359 = vunpack.c.h.b16 %v251
        %v1360 = vunpack.c.l.b16 %v252
        %v1361 = vunpack.c.h.b16 %v252
        %v1362 = vunpack.c.l.b16 %v253
        %v1363 = vunpack.c.h.b16 %v253
        %v1364 = vunpack.c.l.b16 %v254
        %v1365 = vunpack.c.h.b16 %v254
        %v1366 = vunpack.c.l.b16 %v255
        %v1367 = vunpack.c.h.b16 %v255
        %v1368 = vunpack.c.l.b16 %v256
        %v1369 = vunpack.c.h.b16 %v256
        %v1370 = vunpack.c.l.b16 %v257
        %v1371 = vunpack.c.h.b16 %v257
        %v1372 = vunpack.c.l.b16 %v258
        %v1373 = vunpack.c.h.b16 %v258
        %v1374 = vunpack.c.l.b16 %v259
        %v1375 = vunpack.c.h.b16 %v259
        %v1376 = vunpack.c.l.b16 %v260
        %v1377 = vunpack.c.h.b16 %v260
        %v1378 = vunpack.c.l.b16 %v261
        %v1379 = vunpack.c.h.b16 %v261
        %v1380 = vunpack.c.l.b16 %v262
        %v1381 = vunpack.c.h.b16 %v262
        %v1382 = vunpack.c.l.b16 %v263
        %v1383 = vunpack.c.h.b16 %v263
        %v1384 = vunpack.c.l.b16 %v264
        %v1385 = vunpack.c.h.b16 %v264
        %v1386 = vunpack.c.l.b16 %v265
        %v1387 = vunpack.c.h.b16 %v265
        %v1388 = vunpack.c.l.b16 %v266
        %v1389 = vunpack.c.h.b16 %v266
        %v1390 = vunpack.c.l.b16 %v267
        %v1391 = vunpack.c.h.b16 %v267
        %v1392 = vunpack.c.l.b16 %v268
        %v1393 = vunpack.c.h.b16 %v268
        %v1394 = vunpack.c.l.b16 %v269
        %v1395 = vunpack.c.h.b16 %v269
        %v1396 = vunpack.c.l.b16 %v270
        %v1397 = vunpack.c.h.b16 %v270
        %v1398 = vunpack.c.l.b16 %v271
        %v1399 = vunpack.c.h.b16 %v271
        %v1400 = vunpack.c.l.b16 %v272
        %v1401 = vunpack.c.h.b16 %v272
        %v1402 = vunpack.c.l.b16 %v273
        %v1403 = vunpack.c.h.b16 %v273
        %v1404 = vunpack.c.l.b16 %v274
        %v1405 = vunpack.c.h.b16 %v274
        %v1406 = vunpack.c.l.b16 %v275
        %v1407 = vunpack.c.h.b16 %v275
        %v1408 = vunpack.c.l.b16 %v276
        %v1409 = vunpack.c.h.b16 %v276
        %v1410 = vunpack.c.l.b16 %v277
        %v1411 = vunpack.c.h.b16 %v277
        %v1412 = vunpack.c.l.b16 %v278
        %v1413 = vunpack.c.h.b16 %v278
        %v1414 = vunpack.c.l.b16 %v279
        %v1415 = vunpack.c.h.b16 %v279
        %v1416 = vunpack.c.l.b16 %v280
        %v1417 = vunpack.c.h.b16 %v280
        %v1418 = vunpack.c.l.b16 %v281
        %v1419 = vunpack.c.h.b16 %v281
        %v1420 = vunpack.c.l.b16 %v282
        %v1421 = vunpack.c.h.b16 %v282
        %v1422 = vunpack.c.l.b16 %v283
        %v1423 = vunpack.c.h.b16 %v283
        %v1424 = vunpack.c.l.b16 %v284
        %v1425 = vunpack.c.h.b16 %v284
        %v1426 = vunpack.c.l.b16 %v285
        %v1427 = vunpack.c.h.b16 %v285
        %v1428 = vunpack.c.l.b16 %v286
        %v1429 = vunpack.c.h.b16 %v286
        %v1430 = vunpack.c.l.b16 %v287
        %v1431 = vunpack.c.h.b16 %v287
        %v1432 = vunpack.c.l.b16 %v288
        %v1433 = vunpack.c.h.b16 %v288
        %v1434 = vunpack.c.l.b16 %v289
        %v1435 = vunpack.c.h.b16 %v289
        %v1436 = vunpack.c.l.b16 %v290
        %v1437 = vunpack.c.h.b16 %v290
        %v1438 = vunpack.c.l.b16 %v291
        %v1439 = vunpack.c.h.b16 %v291
        %v1440 = vunpack.c.l.b16 %v292
        %v1441 = vunpack.c.h.b16 %v292
        %v1442 = vunpack.c.l.b16 %v293
        %v1443 = vunpack.c.h.b16 %v293
        %v1444 = vunpack.c.l.b16 %v294
        %v1445 = vunpack.c.h.b16 %v294
        %v1446 = vunpack.c.l.b16 %v295
        %v1447 = vunpack.c.h.b16 %v295
        %v1448 = vunpack.c.l.b16 %v296
        %v1449 = vunpack.c.h.b16 %v296
        %v1450 = vunpack.c.l.b16 %v297
        %v1451 = vunpack.c.h.b16 %v297
        %v1452 = vunpack.c.l.b16 %v298
        %v1453 = vunpack.c.h.b16 %v298
        %v1454 = vunpack.c.l.b16 %v299
        %v1455 = vunpack.c.h.b16 %v299
        %v1456 = vunpack.c.l.b16 %v300
        %v1457 = vunpack.c.h.b16 %v300
        %v1458 = vunpack.c.l.b16 %v301
        %v1459 = vunpack.c.h.b16 %v301
        %v1460 = vunpack.c.l.b16 %v302
        %v1461 = vunpack.c.h.b16 %v302
        %v1462 = vunpack.c.l.b16 %v303
        %v1463 = vunpack.c.h.b16 %v303
        %v1464 = vunpack.c.l.b16 %v304
        %v1465 = vunpack.c.h.b16 %v304
        %v1466 = vunpack.c.l.b16 %v305
        %v1467 = vunpack.c.h.b16 %v305
        %v1468 = vunpack.c.l.b16 %v306
        %v1469 = vunpack.c.h.b16 %v306
        %v1470 = vunpack.c.l.b16 %v307
        %v1471 = vunpack.c.h.b16 %v307
        %v1472 = vunpack.c.l.b16 %v308
        %v1473 = vunpack.c.h.b16 %v308
        %v1474 = vunpack.c.l.b16 %v309
        %v1475 = vunpack.c.h.b16 %v309
        %v1476 = vunpack.c.l.b16 %v310
        %v1477 = vunpack.c.h.b16 %v310
        %v1478 = vunpack.c.l.b16 %v311
        %v1479 = vunpack.c.h.b16 %v311
        %v1480 = vunpack.c.l.b16 %v312
        %v1481 = vunpack.c.h.b16 %v312
        %v1482 = vunpack.c.l.b16 %v313
        %v1483 = vunpack.c.h.b16 %v313
        %v1484 = vunpack.c.l.b16 %v314
        %v1485 = vunpack.c.h.b16 %v314
        %v1486 = vunpack.c.l.b16 %v315
        %v1487 = vunpack.c.h.b16 %v315
        %v1488 = vunpack.c.l.b16 %v316
        %v1489 = vunpack.c.h.b16 %v316
        %v1490 = vunpack.c.l.b16 %v317
        %v1491 = vunpack.c.h.b16 %v317
        %v1492 = vunpack.c.l.b16 %v318
        %v1493 = vunpack.c.h.b16 %v318
        %v1494 = vunpack.c.l.b16 %v319
        %v1495 = vunpack.c.h.b16 %v319
        %v1496 = vunpack.c.l.b16 %v320
        %v1497 = vunpack.c.h.b16 %v320
        %v1498 = vunpack.c.l.b16 %v321
        %v1499 = vunpack.c.h.b16 %v321
        %v1500 = vunpack.c.l.b16 %v322
        %v1501 = vunpack.c.h.b16 %v322
        %v1502 = vunpack.c.l.b16 %v323
        %v1503 = vunpack.c.h.b16 %v323
        %v1504 = vunpack.c.l.b16 %v324
        %v1505 = vunpack.c.h.b16 %v324
        %v1506 = vunpack.c.l.b16 %v325
        %v1507 = vunpack.c.h.b16 %v325
        %v1508 = vunpack.c.l.b16 %v326
        %v1509 = vunpack.c.h.b16 %v326
        %v1510 = vunpack.c.l.b16 %v327
        %v1511 = vunpack.c.h.b16 %v327
        %v1512 = vunpack.c.l.b16 %v328
        %v1513 = vunpack.c.h.b16 %v328
        %v1514 = vunpack.c.l.b16 %v329
        %v1515 = vunpack.c.h.b16 %v329
        %v1516 = vunpack.c.l.b16 %v330
        %v1517 = vunpack.c.h.b16 %v330
        %v1518 = vunpack.c.l.b16 %v331
        %v1519 = vunpack.c.h.b16 %v331
        %v1520 = vunpack.c.l.b16 %v332
        %v1521 = vunpack.c.h.b16 %v332
        %v1522 = vunpack.c.l.b16 %v333
        %v1523 = vunpack.c.h.b16 %v333
        %v1524 = vunpack.c.l.b16 %v334
        %v1525 = vunpack.c.h.b16 %v334
        %v1526 = vunpack.c.l.b16 %v335
        %v1527 = vunpack.c.h.b16 %v335
        %v1528 = vunpack.c.l.b16 %v336
        %v1529 = vunpack.c.h.b16 %v336
        %v1530 = vunpack.c.l.b16 %v337
        %v1531 = vunpack.c.h.b16 %v337
        %v1532 = vunpack.c.l.b16 %v338
        %v1533 = vunpack.c.h.b16 %v338
        %v1534 = vunpack.c.l.b16 %v339
        %v1535 = vunpack.c.h.b16 %v339
        %v1536 = vunpack.c.l.b16 %v340
        %v1537 = vunpack.c.h.b16 %v340
        %v1538 = vunpack.c.l.b16 %v341
        %v1539 = vunpack.c.h.b16 %v341
        %v1540 = vunpack.c.l.b16 %v342
        %v1541 = vunpack.c.h.b16 %v342
        %v1542 = vunpack.c.l.b16 %v343
        %v1543 = vunpack.c.h.b16 %v343
        %v1544 = vunpack.c.l.b16 %v344
        %v1545 = vunpack.c.h.b16 %v344
        %v1546 = vunpack.c.l.b16 %v345
        %v1547 = vunpack.c.h.b16 %v345
        %v1548 = vunpack.c.l.b16 %v346
        %v1549 = vunpack.c.h.b16 %v346
        %v1550 = vunpack.c.l.b16 %v347
        %v1551 = vunpack.c.h.b16 %v347
        %v1552 = vunpack.c.l.b16 %v348
        %v1553 = vunpack.c.h.b16 %v348
        %v1554 = vunpack.c.l.b16 %v349
        %v1555 = vunpack.c.h.b16 %v349
        %v1556 = vunpack.c.l.b16 %v350
        %v1557 = vunpack.c.h.b16 %v350
        %v1558 = vunpack.c.l.b16 %v351
        %v1559 = vunpack.c.h.b16 %v351
        %v1560 = vunpack.c.l.b16 %v352
        %v1561 = vunpack.c.h.b16 %v352
        %v1562 = vunpack.c.l.b16 %v353
        %v1563 = vunpack.c.h.b16 %v353
        %v1564 = vunpack.c.l.b16 %v354
        %v1565 = vunpack.c.h.b16 %v354
        %v1566 = vunpack.c.l.b16 %v355
        %v1567 = vunpack.c.h.b16 %v355
        %v1568 = vunpack.c.l.b16 %v356
        %v1569 = vunpack.c.h.b16 %v356
        %v1570 = vunpack.c.l.b16 %v357
        %v1571 = vunpack.c.h.b16 %v357
        %v1572 = vunpack.c.l.b16 %v358
        %v1573 = vunpack.c.h.b16 %v358
        %v1574 = vunpack.c.l.b16 %v359
        %v1575 = vunpack.c.h.b16 %v359
        %v1576 = vunpack.c.l.b16 %v360
        %v1577 = vunpack.c.h.b16 %v360
        %v1578 = vunpack.c.l.b16 %v361
        %v1579 = vunpack.c.h.b16 %v361
        %v1580 = vunpack.c.l.b16 %v362
        %v1581 = vunpack.c.h.b16 %v362
        %v1582 = vunpack.c.l.b16 %v363
        %v1583 = vunpack.c.h.b16 %v363
        %v1584 = vunpack.c.l.b16 %v364
        %v1585 = vunpack.c.h.b16 %v364
        %v1586 = vunpack.c.l.b16 %v365
        %v1587 = vunpack.c.h.b16 %v365
        %v1588 = vunpack.c.l.b16 %v366
        %v1589 = vunpack.c.h.b16 %v366
        %v1590 = vunpack.c.l.b16 %v367
        %v1591 = vunpack.c.h.b16 %v367
        %v1592 = vunpack.c.l.b16 %v368
        %v1593 = vunpack.c.h.b16 %v368
        %v1594 = vunpack.c.l.b16 %v369
        %v1595 = vunpack.c.h.b16 %v369
        %v1596 = vunpack.c.l.b16 %v370
        %v1597 = vunpack.c.h.b16 %v370
        %v1598 = vunpack.c.l.b16 %v371
        %v1599 = vunpack.c.h.b16 %v371
        %v1600 = vunpack.c.l.b16 %v372
        %v1601 = vunpack.c.h.b16 %v372
        %v1602 = vunpack.c.l.b16 %v373
        %v1603 = vunpack.c.h.b16 %v373
        %v1604 = vunpack.c.l.b16 %v374
        %v1605 = vunpack.c.h.b16 %v374
        %v1606 = vunpack.c.l.b16 %v375
        %v1607 = vunpack.c.h.b16 %v375
        %v1608 = vunpack.c.l.b16 %v376
        %v1609 = vunpack.c.h.b16 %v376
        %v1610 = vunpack.c.l.b16 %v377
        %v1611 = vunpack.c.h.b16 %v377
        %v1612 = vunpack.c.l.b16 %v378
        %v1613 = vunpack.c.h.b16 %v378
        %v1614 = vunpack.c.l.b16 %v379
        %v1615 = vunpack.c.h.b16 %v379
        %v1616 = vunpack.c.l.b16 %v380
        %v1617 = vunpack.c.h.b16 %v380
        %v1618 = vunpack.c.l.b16 %v381
        %v1619 = vunpack.c.h.b16 %v381
        %v1620 = vunpack.c.l.b16 %v382
        %v1621 = vunpack.c.h.b16 %v382
        %v1622 = vunpack.c.l.b16 %v383
        %v1623 = vunpack.c.h.b16 %v383
        %v1624 = vunpack.c.l.b16 %v384
        %v1625 = vunpack.c.h.b16 %v384
        %v1626 = vunpack.c.l.b16 %v385
        %v1627 = vunpack.c.h.b16 %v385
        %v1628 = vunpack.c.l.b16 %v386
        %v1629 = vunpack.c.h.b16 %v386
        %v1630 = vunpack.c.l.b16 %v387
        %v1631 = vunpack.c.h.b16 %v387
        %v1632 = vunpack.c.l.b16 %v388
        %v1633 = vunpack.c.h.b16 %v388
        %v1634 = vunpack.c.l.b16 %v389
        %v1635 = vunpack.c.h.b16 %v389
        %v1636 = vunpack.c.l.b16 %v390
        %v1637 = vunpack.c.h.b16 %v390
        %v1638 = vunpack.c.l.b16 %v391
        %v1639 = vunpack.c.h.b16 %v391
        %v1640 = vunpack.c.l.b16 %v392
        %v1641 = vunpack.c.h.b16 %v392
        %v1642 = vunpack.c.l.b16 %v393
        %v1643 = vunpack.c.h.b16 %v393
        %v1644 = vunpack.c.l.b16 %v394
        %v1645 = vunpack.c.h.b16 %v394
        %v1646 = vunpack.c.l.b16 %v395
        %v1647 = vunpack.c.h.b16 %v395
        %v1648 = vunpack.c.l.b16 %v396
        %v1649 = vunpack.c.h.b16 %v396
        %v1650 = vunpack.c.l.b16 %v397
        %v1651 = vunpack.c.h.b16 %v397
        %v1652 = vunpack.c.l.b16 %v398
        %v1653 = vunpack.c.h.b16 %v398
        %v1654 = vunpack.c.l.b16 %v399
        %v1655 = vunpack.c.h.b16 %v399
        %v1656 = vunpack.c.l.b16 %v400
        %v1657 = vunpack.c.h.b16 %v400
        %v1658 = vunpack.c.l.b16 %v401
        %v1659 = vunpack.c.h.b16 %v401
        %v1660 = vunpack.c.l.b16 %v402
        %v1661 = vunpack.c.h.b16 %v402
        %v1662 = vunpack.c.l.b16 %v403
        %v1663 = vunpack.c.h.b16 %v403
        %v1664 = vunpack.c.l.b16 %v404
        %v1665 = vunpack.c.h.b16 %v404
        %v1666 = vunpack.c.l.b16 %v405
        %v1667 = vunpack.c.h.b16 %v405
        %v1668 = vunpack.c.l.b16 %v406
        %v1669 = vunpack.c.h.b16 %v406
        %v1670 = vunpack.c.l.b16 %v407
        %v1671 = vunpack.c.h.b16 %v407
        %v1672 = vunpack.c.l.b16 %v408
        %v1673 = vunpack.c.h.b16 %v408
        %v1674 = vunpack.c.l.b16 %v409
        %v1675 = vunpack.c.h.b16 %v409
        %v1676 = vunpack.c.l.b16 %v410
        %v1677 = vunpack.c.h.b16 %v410
        %v1678 = vunpack.c.l.b16 %v411
        %v1679 = vunpack.c.h.b16 %v411
        %v1680 = vunpack.c.l.b16 %v412
        %v1681 = vunpack.c.h.b16 %v412
        %v1682 = vunpack.c.l.b16 %v413
        %v1683 = vunpack.c.h.b16 %v413
        %v1684 = vunpack.c.l.b16 %v414
        %v1685 = vunpack.c.h.b16 %v414
        %v1686 = vunpack.c.l.b16 %v415
        %v1687 = vunpack.c.h.b16 %v415
        %v1688 = vunpack.c.l.b16 %v416
        %v1689 = vunpack.c.h.b16 %v416
        %v1690 = vunpack.c.l.b16 %v417
        %v1691 = vunpack.c.h.b16 %v417
        %v1692 = vunpack.c.l.b16 %v418
        %v1693 = vunpack.c.h.b16 %v418
        %v1694 = vunpack.c.l.b16 %v419
        %v1695 = vunpack.c.h.b16 %v419
        %v1696 = vunpack.c.l.b16 %v420
        %v1697 = vunpack.c.h.b16 %v420
        %v1698 = vunpack.c.l.b16 %v421
        %v1699 = vunpack.c.h.b16 %v421
        %v1700 = vunpack.c.l.b16 %v422
        %v1701 = vunpack.c.h.b16 %v422
        %v1702 = vunpack.c.l.b16 %v423
        %v1703 = vunpack.c.h.b16 %v423
        %v1704 = vunpack.c.l.b16 %v424
        %v1705 = vunpack.c.h.b16 %v424
        %v1706 = vunpack.c.l.b16 %v425
        %v1707 = vunpack.c.h.b16 %v425
        %v1708 = vunpack.c.l.b16 %v426
        %v1709 = vunpack.c.h.b16 %v426
        %v1710 = vunpack.c.l.b16 %v427
        %v1711 = vunpack.c.h.b16 %v427
        %v1712 = vunpack.c.l.b16 %v428
        %v1713 = vunpack.c.h.b16 %v428
        %v1714 = vunpack.c.l.b16 %v429
        %v1715 = vunpack.c.h.b16 %v429
        %v1716 = vunpack.c.l.b16 %v430
        %v1717 = vunpack.c.h.b16 %v430
        %v1718 = vunpack.c.l.b16 %v431
        %v1719 = vunpack.c.h.b16 %v431
        %v1720 = vunpack.c.l.b16 %v432
        %v1721 = vunpack.c.h.b16 %v432
        %v1722 = vunpack.c.l.b16 %v433
        %v1723 = vunpack.c.h.b16 %v433
        %v1724 = vunpack.c.l.b16 %v434
        %v1725 = vunpack.c.h.b16 %v434
        %v1726 = vunpack.c.l.b16 %v435
        %v1727 = vunpack.c.h.b16 %v435
        %v1728 = vunpack.c.l.b16 %v436
        %v1729 = vunpack.c.h.b16 %v436
        %v1730 = vunpack.c.l.b16 %v437
        %v1731 = vunpack.c.h.b16 %v437
        %v1732 = vunpack.c.l.b16 %v438
        %v1733 = vunpack.c.h.b16 %v438
        %v1734 = vunpack.c.l.b16 %v439
        %v1735 = vunpack.c.h.b16 %v439
        %v1736 = vunpack.c.l.b16 %v440
        %v1737 = vunpack.c.h.b16 %v440
        %v1738 = vunpack.c.l.b16 %v441
        %v1739 = vunpack.c.h.b16 %v441
        %v1740 = vunpack.c.l.b16 %v442
        %v1741 = vunpack.c.h.b16 %v442
        %v1742 = vunpack.c.l.b16 %v443
        %v1743 = vunpack.c.h.b16 %v443
        %v1744 = vunpack.c.l.b16 %v444
        %v1745 = vunpack.c.h.b16 %v444
        %v1746 = vunpack.c.l.b16 %v445
        %v1747 = vunpack.c.h.b16 %v445
        %v1748 = vunpack.c.l.b16 %v446
        %v1749 = vunpack.c.h.b16 %v446
        %v1750 = vunpack.c.l.b16 %v447
        %v1751 = vunpack.c.h.b16 %v447
        %v1752 = vunpack.c.l.b16 %v448
        %v1753 = vunpack.c.h.b16 %v448
        %v1754 = vunpack.c.l.b16 %v449
        %v1755 = vunpack.c.h.b16 %v449
        %v1756 = vunpack.c.l.b16 %v450
        %v1757 = vunpack.c.h.b16 %v450
        %v1758 = vunpack.c.l.b16 %v451
        %v1759 = vunpack.c.h.b16 %v451
        %v1760 = vunpack.c.l.b16 %v452
        %v1761 = vunpack.c.h.b16 %v452
        %v1762 = vunpack.c.l.b16 %v453
        %v1763 = vunpack.c.h.b16 %v453
        %v1764 = vunpack.c.l.b16 %v454
        %v1765 = vunpack.c.h.b16 %v454
        %v1766 = vunpack.c.l.b16 %v455
        %v1767 = vunpack.c.h.b16 %v455
        %v1768 = vunpack.c.l.b16 %v456
        %v1769 = vunpack.c.h.b16 %v456
        %v1770 = vunpack.c.l.b16 %v457
        %v1771 = vunpack.c.h.b16 %v457
        %v1772 = vunpack.c.l.b16 %v458
        %v1773 = vunpack.c.h.b16 %v458
        %v1774 = vunpack.c.l.b16 %v459
        %v1775 = vunpack.c.h.b16 %v459
        %v1776 = vunpack.c.l.b16 %v460
        %v1777 = vunpack.c.h.b16 %v460
        %v1778 = vunpack.c.l.b16 %v461
        %v1779 = vunpack.c.h.b16 %v461
        %v1780 = vunpack.c.l.b16 %v462
        %v1781 = vunpack.c.h.b16 %v462
        %v1782 = vunpack.c.l.b16 %v463
        %v1783 = vunpack.c.h.b16 %v463
        %v1784 = vunpack.c.l.b16 %v464
        %v1785 = vunpack.c.h.b16 %v464
        %v1786 = vunpack.c.l.b16 %v465
        %v1787 = vunpack.c.h.b16 %v465
        %v1788 = vunpack.c.l.b16 %v466
        %v1789 = vunpack.c.h.b16 %v466
        %v1790 = vunpack.c.l.b16 %v467
        %v1791 = vunpack.c.h.b16 %v467
        %v1792 = vunpack.c.l.b16 %v468
        %v1793 = vunpack.c.h.b16 %v468
        %v1794 = vunpack.c.l.b16 %v469
        %v1795 = vunpack.c.h.b16 %v469
        %v1796 = vunpack.c.l.b16 %v470
        %v1797 = vunpack.c.h.b16 %v470
        %v1798 = vunpack.c.l.b16 %v471
        %v1799 = vunpack.c.h.b16 %v471
        %v1800 = vunpack.c.l.b16 %v472
        %v1801 = vunpack.c.h.b16 %v472
        %v1802 = vunpack.c.l.b16 %v473
        %v1803 = vunpack.c.h.b16 %v473
        %v1804 = vunpack.c.l.b16 %v474
        %v1805 = vunpack.c.h.b16 %v474
        %v1806 = vunpack.c.l.b16 %v475
        %v1807 = vunpack.c.h.b16 %v475
        %v1808 = vunpack.c.l.b16 %v476
        %v1809 = vunpack.c.h.b16 %v476
        %v1810 = vunpack.c.l.b16 %v477
        %v1811 = vunpack.c.h.b16 %v477
        %v1812 = vunpack.c.l.b16 %v478
        %v1813 = vunpack.c.h.b16 %v478
        %v1814 = vunpack.c.l.b16 %v479
        %v1815 = vunpack.c.h.b16 %v479
        %v1816 = vunpack.c.l.b16 %v480
        %v1817 = vunpack.c.h.b16 %v480
        %v1818 = vunpack.c.l.b16 %v481
        %v1819 = vunpack.c.h.b16 %v481
        %v1820 = vunpack.c.l.b16 %v482
        %v1821 = vunpack.c.h.b16 %v482
        %v1822 = vunpack.c.l.b16 %v483
        %v1823 = vunpack.c.h.b16 %v483
        %v1824 = vunpack.c.l.b16 %v484
        %v1825 = vunpack.c.h.b16 %v484
        %v1826 = vunpack.c.l.b16 %v485
        %v1827 = vunpack.c.h.b16 %v485
        %v1828 = vunpack.c.l.b16 %v486
        %v1829 = vunpack.c.h.b16 %v486
        %v1830 = vunpack.c.l.b16 %v487
        %v1831 = vunpack.c.h.b16 %v487
        %v1832 = vunpack.c.l.b16 %v488
        %v1833 = vunpack.c.h.b16 %v488
        %v1834 = vunpack.c.l.b16 %v489
        %v1835 = vunpack.c.h.b16 %v489
        %v1836 = vunpack.c.l.b16 %v490
        %v1837 = vunpack.c.h.b16 %v490
        %v1838 = vunpack.c.l.b16 %v491
        %v1839 = vunpack.c.h.b16 %v491
        %v1840 = vunpack.c.l.b16 %v492
        %v1841 = vunpack.c.h.b16 %v492
        %v1842 = vunpack.c.l.b16 %v493
        %v1843 = vunpack.c.h.b16 %v493
        %v1844 = vunpack.c.l.b16 %v494
        %v1845 = vunpack.c.h.b16 %v494
        %v1846 = vunpack.c.l.b16 %v495
        %v1847 = vunpack.c.h.b16 %v495
        %v1848 = vunpack.c.l.b16 %v496
        %v1849 = vunpack.c.h.b16 %v496
        %v1850 = vunpack.c.l.b16 %v497
        %v1851 = vunpack.c.h.b16 %v497
        %v1852 = vunpack.c.l.b16 %v498
        %v1853 = vunpack.c.h.b16 %v498
        %v1854 = vunpack.c.l.b16 %v499
        %v1855 = vunpack.c.h.b16 %v499
        %v1856 = vunpack.c.l.b16 %v500
        %v1857 = vunpack.c.h.b16 %v500
        %v1858 = vunpack.c.l.b16 %v501
        %v1859 = vunpack.c.h.b16 %v501
        %v1860 = vunpack.c.l.b16 %v502
        %v1861 = vunpack.c.h.b16 %v502
        %v1862 = vunpack.c.l.b16 %v503
        %v1863 = vunpack.c.h.b16 %v503
        %v1864 = vunpack.c.l.b16 %v504
        %v1865 = vunpack.c.h.b16 %v504
        %v1866 = vunpack.c.l.b16 %v505
        %v1867 = vunpack.c.h.b16 %v505
        %v1868 = vunpack.c.l.b16 %v506
        %v1869 = vunpack.c.h.b16 %v506
        %v1870 = vunpack.c.l.b16 %v507
        %v1871 = vunpack.c.h.b16 %v507
        %v1872 = vunpack.c.l.b16 %v508
        %v1873 = vunpack.c.h.b16 %v508
        %v1874 = vunpack.c.l.b16 %v509
        %v1875 = vunpack.c.h.b16 %v509
        %v1876 = vunpack.c.l.b16 %v510
        %v1877 = vunpack.c.h.b16 %v510
        %v1878 = vunpack.c.l.b16 %v511
        %v1879 = vunpack.c.h.b16 %v511
        %v1880 = vunpack.c.l.b16 %v512
        %v1881 = vunpack.c.h.b16 %v512
        %v1882 = vunpack.c.l.b16 %v513
        %v1883 = vunpack.c.h.b16 %v513
        %v1884 = vunpack.c.l.b16 %v514
        %v1885 = vunpack.c.h.b16 %v514
        %v1886 = vunpack.c.l.b16 %v515
        %v1887 = vunpack.c.h.b16 %v515
        %v1888 = vunpack.c.l.b16 %v516
        %v1889 = vunpack.c.h.b16 %v516
        %v1890 = vunpack.c.l.b16 %v517
        %v1891 = vunpack.c.h.b16 %v517
        %v1892 = vunpack.c.l.b16 %v518
        %v1893 = vunpack.c.h.b16 %v518
        %v1894 = vunpack.c.l.b16 %v519
        %v1895 = vunpack.c.h.b16 %v519
        %v1896 = vunpack.c.l.b16 %v520
        %v1897 = vunpack.c.h.b16 %v520
        %v1898 = vunpack.c.l.b16 %v521
        %v1899 = vunpack.c.h.b16 %v521
        %v1900 = vunpack.c.l.b16 %v522
        %v1901 = vunpack.c.h.b16 %v522
        %v1902 = vunpack.c.l.b16 %v523
        %v1903 = vunpack.c.h.b16 %v523
        %v1904 = vunpack.c.l.b16 %v524
        %v1905 = vunpack.c.h.b16 %v524
        %v1906 = vunpack.c.l.b16 %v525
        %v1907 = vunpack.c.h.b16 %v525
        %v1908 = vunpack.c.l.b16 %v526
        %v1909 = vunpack.c.h.b16 %v526
        %v1910 = vunpack.c.l.b16 %v527
        %v1911 = vunpack.c.h.b16 %v527
        %v1912 = vunpack.c.l.b16 %v528
        %v1913 = vunpack.c.h.b16 %v528
        %v1914 = vunpack.c.l.b16 %v529
        %v1915 = vunpack.c.h.b16 %v529
        %v1916 = vunpack.c.l.b16 %v530
        %v1917 = vunpack.c.h.b16 %v530
        %v1918 = vunpack.c.l.b16 %v531
        %v1919 = vunpack.c.h.b16 %v531
        %v1920 = vunpack.c.l.b16 %v532
        %v1921 = vunpack.c.h.b16 %v532
        %v1922 = vunpack.c.l.b16 %v533
        %v1923 = vunpack.c.h.b16 %v533
        %v1924 = vunpack.c.l.b16 %v534
        %v1925 = vunpack.c.h.b16 %v534
        %v1926 = vunpack.c.l.b16 %v535
        %v1927 = vunpack.c.h.b16 %v535
        %v1928 = vunpack.c.l.b16 %v536
        %v1929 = vunpack.c.h.b16 %v536
        %v1930 = vunpack.c.l.b16 %v537
        %v1931 = vunpack.c.h.b16 %v537
        %v1932 = vunpack.c.l.b16 %v538
        %v1933 = vunpack.c.h.b16 %v538
        %v1934 = vunpack.c.l.b16 %v539
        %v1935 = vunpack.c.h.b16 %v539
        %v1936 = vunpack.c.l.b16 %v540
        %v1937 = vunpack.c.h.b16 %v540
        %v1938 = vunpack.c.l.b16 %v541
        %v1939 = vunpack.c.h.b16 %v541
        %v1940 = vunpack.c.l.b16 %v542
        %v1941 = vunpack.c.h.b16 %v542
        %v1942 = vunpack.c.l.b16 %v543
        %v1943 = vunpack.c.h.b16 %v543
        %v1944 = vunpack.c.l.b16 %v544
        %v1945 = vunpack.c.h.b16 %v544
        %v1946 = vunpack.c.l.b16 %v545
        %v1947 = vunpack.c.h.b16 %v545
        %v1948 = vunpack.c.l.b16 %v546
        %v1949 = vunpack.c.h.b16 %v546
        %v1950 = vunpack.c.l.b16 %v547
        %v1951 = vunpack.c.h.b16 %v547
        %v1952 = vunpack.c.l.b16 %v548
        %v1953 = vunpack.c.h.b16 %v548
        %v1954 = vunpack.c.l.b16 %v549
        %v1955 = vunpack.c.h.b16 %v549
        %v1956 = vunpack.c.l.b16 %v550
        %v1957 = vunpack.c.h.b16 %v550
        %v1958 = vunpack.c.l.b16 %v551
        %v1959 = vunpack.c.h.b16 %v551
        %v1960 = vunpack.c.l.b16 %v552
        %v1961 = vunpack.c.h.b16 %v552
        %v1962 = vunpack.c.l.b16 %v553
        %v1963 = vunpack.c.h.b16 %v553
        %v1964 = vunpack.c.l.b16 %v554
        %v1965 = vunpack.c.h.b16 %v554
        %v1966 = vunpack.c.l.b16 %v555
        %v1967 = vunpack.c.h.b16 %v555
        %v1968 = vunpack.c.l.b16 %v556
        %v1969 = vunpack.c.h.b16 %v556
        %v1970 = vunpack.c.l.b16 %v557
        %v1971 = vunpack.c.h.b16 %v557
        %v1972 = vunpack.c.l.b16 %v558
        %v1973 = vunpack.c.h.b16 %v558
        %v1974 = vunpack.c.l.b16 %v559
        %v1975 = vunpack.c.h.b16 %v559
        %v1976 = vunpack.c.l.b16 %v560
        %v1977 = vunpack.c.h.b16 %v560
        %v1978 = vunpack.c.l.b16 %v561
        %v1979 = vunpack.c.h.b16 %v561
        %v1980 = vunpack.c.l.b16 %v562
        %v1981 = vunpack.c.h.b16 %v562
        %v1982 = vunpack.c.l.b16 %v563
        %v1983 = vunpack.c.h.b16 %v563
        %v1984 = vunpack.c.l.b16 %v564
        %v1985 = vunpack.c.h.b16 %v564
        %v1986 = vunpack.c.l.b16 %v565
        %v1987 = vunpack.c.h.b16 %v565
        %v1988 = vunpack.c.l.b16 %v566
        %v1989 = vunpack.c.h.b16 %v566
        %v1990 = vunpack.c.l.b16 %v567
        %v1991 = vunpack.c.h.b16 %v567
        %v1992 = vunpack.c.l.b16 %v568
        %v1993 = vunpack.c.h.b16 %v568
        %v1994 = vunpack.c.l.b16 %v569
        %v1995 = vunpack.c.h.b16 %v569
        %v1996 = vunpack.c.l.b16 %v570
        %v1997 = vunpack.c.h.b16 %v570
        %v1998 = vunpack.c.l.b16 %v571
        %v1999 = vunpack.c.h.b16 %v571
        %v2000 = vunpack.c.l.b16 %v572
        %v2001 = vunpack.c.h.b16 %v572
        %v2002 = vunpack.c.l.b16 %v573
        %v2003 = vunpack.c.h.b16 %v573
        %v2004 = vunpack.c.l.b16 %v574
        %v2005 = vunpack.c.h.b16 %v574
        %v2006 = vunpack.c.l.b16 %v575
        %v2007 = vunpack.c.h.b16 %v575
        %v2008 = vunpack.c.l.b16 %v576
        %v2009 = vunpack.c.h.b16 %v576
        %v2010 = vunpack.c.l.b16 %v577
        %v2011 = vunpack.c.h.b16 %v577
        %v2012 = vunpack.c.l.b16 %v578
        %v2013 = vunpack.c.h.b16 %v578
        %v2014 = vunpack.c.l.b16 %v579
        %v2015 = vunpack.c.h.b16 %v579
        %v2016 = vunpack.c.l.b16 %v580
        %v2017 = vunpack.c.h.b16 %v580
        %v2018 = vunpack.c.l.b16 %v581
        %v2019 = vunpack.c.h.b16 %v581
        %v2020 = vunpack.c.l.b16 %v582
        %v2021 = vunpack.c.h.b16 %v582
        %v2022 = vunpack.c.l.b16 %v583
        %v2023 = vunpack.c.h.b16 %v583
        %v2024 = vunpack.c.l.b16 %v584
        %v2025 = vunpack.c.h.b16 %v584
        %v2026 = vunpack.c.l.b16 %v585
        %v2027 = vunpack.c.h.b16 %v585
        %v2028 = vunpack.c.l.b16 %v586
        %v2029 = vunpack.c.h.b16 %v586
        %v2030 = vunpack.c.l.b16 %v587
        %v2031 = vunpack.c.h.b16 %v587
        %v2032 = vunpack.c.l.b16 %v588
        %v2033 = vunpack.c.h.b16 %v588
        %v2034 = vunpack.c.l.b16 %v589
        %v2035 = vunpack.c.h.b16 %v589
        %v2036 = vunpack.c.l.b16 %v590
        %v2037 = vunpack.c.h.b16 %v590
        %v2038 = vunpack.c.l.b16 %v591
        %v2039 = vunpack.c.h.b16 %v591
        %v2040 = vunpack.c.l.b16 %v592
        %v2041 = vunpack.c.h.b16 %v592
        %v2042 = vunpack.c.l.b16 %v593
        %v2043 = vunpack.c.h.b16 %v593
        %v2044 = vunpack.c.l.b16 %v594
        %v2045 = vunpack.c.h.b16 %v594
        %v2046 = vunpack.c.l.b16 %v595
        %v2047 = vunpack.c.h.b16 %v595
        %v2048 = vunpack.c.l.b16 %v596
        %v2049 = vunpack.c.h.b16 %v596
        %v2050 = vunpack.c.l.b16 %v597
        %v2051 = vunpack.c.h.b16 %v597
        %v2052 = vunpack.c.l.b16 %v598
        %v2053 = vunpack.c.h.b16 %v598
        %v2054 = vunpack.c.l.b16 %v599
        %v2055 = vunpack.c.h.b16 %v599
        %v2056 = vunpack.c.l.b16 %v600
        %v2057 = vunpack.c.h.b16 %v600
        %v2058 = vunpack.c.l.b16 %v601
        %v2059 = vunpack.c.h.b16 %v601
        %v2060 = vunpack.c.l.b16 %v602
        %v2061 = vunpack.c.h.b16 %v602
        %v2062 = vunpack.c.l.b16 %v603
        %v2063 = vunpack.c.h.b16 %v603
        %v2064 = vunpack.c.l.b16 %v604
        %v2065 = vunpack.c.h.b16 %v604
        %v2066 = vunpack.c.l.b16 %v605
        %v2067 = vunpack.c.h.b16 %v605
        %v2068 = vunpack.c.l.b16 %v606
        %v2069 = vunpack.c.h.b16 %v606
        %v2070 = vunpack.c.l.b16 %v607
        %v2071 = vunpack.c.h.b16 %v607
        %v2072 = vunpack.c.l.b16 %v608
        %v2073 = vunpack.c.h.b16 %v608
        %v2074 = vunpack.c.l.b16 %v609
        %v2075 = vunpack.c.h.b16 %v609
        %v2076 = vunpack.c.l.b16 %v610
        %v2077 = vunpack.c.h.b16 %v610
        %v2078 = vunpack.c.l.b16 %v611
        %v2079 = vunpack.c.h.b16 %v611
        %v2080 = vunpack.c.l.b16 %v612
        %v2081 = vunpack.c.h.b16 %v612
        %v2082 = vunpack.c.l.b16 %v613
        %v2083 = vunpack.c.h.b16 %v613
        %v2084 = vunpack.c.l.b16 %v614
        %v2085 = vunpack.c.h.b16 %v614
        %v2086 = vunpack.c.l.b16 %v615
        %v2087 = vunpack.c.h.b16 %v615
        %v2088 = vunpack.c.l.b16 %v616
        %v2089 = vunpack.c.h.b16 %v616
        %v2090 = vunpack.c.l.b16 %v617
        %v2091 = vunpack.c.h.b16 %v617
        %v2092 = vunpack.c.l.b16 %v618
        %v2093 = vunpack.c.h.b16 %v618
        %v2094 = vunpack.c.l.b16 %v619
        %v2095 = vunpack.c.h.b16 %v619
        %v2096 = vunpack.c.l.b16 %v620
        %v2097 = vunpack.c.h.b16 %v620
        %v2098 = vunpack.c.l.b16 %v621
        %v2099 = vunpack.c.h.b16 %v621
        %v2100 = vunpack.c.l.b16 %v622
        %v2101 = vunpack.c.h.b16 %v622
        %v2102 = vunpack.c.l.b16 %v623
        %v2103 = vunpack.c.h.b16 %v623
        %v2104 = vunpack.c.l.b16 %v624
        %v2105 = vunpack.c.h.b16 %v624
        %v2106 = vunpack.c.l.b16 %v625
        %v2107 = vunpack.c.h.b16 %v625
        %v2108 = vunpack.c.l.b16 %v626
        %v2109 = vunpack.c.h.b16 %v626
        %v2110 = vunpack.c.l.b16 %v627
        %v2111 = vunpack.c.h.b16 %v627
        %v2112 = vunpack.c.l.b16 %v628
        %v2113 = vunpack.c.h.b16 %v628
        %v2114 = vunpack.c.l.b16 %v629
        %v2115 = vunpack.c.h.b16 %v629
        %v2116 = vunpack.c.l.b16 %v630
        %v2117 = vunpack.c.h.b16 %v630
        %v2118 = vunpack.c.l.b16 %v631
        %v2119 = vunpack.c.h.b16 %v631
        %v2120 = vunpack.c.l.b16 %v632
        %v2121 = vunpack.c.h.b16 %v632
        %v2122 = vunpack.c.l.b16 %v633
        %v2123 = vunpack.c.h.b16 %v633
        %v2124 = vunpack.c.l.b16 %v634
        %v2125 = vunpack.c.h.b16 %v634
        %v2126 = vunpack.c.l.b16 %v635
        %v2127 = vunpack.c.h.b16 %v635
        %v2128 = vunpack.c.l.b16 %v636
        %v2129 = vunpack.c.h.b16 %v636
        %v2130 = vunpack.c.l.b16 %v637
        %v2131 = vunpack.c.h.b16 %v637
        %v2132 = vunpack.c.l.b16 %v638
        %v2133 = vunpack.c.h.b16 %v638
        %v2134 = vunpack.c.l.b16 %v639
        %v2135 = vunpack.c.h.b16 %v639
        %v2136 = vunpack.c.l.b16 %v640
        %v2137 = vunpack.c.h.b16 %v640
        %v2138 = vunpack.c.l.b16 %v641
        %v2139 = vunpack.c.h.b16 %v641
        %v2140 = vunpack.c.l.b16 %v642
        %v2141 = vunpack.c.h.b16 %v642
        %v2142 = vunpack.c.l.b16 %v643
        %v2143 = vunpack.c.h.b16 %v643
        %v2144 = vunpack.c.l.b16 %v644
        %v2145 = vunpack.c.h.b16 %v644
        %v2146 = vunpack.c.l.b16 %v645
        %v2147 = vunpack.c.h.b16 %v645
        %v2148 = vunpack.c.l.b16 %v646
        %v2149 = vunpack.c.h.b16 %v646
        %v2150 = vunpack.c.l.b16 %v647
        %v2151 = vunpack.c.h.b16 %v647
        %v2152 = vunpack.c.l.b16 %v648
        %v2153 = vunpack.c.h.b16 %v648
        %v2154 = vunpack.c.l.b16 %v649
        %v2155 = vunpack.c.h.b16 %v649
        %v2156 = vunpack.c.l.b16 %v650
        %v2157 = vunpack.c.h.b16 %v650
        %v2158 = vunpack.c.l.b16 %v651
        %v2159 = vunpack.c.h.b16 %v651
        %v2160 = vunpack.c.l.b16 %v652
        %v2161 = vunpack.c.h.b16 %v652
        %v2162 = vunpack.c.l.b16 %v653
        %v2163 = vunpack.c.h.b16 %v653
        %v2164 = vunpack.c.l.b16 %v654
        %v2165 = vunpack.c.h.b16 %v654
        %v2166 = vunpack.c.l.b16 %v655
        %v2167 = vunpack.c.h.b16 %v655
        %v2168 = vunpack.c.l.b16 %v656
        %v2169 = vunpack.c.h.b16 %v656
        %v2170 = vunpack.c.l.b16 %v657
        %v2171 = vunpack.c.h.b16 %v657
        %v2172 = vunpack.c.l.b16 %v658
        %v2173 = vunpack.c.h.b16 %v658
        %v2174 = vunpack.c.l.b16 %v659
        %v2175 = vunpack.c.h.b16 %v659
        %v2176 = vunpack.c.l.b16 %v660
        %v2177 = vunpack.c.h.b16 %v660
        %v2178 = vunpack.c.l.b16 %v661
        %v2179 = vunpack.c.h.b16 %v661
        %v2180 = vunpack.c.l.b16 %v662
        %v2181 = vunpack.c.h.b16 %v662
        %v2182 = vunpack.c.l.b16 %v663
        %v2183 = vunpack.c.h.b16 %v663
        %v2184 = vunpack.c.l.b16 %v664
        %v2185 = vunpack.c.h.b16 %v664
        %v2186 = vunpack.c.l.b16 %v665
        %v2187 = vunpack.c.h.b16 %v665
        %v2188 = vunpack.c.l.b16 %v666
        %v2189 = vunpack.c.h.b16 %v666
        %v2190 = vunpack.c.l.b16 %v667
        %v2191 = vunpack.c.h.b16 %v667
        %v2192 = vunpack.c.l.b16 %v668
        %v2193 = vunpack.c.h.b16 %v668
        %v2194 = vunpack.c.l.b16 %v669
        %v2195 = vunpack.c.h.b16 %v669
        %v2196 = vunpack.c.l.b16 %v670
        %v2197 = vunpack.c.h.b16 %v670
        %v2198 = vunpack.c.l.b16 %v671
        %v2199 = vunpack.c.h.b16 %v671
        %v2200 = vunpack.c.l.b16 %v672
        %v2201 = vunpack.c.h.b16 %v672
        %v2202 = vunpack.c.l.b16 %v673
        %v2203 = vunpack.c.h.b16 %v673
        %v2204 = vunpack.c.l.b16 %v674
        %v2205 = vunpack.c.h.b16 %v674
        %v2206 = vunpack.c.l.b16 %v675
        %v2207 = vunpack.c.h.b16 %v675
        %v2208 = vunpack.c.l.b16 %v676
        %v2209 = vunpack.c.h.b16 %v676
        %v2210 = vunpack.c.l.b16 %v677
        %v2211 = vunpack.c.h.b16 %v677
        %v2212 = vunpack.c.l.b16 %v678
        %v2213 = vunpack.c.h.b16 %v678
        %v2214 = vunpack.c.l.b16 %v679
        %v2215 = vunpack.c.h.b16 %v679
        %v2216 = vunpack.c.l.b16 %v680
        %v2217 = vunpack.c.h.b16 %v680
        %v2218 = vunpack.c.l.b16 %v681
        %v2219 = vunpack.c.h.b16 %v681
        %v2220 = vunpack.c.l.b16 %v682
        %v2221 = vunpack.c.h.b16 %v682
        %v2222 = vunpack.c.l.b16 %v683
        %v2223 = vunpack.c.h.b16 %v683
        %v2224 = vunpack.c.l.b16 %v684
        %v2225 = vunpack.c.h.b16 %v684
        %v2226 = vunpack.c.l.b16 %v685
        %v2227 = vunpack.c.h.b16 %v685
        %v2228 = vunpack.c.l.b16 %v686
        %v2229 = vunpack.c.h.b16 %v686
        %v2230 = vunpack.c.l.b16 %v687
        %v2231 = vunpack.c.h.b16 %v687
        %v2232 = vunpack.c.l.b16 %v688
        %v2233 = vunpack.c.h.b16 %v688
        %v2234 = vunpack.c.l.b16 %v689
        %v2235 = vunpack.c.h.b16 %v689
        %v2236 = vunpack.c.l.b16 %v690
        %v2237 = vunpack.c.h.b16 %v690
        %v2238 = vunpack.c.l.b16 %v691
        %v2239 = vunpack.c.h.b16 %v691
        %v2240 = vunpack.c.l.b16 %v692
        %v2241 = vunpack.c.h.b16 %v692
        %v2242 = vunpack.c.l.b16 %v693
        %v2243 = vunpack.c.h.b16 %v693
        %v2244 = vunpack.c.l.b16 %v694
        %v2245 = vunpack.c.h.b16 %v694
        %v2246 = vunpack.c.l.b16 %v695
        %v2247 = vunpack.c.h.b16 %v695
        %v2248 = vunpack.c.l.b16 %v696
        %v2249 = vunpack.c.h.b16 %v696
        %v2250 = vunpack.c.l.b16 %v697
        %v2251 = vunpack.c.h.b16 %v697
        %v2252 = vunpack.c.l.b16 %v698
        %v2253 = vunpack.c.h.b16 %v698
        %v2254 = vunpack.c.l.b16 %v699
        %v2255 = vunpack.c.h.b16 %v699
        %v2256 = vunpack.c.l.b16 %v700
        %v2257 = vunpack.c.h.b16 %v700
        %v2258 = vunpack.c.l.b16 %v701
        %v2259 = vunpack.c.h.b16 %v701
        %v2260 = vunpack.c.l.b16 %v702
        %v2261 = vunpack.c.h.b16 %v702
        %v2262 = vunpack.c.l.b16 %v703
        %v2263 = vunpack.c.h.b16 %v703
        %v2264 = vunpack.c.l.b16 %v704
        %v2265 = vunpack.c.h.b16 %v704
        %v2266 = vunpack.c.l.b16 %v705
        %v2267 = vunpack.c.h.b16 %v705
        %v2268 = vunpack.c.l.b16 %v706
        %v2269 = vunpack.c.h.b16 %v706
        %v2270 = vunpack.c.l.b16 %v707
        %v2271 = vunpack.c.h.b16 %v707
        %v2272 = vunpack.c.l.b16 %v708
        %v2273 = vunpack.c.h.b16 %v708
        %v2274 = vunpack.c.l.b16 %v709
        %v2275 = vunpack.c.h.b16 %v709
        %v2276 = vunpack.c.l.b16 %v710
        %v2277 = vunpack.c.h.b16 %v710
        %v2278 = vunpack.c.l.b16 %v711
        %v2279 = vunpack.c.h.b16 %v711
        %v2280 = vunpack.c.l.b16 %v712
        %v2281 = vunpack.c.h.b16 %v712
        %v2282 = vunpack.c.l.b16 %v713
        %v2283 = vunpack.c.h.b16 %v713
        %v2284 = vunpack.c.l.b16 %v714
        %v2285 = vunpack.c.h.b16 %v714
        %v2286 = vunpack.c.l.b16 %v715
        %v2287 = vunpack.c.h.b16 %v715
        %v2288 = vunpack.c.l.b16 %v716
        %v2289 = vunpack.c.h.b16 %v716
        %v2290 = vunpack.c.l.b16 %v717
        %v2291 = vunpack.c.h.b16 %v717
        %v2292 = vunpack.c.l.b16 %v718
        %v2293 = vunpack.c.h.b16 %v718
        %v2294 = vunpack.c.l.b16 %v719
        %v2295 = vunpack.c.h.b16 %v719
        %v2296 = vpack.c.b16 %v1288, %v1272
        %v2297 = vpack.c.b16 %v1289, %v1273
        %v2298 = vpack.c.b16 %v1290, %v1274
        %v2299 = vpack.c.b16 %v1291, %v1275
        %v2300 = vpack.c.b16 %v1292, %v1276
        %v2301 = vpack.c.b16 %v1293, %v1277
        %v2302 = vpack.c.b16 %v1294, %v1278
        %v2303 = vpack.c.b16 %v1295, %v1279
        %v2304 = vpack.c.b16 %v1296, %v1280
        %v2305 = vpack.c.b16 %v1297, %v1281
        %v2306 = vpack.c.b16 %v1298, %v1282
        %v2307 = vpack.c.b16 %v1299, %v1283
        %v2308 = vpack.c.b16 %v1300, %v1284
        %v2309 = vpack.c.b16 %v1301, %v1285
        %v2310 = vpack.c.b16 %v1302, %v1286
        %v2311 = vpack.c.b16 %v1303, %v1287
        %v2312 = vpack.c.b16 %v1320, %v1304
        %v2313 = vpack.c.b16 %v1321, %v1305
        %v2314 = vpack.c.b16 %v1322, %v1306
        %v2315 = vpack.c.b16 %v1323, %v1307
        %v2316 = vpack.c.b16 %v1324, %v1308
        %v2317 = vpack.c.b16 %v1325, %v1309
        %v2318 = vpack.c.b16 %v1326, %v1310
        %v2319 = vpack.c.b16 %v1327, %v1311
        %v2320 = vpack.c.b16 %v1328, %v1312
        %v2321 = vpack.c.b16 %v1329, %v1313
        %v2322 = vpack.c.b16 %v1330, %v1314
        %v2323 = vpack.c.b16 %v1331, %v1315
        %v2324 = vpack.c.b16 %v1332, %v1316
        %v2325 = vpack.c.b16 %v1333, %v1317
        %v2326 = vpack.c.b16 %v1334, %v1318
        %v2327 = vpack.c.b16 %v1335, %v1319
        %v2328 = vpack.c.b16 %v1352, %v1336
        %v2329 = vpack.c.b16 %v1353, %v1337
        %v2330 = vpack.c.b16 %v1354, %v1338
        %v2331 = vpack.c.b16 %v1355, %v1339
        %v2332 = vpack.c.b16 %v1356, %v1340
        %v2333 = vpack.c.b16 %v1357, %v1341
        %v2334 = vpack.c.b16 %v1358, %v1342
        %v2335 = vpack.c.b16 %v1359, %v1343
        %v2336 = vpack.c.b16 %v1360, %v1344
        %v2337 = vpack.c.b16 %v1361, %v1345
        %v2338 = vpack.c.b16 %v1362, %v1346
        %v2339 = vpack.c.b16 %v1363, %v1347
        %v2340 = vpack.c.b16 %v1364, %v1348
        %v2341 = vpack.c.b16 %v1365, %v1349
        %v2342 = vpack.c.b16 %v1366, %v1350
        %v2343 = vpack.c.b16 %v1367, %v1351
        %v2344 = vpack.c.b16 %v1384, %v1368
        %v2345 = vpack.c.b16 %v1385, %v1369
        %v2346 = vpack.c.b16 %v1386, %v1370
        %v2347 = vpack.c.b16 %v1387, %v1371
        %v2348 = vpack.c.b16 %v1388, %v1372
        %v2349 = vpack.c.b16 %v1389, %v1373
        %v2350 = vpack.c.b16 %v1390, %v1374
        %v2351 = vpack.c.b16 %v1391, %v1375
        %v2352 = vpack.c.b16 %v1392, %v1376
        %v2353 = vpack.c.b16 %v1393, %v1377
        %v2354 = vpack.c.b16 %v1394, %v1378
        %v2355 = vpack.c.b16 %v1395, %v1379
        %v2356 = vpack.c.b16 %v1396, %v1380
        %v2357 = vpack.c.b16 %v1397, %v1381
        %v2358 = vpack.c.b16 %v1398, %v1382
        %v2359 = vpack.c.b16 %v1399, %v1383
        %v2360 = vpack.c.b16 %v1416, %v1400
        %v2361 = vpack.c.b16 %v1417, %v1401
        %v2362 = vpack.c.b16 %v1418, %v1402
        %v2363 = vpack.c.b16 %v1419, %v1403
        %v2364 = vpack.c.b16 %v1420, %v1404
        %v2365 = vpack.c.b16 %v1421, %v1405
        %v2366 = vpack.c.b16 %v1422, %v1406
        %v2367 = vpack.c.b16 %v1423, %v1407
        %v2368 = vpack.c.b16 %v1424, %v1408
        %v2369 = vpack.c.b16 %v1425, %v1409
        %v2370 = vpack.c.b16 %v1426, %v1410
        %v2371 = vpack.c.b16 %v1427, %v1411
        %v2372 = vpack.c.b16 %v1428, %v1412
        %v2373 = vpack.c.b16 %v1429, %v1413
        %v2374 = vpack.c.b16 %v1430, %v1414
        %v2375 = vpack.c.b16 %v1431, %v1415
        %v2376 = vpack.c.b16 %v1448, %v1432
        %v2377 = vpack.c.b16 %v1449, %v1433
        %v2378 = vpack.c.b16 %v1450, %v1434
        %v2379 = vpack.c.b16 %v1451, %v1435
        %v2380 = vpack.c.b16 %v1452, %v1436
        %v2381 = vpack.c.b16 %v1453, %v1437
        %v2382 = vpack.c.b16 %v1454, %v1438
        %v2383 = vpack.c.b16 %v1455, %v1439
        %v2384 = vpack.c.b16 %v1456, %v1440
        %v2385 = vpack.c.b16 %v1457, %v1441
        %v2386 = vpack.c.b16 %v1458, %v1442
        %v2387 = vpack.c.b16 %v1459, %v1443
        %v2388 = vpack.c.b16 %v1460, %v1444
        %v2389 = vpack.c.b16 %v1461, %v1445
        %v2390 = vpack.c.b16 %v1462, %v1446
        %v2391 = vpack.c.b16 %v1463, %v1447
        %v2392 = vpack.c.b16 %v1480, %v1464
        %v2393 = vpack.c.b16 %v1481, %v1465
        %v2394 = vpack.c.b16 %v1482, %v1466
        %v2395 = vpack.c.b16 %v1483, %v1467
        %v2396 = vpack.c.b16 %v1484, %v1468
        %v2397 = vpack.c.b16 %v1485, %v1469
        %v2398 = vpack.c.b16 %v1486, %v1470
        %v2399 = vpack.c.b16 %v1487, %v1471
        %v2400 = vpack.c.b16 %v1488, %v1472
        %v2401 = vpack.c.b16 %v1489, %v1473
        %v2402 = vpack.c.b16 %v1490, %v1474
        %v2403 = vpack.c.b16 %v1491, %v1475
        %v2404 = vpack.c.b16 %v1492, %v1476
        %v2405 = vpack.c.b16 %v1493, %v1477
        %v2406 = vpack.c.b16 %v1494, %v1478
        %v2407 = vpack.c.b16 %v1495, %v1479
        %v2408 = vpack.c.b16 %v1512, %v1496
        %v2409 = vpack.c.b16 %v1513, %v1497
        %v2410 = vpack.c.b16 %v1514, %v1498
        %v2411 = vpack.c.b16 %v1515, %v1499
        %v2412 = vpack.c.b16 %v1516, %v1500
        %v2413 = vpack.c.b16 %v1517, %v1501
        %v2414 = vpack.c.b16 %v1518, %v1502
        %v2415 = vpack.c.b16 %v1519, %v1503
        %v2416 = vpack.c.b16 %v1520, %v1504
        %v2417 = vpack.c.b16 %v1521, %v1505
        %v2418 = vpack.c.b16 %v1522, %v1506
        %v2419 = vpack.c.b16 %v1523, %v1507
        %v2420 = vpack.c.b16 %v1524, %v1508
        %v2421 = vpack.c.b16 %v1525, %v1509
        %v2422 = vpack.c.b16 %v1526, %v1510
        %v2423 = vpack.c.b16 %v1527, %v1511
        %v2424 = vpack.c.b16 %v1544, %v1528
        %v2425 = vpack.c.b16 %v1545, %v1529
        %v2426 = vpack.c.b16 %v1546, %v1530
        %v2427 = vpack.c.b16 %v1547, %v1531
        %v2428 = vpack.c.b16 %v1548, %v1532
        %v2429 = vpack.c.b16 %v1549, %v1533
        %v2430 = vpack.c.b16 %v1550, %v1534
        %v2431 = vpack.c.b16 %v1551, %v1535
        %v2432 = vpack.c.b16 %v1552, %v1536
        %v2433 = vpack.c.b16 %v1553, %v1537
        %v2434 = vpack.c.b16 %v1554, %v1538
        %v2435 = vpack.c.b16 %v1555, %v1539
        %v2436 = vpack.c.b16 %v1556, %v1540
        %v2437 = vpack.c.b16 %v1557, %v1541
        %v2438 = vpack.c.b16 %v1558, %v1542
        %v2439 = vpack.c.b16 %v1559, %v1543
        %v2440 = vpack.c.b16 %v1576, %v1560
        %v2441 = vpack.c.b16 %v1577, %v1561
        %v2442 = vpack.c.b16 %v1578, %v1562
        %v2443 = vpack.c.b16 %v1579, %v1563
        %v2444 = vpack.c.b16 %v1580, %v1564
        %v2445 = vpack.c.b16 %v1581, %v1565
        %v2446 = vpack.c.b16 %v1582, %v1566
        %v2447 = vpack.c.b16 %v1583, %v1567
        %v2448 = vpack.c.b16 %v1584, %v1568
        %v2449 = vpack.c.b16 %v1585, %v1569
        %v2450 = vpack.c.b16 %v1586, %v1570
        %v2451 = vpack.c.b16 %v1587, %v1571
        %v2452 = vpack.c.b16 %v1588, %v1572
        %v2453 = vpack.c.b16 %v1589, %v1573
        %v2454 = vpack.c.b16 %v1590, %v1574
        %v2455 = vpack.c.b16 %v1591, %v1575
        %v2456 = vpack.c.b16 %v1608, %v1592
        %v2457 = vpack.c.b16 %v1609, %v1593
        %v2458 = vpack.c.b16 %v1610, %v1594
        %v2459 = vpack.c.b16 %v1611, %v1595
        %v2460 = vpack.c.b16 %v1612, %v1596
        %v2461 = vpack.c.b16 %v1613, %v1597
        %v2462 = vpack.c.b16 %v1614, %v1598
        %v2463 = vpack.c.b16 %v1615, %v1599
        %v2464 = vpack.c.b16 %v1616, %v1600
        %v2465 = vpack.c.b16 %v1617, %v1601
        %v2466 = vpack.c.b16 %v1618, %v1602
        %v2467 = vpack.c.b16 %v1619, %v1603
        %v2468 = vpack.c.b16 %v1620, %v1604
        %v2469 = vpack.c.b16 %v1621, %v1605
        %v2470 = vpack.c.b16 %v1622, %v1606
        %v2471 = vpack.c.b16 %v1623, %v1607
        %v2472 = vpack.c.b16 %v1640, %v1624
        %v2473 = vpack.c.b16 %v1641, %v1625
        %v2474 = vpack.c.b16 %v1642, %v1626
        %v2475 = vpack.c.b16 %v1643, %v1627
        %v2476 = vpack.c.b16 %v1644, %v1628
        %v2477 = vpack.c.b16 %v1645, %v1629
        %v2478 = vpack.c.b16 %v1646, %v1630
        %v2479 = vpack.c.b16 %v1647, %v1631
        %v2480 = vpack.c.b16 %v1648, %v1632
        %v2481 = vpack.c.b16 %v1649, %v1633
        %v2482 = vpack.c.b16 %v1650, %v1634
        %v2483 = vpack.c.b16 %v1651, %v1635
        %v2484 = vpack.c.b16 %v1652, %v1636
        %v2485 = vpack.c.b16 %v1653, %v1637
        %v2486 = vpack.c.b16 %v1654, %v1638
        %v2487 = vpack.c.b16 %v1655, %v1639
        %v2488 = vpack.c.b16 %v1672, %v1656
        %v2489 = vpack.c.b16 %v1673, %v1657
        %v2490 = vpack.c.b16 %v1674, %v1658
        %v2491 = vpack.c.b16 %v1675, %v1659
        %v2492 = vpack.c.b16 %v1676, %v1660
        %v2493 = vpack.c.b16 %v1677, %v1661
        %v2494 = vpack.c.b16 %v1678, %v1662
        %v2495 = vpack.c.b16 %v1679, %v1663
        %v2496 = vpack.c.b16 %v1680, %v1664
        %v2497 = vpack.c.b16 %v1681, %v1665
        %v2498 = vpack.c.b16 %v1682, %v1666
        %v2499 = vpack.c.b16 %v1683, %v1667
        %v2500 = vpack.c.b16 %v1684, %v1668
        %v2501 = vpack.c.b16 %v1685, %v1669
        %v2502 = vpack.c.b16 %v1686, %v1670
        %v2503 = vpack.c.b16 %v1687, %v1671
        %v2504 = vpack.c.b16 %v1704, %v1688
        %v2505 = vpack.c.b16 %v1705, %v1689
        %v2506 = vpack.c.b16 %v1706, %v1690
        %v2507 = vpack.c.b16 %v1707, %v1691
        %v2508 = vpack.c.b16 %v1708, %v1692
        %v2509 = vpack.c.b16 %v1709, %v1693
        %v2510 = vpack.c.b16 %v1710, %v1694
        %v2511 = vpack.c.b16 %v1711, %v1695
        %v2512 = vpack.c.b16 %v1712, %v1696
        %v2513 = vpack.c.b16 %v1713, %v1697
        %v2514 = vpack.c.b16 %v1714, %v1698
        %v2515 = vpack.c.b16 %v1715, %v1699
        %v2516 = vpack.c.b16 %v1716, %v1700
        %v2517 = vpack.c.b16 %v1717, %v1701
        %v2518 = vpack.c.b16 %v1718, %v1702
        %v2519 = vpack.c.b16 %v1719, %v1703
        %v2520 = vpack.c.b16 %v1736, %v1720
        %v2521 = vpack.c.b16 %v1737, %v1721
        %v2522 = vpack.c.b16 %v1738, %v1722
        %v2523 = vpack.c.b16 %v1739, %v1723
        %v2524 = vpack.c.b16 %v1740, %v1724
        %v2525 = vpack.c.b16 %v1741, %v1725
        %v2526 = vpack.c.b16 %v1742, %v1726
        %v2527 = vpack.c.b16 %v1743, %v1727
        %v2528 = vpack.c.b16 %v1744, %v1728
        %v2529 = vpack.c.b16 %v1745, %v1729
        %v2530 = vpack.c.b16 %v1746, %v1730
        %v2531 = vpack.c.b16 %v1747, %v1731
        %v2532 = vpack.c.b16 %v1748, %v1732
        %v2533 = vpack.c.b16 %v1749, %v1733
        %v2534 = vpack.c.b16 %v1750, %v1734
        %v2535 = vpack.c.b16 %v1751, %v1735
        %v2536 = vpack.c.b16 %v1768, %v1752
        %v2537 = vpack.c.b16 %v1769, %v1753
        %v2538 = vpack.c.b16 %v1770, %v1754
        %v2539 = vpack.c.b16 %v1771, %v1755
        %v2540 = vpack.c.b16 %v1772, %v1756
        %v2541 = vpack.c.b16 %v1773, %v1757
        %v2542 = vpack.c.b16 %v1774, %v1758
        %v2543 = vpack.c.b16 %v1775, %v1759
        %v2544 = vpack.c.b16 %v1776, %v1760
        %v2545 = vpack.c.b16 %v1777, %v1761
        %v2546 = vpack.c.b16 %v1778, %v1762
        %v2547 = vpack.c.b16 %v1779, %v1763
        %v2548 = vpack.c.b16 %v1780, %v1764
        %v2549 = vpack.c.b16 %v1781, %v1765
        %v2550 = vpack.c.b16 %v1782, %v1766
        %v2551 = vpack.c.b16 %v1783, %v1767
        %v2552 = vpack.c.b16 %v1800, %v1784
        %v2553 = vpack.c.b16 %v1801, %v1785
        %v2554 = vpack.c.b16 %v1802, %v1786
        %v2555 = vpack.c.b16 %v1803, %v1787
        %v2556 = vpack.c.b16 %v1804, %v1788
        %v2557 = vpack.c.b16 %v1805, %v1789
        %v2558 = vpack.c.b16 %v1806, %v1790
        %v2559 = vpack.c.b16 %v1807, %v1791
        %v2560 = vpack.c.b16 %v1808, %v1792
        %v2561 = vpack.c.b16 %v1809, %v1793
        %v2562 = vpack.c.b16 %v1810, %v1794
        %v2563 = vpack.c.b16 %v1811, %v1795
        %v2564 = vpack.c.b16 %v1812, %v1796
        %v2565 = vpack.c.b16 %v1813, %v1797
        %v2566 = vpack.c.b16 %v1814, %v1798
        %v2567 = vpack.c.b16 %v1815, %v1799
        %v2568 = vpack.c.b16 %v1832, %v1816
        %v2569 = vpack.c.b16 %v1833, %v1817
        %v2570 = vpack.c.b16 %v1834, %v1818
        %v2571 = vpack.c.b16 %v1835, %v1819
        %v2572 = vpack.c.b16 %v1836, %v1820
        %v2573 = vpack.c.b16 %v1837, %v1821
        %v2574 = vpack.c.b16 %v1838, %v1822
        %v2575 = vpack.c.b16 %v1839, %v1823
        %v2576 = vpack.c.b16 %v1840, %v1824
        %v2577 = vpack.c.b16 %v1841, %v1825
        %v2578 = vpack.c.b16 %v1842, %v1826
        %v2579 = vpack.c.b16 %v1843, %v1827
        %v2580 = vpack.c.b16 %v1844, %v1828
        %v2581 = vpack.c.b16 %v1845, %v1829
        %v2582 = vpack.c.b16 %v1846, %v1830
        %v2583 = vpack.c.b16 %v1847, %v1831
        %v2584 = vpack.c.b16 %v1864, %v1848
        %v2585 = vpack.c.b16 %v1865, %v1849
        %v2586 = vpack.c.b16 %v1866, %v1850
        %v2587 = vpack.c.b16 %v1867, %v1851
        %v2588 = vpack.c.b16 %v1868, %v1852
        %v2589 = vpack.c.b16 %v1869, %v1853
        %v2590 = vpack.c.b16 %v1870, %v1854
        %v2591 = vpack.c.b16 %v1871, %v1855
        %v2592 = vpack.c.b16 %v1872, %v1856
        %v2593 = vpack.c.b16 %v1873, %v1857
        %v2594 = vpack.c.b16 %v1874, %v1858
        %v2595 = vpack.c.b16 %v1875, %v1859
        %v2596 = vpack.c.b16 %v1876, %v1860
        %v2597 = vpack.c.b16 %v1877, %v1861
        %v2598 = vpack.c.b16 %v1878, %v1862
        %v2599 = vpack.c.b16 %v1879, %v1863
        %v2600 = vpack.c.b16 %v1896, %v1880
        %v2601 = vpack.c.b16 %v1897, %v1881
        %v2602 = vpack.c.b16 %v1898, %v1882
        %v2603 = vpack.c.b16 %v1899, %v1883
        %v2604 = vpack.c.b16 %v1900, %v1884
        %v2605 = vpack.c.b16 %v1901, %v1885
        %v2606 = vpack.c.b16 %v1902, %v1886
        %v2607 = vpack.c.b16 %v1903, %v1887
        %v2608 = vpack.c.b16 %v1904, %v1888
        %v2609 = vpack.c.b16 %v1905, %v1889
        %v2610 = vpack.c.b16 %v1906, %v1890
        %v2611 = vpack.c.b16 %v1907, %v1891
        %v2612 = vpack.c.b16 %v1908, %v1892
        %v2613 = vpack.c.b16 %v1909, %v1893
        %v2614 = vpack.c.b16 %v1910, %v1894
        %v2615 = vpack.c.b16 %v1911, %v1895
        %v2616 = vpack.c.b16 %v1928, %v1912
        %v2617 = vpack.c.b16 %v1929, %v1913
        %v2618 = vpack.c.b16 %v1930, %v1914
        %v2619 = vpack.c.b16 %v1931, %v1915
        %v2620 = vpack.c.b16 %v1932, %v1916
        %v2621 = vpack.c.b16 %v1933, %v1917
        %v2622 = vpack.c.b16 %v1934, %v1918
        %v2623 = vpack.c.b16 %v1935, %v1919
        %v2624 = vpack.c.b16 %v1936, %v1920
        %v2625 = vpack.c.b16 %v1937, %v1921
        %v2626 = vpack.c.b16 %v1938, %v1922
        %v2627 = vpack.c.b16 %v1939, %v1923
        %v2628 = vpack.c.b16 %v1940, %v1924
        %v2629 = vpack.c.b16 %v1941, %v1925
        %v2630 = vpack.c.b16 %v1942, %v1926
        %v2631 = vpack.c.b16 %v1943, %v1927
        %v2632 = vpack.c.b16 %v1960, %v1944
        %v2633 = vpack.c.b16 %v1961, %v1945
        %v2634 = vpack.c.b16 %v1962, %v1946
        %v2635 = vpack.c.b16 %v1963, %v1947
        %v2636 = vpack.c.b16 %v1964, %v1948
        %v2637 = vpack.c.b16 %v1965, %v1949
        %v2638 = vpack.c.b16 %v1966, %v1950
        %v2639 = vpack.c.b16 %v1967, %v1951
        %v2640 = vpack.c.b16 %v1968, %v1952
        %v2641 = vpack.c.b16 %v1969, %v1953
        %v2642 = vpack.c.b16 %v1970, %v1954
        %v2643 = vpack.c.b16 %v1971, %v1955
        %v2644 = vpack.c.b16 %v1972, %v1956
        %v2645 = vpack.c.b16 %v1973, %v1957
        %v2646 = vpack.c.b16 %v1974, %v1958
        %v2647 = vpack.c.b16 %v1975, %v1959
        %v2648 = vpack.c.b16 %v1992, %v1976
        %v2649 = vpack.c.b16 %v1993, %v1977
        %v2650 = vpack.c.b16 %v1994, %v1978
        %v2651 = vpack.c.b16 %v1995, %v1979
        %v2652 = vpack.c.b16 %v1996, %v1980
        %v2653 = vpack.c.b16 %v1997, %v1981
        %v2654 = vpack.c.b16 %v1998, %v1982
        %v2655 = vpack.c.b16 %v1999, %v1983
        %v2656 = vpack.c.b16 %v2000, %v1984
        %v2657 = vpack.c.b16 %v2001, %v1985
        %v2658 = vpack.c.b16 %v2002, %v1986
        %v2659 = vpack.c.b16 %v2003, %v1987
        %v2660 = vpack.c.b16 %v2004, %v1988
        %v2661 = vpack.c.b16 %v2005, %v1989
        %v2662 = vpack.c.b16 %v2006, %v1990
        %v2663 = vpack.c.b16 %v2007, %v1991
        %v2664 = vpack.c.b16 %v2024, %v2008
        %v2665 = vpack.c.b16 %v2025, %v2009
        %v2666 = vpack.c.b16 %v2026, %v2010
        %v2667 = vpack.c.b16 %v2027, %v2011
        %v2668 = vpack.c.b16 %v2028, %v2012
        %v2669 = vpack.c.b16 %v2029, %v2013
        %v2670 = vpack.c.b16 %v2030, %v2014
        %v2671 = vpack.c.b16 %v2031, %v2015
        %v2672 = vpack.c.b16 %v2032, %v2016
        %v2673 = vpack.c.b16 %v2033, %v2017
        %v2674 = vpack.c.b16 %v2034, %v2018
        %v2675 = vpack.c.b16 %v2035, %v2019
        %v2676 = vpack.c.b16 %v2036, %v2020
        %v2677 = vpack.c.b16 %v2037, %v2021
        %v2678 = vpack.c.b16 %v2038, %v2022
        %v2679 = vpack.c.b16 %v2039, %v2023
        %v2680 = vpack.c.b16 %v2056, %v2040
        %v2681 = vpack.c.b16 %v2057, %v2041
        %v2682 = vpack.c.b16 %v2058, %v2042
        %v2683 = vpack.c.b16 %v2059, %v2043
        %v2684 = vpack.c.b16 %v2060, %v2044
        %v2685 = vpack.c.b16 %v2061, %v2045
        %v2686 = vpack.c.b16 %v2062, %v2046
        %v2687 = vpack.c.b16 %v2063, %v2047
        %v2688 = vpack.c.b16 %v2064, %v2048
        %v2689 = vpack.c.b16 %v2065, %v2049
        %v2690 = vpack.c.b16 %v2066, %v2050
        %v2691 = vpack.c.b16 %v2067, %v2051
        %v2692 = vpack.c.b16 %v2068, %v2052
        %v2693 = vpack.c.b16 %v2069, %v2053
        %v2694 = vpack.c.b16 %v2070, %v2054
        %v2695 = vpack.c.b16 %v2071, %v2055
        %v2696 = vpack.c.b16 %v2088, %v2072
        %v2697 = vpack.c.b16 %v2089, %v2073
        %v2698 = vpack.c.b16 %v2090, %v2074
        %v2699 = vpack.c.b16 %v2091, %v2075
        %v2700 = vpack.c.b16 %v2092, %v2076
        %v2701 = vpack.c.b16 %v2093, %v2077
        %v2702 = vpack.c.b16 %v2094, %v2078
        %v2703 = vpack.c.b16 %v2095, %v2079
        %v2704 = vpack.c.b16 %v2096, %v2080
        %v2705 = vpack.c.b16 %v2097, %v2081
        %v2706 = vpack.c.b16 %v2098, %v2082
        %v2707 = vpack.c.b16 %v2099, %v2083
        %v2708 = vpack.c.b16 %v2100, %v2084
        %v2709 = vpack.c.b16 %v2101, %v2085
        %v2710 = vpack.c.b16 %v2102, %v2086
        %v2711 = vpack.c.b16 %v2103, %v2087
        %v2712 = vpack.c.b16 %v2120, %v2104
        %v2713 = vpack.c.b16 %v2121, %v2105
        %v2714 = vpack.c.b16 %v2122, %v2106
        %v2715 = vpack.c.b16 %v2123, %v2107
        %v2716 = vpack.c.b16 %v2124, %v2108
        %v2717 = vpack.c.b16 %v2125, %v2109
        %v2718 = vpack.c.b16 %v2126, %v2110
        %v2719 = vpack.c.b16 %v2127, %v2111
        %v2720 = vpack.c.b16 %v2128, %v2112
        %v2721 = vpack.c.b16 %v2129, %v2113
        %v2722 = vpack.c.b16 %v2130, %v2114
        %v2723 = vpack.c.b16 %v2131, %v2115
        %v2724 = vpack.c.b16 %v2132, %v2116
        %v2725 = vpack.c.b16 %v2133, %v2117
        %v2726 = vpack.c.b16 %v2134, %v2118
        %v2727 = vpack.c.b16 %v2135, %v2119
        %v2728 = vpack.c.b16 %v2152, %v2136
        %v2729 = vpack.c.b16 %v2153, %v2137
        %v2730 = vpack.c.b16 %v2154, %v2138
        %v2731 = vpack.c.b16 %v2155, %v2139
        %v2732 = vpack.c.b16 %v2156, %v2140
        %v2733 = vpack.c.b16 %v2157, %v2141
        %v2734 = vpack.c.b16 %v2158, %v2142
        %v2735 = vpack.c.b16 %v2159, %v2143
        %v2736 = vpack.c.b16 %v2160, %v2144
        %v2737 = vpack.c.b16 %v2161, %v2145
        %v2738 = vpack.c.b16 %v2162, %v2146
        %v2739 = vpack.c.b16 %v2163, %v2147
        %v2740 = vpack.c.b16 %v2164, %v2148
        %v2741 = vpack.c.b16 %v2165, %v2149
        %v2742 = vpack.c.b16 %v2166, %v2150
        %v2743 = vpack.c.b16 %v2167, %v2151
        %v2744 = vpack.c.b16 %v2184, %v2168
        %v2745 = vpack.c.b16 %v2185, %v2169
        %v2746 = vpack.c.b16 %v2186, %v2170
        %v2747 = vpack.c.b16 %v2187, %v2171
        %v2748 = vpack.c.b16 %v2188, %v2172
        %v2749 = vpack.c.b16 %v2189, %v2173
        %v2750 = vpack.c.b16 %v2190, %v2174
        %v2751 = vpack.c.b16 %v2191, %v2175
        %v2752 = vpack.c.b16 %v2192, %v2176
        %v2753 = vpack.c.b16 %v2193, %v2177
        %v2754 = vpack.c.b16 %v2194, %v2178
        %v2755 = vpack.c.b16 %v2195, %v2179
        %v2756 = vpack.c.b16 %v2196, %v2180
        %v2757 = vpack.c.b16 %v2197, %v2181
        %v2758 = vpack.c.b16 %v2198, %v2182
        %v2759 = vpack.c.b16 %v2199, %v2183
        %v2760 = vpack.c.b16 %v2216, %v2200
        %v2761 = vpack.c.b16 %v2217, %v2201
        %v2762 = vpack.c.b16 %v2218, %v2202
        %v2763 = vpack.c.b16 %v2219, %v2203
        %v2764 = vpack.c.b16 %v2220, %v2204
        %v2765 = vpack.c.b16 %v2221, %v2205
        %v2766 = vpack.c.b16 %v2222, %v2206
        %v2767 = vpack.c.b16 %v2223, %v2207
        %v2768 = vpack.c.b16 %v2224, %v2208
        %v2769 = vpack.c.b16 %v2225, %v2209
        %v2770 = vpack.c.b16 %v2226, %v2210
        %v2771 = vpack.c.b16 %v2227, %v2211
        %v2772 = vpack.c.b16 %v2228, %v2212
        %v2773 = vpack.c.b16 %v2229, %v2213
        %v2774 = vpack.c.b16 %v2230, %v2214
        %v2775 = vpack.c.b16 %v2231, %v2215
        %v2776 = vpack.c.b16 %v2248, %v2232
        %v2777 = vpack.c.b16 %v2249, %v2233
        %v2778 = vpack.c.b16 %v2250, %v2234
        %v2779 = vpack.c.b16 %v2251, %v2235
        %v2780 = vpack.c.b16 %v2252, %v2236
        %v2781 = vpack.c.b16 %v2253, %v2237
        %v2782 = vpack.c.b16 %v2254, %v2238
        %v2783 = vpack.c.b16 %v2255, %v2239
        %v2784 = vpack.c.b16 %v2256, %v2240
        %v2785 = vpack.c.b16 %v2257, %v2241
        %v2786 = vpack.c.b16 %v2258, %v2242
        %v2787 = vpack.c.b16 %v2259, %v2243
        %v2788 = vpack.c.b16 %v2260, %v2244
        %v2789 = vpack.c.b16 %v2261, %v2245
        %v2790 = vpack.c.b16 %v2262, %v2246
        %v2791 = vpack.c.b16 %v2263, %v2247
        %v2792 = vpack.c.b16 %v2280, %v2264
        %v2793 = vpack.c.b16 %v2281, %v2265
        %v2794 = vpack.c.b16 %v2282, %v2266
        %v2795 = vpack.c.b16 %v2283, %v2267
        %v2796 = vpack.c.b16 %v2284, %v2268
        %v2797 = vpack.c.b16 %v2285, %v2269
        %v2798 = vpack.c.b16 %v2286, %v2270
        %v2799 = vpack.c.b16 %v2287, %v2271
        %v2800 = vpack.c.b16 %v2288, %v2272
        %v2801 = vpack.c.b16 %v2289, %v2273
        %v2802 = vpack.c.b16 %v2290, %v2274
        %v2803 = vpack.c.b16 %v2291, %v2275
        %v2804 = vpack.c.b16 %v2292, %v2276
        %v2805 = vpack.c.b16 %v2293, %v2277
        %v2806 = vpack.c.b16 %v2294, %v2278
        %v2807 = vpack.c.b16 %v2295, %v2279
        %3320 = vmatprep.subr.bf16.mxu0 %v2297
        %3321 = vmatpush1.bf16.msra.mxu0 %v2296
        %3322 = vmatprep.subr.bf16.mxu0 %v2313
        %3323 = vmatpush1.bf16.msra.mxu0 %v2312
        %3324 = vmatprep.subr.bf16.mxu0 %v2329
        %3325 = vmatpush1.bf16.msra.mxu0 %v2328
        %3326 = vmatprep.subr.bf16.mxu0 %v2345
        %3327 = vmatpush1.bf16.msra.mxu0 %v2344
        %3328 = vmatprep.subr.bf16.mxu0 %v2361
        %3329 = vmatpush1.bf16.msra.mxu0 %v2360
        %3330 = vmatprep.subr.bf16.mxu0 %v2377
        %3331 = vmatpush1.bf16.msra.mxu0 %v2376
        %3332 = vmatprep.subr.bf16.mxu0 %v2393
        %3333 = vmatpush1.bf16.msra.mxu0 %v2392
        %3334 = vmatprep.subr.bf16.mxu0 %v2409
        %3335 = vmatpush1.bf16.msra.mxu0 %v2408
        %3336 = vmatprep.subr.bf16.mxu0 %v2425
        %3337 = vmatpush1.bf16.msra.mxu0 %v2424
        %3338 = vmatprep.subr.bf16.mxu0 %v2441
        %3339 = vmatpush1.bf16.msra.mxu0 %v2440
        %3340 = vmatprep.subr.bf16.mxu0 %v2457
        %3341 = vmatpush1.bf16.msra.mxu0 %v2456
        %3342 = vmatprep.subr.bf16.mxu0 %v2473
        %3343 = vmatpush1.bf16.msra.mxu0 %v2472
        %3344 = vmatprep.subr.bf16.mxu0 %v2489
        %3345 = vmatpush1.bf16.msra.mxu0 %v2488
        %3346 = vmatprep.subr.bf16.mxu0 %v2505
        %3347 = vmatpush1.bf16.msra.mxu0 %v2504
        %3348 = vmatprep.subr.bf16.mxu0 %v2521
        %3349 = vmatpush1.bf16.msra.mxu0 %v2520
        %3350 = vmatprep.subr.bf16.mxu0 %v2537
        %3351 = vmatpush1.bf16.msra.mxu0 %v2536
        %3352 = vmatprep.mubr.bf16.mxu0 %v745
        %3353 = vmatmul.mubr.bf16.gmra.mrb[0].mxu0 %v744
        %v3354 = vpop.f32.mrb[0].mxu0
        %v3355 = vadd.f32 0.0, %v3354
        %v3356 = vpop.f32.mrb[0].mxu0
        %v3357 = vadd.f32 0.0, %v3356
        %v3358 = vpop.f32.mrb[0].mxu0
        %v3359 = vadd.f32 0.0, %v3358
        %v3360 = vpop.f32.mrb[0].mxu0
        %v3361 = vadd.f32 0.0, %v3360
        %3362 = vmatprep.mubr.bf16.mxu0 %v749
        %3363 = vmatmul.mubr.bf16.gmra.mrb[0].mxu0 %v748
        %v3364 = vpop.f32.mrb[0].mxu0
        %v3365 = vadd.f32 0.0, %v3364
        %v3366 = vpop.f32.mrb[0].mxu0
        %v3367 = vadd.f32 0.0, %v3366
        %v3368 = vpop.f32.mrb[0].mxu0
        %v3369 = vadd.f32 0.0, %v3368
        %v3370 = vpop.f32.mrb[0].mxu0
        %v3371 = vadd.f32 0.0, %v3370
        %3372 = vdwg.mxu0
        %3373 = vmatprep.subr.bf16.mxu0 %v2553
        %3374 = vmatpush1.bf16.msra.mxu0 %v2552
        %3375 = vmatprep.subr.bf16.mxu0 %v2569
        %3376 = vmatpush1.bf16.msra.mxu0 %v2568
        %3377 = vmatprep.subr.bf16.mxu0 %v2585
        %3378 = vmatpush1.bf16.msra.mxu0 %v2584
        %3379 = vmatprep.subr.bf16.mxu0 %v2601
        %3380 = vmatpush1.bf16.msra.mxu0 %v2600
        %3381 = vmatprep.subr.bf16.mxu0 %v2617
        %3382 = vmatpush1.bf16.msra.mxu0 %v2616
        %3383 = vmatprep.subr.bf16.mxu0 %v2633
        %3384 = vmatpush1.bf16.msra.mxu0 %v2632
        %3385 = vmatprep.subr.bf16.mxu0 %v2649
        %3386 = vmatpush1.bf16.msra.mxu0 %v2648
        %3387 = vmatprep.subr.bf16.mxu0 %v2665
        %3388 = vmatpush1.bf16.msra.mxu0 %v2664
        %3389 = vmatprep.subr.bf16.mxu0 %v2681
        %3390 = vmatpush1.bf16.msra.mxu0 %v2680
        %3391 = vmatprep.subr.bf16.mxu0 %v2697
        %3392 = vmatpush1.bf16.msra.mxu0 %v2696
        %3393 = vmatprep.subr.bf16.mxu0 %v2713
        %3394 = vmatpush1.bf16.msra.mxu0 %v2712
        %3395 = vmatprep.subr.bf16.mxu0 %v2729
        %3396 = vmatpush1.bf16.msra.mxu0 %v2728
        %3397 = vmatprep.subr.bf16.mxu0 %v2745
        %3398 = vmatpush1.bf16.msra.mxu0 %v2744
        %3399 = vmatprep.subr.bf16.mxu0 %v2761
        %3400 = vmatpush1.bf16.msra.mxu0 %v2760
        %3401 = vmatprep.subr.bf16.mxu0 %v2777
        %3402 = vmatpush1.bf16.msra.mxu0 %v2776
        %3403 = vmatprep.subr.bf16.mxu0 %v2793
        %3404 = vmatpush1.bf16.msra.mxu0 %v2792
        %3405 = vmatprep.mubr.bf16.mxu0 %v747
        %3406 = vmatmul.mubr.bf16.gmra.mrb[0].mxu0 %v746
        %v3407 = vpop.f32.mrb[0].mxu0
        %v3408 = vadd.f32 %v3355, %v3407
        %v3409 = vpop.f32.mrb[0].mxu0
        %v3410 = vadd.f32 %v3357, %v3409
        %v3411 = vpop.f32.mrb[0].mxu0
        %v3412 = vadd.f32 %v3359, %v3411
        %v3413 = vpop.f32.mrb[0].mxu0
        %v3414 = vadd.f32 %v3361, %v3413
        %3415 = vmatprep.mubr.bf16.mxu0 %v751
        %3416 = vmatmul.mubr.bf16.gmra.mrb[0].mxu0 %v750
        %v3417 = vpop.f32.mrb[0].mxu0
        %v3418 = vadd.f32 %v3365, %v3417
        %v3419 = vpop.f32.mrb[0].mxu0
        %v3420 = vadd.f32 %v3367, %v3419
        %v3421 = vpop.f32.mrb[0].mxu0
        %v3422 = vadd.f32 %v3369, %v3421
        %v3423 = vpop.f32.mrb[0].mxu0
        %v3424 = vadd.f32 %v3371, %v3423
        %3425 = vdwg.mxu0
        %3426 = vmatprep.subr.bf16.mxu0 %v2299
        %3427 = vmatpush1.bf16.msra.mxu0 %v2298
        %3428 = vmatprep.subr.bf16.mxu0 %v2315
        %3429 = vmatpush1.bf16.msra.mxu0 %v2314
        %3430 = vmatprep.subr.bf16.mxu0 %v2331
        %3431 = vmatpush1.bf16.msra.mxu0 %v2330
        %3432 = vmatprep.subr.bf16.mxu0 %v2347
        %3433 = vmatpush1.bf16.msra.mxu0 %v2346
        %3434 = vmatprep.subr.bf16.mxu0 %v2363
        %3435 = vmatpush1.bf16.msra.mxu0 %v2362
        %3436 = vmatprep.subr.bf16.mxu0 %v2379
        %3437 = vmatpush1.bf16.msra.mxu0 %v2378
        %3438 = vmatprep.subr.bf16.mxu0 %v2395
        %3439 = vmatpush1.bf16.msra.mxu0 %v2394
        %3440 = vmatprep.subr.bf16.mxu0 %v2411
        %3441 = vmatpush1.bf16.msra.mxu0 %v2410
        %3442 = vmatprep.subr.bf16.mxu0 %v2427
        %3443 = vmatpush1.bf16.msra.mxu0 %v2426
        %3444 = vmatprep.subr.bf16.mxu0 %v2443
        %3445 = vmatpush1.bf16.msra.mxu0 %v2442
        %3446 = vmatprep.subr.bf16.mxu0 %v2459
        %3447 = vmatpush1.bf16.msra.mxu0 %v2458
        %3448 = vmatprep.subr.bf16.mxu0 %v2475
        %3449 = vmatpush1.bf16.msra.mxu0 %v2474
        %3450 = vmatprep.subr.bf16.mxu0 %v2491
        %3451 = vmatpush1.bf16.msra.mxu0 %v2490
        %3452 = vmatprep.subr.bf16.mxu0 %v2507
        %3453 = vmatpush1.bf16.msra.mxu0 %v2506
        %3454 = vmatprep.subr.bf16.mxu0 %v2523
        %3455 = vmatpush1.bf16.msra.mxu0 %v2522
        %3456 = vmatprep.subr.bf16.mxu0 %v2539
        %3457 = vmatpush1.bf16.msra.mxu0 %v2538
        %3458 = vmatprep.mubr.bf16.mxu0 %v745
        %3459 = vmatmul.mubr.bf16.gmra.mrb[0].mxu0 %v744
        %v3460 = vpop.f32.mrb[0].mxu0
        %v3461 = vadd.f32 0.0, %v3460
        %v3462 = vpop.f32.mrb[0].mxu0
        %v3463 = vadd.f32 0.0, %v3462
        %v3464 = vpop.f32.mrb[0].mxu0
        %v3465 = vadd.f32 0.0, %v3464
        %v3466 = vpop.f32.mrb[0].mxu0
        %v3467 = vadd.f32 0.0, %v3466
        %3468 = vmatprep.mubr.bf16.mxu0 %v749
        %3469 = vmatmul.mubr.bf16.gmra.mrb[0].mxu0 %v748
        %v3470 = vpop.f32.mrb[0].mxu0
        %v3471 = vadd.f32 0.0, %v3470
        %v3472 = vpop.f32.mrb[0].mxu0
        %v3473 = vadd.f32 0.0, %v3472
        %v3474 = vpop.f32.mrb[0].mxu0
        %v3475 = vadd.f32 0.0, %v3474
        %v3476 = vpop.f32.mrb[0].mxu0
        %v3477 = vadd.f32 0.0, %v3476
        %3478 = vdwg.mxu0
        %3479 = vmatprep.subr.bf16.mxu0 %v2555
        %3480 = vmatpush1.bf16.msra.mxu0 %v2554
        %3481 = vmatprep.subr.bf16.mxu0 %v2571
        %3482 = vmatpush1.bf16.msra.mxu0 %v2570
        %3483 = vmatprep.subr.bf16.mxu0 %v2587
        %3484 = vmatpush1.bf16.msra.mxu0 %v2586
        %3485 = vmatprep.subr.bf16.mxu0 %v2603
        %3486 = vmatpush1.bf16.msra.mxu0 %v2602
        %3487 = vmatprep.subr.bf16.mxu0 %v2619
        %3488 = vmatpush1.bf16.msra.mxu0 %v2618
        %3489 = vmatprep.subr.bf16.mxu0 %v2635
        %3490 = vmatpush1.bf16.msra.mxu0 %v2634
        %3491 = vmatprep.subr.bf16.mxu0 %v2651
        %3492 = vmatpush1.bf16.msra.mxu0 %v2650
        %3493 = vmatprep.subr.bf16.mxu0 %v2667
        %3494 = vmatpush1.bf16.msra.mxu0 %v2666
        %3495 = vmatprep.subr.bf16.mxu0 %v2683
        %3496 = vmatpush1.bf16.msra.mxu0 %v2682
        %3497 = vmatprep.subr.bf16.mxu0 %v2699
        %3498 = vmatpush1.bf16.msra.mxu0 %v2698
        %3499 = vmatprep.subr.bf16.mxu0 %v2715
        %3500 = vmatpush1.bf16.msra.mxu0 %v2714
        %3501 = vmatprep.subr.bf16.mxu0 %v2731
        %3502 = vmatpush1.bf16.msra.mxu0 %v2730
        %3503 = vmatprep.subr.bf16.mxu0 %v2747
        %3504 = vmatpush1.bf16.msra.mxu0 %v2746
        %3505 = vmatprep.subr.bf16.mxu0 %v2763
        %3506 = vmatpush1.bf16.msra.mxu0 %v2762
        %3507 = vmatprep.subr.bf16.mxu0 %v2779
        %3508 = vmatpush1.bf16.msra.mxu0 %v2778
        %3509 = vmatprep.subr.bf16.mxu0 %v2795
        %3510 = vmatpush1.bf16.msra.mxu0 %v2794
        %3511 = vmatprep.mubr.bf16.mxu0 %v747
        %3512 = vmatmul.mubr.bf16.gmra.mrb[0].mxu0 %v746
        %v3513 = vpop.f32.mrb[0].mxu0
        %v3514 = vadd.f32 %v3461, %v3513
        %v3515 = vpop.f32.mrb[0].mxu0
        %v3516 = vadd.f32 %v3463, %v3515
        %v3517 = vpop.f32.mrb[0].mxu0
        %v3518 = vadd.f32 %v3465, %v3517
        %v3519 = vpop.f32.mrb[0].mxu0
        %v3520 = vadd.f32 %v3467, %v3519
        %3521 = vmatprep.mubr.bf16.mxu0 %v751
        %3522 = vmatmul.mubr.bf16.gmra.mrb[0].mxu0 %v750
        %v3523 = vpop.f32.mrb[0].mxu0
        %v3524 = vadd.f32 %v3471, %v3523
        %v3525 = vpop.f32.mrb[0].mxu0
        %v3526 = vadd.f32 %v3473, %v3525
        %v3527 = vpop.f32.mrb[0].mxu0
        %v3528 = vadd.f32 %v3475, %v3527
        %v3529 = vpop.f32.mrb[0].mxu0
        %v3530 = vadd.f32 %v3477, %v3529
        %3531 = vdwg.mxu0
        %3532 = vmatprep.subr.bf16.mxu0 %v2301
        %3533 = vmatpush1.bf16.msra.mxu0 %v2300
        %3534 = vmatprep.subr.bf16.mxu0 %v2317
        %3535 = vmatpush1.bf16.msra.mxu0 %v2316
        %3536 = vmatprep.subr.bf16.mxu0 %v2333
        %3537 = vmatpush1.bf16.msra.mxu0 %v2332
        %3538 = vmatprep.subr.bf16.mxu0 %v2349
        %3539 = vmatpush1.bf16.msra.mxu0 %v2348
        %3540 = vmatprep.subr.bf16.mxu0 %v2365
        %3541 = vmatpush1.bf16.msra.mxu0 %v2364
        %3542 = vmatprep.subr.bf16.mxu0 %v2381
        %3543 = vmatpush1.bf16.msra.mxu0 %v2380
        %3544 = vmatprep.subr.bf16.mxu0 %v2397
        %3545 = vmatpush1.bf16.msra.mxu0 %v2396
        %3546 = vmatprep.subr.bf16.mxu0 %v2413
        %3547 = vmatpush1.bf16.msra.mxu0 %v2412
        %3548 = vmatprep.subr.bf16.mxu0 %v2429
        %3549 = vmatpush1.bf16.msra.mxu0 %v2428
        %3550 = vmatprep.subr.bf16.mxu0 %v2445
        %3551 = vmatpush1.bf16.msra.mxu0 %v2444
        %3552 = vmatprep.subr.bf16.mxu0 %v2461
        %3553 = vmatpush1.bf16.msra.mxu0 %v2460
        %3554 = vmatprep.subr.bf16.mxu0 %v2477
        %3555 = vmatpush1.bf16.msra.mxu0 %v2476
        %3556 = vmatprep.subr.bf16.mxu0 %v2493
        %3557 = vmatpush1.bf16.msra.mxu0 %v2492
        %3558 = vmatprep.subr.bf16.mxu0 %v2509
        %3559 = vmatpush1.bf16.msra.mxu0 %v2508
        %3560 = vmatprep.subr.bf16.mxu0 %v2525
        %3561 = vmatpush1.bf16.msra.mxu0 %v2524
        %3562 = vmatprep.subr.bf16.mxu0 %v2541
        %3563 = vmatpush1.bf16.msra.mxu0 %v2540
        %3564 = vmatprep.mubr.bf16.mxu0 %v745
        %3565 = vmatmul.mubr.bf16.gmra.mrb[0].mxu0 %v744
        %v3566 = vpop.f32.mrb[0].mxu0
        %v3567 = vadd.f32 0.0, %v3566
        %v3568 = vpop.f32.mrb[0].mxu0
        %v3569 = vadd.f32 0.0, %v3568
        %v3570 = vpop.f32.mrb[0].mxu0
        %v3571 = vadd.f32 0.0, %v3570
        %v3572 = vpop.f32.mrb[0].mxu0
        %v3573 = vadd.f32 0.0, %v3572
        %3574 = vmatprep.mubr.bf16.mxu0 %v749
        %3575 = vmatmul.mubr.bf16.gmra.mrb[0].mxu0 %v748
        %v3576 = vpop.f32.mrb[0].mxu0
        %v3577 = vadd.f32 0.0, %v3576
        %v3578 = vpop.f32.mrb[0].mxu0
        %v3579 = vadd.f32 0.0, %v3578
        %v3580 = vpop.f32.mrb[0].mxu0
        %v3581 = vadd.f32 0.0, %v3580
        %v3582 = vpop.f32.mrb[0].mxu0
        %v3583 = vadd.f32 0.0, %v3582
        %3584 = vdwg.mxu0
        %3585 = vmatprep.subr.bf16.mxu0 %v2557
        %3586 = vmatpush1.bf16.msra.mxu0 %v2556
        %3587 = vmatprep.subr.bf16.mxu0 %v2573
        %3588 = vmatpush1.bf16.msra.mxu0 %v2572
        %3589 = vmatprep.subr.bf16.mxu0 %v2589
        %3590 = vmatpush1.bf16.msra.mxu0 %v2588
        %3591 = vmatprep.subr.bf16.mxu0 %v2605
        %3592 = vmatpush1.bf16.msra.mxu0 %v2604
        %3593 = vmatprep.subr.bf16.mxu0 %v2621
        %3594 = vmatpush1.bf16.msra.mxu0 %v2620
        %3595 = vmatprep.subr.bf16.mxu0 %v2637
        %3596 = vmatpush1.bf16.msra.mxu0 %v2636
        %3597 = vmatprep.subr.bf16.mxu0 %v2653
        %3598 = vmatpush1.bf16.msra.mxu0 %v2652
        %3599 = vmatprep.subr.bf16.mxu0 %v2669
        %3600 = vmatpush1.bf16.msra.mxu0 %v2668
        %3601 = vmatprep.subr.bf16.mxu0 %v2685
        %3602 = vmatpush1.bf16.msra.mxu0 %v2684
        %3603 = vmatprep.subr.bf16.mxu0 %v2701
        %3604 = vmatpush1.bf16.msra.mxu0 %v2700
        %3605 = vmatprep.subr.bf16.mxu0 %v2717
        %3606 = vmatpush1.bf16.msra.mxu0 %v2716
        %3607 = vmatprep.subr.bf16.mxu0 %v2733
        %3608 = vmatpush1.bf16.msra.mxu0 %v2732
        %3609 = vmatprep.subr.bf16.mxu0 %v2749
        %3610 = vmatpush1.bf16.msra.mxu0 %v2748
        %3611 = vmatprep.subr.bf16.mxu0 %v2765
        %3612 = vmatpush1.bf16.msra.mxu0 %v2764
        %3613 = vmatprep.subr.bf16.mxu0 %v2781
        %3614 = vmatpush1.bf16.msra.mxu0 %v2780
        %3615 = vmatprep.subr.bf16.mxu0 %v2797
        %3616 = vmatpush1.bf16.msra.mxu0 %v2796
        %3617 = vmatprep.mubr.bf16.mxu0 %v747
        %3618 = vmatmul.mubr.bf16.gmra.mrb[0].mxu0 %v746
        %v3619 = vpop.f32.mrb[0].mxu0
        %v3620 = vadd.f32 %v3567, %v3619
        %v3621 = vpop.f32.mrb[0].mxu0
        %v3622 = vadd.f32 %v3569, %v3621
        %v3623 = vpop.f32.mrb[0].mxu0
        %v3624 = vadd.f32 %v3571, %v3623
        %v3625 = vpop.f32.mrb[0].mxu0
        %v3626 = vadd.f32 %v3573, %v3625
        %3627 = vmatprep.mubr.bf16.mxu0 %v751
        %3628 = vmatmul.mubr.bf16.gmra.mrb[0].mxu0 %v750
        %v3629 = vpop.f32.mrb[0].mxu0
        %v3630 = vadd.f32 %v3577, %v3629
        %v3631 = vpop.f32.mrb[0].mxu0
        %v3632 = vadd.f32 %v3579, %v3631
        %v3633 = vpop.f32.mrb[0].mxu0
        %v3634 = vadd.f32 %v3581, %v3633
        %v3635 = vpop.f32.mrb[0].mxu0
        %v3636 = vadd.f32 %v3583, %v3635
        %3637 = vdwg.mxu0
        %3638 = vmatprep.subr.bf16.mxu0 %v2303
        %3639 = vmatpush1.bf16.msra.mxu0 %v2302
        %3640 = vmatprep.subr.bf16.mxu0 %v2319
        %3641 = vmatpush1.bf16.msra.mxu0 %v2318
        %3642 = vmatprep.subr.bf16.mxu0 %v2335
        %3643 = vmatpush1.bf16.msra.mxu0 %v2334
        %3644 = vmatprep.subr.bf16.mxu0 %v2351
        %3645 = vmatpush1.bf16.msra.mxu0 %v2350
        %3646 = vmatprep.subr.bf16.mxu0 %v2367
        %3647 = vmatpush1.bf16.msra.mxu0 %v2366
        %3648 = vmatprep.subr.bf16.mxu0 %v2383
        %3649 = vmatpush1.bf16.msra.mxu0 %v2382
        %3650 = vmatprep.subr.bf16.mxu0 %v2399
        %3651 = vmatpush1.bf16.msra.mxu0 %v2398
        %3652 = vmatprep.subr.bf16.mxu0 %v2415
        %3653 = vmatpush1.bf16.msra.mxu0 %v2414
        %3654 = vmatprep.subr.bf16.mxu0 %v2431
        %3655 = vmatpush1.bf16.msra.mxu0 %v2430
        %3656 = vmatprep.subr.bf16.mxu0 %v2447
        %3657 = vmatpush1.bf16.msra.mxu0 %v2446
        %3658 = vmatprep.subr.bf16.mxu0 %v2463
        %3659 = vmatpush1.bf16.msra.mxu0 %v2462
        %3660 = vmatprep.subr.bf16.mxu0 %v2479
        %3661 = vmatpush1.bf16.msra.mxu0 %v2478
        %3662 = vmatprep.subr.bf16.mxu0 %v2495
        %3663 = vmatpush1.bf16.msra.mxu0 %v2494
        %3664 = vmatprep.subr.bf16.mxu0 %v2511
        %3665 = vmatpush1.bf16.msra.mxu0 %v2510
        %3666 = vmatprep.subr.bf16.mxu0 %v2527
        %3667 = vmatpush1.bf16.msra.mxu0 %v2526
        %3668 = vmatprep.subr.bf16.mxu0 %v2543
        %3669 = vmatpush1.bf16.msra.mxu0 %v2542
        %3670 = vmatprep.mubr.bf16.mxu0 %v745
        %3671 = vmatmul.mubr.bf16.gmra.mrb[0].mxu0 %v744
        %v3672 = vpop.f32.mrb[0].mxu0
        %v3673 = vadd.f32 0.0, %v3672
        %v3674 = vpop.f32.mrb[0].mxu0
        %v3675 = vadd.f32 0.0, %v3674
        %v3676 = vpop.f32.mrb[0].mxu0
        %v3677 = vadd.f32 0.0, %v3676
        %v3678 = vpop.f32.mrb[0].mxu0
        %v3679 = vadd.f32 0.0, %v3678
        %3680 = vmatprep.mubr.bf16.mxu0 %v749
        %3681 = vmatmul.mubr.bf16.gmra.mrb[0].mxu0 %v748
        %v3682 = vpop.f32.mrb[0].mxu0
        %v3683 = vadd.f32 0.0, %v3682
        %v3684 = vpop.f32.mrb[0].mxu0
        %v3685 = vadd.f32 0.0, %v3684
        %v3686 = vpop.f32.mrb[0].mxu0
        %v3687 = vadd.f32 0.0, %v3686
        %v3688 = vpop.f32.mrb[0].mxu0
        %v3689 = vadd.f32 0.0, %v3688
        %3690 = vdwg.mxu0
        %3691 = vmatprep.subr.bf16.mxu0 %v2559
        %3692 = vmatpush1.bf16.msra.mxu0 %v2558
        %3693 = vmatprep.subr.bf16.mxu0 %v2575
        %3694 = vmatpush1.bf16.msra.mxu0 %v2574
        %3695 = vmatprep.subr.bf16.mxu0 %v2591
        %3696 = vmatpush1.bf16.msra.mxu0 %v2590
        %3697 = vmatprep.subr.bf16.mxu0 %v2607
        %3698 = vmatpush1.bf16.msra.mxu0 %v2606
        %3699 = vmatprep.subr.bf16.mxu0 %v2623
        %3700 = vmatpush1.bf16.msra.mxu0 %v2622
        %3701 = vmatprep.subr.bf16.mxu0 %v2639
        %3702 = vmatpush1.bf16.msra.mxu0 %v2638
        %3703 = vmatprep.subr.bf16.mxu0 %v2655
        %3704 = vmatpush1.bf16.msra.mxu0 %v2654
        %3705 = vmatprep.subr.bf16.mxu0 %v2671
        %3706 = vmatpush1.bf16.msra.mxu0 %v2670
        %3707 = vmatprep.subr.bf16.mxu0 %v2687
        %3708 = vmatpush1.bf16.msra.mxu0 %v2686
        %3709 = vmatprep.subr.bf16.mxu0 %v2703
        %3710 = vmatpush1.bf16.msra.mxu0 %v2702
        %3711 = vmatprep.subr.bf16.mxu0 %v2719
        %3712 = vmatpush1.bf16.msra.mxu0 %v2718
        %3713 = vmatprep.subr.bf16.mxu0 %v2735
        %3714 = vmatpush1.bf16.msra.mxu0 %v2734
        %3715 = vmatprep.subr.bf16.mxu0 %v2751
        %3716 = vmatpush1.bf16.msra.mxu0 %v2750
        %3717 = vmatprep.subr.bf16.mxu0 %v2767
        %3718 = vmatpush1.bf16.msra.mxu0 %v2766
        %3719 = vmatprep.subr.bf16.mxu0 %v2783
        %3720 = vmatpush1.bf16.msra.mxu0 %v2782
        %3721 = vmatprep.subr.bf16.mxu0 %v2799
        %3722 = vmatpush1.bf16.msra.mxu0 %v2798
        %3723 = vmatprep.mubr.bf16.mxu0 %v747
        %3724 = vmatmul.mubr.bf16.gmra.mrb[0].mxu0 %v746
        %v3725 = vpop.f32.mrb[0].mxu0
        %v3726 = vadd.f32 %v3673, %v3725
        %v3727 = vpop.f32.mrb[0].mxu0
        %v3728 = vadd.f32 %v3675, %v3727
        %v3729 = vpop.f32.mrb[0].mxu0
        %v3730 = vadd.f32 %v3677, %v3729
        %v3731 = vpop.f32.mrb[0].mxu0
        %v3732 = vadd.f32 %v3679, %v3731
        %3733 = vmatprep.mubr.bf16.mxu0 %v751
        %3734 = vmatmul.mubr.bf16.gmra.mrb[0].mxu0 %v750
        %v3735 = vpop.f32.mrb[0].mxu0
        %v3736 = vadd.f32 %v3683, %v3735
        %v3737 = vpop.f32.mrb[0].mxu0
        %v3738 = vadd.f32 %v3685, %v3737
        %v3739 = vpop.f32.mrb[0].mxu0
        %v3740 = vadd.f32 %v3687, %v3739
        %v3741 = vpop.f32.mrb[0].mxu0
        %v3742 = vadd.f32 %v3689, %v3741
        %3743 = vdwg.mxu0
        %3744 = vmatprep.subr.bf16.mxu0 %v2305
        %3745 = vmatpush1.bf16.msra.mxu0 %v2304
        %3746 = vmatprep.subr.bf16.mxu0 %v2321
        %3747 = vmatpush1.bf16.msra.mxu0 %v2320
        %3748 = vmatprep.subr.bf16.mxu0 %v2337
        %3749 = vmatpush1.bf16.msra.mxu0 %v2336
        %3750 = vmatprep.subr.bf16.mxu0 %v2353
        %3751 = vmatpush1.bf16.msra.mxu0 %v2352
        %3752 = vmatprep.subr.bf16.mxu0 %v2369
        %3753 = vmatpush1.bf16.msra.mxu0 %v2368
        %3754 = vmatprep.subr.bf16.mxu0 %v2385
        %3755 = vmatpush1.bf16.msra.mxu0 %v2384
        %3756 = vmatprep.subr.bf16.mxu0 %v2401
        %3757 = vmatpush1.bf16.msra.mxu0 %v2400
        %3758 = vmatprep.subr.bf16.mxu0 %v2417
        %3759 = vmatpush1.bf16.msra.mxu0 %v2416
        %3760 = vmatprep.subr.bf16.mxu0 %v2433
        %3761 = vmatpush1.bf16.msra.mxu0 %v2432
        %3762 = vmatprep.subr.bf16.mxu0 %v2449
        %3763 = vmatpush1.bf16.msra.mxu0 %v2448
        %3764 = vmatprep.subr.bf16.mxu0 %v2465
        %3765 = vmatpush1.bf16.msra.mxu0 %v2464
        %3766 = vmatprep.subr.bf16.mxu0 %v2481
        %3767 = vmatpush1.bf16.msra.mxu0 %v2480
        %3768 = vmatprep.subr.bf16.mxu0 %v2497
        %3769 = vmatpush1.bf16.msra.mxu0 %v2496
        %3770 = vmatprep.subr.bf16.mxu0 %v2513
        %3771 = vmatpush1.bf16.msra.mxu0 %v2512
        %3772 = vmatprep.subr.bf16.mxu0 %v2529
        %3773 = vmatpush1.bf16.msra.mxu0 %v2528
        %3774 = vmatprep.subr.bf16.mxu0 %v2545
        %3775 = vmatpush1.bf16.msra.mxu0 %v2544
        %3776 = vmatprep.mubr.bf16.mxu0 %v745
        %3777 = vmatmul.mubr.bf16.gmra.mrb[0].mxu0 %v744
        %v3778 = vpop.f32.mrb[0].mxu0
        %v3779 = vadd.f32 0.0, %v3778
        %v3780 = vpop.f32.mrb[0].mxu0
        %v3781 = vadd.f32 0.0, %v3780
        %v3782 = vpop.f32.mrb[0].mxu0
        %v3783 = vadd.f32 0.0, %v3782
        %v3784 = vpop.f32.mrb[0].mxu0
        %v3785 = vadd.f32 0.0, %v3784
        %3786 = vmatprep.mubr.bf16.mxu0 %v749
        %3787 = vmatmul.mubr.bf16.gmra.mrb[0].mxu0 %v748
        %v3788 = vpop.f32.mrb[0].mxu0
        %v3789 = vadd.f32 0.0, %v3788
        %v3790 = vpop.f32.mrb[0].mxu0
        %v3791 = vadd.f32 0.0, %v3790
        %v3792 = vpop.f32.mrb[0].mxu0
        %v3793 = vadd.f32 0.0, %v3792
        %v3794 = vpop.f32.mrb[0].mxu0
        %v3795 = vadd.f32 0.0, %v3794
        %3796 = vdwg.mxu0
        %3797 = vmatprep.subr.bf16.mxu0 %v2561
        %3798 = vmatpush1.bf16.msra.mxu0 %v2560
        %3799 = vmatprep.subr.bf16.mxu0 %v2577
        %3800 = vmatpush1.bf16.msra.mxu0 %v2576
        %3801 = vmatprep.subr.bf16.mxu0 %v2593
        %3802 = vmatpush1.bf16.msra.mxu0 %v2592
        %3803 = vmatprep.subr.bf16.mxu0 %v2609
        %3804 = vmatpush1.bf16.msra.mxu0 %v2608
        %3805 = vmatprep.subr.bf16.mxu0 %v2625
        %3806 = vmatpush1.bf16.msra.mxu0 %v2624
        %3807 = vmatprep.subr.bf16.mxu0 %v2641
        %3808 = vmatpush1.bf16.msra.mxu0 %v2640
        %3809 = vmatprep.subr.bf16.mxu0 %v2657
        %3810 = vmatpush1.bf16.msra.mxu0 %v2656
        %3811 = vmatprep.subr.bf16.mxu0 %v2673
        %3812 = vmatpush1.bf16.msra.mxu0 %v2672
        %3813 = vmatprep.subr.bf16.mxu0 %v2689
        %3814 = vmatpush1.bf16.msra.mxu0 %v2688
        %3815 = vmatprep.subr.bf16.mxu0 %v2705
        %3816 = vmatpush1.bf16.msra.mxu0 %v2704
        %3817 = vmatprep.subr.bf16.mxu0 %v2721
        %3818 = vmatpush1.bf16.msra.mxu0 %v2720
        %3819 = vmatprep.subr.bf16.mxu0 %v2737
        %3820 = vmatpush1.bf16.msra.mxu0 %v2736
        %3821 = vmatprep.subr.bf16.mxu0 %v2753
        %3822 = vmatpush1.bf16.msra.mxu0 %v2752
        %3823 = vmatprep.subr.bf16.mxu0 %v2769
        %3824 = vmatpush1.bf16.msra.mxu0 %v2768
        %3825 = vmatprep.subr.bf16.mxu0 %v2785
        %3826 = vmatpush1.bf16.msra.mxu0 %v2784
        %3827 = vmatprep.subr.bf16.mxu0 %v2801
        %3828 = vmatpush1.bf16.msra.mxu0 %v2800
        %3829 = vmatprep.mubr.bf16.mxu0 %v747
        %3830 = vmatmul.mubr.bf16.gmra.mrb[0].mxu0 %v746
        %v3831 = vpop.f32.mrb[0].mxu0
        %v3832 = vadd.f32 %v3779, %v3831
        %v3833 = vpop.f32.mrb[0].mxu0
        %v3834 = vadd.f32 %v3781, %v3833
        %v3835 = vpop.f32.mrb[0].mxu0
        %v3836 = vadd.f32 %v3783, %v3835
        %v3837 = vpop.f32.mrb[0].mxu0
        %v3838 = vadd.f32 %v3785, %v3837
        %3839 = vmatprep.mubr.bf16.mxu0 %v751
        %3840 = vmatmul.mubr.bf16.gmra.mrb[0].mxu0 %v750
        %v3841 = vpop.f32.mrb[0].mxu0
        %v3842 = vadd.f32 %v3789, %v3841
        %v3843 = vpop.f32.mrb[0].mxu0
        %v3844 = vadd.f32 %v3791, %v3843
        %v3845 = vpop.f32.mrb[0].mxu0
        %v3846 = vadd.f32 %v3793, %v3845
        %v3847 = vpop.f32.mrb[0].mxu0
        %v3848 = vadd.f32 %v3795, %v3847
        %3849 = vdwg.mxu0
        %3850 = vmatprep.subr.bf16.mxu0 %v2307
        %3851 = vmatpush1.bf16.msra.mxu0 %v2306
        %3852 = vmatprep.subr.bf16.mxu0 %v2323
        %3853 = vmatpush1.bf16.msra.mxu0 %v2322
        %3854 = vmatprep.subr.bf16.mxu0 %v2339
        %3855 = vmatpush1.bf16.msra.mxu0 %v2338
        %3856 = vmatprep.subr.bf16.mxu0 %v2355
        %3857 = vmatpush1.bf16.msra.mxu0 %v2354
        %3858 = vmatprep.subr.bf16.mxu0 %v2371
        %3859 = vmatpush1.bf16.msra.mxu0 %v2370
        %3860 = vmatprep.subr.bf16.mxu0 %v2387
        %3861 = vmatpush1.bf16.msra.mxu0 %v2386
        %3862 = vmatprep.subr.bf16.mxu0 %v2403
        %3863 = vmatpush1.bf16.msra.mxu0 %v2402
        %3864 = vmatprep.subr.bf16.mxu0 %v2419
        %3865 = vmatpush1.bf16.msra.mxu0 %v2418
        %3866 = vmatprep.subr.bf16.mxu0 %v2435
        %3867 = vmatpush1.bf16.msra.mxu0 %v2434
        %3868 = vmatprep.subr.bf16.mxu0 %v2451
        %3869 = vmatpush1.bf16.msra.mxu0 %v2450
        %3870 = vmatprep.subr.bf16.mxu0 %v2467
        %3871 = vmatpush1.bf16.msra.mxu0 %v2466
        %3872 = vmatprep.subr.bf16.mxu0 %v2483
        %3873 = vmatpush1.bf16.msra.mxu0 %v2482
        %3874 = vmatprep.subr.bf16.mxu0 %v2499
        %3875 = vmatpush1.bf16.msra.mxu0 %v2498
        %3876 = vmatprep.subr.bf16.mxu0 %v2515
        %3877 = vmatpush1.bf16.msra.mxu0 %v2514
        %3878 = vmatprep.subr.bf16.mxu0 %v2531
        %3879 = vmatpush1.bf16.msra.mxu0 %v2530
        %3880 = vmatprep.subr.bf16.mxu0 %v2547
        %3881 = vmatpush1.bf16.msra.mxu0 %v2546
        %3882 = vmatprep.mubr.bf16.mxu0 %v745
        %3883 = vmatmul.mubr.bf16.gmra.mrb[0].mxu0 %v744
        %v3884 = vpop.f32.mrb[0].mxu0
        %v3885 = vadd.f32 0.0, %v3884
        %v3886 = vpop.f32.mrb[0].mxu0
        %v3887 = vadd.f32 0.0, %v3886
        %v3888 = vpop.f32.mrb[0].mxu0
        %v3889 = vadd.f32 0.0, %v3888
        %v3890 = vpop.f32.mrb[0].mxu0
        %v3891 = vadd.f32 0.0, %v3890
        %3892 = vmatprep.mubr.bf16.mxu0 %v749
        %3893 = vmatmul.mubr.bf16.gmra.mrb[0].mxu0 %v748
        %v3894 = vpop.f32.mrb[0].mxu0
        %v3895 = vadd.f32 0.0, %v3894
        %v3896 = vpop.f32.mrb[0].mxu0
        %v3897 = vadd.f32 0.0, %v3896
        %v3898 = vpop.f32.mrb[0].mxu0
        %v3899 = vadd.f32 0.0, %v3898
        %v3900 = vpop.f32.mrb[0].mxu0
        %v3901 = vadd.f32 0.0, %v3900
        %3902 = vdwg.mxu0
        %3903 = vmatprep.subr.bf16.mxu0 %v2563
        %3904 = vmatpush1.bf16.msra.mxu0 %v2562
        %3905 = vmatprep.subr.bf16.mxu0 %v2579
        %3906 = vmatpush1.bf16.msra.mxu0 %v2578
        %3907 = vmatprep.subr.bf16.mxu0 %v2595
        %3908 = vmatpush1.bf16.msra.mxu0 %v2594
        %3909 = vmatprep.subr.bf16.mxu0 %v2611
        %3910 = vmatpush1.bf16.msra.mxu0 %v2610
        %3911 = vmatprep.subr.bf16.mxu0 %v2627
        %3912 = vmatpush1.bf16.msra.mxu0 %v2626
        %3913 = vmatprep.subr.bf16.mxu0 %v2643
        %3914 = vmatpush1.bf16.msra.mxu0 %v2642
        %3915 = vmatprep.subr.bf16.mxu0 %v2659
        %3916 = vmatpush1.bf16.msra.mxu0 %v2658
        %3917 = vmatprep.subr.bf16.mxu0 %v2675
        %3918 = vmatpush1.bf16.msra.mxu0 %v2674
        %3919 = vmatprep.subr.bf16.mxu0 %v2691
        %3920 = vmatpush1.bf16.msra.mxu0 %v2690
        %3921 = vmatprep.subr.bf16.mxu0 %v2707
        %3922 = vmatpush1.bf16.msra.mxu0 %v2706
        %3923 = vmatprep.subr.bf16.mxu0 %v2723
        %3924 = vmatpush1.bf16.msra.mxu0 %v2722
        %3925 = vmatprep.subr.bf16.mxu0 %v2739
        %3926 = vmatpush1.bf16.msra.mxu0 %v2738
        %3927 = vmatprep.subr.bf16.mxu0 %v2755
        %3928 = vmatpush1.bf16.msra.mxu0 %v2754
        %3929 = vmatprep.subr.bf16.mxu0 %v2771
        %3930 = vmatpush1.bf16.msra.mxu0 %v2770
        %3931 = vmatprep.subr.bf16.mxu0 %v2787
        %3932 = vmatpush1.bf16.msra.mxu0 %v2786
        %3933 = vmatprep.subr.bf16.mxu0 %v2803
        %3934 = vmatpush1.bf16.msra.mxu0 %v2802
        %3935 = vmatprep.mubr.bf16.mxu0 %v747
        %3936 = vmatmul.mubr.bf16.gmra.mrb[0].mxu0 %v746
        %v3937 = vpop.f32.mrb[0].mxu0
        %v3938 = vadd.f32 %v3885, %v3937
        %v3939 = vpop.f32.mrb[0].mxu0
        %v3940 = vadd.f32 %v3887, %v3939
        %v3941 = vpop.f32.mrb[0].mxu0
        %v3942 = vadd.f32 %v3889, %v3941
        %v3943 = vpop.f32.mrb[0].mxu0
        %v3944 = vadd.f32 %v3891, %v3943
        %3945 = vmatprep.mubr.bf16.mxu0 %v751
        %3946 = vmatmul.mubr.bf16.gmra.mrb[0].mxu0 %v750
        %v3947 = vpop.f32.mrb[0].mxu0
        %v3948 = vadd.f32 %v3895, %v3947
        %v3949 = vpop.f32.mrb[0].mxu0
        %v3950 = vadd.f32 %v3897, %v3949
        %v3951 = vpop.f32.mrb[0].mxu0
        %v3952 = vadd.f32 %v3899, %v3951
        %v3953 = vpop.f32.mrb[0].mxu0
        %v3954 = vadd.f32 %v3901, %v3953
        %3955 = vdwg.mxu0
        %3956 = vmatprep.subr.bf16.mxu0 %v2309
        %3957 = vmatpush1.bf16.msra.mxu0 %v2308
        %3958 = vmatprep.subr.bf16.mxu0 %v2325
        %3959 = vmatpush1.bf16.msra.mxu0 %v2324
        %3960 = vmatprep.subr.bf16.mxu0 %v2341
        %3961 = vmatpush1.bf16.msra.mxu0 %v2340
        %3962 = vmatprep.subr.bf16.mxu0 %v2357
        %3963 = vmatpush1.bf16.msra.mxu0 %v2356
        %3964 = vmatprep.subr.bf16.mxu0 %v2373
        %3965 = vmatpush1.bf16.msra.mxu0 %v2372
        %3966 = vmatprep.subr.bf16.mxu0 %v2389
        %3967 = vmatpush1.bf16.msra.mxu0 %v2388
        %3968 = vmatprep.subr.bf16.mxu0 %v2405
        %3969 = vmatpush1.bf16.msra.mxu0 %v2404
        %3970 = vmatprep.subr.bf16.mxu0 %v2421
        %3971 = vmatpush1.bf16.msra.mxu0 %v2420
        %3972 = vmatprep.subr.bf16.mxu0 %v2437
        %3973 = vmatpush1.bf16.msra.mxu0 %v2436
        %3974 = vmatprep.subr.bf16.mxu0 %v2453
        %3975 = vmatpush1.bf16.msra.mxu0 %v2452
        %3976 = vmatprep.subr.bf16.mxu0 %v2469
        %3977 = vmatpush1.bf16.msra.mxu0 %v2468
        %3978 = vmatprep.subr.bf16.mxu0 %v2485
        %3979 = vmatpush1.bf16.msra.mxu0 %v2484
        %3980 = vmatprep.subr.bf16.mxu0 %v2501
        %3981 = vmatpush1.bf16.msra.mxu0 %v2500
        %3982 = vmatprep.subr.bf16.mxu0 %v2517
        %3983 = vmatpush1.bf16.msra.mxu0 %v2516
        %3984 = vmatprep.subr.bf16.mxu0 %v2533
        %3985 = vmatpush1.bf16.msra.mxu0 %v2532
        %3986 = vmatprep.subr.bf16.mxu0 %v2549
        %3987 = vmatpush1.bf16.msra.mxu0 %v2548
        %3988 = vmatprep.mubr.bf16.mxu0 %v745
        %3989 = vmatmul.mubr.bf16.gmra.mrb[0].mxu0 %v744
        %v3990 = vpop.f32.mrb[0].mxu0
        %v3991 = vadd.f32 0.0, %v3990
        %v3992 = vpop.f32.mrb[0].mxu0
        %v3993 = vadd.f32 0.0, %v3992
        %v3994 = vpop.f32.mrb[0].mxu0
        %v3995 = vadd.f32 0.0, %v3994
        %v3996 = vpop.f32.mrb[0].mxu0
        %v3997 = vadd.f32 0.0, %v3996
        %3998 = vmatprep.mubr.bf16.mxu0 %v749
        %3999 = vmatmul.mubr.bf16.gmra.mrb[0].mxu0 %v748
        %v4000 = vpop.f32.mrb[0].mxu0
        %v4001 = vadd.f32 0.0, %v4000
        %v4002 = vpop.f32.mrb[0].mxu0
        %v4003 = vadd.f32 0.0, %v4002
        %v4004 = vpop.f32.mrb[0].mxu0
        %v4005 = vadd.f32 0.0, %v4004
        %v4006 = vpop.f32.mrb[0].mxu0
        %v4007 = vadd.f32 0.0, %v4006
        %4008 = vdwg.mxu0
        %4009 = vmatprep.subr.bf16.mxu0 %v2565
        %4010 = vmatpush1.bf16.msra.mxu0 %v2564
        %4011 = vmatprep.subr.bf16.mxu0 %v2581
        %4012 = vmatpush1.bf16.msra.mxu0 %v2580
        %4013 = vmatprep.subr.bf16.mxu0 %v2597
        %4014 = vmatpush1.bf16.msra.mxu0 %v2596
        %4015 = vmatprep.subr.bf16.mxu0 %v2613
        %4016 = vmatpush1.bf16.msra.mxu0 %v2612
        %4017 = vmatprep.subr.bf16.mxu0 %v2629
        %4018 = vmatpush1.bf16.msra.mxu0 %v2628
        %4019 = vmatprep.subr.bf16.mxu0 %v2645
        %4020 = vmatpush1.bf16.msra.mxu0 %v2644
        %4021 = vmatprep.subr.bf16.mxu0 %v2661
        %4022 = vmatpush1.bf16.msra.mxu0 %v2660
        %4023 = vmatprep.subr.bf16.mxu0 %v2677
        %4024 = vmatpush1.bf16.msra.mxu0 %v2676
        %4025 = vmatprep.subr.bf16.mxu0 %v2693
        %4026 = vmatpush1.bf16.msra.mxu0 %v2692
        %4027 = vmatprep.subr.bf16.mxu0 %v2709
        %4028 = vmatpush1.bf16.msra.mxu0 %v2708
        %4029 = vmatprep.subr.bf16.mxu0 %v2725
        %4030 = vmatpush1.bf16.msra.mxu0 %v2724
        %4031 = vmatprep.subr.bf16.mxu0 %v2741
        %4032 = vmatpush1.bf16.msra.mxu0 %v2740
        %4033 = vmatprep.subr.bf16.mxu0 %v2757
        %4034 = vmatpush1.bf16.msra.mxu0 %v2756
        %4035 = vmatprep.subr.bf16.mxu0 %v2773
        %4036 = vmatpush1.bf16.msra.mxu0 %v2772
        %4037 = vmatprep.subr.bf16.mxu0 %v2789
        %4038 = vmatpush1.bf16.msra.mxu0 %v2788
        %4039 = vmatprep.subr.bf16.mxu0 %v2805
        %4040 = vmatpush1.bf16.msra.mxu0 %v2804
        %4041 = vmatprep.mubr.bf16.mxu0 %v747
        %4042 = vmatmul.mubr.bf16.gmra.mrb[0].mxu0 %v746
        %v4043 = vpop.f32.mrb[0].mxu0
        %v4044 = vadd.f32 %v3991, %v4043
        %v4045 = vpop.f32.mrb[0].mxu0
        %v4046 = vadd.f32 %v3993, %v4045
        %v4047 = vpop.f32.mrb[0].mxu0
        %v4048 = vadd.f32 %v3995, %v4047
        %v4049 = vpop.f32.mrb[0].mxu0
        %v4050 = vadd.f32 %v3997, %v4049
        %4051 = vmatprep.mubr.bf16.mxu0 %v751
        %4052 = vmatmul.mubr.bf16.gmra.mrb[0].mxu0 %v750
        %v4053 = vpop.f32.mrb[0].mxu0
        %v4054 = vadd.f32 %v4001, %v4053
        %v4055 = vpop.f32.mrb[0].mxu0
        %v4056 = vadd.f32 %v4003, %v4055
        %v4057 = vpop.f32.mrb[0].mxu0
        %v4058 = vadd.f32 %v4005, %v4057
        %v4059 = vpop.f32.mrb[0].mxu0
        %v4060 = vadd.f32 %v4007, %v4059
        %4061 = vdwg.mxu0
        %4062 = vmatprep.subr.bf16.mxu0 %v2311
        %4063 = vmatpush1.bf16.msra.mxu0 %v2310
        %4064 = vmatprep.subr.bf16.mxu0 %v2327
        %4065 = vmatpush1.bf16.msra.mxu0 %v2326
        %4066 = vmatprep.subr.bf16.mxu0 %v2343
        %4067 = vmatpush1.bf16.msra.mxu0 %v2342
        %4068 = vmatprep.subr.bf16.mxu0 %v2359
        %4069 = vmatpush1.bf16.msra.mxu0 %v2358
        %4070 = vmatprep.subr.bf16.mxu0 %v2375
        %4071 = vmatpush1.bf16.msra.mxu0 %v2374
        %4072 = vmatprep.subr.bf16.mxu0 %v2391
        %4073 = vmatpush1.bf16.msra.mxu0 %v2390
        %4074 = vmatprep.subr.bf16.mxu0 %v2407
        %4075 = vmatpush1.bf16.msra.mxu0 %v2406
        %4076 = vmatprep.subr.bf16.mxu0 %v2423
        %4077 = vmatpush1.bf16.msra.mxu0 %v2422
        %4078 = vmatprep.subr.bf16.mxu0 %v2439
        %4079 = vmatpush1.bf16.msra.mxu0 %v2438
        %4080 = vmatprep.subr.bf16.mxu0 %v2455
        %4081 = vmatpush1.bf16.msra.mxu0 %v2454
        %4082 = vmatprep.subr.bf16.mxu0 %v2471
        %4083 = vmatpush1.bf16.msra.mxu0 %v2470
        %4084 = vmatprep.subr.bf16.mxu0 %v2487
        %4085 = vmatpush1.bf16.msra.mxu0 %v2486
        %4086 = vmatprep.subr.bf16.mxu0 %v2503
        %4087 = vmatpush1.bf16.msra.mxu0 %v2502
        %4088 = vmatprep.subr.bf16.mxu0 %v2519
        %4089 = vmatpush1.bf16.msra.mxu0 %v2518
        %4090 = vmatprep.subr.bf16.mxu0 %v2535
        %4091 = vmatpush1.bf16.msra.mxu0 %v2534
        %4092 = vmatprep.subr.bf16.mxu0 %v2551
        %4093 = vmatpush1.bf16.msra.mxu0 %v2550
        %4094 = vmatprep.mubr.bf16.mxu0 %v745
        %4095 = vmatmul.mubr.bf16.gmra.mrb[0].mxu0 %v744
        %v4096 = vpop.f32.mrb[0].mxu0
        %v4097 = vadd.f32 0.0, %v4096
        %v4098 = vpop.f32.mrb[0].mxu0
        %v4099 = vadd.f32 0.0, %v4098
        %v4100 = vpop.f32.mrb[0].mxu0
        %v4101 = vadd.f32 0.0, %v4100
        %v4102 = vpop.f32.mrb[0].mxu0
        %v4103 = vadd.f32 0.0, %v4102
        %4104 = vmatprep.mubr.bf16.mxu0 %v749
        %4105 = vmatmul.mubr.bf16.gmra.mrb[0].mxu0 %v748
        %v4106 = vpop.f32.mrb[0].mxu0
        %v4107 = vadd.f32 0.0, %v4106
        %v4108 = vpop.f32.mrb[0].mxu0
        %v4109 = vadd.f32 0.0, %v4108
        %v4110 = vpop.f32.mrb[0].mxu0
        %v4111 = vadd.f32 0.0, %v4110
        %v4112 = vpop.f32.mrb[0].mxu0
        %v4113 = vadd.f32 0.0, %v4112
        %4114 = vdwg.mxu0
        %4115 = vmatprep.subr.bf16.mxu0 %v2567
        %4116 = vmatpush1.bf16.msra.mxu0 %v2566
        %4117 = vmatprep.subr.bf16.mxu0 %v2583
        %4118 = vmatpush1.bf16.msra.mxu0 %v2582
        %4119 = vmatprep.subr.bf16.mxu0 %v2599
        %4120 = vmatpush1.bf16.msra.mxu0 %v2598
        %4121 = vmatprep.subr.bf16.mxu0 %v2615
        %4122 = vmatpush1.bf16.msra.mxu0 %v2614
        %4123 = vmatprep.subr.bf16.mxu0 %v2631
        %4124 = vmatpush1.bf16.msra.mxu0 %v2630
        %4125 = vmatprep.subr.bf16.mxu0 %v2647
        %4126 = vmatpush1.bf16.msra.mxu0 %v2646
        %4127 = vmatprep.subr.bf16.mxu0 %v2663
        %4128 = vmatpush1.bf16.msra.mxu0 %v2662
        %4129 = vmatprep.subr.bf16.mxu0 %v2679
        %4130 = vmatpush1.bf16.msra.mxu0 %v2678
        %4131 = vmatprep.subr.bf16.mxu0 %v2695
        %4132 = vmatpush1.bf16.msra.mxu0 %v2694
        %4133 = vmatprep.subr.bf16.mxu0 %v2711
        %4134 = vmatpush1.bf16.msra.mxu0 %v2710
        %4135 = vmatprep.subr.bf16.mxu0 %v2727
        %4136 = vmatpush1.bf16.msra.mxu0 %v2726
        %4137 = vmatprep.subr.bf16.mxu0 %v2743
        %4138 = vmatpush1.bf16.msra.mxu0 %v2742
        %4139 = vmatprep.subr.bf16.mxu0 %v2759
        %4140 = vmatpush1.bf16.msra.mxu0 %v2758
        %4141 = vmatprep.subr.bf16.mxu0 %v2775
        %4142 = vmatpush1.bf16.msra.mxu0 %v2774
        %4143 = vmatprep.subr.bf16.mxu0 %v2791
        %4144 = vmatpush1.bf16.msra.mxu0 %v2790
        %4145 = vmatprep.subr.bf16.mxu0 %v2807
        %4146 = vmatpush1.bf16.msra.mxu0 %v2806
        %4147 = vmatprep.mubr.bf16.mxu0 %v747
        %4148 = vmatmul.mubr.bf16.gmra.mrb[0].mxu0 %v746
        %v4149 = vpop.f32.mrb[0].mxu0
        %v4150 = vadd.f32 %v4097, %v4149
        %v4151 = vpop.f32.mrb[0].mxu0
        %v4152 = vadd.f32 %v4099, %v4151
        %v4153 = vpop.f32.mrb[0].mxu0
        %v4154 = vadd.f32 %v4101, %v4153
        %v4155 = vpop.f32.mrb[0].mxu0
        %v4156 = vadd.f32 %v4103, %v4155
        %4157 = vmatprep.mubr.bf16.mxu0 %v751
        %4158 = vmatmul.mubr.bf16.gmra.mrb[0].mxu0 %v750
        %v4159 = vpop.f32.mrb[0].mxu0
        %v4160 = vadd.f32 %v4107, %v4159
        %v4161 = vpop.f32.mrb[0].mxu0
        %v4162 = vadd.f32 %v4109, %v4161
        %v4163 = vpop.f32.mrb[0].mxu0
        %v4164 = vadd.f32 %v4111, %v4163
        %v4165 = vpop.f32.mrb[0].mxu0
        %v4166 = vadd.f32 %v4113, %v4165
        %4167 = vdwg.mxu0
        %4168 = vst [vmem:[%s189] sm:$0xff] %v3408
        %4169 = vst [vmem:[%s189 + $0x8] sm:$0xff] %v3410
        %4170 = vst [vmem:[%s189 + $0x10] sm:$0xff] %v3514
        %4171 = vst [vmem:[%s189 + $0x18] sm:$0xff] %v3516
        %4172 = vst [vmem:[%s189 + $0x20] sm:$0xff] %v3620
        %4173 = vst [vmem:[%s189 + $0x28] sm:$0xff] %v3622
        %4174 = vst [vmem:[%s189 + $0x30] sm:$0xff] %v3726
        %4175 = vst [vmem:[%s189 + $0x38] sm:$0xff] %v3728
        %4176 = vst [vmem:[%s189 + $0x40] sm:$0xff] %v3832
        %4177 = vst [vmem:[%s189 + $0x48] sm:$0xff] %v3834
        %4178 = vst [vmem:[%s189 + $0x50] sm:$0xff] %v3938
        %4179 = vst [vmem:[%s189 + $0x58] sm:$0xff] %v3940
        %4180 = vst [vmem:[%s189 + $0x60] sm:$0xff] %v4044
        %4181 = vst [vmem:[%s189 + $0x68] sm:$0xff] %v4046
        %4182 = vst [vmem:[%s189 + $0x70] sm:$0xff] %v4150
        %4183 = vst [vmem:[%s189 + $0x78] sm:$0xff] %v4152
        %4184 = vst [vmem:[%s189 + $0x80] sm:$0xff] %v3412
        %4185 = vst [vmem:[%s189 + $0x88] sm:$0xff] %v3414
        %4186 = vst [vmem:[%s189 + $0x90] sm:$0xff] %v3518
        %4187 = vst [vmem:[%s189 + $0x98] sm:$0xff] %v3520
        %4188 = vst [vmem:[%s189 + $0xa0] sm:$0xff] %v3624
        %4189 = vst [vmem:[%s189 + $0xa8] sm:$0xff] %v3626
        %4190 = vst [vmem:[%s189 + $0xb0] sm:$0xff] %v3730
        %4191 = vst [vmem:[%s189 + $0xb8] sm:$0xff] %v3732
        %4192 = vst [vmem:[%s189 + $0xc0] sm:$0xff] %v3836
        %4193 = vst [vmem:[%s189 + $0xc8] sm:$0xff] %v3838
        %4194 = vst [vmem:[%s189 + $0xd0] sm:$0xff] %v3942
        %4195 = vst [vmem:[%s189 + $0xd8] sm:$0xff] %v3944
        %4196 = vst [vmem:[%s189 + $0xe0] sm:$0xff] %v4048
        %4197 = vst [vmem:[%s189 + $0xe8] sm:$0xff] %v4050
        %4198 = vst [vmem:[%s189 + $0xf0] sm:$0xff] %v4154
        %4199 = vst [vmem:[%s189 + $0xf8] sm:$0xff] %v4156
        %4200 = vst [vmem:[%s189 + $0x100] sm:$0xff] %v3418
        %4201 = vst [vmem:[%s189 + $0x108] sm:$0xff] %v3420
        %4202 = vst [vmem:[%s189 + $0x110] sm:$0xff] %v3524
        %4203 = vst [vmem:[%s189 + $0x118] sm:$0xff] %v3526
        %4204 = vst [vmem:[%s189 + $0x120] sm:$0xff] %v3630
        %4205 = vst [vmem:[%s189 + $0x128] sm:$0xff] %v3632
        %4206 = vst [vmem:[%s189 + $0x130] sm:$0xff] %v3736
        %4207 = vst [vmem:[%s189 + $0x138] sm:$0xff] %v3738
        %4208 = vst [vmem:[%s189 + $0x140] sm:$0xff] %v3842
        %4209 = vst [vmem:[%s189 + $0x148] sm:$0xff] %v3844
        %4210 = vst [vmem:[%s189 + $0x150] sm:$0xff] %v3948
        %4211 = vst [vmem:[%s189 + $0x158] sm:$0xff] %v3950
        %4212 = vst [vmem:[%s189 + $0x160] sm:$0xff] %v4054
        %4213 = vst [vmem:[%s189 + $0x168] sm:$0xff] %v4056
        %4214 = vst [vmem:[%s189 + $0x170] sm:$0xff] %v4160
        %4215 = vst [vmem:[%s189 + $0x178] sm:$0xff] %v4162
        %4216 = vst [vmem:[%s189 + $0x180] sm:$0xff] %v3422
        %4217 = vst [vmem:[%s189 + $0x188] sm:$0xff] %v3424
        %4218 = vst [vmem:[%s189 + $0x190] sm:$0xff] %v3528
        %4219 = vst [vmem:[%s189 + $0x198] sm:$0xff] %v3530
        %4220 = vst [vmem:[%s189 + $0x1a0] sm:$0xff] %v3634
        %4221 = vst [vmem:[%s189 + $0x1a8] sm:$0xff] %v3636
        %4222 = vst [vmem:[%s189 + $0x1b0] sm:$0xff] %v3740
        %4223 = vst [vmem:[%s189 + $0x1b8] sm:$0xff] %v3742
        %4224 = vst [vmem:[%s189 + $0x1c0] sm:$0xff] %v3846
        %4225 = vst [vmem:[%s189 + $0x1c8] sm:$0xff] %v3848
        %4226 = vst [vmem:[%s189 + $0x1d0] sm:$0xff] %v3952
        %4227 = vst [vmem:[%s189 + $0x1d8] sm:$0xff] %v3954
        %4228 = vst [vmem:[%s189 + $0x1e0] sm:$0xff] %v4058
        %4229 = vst [vmem:[%s189 + $0x1e8] sm:$0xff] %v4060
        %4230 = vst [vmem:[%s189 + $0x1f0] sm:$0xff] %v4164
        %4231 = vst [vmem:[%s189 + $0x1f8] sm:$0xff] %v4166
        %s4232 = sand.u32 %s90, 1
        %s4233 = sand.u32 %s90, 1
        %s4234 = smul.addr %s4233, 512
        %s4235 = scalar_lea.vmem [#allocation4], %s4234
        // Predicated region
        $region33: #{netg_forward.12} parent=27 // pred_check
          %p4236 = pneg %p100
        $region34: #{netg_forward.12} parent=27 // pred_check_branch
          %4238 = sbr.rel (%p4236) target = $region36
        $region35: #{netg_forward.12} parent=27 // pred_region
          %s4239 = smul.u32 4, %s20
          %s4240 = smul.u32 16, %s21
          %s4241 = smul.addr %s4239, 32
          %s4242 = sadd.s32 %s4240, %s4241
          %s4243 = smul.addr %s4242, 8
          %s4244 = scalar_lea.vmem %s2, %s4243
          // Predicated region
          $region37: #{netg_forward.12} parent=35 // pred_check
            _
          $region38: #{netg_forward.12} parent=35 // pred_check_branch
            %4246 = sbr.rel (0) target = $region40
          $region39: #{netg_forward.12} parent=35 // pred_region
            // Predicated region
            $region41: #{netg_forward.12} parent=39 // pred_check
              _
            $region42: #{netg_forward.12} parent=39 // pred_check_branch
              %4248 = sbr.rel (0) target = $region44
            $region43: #{netg_forward.12} parent=39 // pred_region
              loop: start=0, step=1, limit=1
              $region45: #{netg_forward.12} parent=43 // loop_pre_header
                _
              $region46: #{netg_forward.12} parent=43 // loop_header
                %s4250 = sphi 0, %s4254
                %p4251 = scmp.ge.s32.totalorder %s4250, 1
                %s4255 = sphi %s4235, %s4235
                %s4256 = sphi %s4244, %s4244
              $region47: #{netg_forward.12} parent=43 // loop_header_branch
                %4253 = sbr.rel (%p4251) target = $region51
              $region48: #{netg_forward.12} parent=43 // loop_body
                %v4257 = vld [vmem:[%s4255] sm:$0xff]
                %4258 = vst [vmem:[%s4256] sm:$0xff] %v4257
                %v4259 = vld [vmem:[%s4255 + $0x8] sm:$0xff]
                %4260 = vst [vmem:[%s4256 + $0x8] sm:$0xff] %v4259
                %v4261 = vld [vmem:[%s4255 + $0x10] sm:$0xff]
                %4262 = vst [vmem:[%s4256 + $0x10] sm:$0xff] %v4261
                %v4263 = vld [vmem:[%s4255 + $0x18] sm:$0xff]
                %4264 = vst [vmem:[%s4256 + $0x18] sm:$0xff] %v4263
                %v4265 = vld [vmem:[%s4255 + $0x20] sm:$0xff]
                %4266 = vst [vmem:[%s4256 + $0x20] sm:$0xff] %v4265
                %v4267 = vld [vmem:[%s4255 + $0x28] sm:$0xff]
                %4268 = vst [vmem:[%s4256 + $0x28] sm:$0xff] %v4267
                %v4269 = vld [vmem:[%s4255 + $0x30] sm:$0xff]
                %4270 = vst [vmem:[%s4256 + $0x30] sm:$0xff] %v4269
                %v4271 = vld [vmem:[%s4255 + $0x38] sm:$0xff]
                %4272 = vst [vmem:[%s4256 + $0x38] sm:$0xff] %v4271
                %v4273 = vld [vmem:[%s4255 + $0x40] sm:$0xff]
                %4274 = vst [vmem:[%s4256 + $0x40] sm:$0xff] %v4273
                %v4275 = vld [vmem:[%s4255 + $0x48] sm:$0xff]
                %4276 = vst [vmem:[%s4256 + $0x48] sm:$0xff] %v4275
                %v4277 = vld [vmem:[%s4255 + $0x50] sm:$0xff]
                %4278 = vst [vmem:[%s4256 + $0x50] sm:$0xff] %v4277
                %v4279 = vld [vmem:[%s4255 + $0x58] sm:$0xff]
                %4280 = vst [vmem:[%s4256 + $0x58] sm:$0xff] %v4279
                %v4281 = vld [vmem:[%s4255 + $0x60] sm:$0xff]
                %4282 = vst [vmem:[%s4256 + $0x60] sm:$0xff] %v4281
                %v4283 = vld [vmem:[%s4255 + $0x68] sm:$0xff]
                %4284 = vst [vmem:[%s4256 + $0x68] sm:$0xff] %v4283
                %v4285 = vld [vmem:[%s4255 + $0x70] sm:$0xff]
                %4286 = vst [vmem:[%s4256 + $0x70] sm:$0xff] %v4285
                %v4287 = vld [vmem:[%s4255 + $0x78] sm:$0xff]
                %4288 = vst [vmem:[%s4256 + $0x78] sm:$0xff] %v4287
                %v4289 = vld [vmem:[%s4255 + $0x80] sm:$0xff]
                %4290 = vst [vmem:[%s4256 + $0x100] sm:$0xff] %v4289
                %v4291 = vld [vmem:[%s4255 + $0x88] sm:$0xff]
                %4292 = vst [vmem:[%s4256 + $0x108] sm:$0xff] %v4291
                %v4293 = vld [vmem:[%s4255 + $0x90] sm:$0xff]
                %4294 = vst [vmem:[%s4256 + $0x110] sm:$0xff] %v4293
                %v4295 = vld [vmem:[%s4255 + $0x98] sm:$0xff]
                %4296 = vst [vmem:[%s4256 + $0x118] sm:$0xff] %v4295
                %v4297 = vld [vmem:[%s4255 + $0xa0] sm:$0xff]
                %4298 = vst [vmem:[%s4256 + $0x120] sm:$0xff] %v4297
                %v4299 = vld [vmem:[%s4255 + $0xa8] sm:$0xff]
                %4300 = vst [vmem:[%s4256 + $0x128] sm:$0xff] %v4299
                %v4301 = vld [vmem:[%s4255 + $0xb0] sm:$0xff]
                %4302 = vst [vmem:[%s4256 + $0x130] sm:$0xff] %v4301
                %v4303 = vld [vmem:[%s4255 + $0xb8] sm:$0xff]
                %4304 = vst [vmem:[%s4256 + $0x138] sm:$0xff] %v4303
                %v4305 = vld [vmem:[%s4255 + $0xc0] sm:$0xff]
                %4306 = vst [vmem:[%s4256 + $0x140] sm:$0xff] %v4305
                %v4307 = vld [vmem:[%s4255 + $0xc8] sm:$0xff]
                %4308 = vst [vmem:[%s4256 + $0x148] sm:$0xff] %v4307
                %v4309 = vld [vmem:[%s4255 + $0xd0] sm:$0xff]
                %4310 = vst [vmem:[%s4256 + $0x150] sm:$0xff] %v4309
                %v4311 = vld [vmem:[%s4255 + $0xd8] sm:$0xff]
                %4312 = vst [vmem:[%s4256 + $0x158] sm:$0xff] %v4311
                %v4313 = vld [vmem:[%s4255 + $0xe0] sm:$0xff]
                %4314 = vst [vmem:[%s4256 + $0x160] sm:$0xff] %v4313
                %v4315 = vld [vmem:[%s4255 + $0xe8] sm:$0xff]
                %4316 = vst [vmem:[%s4256 + $0x168] sm:$0xff] %v4315
                %v4317 = vld [vmem:[%s4255 + $0xf0] sm:$0xff]
                %4318 = vst [vmem:[%s4256 + $0x170] sm:$0xff] %v4317
                %v4319 = vld [vmem:[%s4255 + $0xf8] sm:$0xff]
                %4320 = vst [vmem:[%s4256 + $0x178] sm:$0xff] %v4319
                %v4321 = vld [vmem:[%s4255 + $0x100] sm:$0xff]
                %4322 = vst [vmem:[%s4256 + $0x200] sm:$0xff] %v4321
                %v4323 = vld [vmem:[%s4255 + $0x108] sm:$0xff]
                %4324 = vst [vmem:[%s4256 + $0x208] sm:$0xff] %v4323
                %v4325 = vld [vmem:[%s4255 + $0x110] sm:$0xff]
                %4326 = vst [vmem:[%s4256 + $0x210] sm:$0xff] %v4325
                %v4327 = vld [vmem:[%s4255 + $0x118] sm:$0xff]
                %4328 = vst [vmem:[%s4256 + $0x218] sm:$0xff] %v4327
                %v4329 = vld [vmem:[%s4255 + $0x120] sm:$0xff]
                %4330 = vst [vmem:[%s4256 + $0x220] sm:$0xff] %v4329
                %v4331 = vld [vmem:[%s4255 + $0x128] sm:$0xff]
                %4332 = vst [vmem:[%s4256 + $0x228] sm:$0xff] %v4331
                %v4333 = vld [vmem:[%s4255 + $0x130] sm:$0xff]
                %4334 = vst [vmem:[%s4256 + $0x230] sm:$0xff] %v4333
                %v4335 = vld [vmem:[%s4255 + $0x138] sm:$0xff]
                %4336 = vst [vmem:[%s4256 + $0x238] sm:$0xff] %v4335
                %v4337 = vld [vmem:[%s4255 + $0x140] sm:$0xff]
                %4338 = vst [vmem:[%s4256 + $0x240] sm:$0xff] %v4337
                %v4339 = vld [vmem:[%s4255 + $0x148] sm:$0xff]
                %4340 = vst [vmem:[%s4256 + $0x248] sm:$0xff] %v4339
                %v4341 = vld [vmem:[%s4255 + $0x150] sm:$0xff]
                %4342 = vst [vmem:[%s4256 + $0x250] sm:$0xff] %v4341
                %v4343 = vld [vmem:[%s4255 + $0x158] sm:$0xff]
                %4344 = vst [vmem:[%s4256 + $0x258] sm:$0xff] %v4343
                %v4345 = vld [vmem:[%s4255 + $0x160] sm:$0xff]
                %4346 = vst [vmem:[%s4256 + $0x260] sm:$0xff] %v4345
                %v4347 = vld [vmem:[%s4255 + $0x168] sm:$0xff]
                %4348 = vst [vmem:[%s4256 + $0x268] sm:$0xff] %v4347
                %v4349 = vld [vmem:[%s4255 + $0x170] sm:$0xff]
                %4350 = vst [vmem:[%s4256 + $0x270] sm:$0xff] %v4349
                %v4351 = vld [vmem:[%s4255 + $0x178] sm:$0xff]
                %4352 = vst [vmem:[%s4256 + $0x278] sm:$0xff] %v4351
                %v4353 = vld [vmem:[%s4255 + $0x180] sm:$0xff]
                %4354 = vst [vmem:[%s4256 + $0x300] sm:$0xff] %v4353
                %v4355 = vld [vmem:[%s4255 + $0x188] sm:$0xff]
                %4356 = vst [vmem:[%s4256 + $0x308] sm:$0xff] %v4355
                %v4357 = vld [vmem:[%s4255 + $0x190] sm:$0xff]
                %4358 = vst [vmem:[%s4256 + $0x310] sm:$0xff] %v4357
                %v4359 = vld [vmem:[%s4255 + $0x198] sm:$0xff]
                %4360 = vst [vmem:[%s4256 + $0x318] sm:$0xff] %v4359
                %v4361 = vld [vmem:[%s4255 + $0x1a0] sm:$0xff]
                %4362 = vst [vmem:[%s4256 + $0x320] sm:$0xff] %v4361
                %v4363 = vld [vmem:[%s4255 + $0x1a8] sm:$0xff]
                %4364 = vst [vmem:[%s4256 + $0x328] sm:$0xff] %v4363
                %v4365 = vld [vmem:[%s4255 + $0x1b0] sm:$0xff]
                %4366 = vst [vmem:[%s4256 + $0x330] sm:$0xff] %v4365
                %v4367 = vld [vmem:[%s4255 + $0x1b8] sm:$0xff]
                %4368 = vst [vmem:[%s4256 + $0x338] sm:$0xff] %v4367
                %v4369 = vld [vmem:[%s4255 + $0x1c0] sm:$0xff]
                %4370 = vst [vmem:[%s4256 + $0x340] sm:$0xff] %v4369
                %v4371 = vld [vmem:[%s4255 + $0x1c8] sm:$0xff]
                %4372 = vst [vmem:[%s4256 + $0x348] sm:$0xff] %v4371
                %v4373 = vld [vmem:[%s4255 + $0x1d0] sm:$0xff]
                %4374 = vst [vmem:[%s4256 + $0x350] sm:$0xff] %v4373
                %v4375 = vld [vmem:[%s4255 + $0x1d8] sm:$0xff]
                %4376 = vst [vmem:[%s4256 + $0x358] sm:$0xff] %v4375
                %v4377 = vld [vmem:[%s4255 + $0x1e0] sm:$0xff]
                %4378 = vst [vmem:[%s4256 + $0x360] sm:$0xff] %v4377
                %v4379 = vld [vmem:[%s4255 + $0x1e8] sm:$0xff]
                %4380 = vst [vmem:[%s4256 + $0x368] sm:$0xff] %v4379
                %v4381 = vld [vmem:[%s4255 + $0x1f0] sm:$0xff]
                %4382 = vst [vmem:[%s4256 + $0x370] sm:$0xff] %v4381
                %v4383 = vld [vmem:[%s4255 + $0x1f8] sm:$0xff]
                %4384 = vst [vmem:[%s4256 + $0x378] sm:$0xff] %v4383
              $region49: #{netg_forward.12} parent=43 // loop_footer
                %s4254 = sadd.s32 1, %s4250
              $region50: #{netg_forward.12} parent=43 // loop_footer_branch
                %4249 = sbr.rel target = $region46
              $region51: #{netg_forward.12} parent=43 // loop_exit
                _
            $region44: #{netg_forward.12} parent=39 // pred_fallthru
              _
            // Predicated region
            $region52: #{netg_forward.12} parent=39 // pred_check
              _
            $region53: #{netg_forward.12} parent=39 // pred_check_branch
              %4386 = sbr.rel target = $region55
            $region54: #{netg_forward.12} parent=39 // pred_region
              _
            $region55: #{netg_forward.12} parent=39 // pred_fallthru
              _
          $region40: #{netg_forward.12} parent=35 // pred_fallthru
            _
          %4387 = vnop
        $region36: #{netg_forward.12} parent=27 // pred_fallthru
          _
      $region28: #{netg_forward.12} parent=5 // pred_fallthru
        _
      %p4388 = scmp.le.s32.totalorder 2, %s11
      // Predicated region
      $region56: #{netg_forward.12} parent=5 // pred_check
        %p4389 = pneg %p4388
      $region57: #{netg_forward.12} parent=5 // pred_check_branch
        %4391 = sbr.rel (%p4389) target = $region59
      $region58: #{netg_forward.12} parent=5 // pred_region
        %s4392 = ssub.s32 %s11, 2
        // Predicated region
        $region60: #{netg_forward.12} parent=58 // pred_check
          %p4393 = pneg %p106
        $region61: #{netg_forward.12} parent=58 // pred_check_branch
          %4395 = sbr.rel (%p4393) target = $region63
        $region62: #{netg_forward.12} parent=58 // pred_region
          %s4396 = sand.u32 %s91, 1
          %s4397 = sand.u32 %s91, 1
          %s4398 = smul.addr %s4397, 512
          %s4399 = scalar_lea.vmem [#allocation4], %s4398
        $region63: #{netg_forward.12} parent=58 // pred_fallthru
          _
      $region59: #{netg_forward.12} parent=5 // pred_fallthru
        _
    $region6: #{netg_forward.12} parent=1 // loop_footer
      %s15 = sadd.s32 1, %s11
    $region7: #{netg_forward.12} parent=1 // loop_footer_branch
      %10 = sbr.rel target = $region3
    $region8: #{netg_forward.12} parent=1 // loop_exit
      _
    %4400 = vsyncpa [#allocation3], 1
    %s4401 = scalar_lea.sflag [#allocation3], 1
    %4402 = vsyncpa %s4401, 1

// kernel: netg_forward.13
$region0: #{netg_forward.13}
  #allocation0 [shape = 'u32[]', space=smem, size = 0x4, offset = 0x4, fixed_abs, tag = 'smem constant byte address 0x4 - core index']
  #allocation1 [shape = 'u32[144,128]{1,0:T(1,128)}', space=vmem, size = 0x12000, scoped, tag = 'internal scratch']
  %s0 = inlined_call_operand.vmem [shape: f32[128,256], index: 0, kind: input, shape index: {}]
  %s1 = inlined_call_operand.vmem [shape: f32[1,256], index: 1, kind: input, shape index: {}]
  %s2 = inlined_call_operand.vmem [shape: f32[1,256], index: 2, kind: input, shape index: {}]
  %s3 = inlined_call_operand.vmem [shape: f32[128,256], index: 3, kind: output, shape index: {}]
  %s4 = sld [smem:[#allocation0]]
  $region22: #{netg_forward.13} parent=0
    _
  %s6 = ssub.s32 1, %s4
  %s7 = scalar_select 0, %s6, %s4
  // Predicated region
  $region2: #{netg_forward.13} parent=0 // pred_check
    _
  $region3: #{netg_forward.13} parent=0 // pred_check_branch
    %9 = sbr.rel (0) target = $region5
  $region4: #{netg_forward.13} parent=0 // pred_region
    _
  $region5: #{netg_forward.13} parent=0 // pred_fallthru
    _
  // Predicated region
  $region6: #{netg_forward.13} parent=0 // pred_check
    _
  $region7: #{netg_forward.13} parent=0 // pred_check_branch
    %11 = sbr.rel (0) target = $region9
  $region8: #{netg_forward.13} parent=0 // pred_region
    _
  $region9: #{netg_forward.13} parent=0 // pred_fallthru
    _
  // Predicated region
  $region10: #{netg_forward.13} parent=0 // pred_check
    _
  $region11: #{netg_forward.13} parent=0 // pred_check_branch
    %13 = sbr.rel (0) target = $region13
  $region12: #{netg_forward.13} parent=0 // pred_region
    _
  $region13: #{netg_forward.13} parent=0 // pred_fallthru
    _
  %v14 = vld [vmem:[%s0] sm:$0xff]
  %v15 = vld [vmem:[%s0 + $0x8] sm:$0xff]
  %v16 = vld [vmem:[%s0 + $0x10] sm:$0xff]
  %v17 = vld [vmem:[%s0 + $0x18] sm:$0xff]
  %v18 = vld [vmem:[%s0 + $0x20] sm:$0xff]
  %v19 = vld [vmem:[%s0 + $0x28] sm:$0xff]
  %v20 = vld [vmem:[%s0 + $0x30] sm:$0xff]
  %v21 = vld [vmem:[%s0 + $0x38] sm:$0xff]
  %v22 = vld [vmem:[%s0 + $0x40] sm:$0xff]
  %v23 = vld [vmem:[%s0 + $0x48] sm:$0xff]
  %v24 = vld [vmem:[%s0 + $0x50] sm:$0xff]
  %v25 = vld [vmem:[%s0 + $0x58] sm:$0xff]
  %v26 = vld [vmem:[%s0 + $0x60] sm:$0xff]
  %v27 = vld [vmem:[%s0 + $0x68] sm:$0xff]
  %v28 = vld [vmem:[%s0 + $0x70] sm:$0xff]
  %v29 = vld [vmem:[%s0 + $0x78] sm:$0xff]
  %v30 = vld [vmem:[%s0 + $0x80] sm:$0xff]
  %v31 = vld [vmem:[%s0 + $0x88] sm:$0xff]
  %v32 = vld [vmem:[%s0 + $0x90] sm:$0xff]
  %v33 = vld [vmem:[%s0 + $0x98] sm:$0xff]
  %v34 = vld [vmem:[%s0 + $0xa0] sm:$0xff]
  %v35 = vld [vmem:[%s0 + $0xa8] sm:$0xff]
  %v36 = vld [vmem:[%s0 + $0xb0] sm:$0xff]
  %v37 = vld [vmem:[%s0 + $0xb8] sm:$0xff]
  %v38 = vld [vmem:[%s0 + $0xc0] sm:$0xff]
  %v39 = vld [vmem:[%s0 + $0xc8] sm:$0xff]
  %v40 = vld [vmem:[%s0 + $0xd0] sm:$0xff]
  %v41 = vld [vmem:[%s0 + $0xd8] sm:$0xff]
  %v42 = vld [vmem:[%s0 + $0xe0] sm:$0xff]
  %v43 = vld [vmem:[%s0 + $0xe8] sm:$0xff]
  %v44 = vld [vmem:[%s0 + $0xf0] sm:$0xff]
  %v45 = vld [vmem:[%s0 + $0xf8] sm:$0xff]
  %v46 = vld [vmem:[%s1] sm:$0x3]
  %v48 = vlaneseq
  %v49 = vshrl.u32 %v48, 7
  %v50 = vsub.s32 0, %v49
  %v51 = vrot.slane %v46, %v50
  %v52 = vlaneseq
  %v53 = vshrl.u32 %v52, 7
  %v54 = vsub.s32 1, %v53
  %v55 = vrot.slane %v46, %v54
  %v58 = vmul.f32 %v14, %v51
  %v59 = vmul.f32 %v15, %v55
  %v60 = vmul.f32 %v16, %v51
  %v61 = vmul.f32 %v17, %v55
  %v62 = vmul.f32 %v18, %v51
  %v63 = vmul.f32 %v19, %v55
  %v64 = vmul.f32 %v20, %v51
  %v65 = vmul.f32 %v21, %v55
  %v66 = vmul.f32 %v22, %v51
  %v67 = vmul.f32 %v23, %v55
  %v68 = vmul.f32 %v24, %v51
  %v69 = vmul.f32 %v25, %v55
  %v70 = vmul.f32 %v26, %v51
  %v71 = vmul.f32 %v27, %v55
  %v72 = vmul.f32 %v28, %v51
  %v73 = vmul.f32 %v29, %v55
  %v74 = vmul.f32 %v30, %v51
  %v75 = vmul.f32 %v31, %v55
  %v76 = vmul.f32 %v32, %v51
  %v77 = vmul.f32 %v33, %v55
  %v78 = vmul.f32 %v34, %v51
  %v79 = vmul.f32 %v35, %v55
  %v80 = vmul.f32 %v36, %v51
  %v81 = vmul.f32 %v37, %v55
  %v82 = vmul.f32 %v38, %v51
  %v83 = vmul.f32 %v39, %v55
  %v84 = vmul.f32 %v40, %v51
  %v85 = vmul.f32 %v41, %v55
  %v86 = vmul.f32 %v42, %v51
  %v87 = vmul.f32 %v43, %v55
  %v88 = vmul.f32 %v44, %v51
  %v89 = vmul.f32 %v45, %v55
  %v90 = vld [vmem:[%s2] sm:$0x3]
  %v92 = vlaneseq
  %v93 = vshrl.u32 %v92, 7
  %v94 = vsub.s32 0, %v93
  %v95 = vrot.slane %v90, %v94
  %v96 = vlaneseq
  %v97 = vshrl.u32 %v96, 7
  %v98 = vsub.s32 1, %v97
  %v99 = vrot.slane %v90, %v98
  %v102 = vadd.f32 %v58, %v95
  %v103 = vadd.f32 %v59, %v99
  %v104 = vadd.f32 %v60, %v95
  %v105 = vadd.f32 %v61, %v99
  %v106 = vadd.f32 %v62, %v95
  %v107 = vadd.f32 %v63, %v99
  %v108 = vadd.f32 %v64, %v95
  %v109 = vadd.f32 %v65, %v99
  %v110 = vadd.f32 %v66, %v95
  %v111 = vadd.f32 %v67, %v99
  %v112 = vadd.f32 %v68, %v95
  %v113 = vadd.f32 %v69, %v99
  %v114 = vadd.f32 %v70, %v95
  %v115 = vadd.f32 %v71, %v99
  %v116 = vadd.f32 %v72, %v95
  %v117 = vadd.f32 %v73, %v99
  %v118 = vadd.f32 %v74, %v95
  %v119 = vadd.f32 %v75, %v99
  %v120 = vadd.f32 %v76, %v95
  %v121 = vadd.f32 %v77, %v99
  %v122 = vadd.f32 %v78, %v95
  %v123 = vadd.f32 %v79, %v99
  %v124 = vadd.f32 %v80, %v95
  %v125 = vadd.f32 %v81, %v99
  %v126 = vadd.f32 %v82, %v95
  %v127 = vadd.f32 %v83, %v99
  %v128 = vadd.f32 %v84, %v95
  %v129 = vadd.f32 %v85, %v99
  %v130 = vadd.f32 %v86, %v95
  %v131 = vadd.f32 %v87, %v99
  %v132 = vadd.f32 %v88, %v95
  %v133 = vadd.f32 %v89, %v99
  %v134 = vmax.f32 %v102, 0.0
  %v135 = vmax.f32 %v103, 0.0
  %v136 = vmax.f32 %v104, 0.0
  %v137 = vmax.f32 %v105, 0.0
  %v138 = vmax.f32 %v106, 0.0
  %v139 = vmax.f32 %v107, 0.0
  %v140 = vmax.f32 %v108, 0.0
  %v141 = vmax.f32 %v109, 0.0
  %v142 = vmax.f32 %v110, 0.0
  %v143 = vmax.f32 %v111, 0.0
  %v144 = vmax.f32 %v112, 0.0
  %v145 = vmax.f32 %v113, 0.0
  %v146 = vmax.f32 %v114, 0.0
  %v147 = vmax.f32 %v115, 0.0
  %v148 = vmax.f32 %v116, 0.0
  %v149 = vmax.f32 %v117, 0.0
  %v150 = vmax.f32 %v118, 0.0
  %v151 = vmax.f32 %v119, 0.0
  %v152 = vmax.f32 %v120, 0.0
  %v153 = vmax.f32 %v121, 0.0
  %v154 = vmax.f32 %v122, 0.0
  %v155 = vmax.f32 %v123, 0.0
  %v156 = vmax.f32 %v124, 0.0
  %v157 = vmax.f32 %v125, 0.0
  %v158 = vmax.f32 %v126, 0.0
  %v159 = vmax.f32 %v127, 0.0
  %v160 = vmax.f32 %v128, 0.0
  %v161 = vmax.f32 %v129, 0.0
  %v162 = vmax.f32 %v130, 0.0
  %v163 = vmax.f32 %v131, 0.0
  %v164 = vmax.f32 %v132, 0.0
  %v165 = vmax.f32 %v133, 0.0
  %166 = vst [vmem:[%s3] sm:$0xff] %v134
  %167 = vst [vmem:[%s3 + $0x8] sm:$0xff] %v135
  %168 = vst [vmem:[%s3 + $0x10] sm:$0xff] %v136
  %169 = vst [vmem:[%s3 + $0x18] sm:$0xff] %v137
  %170 = vst [vmem:[%s3 + $0x20] sm:$0xff] %v138
  %171 = vst [vmem:[%s3 + $0x28] sm:$0xff] %v139
  %172 = vst [vmem:[%s3 + $0x30] sm:$0xff] %v140
  %173 = vst [vmem:[%s3 + $0x38] sm:$0xff] %v141
  %174 = vst [vmem:[%s3 + $0x40] sm:$0xff] %v142
  %175 = vst [vmem:[%s3 + $0x48] sm:$0xff] %v143
  %176 = vst [vmem:[%s3 + $0x50] sm:$0xff] %v144
  %177 = vst [vmem:[%s3 + $0x58] sm:$0xff] %v145
  %178 = vst [vmem:[%s3 + $0x60] sm:$0xff] %v146
  %179 = vst [vmem:[%s3 + $0x68] sm:$0xff] %v147
  %180 = vst [vmem:[%s3 + $0x70] sm:$0xff] %v148
  %181 = vst [vmem:[%s3 + $0x78] sm:$0xff] %v149
  %182 = vst [vmem:[%s3 + $0x80] sm:$0xff] %v150
  %183 = vst [vmem:[%s3 + $0x88] sm:$0xff] %v151
  %184 = vst [vmem:[%s3 + $0x90] sm:$0xff] %v152
  %185 = vst [vmem:[%s3 + $0x98] sm:$0xff] %v153
  %186 = vst [vmem:[%s3 + $0xa0] sm:$0xff] %v154
  %187 = vst [vmem:[%s3 + $0xa8] sm:$0xff] %v155
  %188 = vst [vmem:[%s3 + $0xb0] sm:$0xff] %v156
  %189 = vst [vmem:[%s3 + $0xb8] sm:$0xff] %v157
  %190 = vst [vmem:[%s3 + $0xc0] sm:$0xff] %v158
  %191 = vst [vmem:[%s3 + $0xc8] sm:$0xff] %v159
  %192 = vst [vmem:[%s3 + $0xd0] sm:$0xff] %v160
  %193 = vst [vmem:[%s3 + $0xd8] sm:$0xff] %v161
  %194 = vst [vmem:[%s3 + $0xe0] sm:$0xff] %v162
  %195 = vst [vmem:[%s3 + $0xe8] sm:$0xff] %v163
  %196 = vst [vmem:[%s3 + $0xf0] sm:$0xff] %v164
  %197 = vst [vmem:[%s3 + $0xf8] sm:$0xff] %v165
  // Predicated region
  $region14: #{netg_forward.13} parent=0 // pred_check
    _
  $region15: #{netg_forward.13} parent=0 // pred_check_branch
    %199 = sbr.rel (0) target = $region17
  $region16: #{netg_forward.13} parent=0 // pred_region
    _
  $region17: #{netg_forward.13} parent=0 // pred_fallthru
    _
  // Predicated region
  $region18: #{netg_forward.13} parent=0 // pred_check
    _
  $region19: #{netg_forward.13} parent=0 // pred_check_branch
    %201 = sbr.rel (0) target = $region21
  $region20: #{netg_forward.13} parent=0 // pred_region
    _
  $region21: #{netg_forward.13} parent=0 // pred_fallthru
    _

// kernel: netg_forward.14
$region0: #{netg_forward.14}
  #allocation0 [shape = 'u32[]', space=smem, size = 0x4, offset = 0x4, fixed_abs, tag = 'smem constant byte address 0x4 - core index']
  #allocation1 [shape = 'u32[144,128]{1,0:T(1,128)}', space=vmem, size = 0x12000, scoped, tag = 'internal scratch']
  %s0 = inlined_call_operand.vmem [shape: bf16[128,256], index: 0, kind: input, shape index: {}]
  %s1 = inlined_call_operand.vmem [shape: bf16[256,2048], index: 1, kind: input, shape index: {}]
  %s2 = inlined_call_operand.vmem [shape: f32[128,2048], index: 2, kind: output, shape index: {}]
  %s3 = sld [smem:[#allocation0]]
  $region83: #{netg_forward.14} parent=0
    _
  %s5 = ssub.s32 1, %s3
  %s6 = scalar_select 0, %s5, %s3
  $region1: #{netg_forward.14} parent=0
    #allocation2 [shape = 'u8[1048576]{0}', space=vmem, size = 0x100000, scoped, tag = 'input window, operand 1']
    #allocation3 [shape = 'u8[1048576]{0}', space=vmem, size = 0x100000, scoped, tag = 'output window, operand 0']
    loop: start=0, step=1, limit=4
    $region2: #{netg_forward.14} parent=1 // loop_pre_header
      _
    $region3: #{netg_forward.14} parent=1 // loop_header
      %s8 = sphi 0, %s12
      %p9 = scmp.ge.s32.totalorder %s8, 4
      %s15 = sphi 0, %s27
      %s16 = sphi 0, %s23
      %s17 = sphi 0, %s15
      %s18 = sphi 0, %s16
      %s19 = sphi 0, %s17
      %s20 = sphi 0, %s18
      %s30 = sphi 0, %s32
      %s33 = sphi 0, %s30
      %s34 = sphi 0, %s33
      %s50 = sphi 0, %s34
      %s56 = sphi 0, %s58
      %s59 = sphi 0, %s56
      %s60 = sphi 0, %s59
      %s76 = sphi 0, %s60
      %s84 = sphi 0, %s86
      %s87 = sphi 0, %s84
      %s88 = sphi 0, %s87
      %s104 = sphi 0, %s88
    $region4: #{netg_forward.14} parent=1 // loop_header_branch
      %11 = sbr.rel (%p9) target = $region8
    $region5: #{netg_forward.14} parent=1 // loop_body
      %s13 = ssub.s32 %s8, 1
      %s14 = ssub.s32 %s8, 2
      %s21 = sadd.s32 1, %s16
      %p22 = scmp.ge.s32.totalorder %s21, 2
      %s23 = scalar_select %p22, 0, %s21
      %s24 = sadd.s32 1, %s15
      %s25 = scalar_select %p22, %s24, %s15
      %p26 = scmp.ge.s32.totalorder %s25, 1
      %s27 = scalar_select %p26, 0, %s25
      %s28 = ssub.s32 %s15, %s27
      %p29 = scmp.eq.s32.totalorder %s28, 0
      %s31 = sadd.s32 %s30, 1
      %s32 = scalar_select %p29, %s30, %s31
      %p35 = pneg %p29
      %p36 = scmp.eq.s32.totalorder %s8, 1
      %p37 = por %p35, %p36
      %p38 = scmp.ne.s32.totalorder %s30, %s33
      %p39 = scmp.eq.s32.totalorder %s8, 0
      %p40 = por %p38, %p39
      %p41 = scmp.ne.s32.totalorder %s30, %s33
      %p42 = scmp.eq.s32.totalorder %s13, 1
      %p43 = por %p41, %p42
      %p44 = scmp.ne.s32.totalorder %s33, %s34
      %p45 = scmp.eq.s32.totalorder %s13, 0
      %p46 = por %p44, %p45
      %p47 = scmp.ne.s32.totalorder %s33, %s34
      %p48 = scmp.eq.s32.totalorder %s14, 1
      %p49 = por %p47, %p48
      %p51 = scmp.ne.s32.totalorder %s34, %s50
      %p52 = scmp.eq.s32.totalorder %s14, 0
      %p53 = por %p51, %p52
      %s54 = ssub.s32 %s16, %s23
      %p55 = scmp.eq.s32.totalorder %s54, 0
      %s57 = sadd.s32 %s56, 1
      %s58 = scalar_select %p55, %s56, %s57
      %p61 = pneg %p55
      %p62 = scmp.eq.s32.totalorder %s8, 1
      %p63 = por %p61, %p62
      %p64 = scmp.ne.s32.totalorder %s56, %s59
      %p65 = scmp.eq.s32.totalorder %s8, 0
      %p66 = por %p64, %p65
      %p67 = scmp.ne.s32.totalorder %s56, %s59
      %p68 = scmp.eq.s32.totalorder %s13, 1
      %p69 = por %p67, %p68
      %p70 = scmp.ne.s32.totalorder %s59, %s60
      %p71 = scmp.eq.s32.totalorder %s13, 0
      %p72 = por %p70, %p71
      %p73 = scmp.ne.s32.totalorder %s59, %s60
      %p74 = scmp.eq.s32.totalorder %s14, 1
      %p75 = por %p73, %p74
      %p77 = scmp.ne.s32.totalorder %s60, %s76
      %p78 = scmp.eq.s32.totalorder %s14, 0
      %p79 = por %p77, %p78
      %s80 = ssub.s32 %s15, %s27
      %s81 = ssub.s32 %s16, %s23
      %s82 = sor.u32 %s80, %s81
      %p83 = scmp.eq.s32.totalorder %s82, 0
      %s85 = sadd.s32 %s84, 1
      %s86 = scalar_select %p83, %s84, %s85
      %p89 = pneg %p83
      %p90 = scmp.eq.s32.totalorder %s8, 1
      %p91 = por %p89, %p90
      %p92 = scmp.ne.s32.totalorder %s84, %s87
      %p93 = scmp.eq.s32.totalorder %s8, 0
      %p94 = por %p92, %p93
      %p95 = scmp.ne.s32.totalorder %s84, %s87
      %p96 = scmp.eq.s32.totalorder %s13, 1
      %p97 = por %p95, %p96
      %p98 = scmp.ne.s32.totalorder %s87, %s88
      %p99 = scmp.eq.s32.totalorder %s13, 0
      %p100 = por %p98, %p99
      %p101 = scmp.ne.s32.totalorder %s87, %s88
      %p102 = scmp.eq.s32.totalorder %s14, 1
      %p103 = por %p101, %p102
      %p105 = scmp.ne.s32.totalorder %s88, %s104
      %p106 = scmp.eq.s32.totalorder %s14, 0
      %p107 = por %p105, %p106
      %p108 = scmp.le.s32.totalorder 1, %s8
      %p109 = scmp.lt.s32.totalorder %s8, 3
      %p110 = pnand %p108, %p109
      %p111 = pneg %p110
      // Predicated region
      $region9: #{netg_forward.14} parent=5 // pred_check
        _
      $region10: #{netg_forward.14} parent=5 // pred_check_branch
        %113 = sbr.rel (%p110) target = $region12
      $region11: #{netg_forward.14} parent=5 // pred_region
        %s114 = ssub.s32 %s8, 1
        // Predicated region
        $region13: #{netg_forward.14} parent=11 // pred_check
          %p115 = pneg %p46
        $region14: #{netg_forward.14} parent=11 // pred_check_branch
          %117 = sbr.rel (%p115) target = $region16
        $region15: #{netg_forward.14} parent=11 // pred_region
          %s118 = smul.u32 16, %s17
          %p119 = scmp.lt.s32.totalorder %s118, 15
          %s120 = scalar_select %p119, %s118, 15
          %s121 = smul.addr %s120, 2
          %s122 = smul.addr %s121, 4
          %s123 = scalar_lea.vmem %s0, %s122
          %s124 = smul.u32 16, %s17
        $region16: #{netg_forward.14} parent=11 // pred_fallthru
          _
      $region12: #{netg_forward.14} parent=5 // pred_fallthru
        _
      %p125 = scmp.lt.s32.totalorder %s8, 2
      // Predicated region
      $region17: #{netg_forward.14} parent=5 // pred_check
        %p126 = pneg %p125
      $region18: #{netg_forward.14} parent=5 // pred_check_branch
        %128 = sbr.rel (%p126) target = $region20
      $region19: #{netg_forward.14} parent=5 // pred_region
        // Predicated region
        $region21: #{netg_forward.14} parent=19 // pred_check
          %p129 = pneg %p66
        $region22: #{netg_forward.14} parent=19 // pred_check_branch
          %131 = sbr.rel (%p129) target = $region24
        $region23: #{netg_forward.14} parent=19 // pred_region
          %s132 = sand.u32 %s56, 1
          %s133 = sand.u32 %s56, 1
          %s134 = smul.addr %s133, 1024
          %s135 = scalar_lea.vmem [#allocation2], %s134
          %s136 = smul.u32 8, %s16
          %s137 = smul.addr %s136, 4
          %s138 = scalar_lea.vmem %s1, %s137
          // Predicated region
          $region25: #{netg_forward.14} parent=23 // pred_check
            _
          $region26: #{netg_forward.14} parent=23 // pred_check_branch
            %140 = sbr.rel (0) target = $region28
          $region27: #{netg_forward.14} parent=23 // pred_region
            // Predicated region
            $region29: #{netg_forward.14} parent=27 // pred_check
              _
            $region30: #{netg_forward.14} parent=27 // pred_check_branch
              %142 = sbr.rel (0) target = $region32
            $region31: #{netg_forward.14} parent=27 // pred_region
              loop: start=0, step=1, limit=1
              $region33: #{netg_forward.14} parent=31 // loop_pre_header
                _
              $region34: #{netg_forward.14} parent=31 // loop_header
                %s144 = sphi 0, %s148
                %p145 = scmp.ge.s32.totalorder %s144, 1
                %s149 = sphi %s138, %s138
                %s150 = sphi %s135, %s135
              $region35: #{netg_forward.14} parent=31 // loop_header_branch
                %147 = sbr.rel (%p145) target = $region39
              $region36: #{netg_forward.14} parent=31 // loop_body
                %v151 = vld [vmem:[%s149] sm:$0xff]
                %152 = vst [vmem:[%s150] sm:$0xff] %v151
                %v153 = vld [vmem:[%s149 + $0x8] sm:$0xff]
                %154 = vst [vmem:[%s150 + $0x8] sm:$0xff] %v153
                %v155 = vld [vmem:[%s149 + $0x10] sm:$0xff]
                %156 = vst [vmem:[%s150 + $0x10] sm:$0xff] %v155
                %v157 = vld [vmem:[%s149 + $0x18] sm:$0xff]
                %158 = vst [vmem:[%s150 + $0x18] sm:$0xff] %v157
                %v159 = vld [vmem:[%s149 + $0x40] sm:$0xff]
                %160 = vst [vmem:[%s150 + $0x20] sm:$0xff] %v159
                %v161 = vld [vmem:[%s149 + $0x48] sm:$0xff]
                %162 = vst [vmem:[%s150 + $0x28] sm:$0xff] %v161
                %v163 = vld [vmem:[%s149 + $0x50] sm:$0xff]
                %164 = vst [vmem:[%s150 + $0x30] sm:$0xff] %v163
                %v165 = vld [vmem:[%s149 + $0x58] sm:$0xff]
                %166 = vst [vmem:[%s150 + $0x38] sm:$0xff] %v165
                %v167 = vld [vmem:[%s149 + $0x80] sm:$0xff]
                %168 = vst [vmem:[%s150 + $0x40] sm:$0xff] %v167
                %v169 = vld [vmem:[%s149 + $0x88] sm:$0xff]
                %170 = vst [vmem:[%s150 + $0x48] sm:$0xff] %v169
                %v171 = vld [vmem:[%s149 + $0x90] sm:$0xff]
                %172 = vst [vmem:[%s150 + $0x50] sm:$0xff] %v171
                %v173 = vld [vmem:[%s149 + $0x98] sm:$0xff]
                %174 = vst [vmem:[%s150 + $0x58] sm:$0xff] %v173
                %v175 = vld [vmem:[%s149 + $0xc0] sm:$0xff]
                %176 = vst [vmem:[%s150 + $0x60] sm:$0xff] %v175
                %v177 = vld [vmem:[%s149 + $0xc8] sm:$0xff]
                %178 = vst [vmem:[%s150 + $0x68] sm:$0xff] %v177
                %v179 = vld [vmem:[%s149 + $0xd0] sm:$0xff]
                %180 = vst [vmem:[%s150 + $0x70] sm:$0xff] %v179
                %v181 = vld [vmem:[%s149 + $0xd8] sm:$0xff]
                %182 = vst [vmem:[%s150 + $0x78] sm:$0xff] %v181
                %v183 = vld [vmem:[%s149 + $0x100] sm:$0xff]
                %184 = vst [vmem:[%s150 + $0x80] sm:$0xff] %v183
                %v185 = vld [vmem:[%s149 + $0x108] sm:$0xff]
                %186 = vst [vmem:[%s150 + $0x88] sm:$0xff] %v185
                %v187 = vld [vmem:[%s149 + $0x110] sm:$0xff]
                %188 = vst [vmem:[%s150 + $0x90] sm:$0xff] %v187
                %v189 = vld [vmem:[%s149 + $0x118] sm:$0xff]
                %190 = vst [vmem:[%s150 + $0x98] sm:$0xff] %v189
                %v191 = vld [vmem:[%s149 + $0x140] sm:$0xff]
                %192 = vst [vmem:[%s150 + $0xa0] sm:$0xff] %v191
                %v193 = vld [vmem:[%s149 + $0x148] sm:$0xff]
                %194 = vst [vmem:[%s150 + $0xa8] sm:$0xff] %v193
                %v195 = vld [vmem:[%s149 + $0x150] sm:$0xff]
                %196 = vst [vmem:[%s150 + $0xb0] sm:$0xff] %v195
                %v197 = vld [vmem:[%s149 + $0x158] sm:$0xff]
                %198 = vst [vmem:[%s150 + $0xb8] sm:$0xff] %v197
                %v199 = vld [vmem:[%s149 + $0x180] sm:$0xff]
                %200 = vst [vmem:[%s150 + $0xc0] sm:$0xff] %v199
                %v201 = vld [vmem:[%s149 + $0x188] sm:$0xff]
                %202 = vst [vmem:[%s150 + $0xc8] sm:$0xff] %v201
                %v203 = vld [vmem:[%s149 + $0x190] sm:$0xff]
                %204 = vst [vmem:[%s150 + $0xd0] sm:$0xff] %v203
                %v205 = vld [vmem:[%s149 + $0x198] sm:$0xff]
                %206 = vst [vmem:[%s150 + $0xd8] sm:$0xff] %v205
                %v207 = vld [vmem:[%s149 + $0x1c0] sm:$0xff]
                %208 = vst [vmem:[%s150 + $0xe0] sm:$0xff] %v207
                %v209 = vld [vmem:[%s149 + $0x1c8] sm:$0xff]
                %210 = vst [vmem:[%s150 + $0xe8] sm:$0xff] %v209
                %v211 = vld [vmem:[%s149 + $0x1d0] sm:$0xff]
                %212 = vst [vmem:[%s150 + $0xf0] sm:$0xff] %v211
                %v213 = vld [vmem:[%s149 + $0x1d8] sm:$0xff]
                %214 = vst [vmem:[%s150 + $0xf8] sm:$0xff] %v213
                %v215 = vld [vmem:[%s149 + $0x200] sm:$0xff]
                %216 = vst [vmem:[%s150 + $0x100] sm:$0xff] %v215
                %v217 = vld [vmem:[%s149 + $0x208] sm:$0xff]
                %218 = vst [vmem:[%s150 + $0x108] sm:$0xff] %v217
                %v219 = vld [vmem:[%s149 + $0x210] sm:$0xff]
                %220 = vst [vmem:[%s150 + $0x110] sm:$0xff] %v219
                %v221 = vld [vmem:[%s149 + $0x218] sm:$0xff]
                %222 = vst [vmem:[%s150 + $0x118] sm:$0xff] %v221
                %v223 = vld [vmem:[%s149 + $0x240] sm:$0xff]
                %224 = vst [vmem:[%s150 + $0x120] sm:$0xff] %v223
                %v225 = vld [vmem:[%s149 + $0x248] sm:$0xff]
                %226 = vst [vmem:[%s150 + $0x128] sm:$0xff] %v225
                %v227 = vld [vmem:[%s149 + $0x250] sm:$0xff]
                %228 = vst [vmem:[%s150 + $0x130] sm:$0xff] %v227
                %v229 = vld [vmem:[%s149 + $0x258] sm:$0xff]
                %230 = vst [vmem:[%s150 + $0x138] sm:$0xff] %v229
                %v231 = vld [vmem:[%s149 + $0x280] sm:$0xff]
                %232 = vst [vmem:[%s150 + $0x140] sm:$0xff] %v231
                %v233 = vld [vmem:[%s149 + $0x288] sm:$0xff]
                %234 = vst [vmem:[%s150 + $0x148] sm:$0xff] %v233
                %v235 = vld [vmem:[%s149 + $0x290] sm:$0xff]
                %236 = vst [vmem:[%s150 + $0x150] sm:$0xff] %v235
                %v237 = vld [vmem:[%s149 + $0x298] sm:$0xff]
                %238 = vst [vmem:[%s150 + $0x158] sm:$0xff] %v237
                %v239 = vld [vmem:[%s149 + $0x2c0] sm:$0xff]
                %240 = vst [vmem:[%s150 + $0x160] sm:$0xff] %v239
                %v241 = vld [vmem:[%s149 + $0x2c8] sm:$0xff]
                %242 = vst [vmem:[%s150 + $0x168] sm:$0xff] %v241
                %v243 = vld [vmem:[%s149 + $0x2d0] sm:$0xff]
                %244 = vst [vmem:[%s150 + $0x170] sm:$0xff] %v243
                %v245 = vld [vmem:[%s149 + $0x2d8] sm:$0xff]
                %246 = vst [vmem:[%s150 + $0x178] sm:$0xff] %v245
                %v247 = vld [vmem:[%s149 + $0x300] sm:$0xff]
                %248 = vst [vmem:[%s150 + $0x180] sm:$0xff] %v247
                %v249 = vld [vmem:[%s149 + $0x308] sm:$0xff]
                %250 = vst [vmem:[%s150 + $0x188] sm:$0xff] %v249
                %v251 = vld [vmem:[%s149 + $0x310] sm:$0xff]
                %252 = vst [vmem:[%s150 + $0x190] sm:$0xff] %v251
                %v253 = vld [vmem:[%s149 + $0x318] sm:$0xff]
                %254 = vst [vmem:[%s150 + $0x198] sm:$0xff] %v253
                %v255 = vld [vmem:[%s149 + $0x340] sm:$0xff]
                %256 = vst [vmem:[%s150 + $0x1a0] sm:$0xff] %v255
                %v257 = vld [vmem:[%s149 + $0x348] sm:$0xff]
                %258 = vst [vmem:[%s150 + $0x1a8] sm:$0xff] %v257
                %v259 = vld [vmem:[%s149 + $0x350] sm:$0xff]
                %260 = vst [vmem:[%s150 + $0x1b0] sm:$0xff] %v259
                %v261 = vld [vmem:[%s149 + $0x358] sm:$0xff]
                %262 = vst [vmem:[%s150 + $0x1b8] sm:$0xff] %v261
                %v263 = vld [vmem:[%s149 + $0x380] sm:$0xff]
                %264 = vst [vmem:[%s150 + $0x1c0] sm:$0xff] %v263
                %v265 = vld [vmem:[%s149 + $0x388] sm:$0xff]
                %266 = vst [vmem:[%s150 + $0x1c8] sm:$0xff] %v265
                %v267 = vld [vmem:[%s149 + $0x390] sm:$0xff]
                %268 = vst [vmem:[%s150 + $0x1d0] sm:$0xff] %v267
                %v269 = vld [vmem:[%s149 + $0x398] sm:$0xff]
                %270 = vst [vmem:[%s150 + $0x1d8] sm:$0xff] %v269
                %v271 = vld [vmem:[%s149 + $0x3c0] sm:$0xff]
                %272 = vst [vmem:[%s150 + $0x1e0] sm:$0xff] %v271
                %v273 = vld [vmem:[%s149 + $0x3c8] sm:$0xff]
                %274 = vst [vmem:[%s150 + $0x1e8] sm:$0xff] %v273
                %v275 = vld [vmem:[%s149 + $0x3d0] sm:$0xff]
                %276 = vst [vmem:[%s150 + $0x1f0] sm:$0xff] %v275
                %v277 = vld [vmem:[%s149 + $0x3d8] sm:$0xff]
                %278 = vst [vmem:[%s150 + $0x1f8] sm:$0xff] %v277
                %v279 = vld [vmem:[%s149 + $0x400] sm:$0xff]
                %280 = vst [vmem:[%s150 + $0x200] sm:$0xff] %v279
                %v281 = vld [vmem:[%s149 + $0x408] sm:$0xff]
                %282 = vst [vmem:[%s150 + $0x208] sm:$0xff] %v281
                %v283 = vld [vmem:[%s149 + $0x410] sm:$0xff]
                %284 = vst [vmem:[%s150 + $0x210] sm:$0xff] %v283
                %v285 = vld [vmem:[%s149 + $0x418] sm:$0xff]
                %286 = vst [vmem:[%s150 + $0x218] sm:$0xff] %v285
                %v287 = vld [vmem:[%s149 + $0x440] sm:$0xff]
                %288 = vst [vmem:[%s150 + $0x220] sm:$0xff] %v287
                %v289 = vld [vmem:[%s149 + $0x448] sm:$0xff]
                %290 = vst [vmem:[%s150 + $0x228] sm:$0xff] %v289
                %v291 = vld [vmem:[%s149 + $0x450] sm:$0xff]
                %292 = vst [vmem:[%s150 + $0x230] sm:$0xff] %v291
                %v293 = vld [vmem:[%s149 + $0x458] sm:$0xff]
                %294 = vst [vmem:[%s150 + $0x238] sm:$0xff] %v293
                %v295 = vld [vmem:[%s149 + $0x480] sm:$0xff]
                %296 = vst [vmem:[%s150 + $0x240] sm:$0xff] %v295
                %v297 = vld [vmem:[%s149 + $0x488] sm:$0xff]
                %298 = vst [vmem:[%s150 + $0x248] sm:$0xff] %v297
                %v299 = vld [vmem:[%s149 + $0x490] sm:$0xff]
                %300 = vst [vmem:[%s150 + $0x250] sm:$0xff] %v299
                %v301 = vld [vmem:[%s149 + $0x498] sm:$0xff]
                %302 = vst [vmem:[%s150 + $0x258] sm:$0xff] %v301
                %v303 = vld [vmem:[%s149 + $0x4c0] sm:$0xff]
                %304 = vst [vmem:[%s150 + $0x260] sm:$0xff] %v303
                %v305 = vld [vmem:[%s149 + $0x4c8] sm:$0xff]
                %306 = vst [vmem:[%s150 + $0x268] sm:$0xff] %v305
                %v307 = vld [vmem:[%s149 + $0x4d0] sm:$0xff]
                %308 = vst [vmem:[%s150 + $0x270] sm:$0xff] %v307
                %v309 = vld [vmem:[%s149 + $0x4d8] sm:$0xff]
                %310 = vst [vmem:[%s150 + $0x278] sm:$0xff] %v309
                %v311 = vld [vmem:[%s149 + $0x500] sm:$0xff]
                %312 = vst [vmem:[%s150 + $0x280] sm:$0xff] %v311
                %v313 = vld [vmem:[%s149 + $0x508] sm:$0xff]
                %314 = vst [vmem:[%s150 + $0x288] sm:$0xff] %v313
                %v315 = vld [vmem:[%s149 + $0x510] sm:$0xff]
                %316 = vst [vmem:[%s150 + $0x290] sm:$0xff] %v315
                %v317 = vld [vmem:[%s149 + $0x518] sm:$0xff]
                %318 = vst [vmem:[%s150 + $0x298] sm:$0xff] %v317
                %v319 = vld [vmem:[%s149 + $0x540] sm:$0xff]
                %320 = vst [vmem:[%s150 + $0x2a0] sm:$0xff] %v319
                %v321 = vld [vmem:[%s149 + $0x548] sm:$0xff]
                %322 = vst [vmem:[%s150 + $0x2a8] sm:$0xff] %v321
                %v323 = vld [vmem:[%s149 + $0x550] sm:$0xff]
                %324 = vst [vmem:[%s150 + $0x2b0] sm:$0xff] %v323
                %v325 = vld [vmem:[%s149 + $0x558] sm:$0xff]
                %326 = vst [vmem:[%s150 + $0x2b8] sm:$0xff] %v325
                %v327 = vld [vmem:[%s149 + $0x580] sm:$0xff]
                %328 = vst [vmem:[%s150 + $0x2c0] sm:$0xff] %v327
                %v329 = vld [vmem:[%s149 + $0x588] sm:$0xff]
                %330 = vst [vmem:[%s150 + $0x2c8] sm:$0xff] %v329
                %v331 = vld [vmem:[%s149 + $0x590] sm:$0xff]
                %332 = vst [vmem:[%s150 + $0x2d0] sm:$0xff] %v331
                %v333 = vld [vmem:[%s149 + $0x598] sm:$0xff]
                %334 = vst [vmem:[%s150 + $0x2d8] sm:$0xff] %v333
                %v335 = vld [vmem:[%s149 + $0x5c0] sm:$0xff]
                %336 = vst [vmem:[%s150 + $0x2e0] sm:$0xff] %v335
                %v337 = vld [vmem:[%s149 + $0x5c8] sm:$0xff]
                %338 = vst [vmem:[%s150 + $0x2e8] sm:$0xff] %v337
                %v339 = vld [vmem:[%s149 + $0x5d0] sm:$0xff]
                %340 = vst [vmem:[%s150 + $0x2f0] sm:$0xff] %v339
                %v341 = vld [vmem:[%s149 + $0x5d8] sm:$0xff]
                %342 = vst [vmem:[%s150 + $0x2f8] sm:$0xff] %v341
                %v343 = vld [vmem:[%s149 + $0x600] sm:$0xff]
                %344 = vst [vmem:[%s150 + $0x300] sm:$0xff] %v343
                %v345 = vld [vmem:[%s149 + $0x608] sm:$0xff]
                %346 = vst [vmem:[%s150 + $0x308] sm:$0xff] %v345
                %v347 = vld [vmem:[%s149 + $0x610] sm:$0xff]
                %348 = vst [vmem:[%s150 + $0x310] sm:$0xff] %v347
                %v349 = vld [vmem:[%s149 + $0x618] sm:$0xff]
                %350 = vst [vmem:[%s150 + $0x318] sm:$0xff] %v349
                %v351 = vld [vmem:[%s149 + $0x640] sm:$0xff]
                %352 = vst [vmem:[%s150 + $0x320] sm:$0xff] %v351
                %v353 = vld [vmem:[%s149 + $0x648] sm:$0xff]
                %354 = vst [vmem:[%s150 + $0x328] sm:$0xff] %v353
                %v355 = vld [vmem:[%s149 + $0x650] sm:$0xff]
                %356 = vst [vmem:[%s150 + $0x330] sm:$0xff] %v355
                %v357 = vld [vmem:[%s149 + $0x658] sm:$0xff]
                %358 = vst [vmem:[%s150 + $0x338] sm:$0xff] %v357
                %v359 = vld [vmem:[%s149 + $0x680] sm:$0xff]
                %360 = vst [vmem:[%s150 + $0x340] sm:$0xff] %v359
                %v361 = vld [vmem:[%s149 + $0x688] sm:$0xff]
                %362 = vst [vmem:[%s150 + $0x348] sm:$0xff] %v361
                %v363 = vld [vmem:[%s149 + $0x690] sm:$0xff]
                %364 = vst [vmem:[%s150 + $0x350] sm:$0xff] %v363
                %v365 = vld [vmem:[%s149 + $0x698] sm:$0xff]
                %366 = vst [vmem:[%s150 + $0x358] sm:$0xff] %v365
                %v367 = vld [vmem:[%s149 + $0x6c0] sm:$0xff]
                %368 = vst [vmem:[%s150 + $0x360] sm:$0xff] %v367
                %v369 = vld [vmem:[%s149 + $0x6c8] sm:$0xff]
                %370 = vst [vmem:[%s150 + $0x368] sm:$0xff] %v369
                %v371 = vld [vmem:[%s149 + $0x6d0] sm:$0xff]
                %372 = vst [vmem:[%s150 + $0x370] sm:$0xff] %v371
                %v373 = vld [vmem:[%s149 + $0x6d8] sm:$0xff]
                %374 = vst [vmem:[%s150 + $0x378] sm:$0xff] %v373
                %v375 = vld [vmem:[%s149 + $0x700] sm:$0xff]
                %376 = vst [vmem:[%s150 + $0x380] sm:$0xff] %v375
                %v377 = vld [vmem:[%s149 + $0x708] sm:$0xff]
                %378 = vst [vmem:[%s150 + $0x388] sm:$0xff] %v377
                %v379 = vld [vmem:[%s149 + $0x710] sm:$0xff]
                %380 = vst [vmem:[%s150 + $0x390] sm:$0xff] %v379
                %v381 = vld [vmem:[%s149 + $0x718] sm:$0xff]
                %382 = vst [vmem:[%s150 + $0x398] sm:$0xff] %v381
                %v383 = vld [vmem:[%s149 + $0x740] sm:$0xff]
                %384 = vst [vmem:[%s150 + $0x3a0] sm:$0xff] %v383
                %v385 = vld [vmem:[%s149 + $0x748] sm:$0xff]
                %386 = vst [vmem:[%s150 + $0x3a8] sm:$0xff] %v385
                %v387 = vld [vmem:[%s149 + $0x750] sm:$0xff]
                %388 = vst [vmem:[%s150 + $0x3b0] sm:$0xff] %v387
                %v389 = vld [vmem:[%s149 + $0x758] sm:$0xff]
                %390 = vst [vmem:[%s150 + $0x3b8] sm:$0xff] %v389
                %v391 = vld [vmem:[%s149 + $0x780] sm:$0xff]
                %392 = vst [vmem:[%s150 + $0x3c0] sm:$0xff] %v391
                %v393 = vld [vmem:[%s149 + $0x788] sm:$0xff]
                %394 = vst [vmem:[%s150 + $0x3c8] sm:$0xff] %v393
                %v395 = vld [vmem:[%s149 + $0x790] sm:$0xff]
                %396 = vst [vmem:[%s150 + $0x3d0] sm:$0xff] %v395
                %v397 = vld [vmem:[%s149 + $0x798] sm:$0xff]
                %398 = vst [vmem:[%s150 + $0x3d8] sm:$0xff] %v397
                %v399 = vld [vmem:[%s149 + $0x7c0] sm:$0xff]
                %400 = vst [vmem:[%s150 + $0x3e0] sm:$0xff] %v399
                %v401 = vld [vmem:[%s149 + $0x7c8] sm:$0xff]
                %402 = vst [vmem:[%s150 + $0x3e8] sm:$0xff] %v401
                %v403 = vld [vmem:[%s149 + $0x7d0] sm:$0xff]
                %404 = vst [vmem:[%s150 + $0x3f0] sm:$0xff] %v403
                %v405 = vld [vmem:[%s149 + $0x7d8] sm:$0xff]
                %406 = vst [vmem:[%s150 + $0x3f8] sm:$0xff] %v405
              $region37: #{netg_forward.14} parent=31 // loop_footer
                %s148 = sadd.s32 1, %s144
              $region38: #{netg_forward.14} parent=31 // loop_footer_branch
                %143 = sbr.rel target = $region34
              $region39: #{netg_forward.14} parent=31 // loop_exit
                _
            $region32: #{netg_forward.14} parent=27 // pred_fallthru
              _
            // Predicated region
            $region40: #{netg_forward.14} parent=27 // pred_check
              _
            $region41: #{netg_forward.14} parent=27 // pred_check_branch
              %408 = sbr.rel target = $region43
            $region42: #{netg_forward.14} parent=27 // pred_region
              _
            $region43: #{netg_forward.14} parent=27 // pred_fallthru
              _
          $region28: #{netg_forward.14} parent=23 // pred_fallthru
            _
          %409 = vnop
        $region24: #{netg_forward.14} parent=19 // pred_fallthru
          _
      $region20: #{netg_forward.14} parent=5 // pred_fallthru
        _
      %p410 = scmp.le.s32.totalorder 1, %s8
      %p411 = scmp.lt.s32.totalorder %s8, 3
      %p412 = pnand %p410, %p411
      %p413 = pneg %p412
      // Predicated region
      $region44: #{netg_forward.14} parent=5 // pred_check
        _
      $region45: #{netg_forward.14} parent=5 // pred_check_branch
        %415 = sbr.rel (%p412) target = $region47
      $region46: #{netg_forward.14} parent=5 // pred_region
        %s416 = ssub.s32 %s8, 1
        %s417 = sand.u32 %s59, 1
        %s418 = sand.u32 %s59, 1
        %s419 = smul.addr %s418, 1024
        %s420 = scalar_lea.vmem [#allocation2], %s419
        // Predicated region
        $region48: #{netg_forward.14} parent=46 // pred_check
          %p421 = pneg %p72
        $region49: #{netg_forward.14} parent=46 // pred_check_branch
          %423 = sbr.rel (%p421) target = $region51
        $region50: #{netg_forward.14} parent=46 // pred_region
          _
        $region51: #{netg_forward.14} parent=46 // pred_fallthru
          _
        %s424 = smul.u32 16, %s17
        %p425 = scmp.lt.s32.totalorder %s424, 15
        %s426 = scalar_select %p425, %s424, 15
        %s427 = smul.addr %s426, 2
        %s428 = smul.addr %s427, 4
        %s429 = scalar_lea.vmem %s0, %s428
        %p430 = pneg %p46
        %p431 = pneg %p43
        %s432 = sand.u32 %s59, 1
        %s433 = sand.u32 %s59, 1
        %s434 = smul.addr %s433, 1024
        %s435 = scalar_lea.vmem [#allocation2], %s434
        %p436 = pneg %p72
        %p437 = pneg %p69
        %p438 = pneg %p100
        %p439 = pneg %p97
        %s440 = sand.u32 %s87, 1
        %s441 = sand.u32 %s87, 1
        %s442 = smul.addr %s441, 1024
        %s443 = scalar_lea.vmem [#allocation3], %s442
        %s444 = smul.u32 16, %s17
        %p445 = scmp.lt.s32.totalorder %s444, 15
        %s446 = scalar_select %p445, %s444, 15
        %s447 = smul.addr %s446, 2
        %s448 = smul.addr %s447, 4
        %s449 = scalar_lea.vmem %s0, %s448
        %s450 = smul.u32 16, %s17
        %s451 = smul.u32 8, %s18
        %s452 = smul.u32 16, %s17
        %s453 = smul.u32 8, %s18
        %v454 = vld [vmem:[%s449] sm:$0xff]
        %v455 = vld [vmem:[%s449 + $0x8] sm:$0xff]
        %v456 = vld [vmem:[%s449 + $0x10] sm:$0xff]
        %v457 = vld [vmem:[%s449 + $0x18] sm:$0xff]
        %v458 = vld [vmem:[%s449 + $0x20] sm:$0xff]
        %v459 = vld [vmem:[%s449 + $0x28] sm:$0xff]
        %v460 = vld [vmem:[%s449 + $0x30] sm:$0xff]
        %v461 = vld [vmem:[%s449 + $0x38] sm:$0xff]
        %v462 = vld [vmem:[%s449 + $0x40] sm:$0xff]
        %v463 = vld [vmem:[%s449 + $0x48] sm:$0xff]
        %v464 = vld [vmem:[%s449 + $0x50] sm:$0xff]
        %v465 = vld [vmem:[%s449 + $0x58] sm:$0xff]
        %v466 = vld [vmem:[%s449 + $0x60] sm:$0xff]
        %v467 = vld [vmem:[%s449 + $0x68] sm:$0xff]
        %v468 = vld [vmem:[%s449 + $0x70] sm:$0xff]
        %v469 = vld [vmem:[%s449 + $0x78] sm:$0xff]
        %v470 = vld [vmem:[%s420] sm:$0xff]
        %v471 = vld [vmem:[%s420 + $0x8] sm:$0xff]
        %v472 = vld [vmem:[%s420 + $0x10] sm:$0xff]
        %v473 = vld [vmem:[%s420 + $0x18] sm:$0xff]
        %v474 = vld [vmem:[%s420 + $0x20] sm:$0xff]
        %v475 = vld [vmem:[%s420 + $0x28] sm:$0xff]
        %v476 = vld [vmem:[%s420 + $0x30] sm:$0xff]
        %v477 = vld [vmem:[%s420 + $0x38] sm:$0xff]
        %v478 = vld [vmem:[%s420 + $0x40] sm:$0xff]
        %v479 = vld [vmem:[%s420 + $0x48] sm:$0xff]
        %v480 = vld [vmem:[%s420 + $0x50] sm:$0xff]
        %v481 = vld [vmem:[%s420 + $0x58] sm:$0xff]
        %v482 = vld [vmem:[%s420 + $0x60] sm:$0xff]
        %v483 = vld [vmem:[%s420 + $0x68] sm:$0xff]
        %v484 = vld [vmem:[%s420 + $0x70] sm:$0xff]
        %v485 = vld [vmem:[%s420 + $0x78] sm:$0xff]
        %v486 = vld [vmem:[%s420 + $0x80] sm:$0xff]
        %v487 = vld [vmem:[%s420 + $0x88] sm:$0xff]
        %v488 = vld [vmem:[%s420 + $0x90] sm:$0xff]
        %v489 = vld [vmem:[%s420 + $0x98] sm:$0xff]
        %v490 = vld [vmem:[%s420 + $0xa0] sm:$0xff]
        %v491 = vld [vmem:[%s420 + $0xa8] sm:$0xff]
        %v492 = vld [vmem:[%s420 + $0xb0] sm:$0xff]
        %v493 = vld [vmem:[%s420 + $0xb8] sm:$0xff]
        %v494 = vld [vmem:[%s420 + $0xc0] sm:$0xff]
        %v495 = vld [vmem:[%s420 + $0xc8] sm:$0xff]
        %v496 = vld [vmem:[%s420 + $0xd0] sm:$0xff]
        %v497 = vld [vmem:[%s420 + $0xd8] sm:$0xff]
        %v498 = vld [vmem:[%s420 + $0xe0] sm:$0xff]
        %v499 = vld [vmem:[%s420 + $0xe8] sm:$0xff]
        %v500 = vld [vmem:[%s420 + $0xf0] sm:$0xff]
        %v501 = vld [vmem:[%s420 + $0xf8] sm:$0xff]
        %v502 = vld [vmem:[%s420 + $0x100] sm:$0xff]
        %v503 = vld [vmem:[%s420 + $0x108] sm:$0xff]
        %v504 = vld [vmem:[%s420 + $0x110] sm:$0xff]
        %v505 = vld [vmem:[%s420 + $0x118] sm:$0xff]
        %v506 = vld [vmem:[%s420 + $0x120] sm:$0xff]
        %v507 = vld [vmem:[%s420 + $0x128] sm:$0xff]
        %v508 = vld [vmem:[%s420 + $0x130] sm:$0xff]
        %v509 = vld [vmem:[%s420 + $0x138] sm:$0xff]
        %v510 = vld [vmem:[%s420 + $0x140] sm:$0xff]
        %v511 = vld [vmem:[%s420 + $0x148] sm:$0xff]
        %v512 = vld [vmem:[%s420 + $0x150] sm:$0xff]
        %v513 = vld [vmem:[%s420 + $0x158] sm:$0xff]
        %v514 = vld [vmem:[%s420 + $0x160] sm:$0xff]
        %v515 = vld [vmem:[%s420 + $0x168] sm:$0xff]
        %v516 = vld [vmem:[%s420 + $0x170] sm:$0xff]
        %v517 = vld [vmem:[%s420 + $0x178] sm:$0xff]
        %v518 = vld [vmem:[%s420 + $0x180] sm:$0xff]
        %v519 = vld [vmem:[%s420 + $0x188] sm:$0xff]
        %v520 = vld [vmem:[%s420 + $0x190] sm:$0xff]
        %v521 = vld [vmem:[%s420 + $0x198] sm:$0xff]
        %v522 = vld [vmem:[%s420 + $0x1a0] sm:$0xff]
        %v523 = vld [vmem:[%s420 + $0x1a8] sm:$0xff]
        %v524 = vld [vmem:[%s420 + $0x1b0] sm:$0xff]
        %v525 = vld [vmem:[%s420 + $0x1b8] sm:$0xff]
        %v526 = vld [vmem:[%s420 + $0x1c0] sm:$0xff]
        %v527 = vld [vmem:[%s420 + $0x1c8] sm:$0xff]
        %v528 = vld [vmem:[%s420 + $0x1d0] sm:$0xff]
        %v529 = vld [vmem:[%s420 + $0x1d8] sm:$0xff]
        %v530 = vld [vmem:[%s420 + $0x1e0] sm:$0xff]
        %v531 = vld [vmem:[%s420 + $0x1e8] sm:$0xff]
        %v532 = vld [vmem:[%s420 + $0x1f0] sm:$0xff]
        %v533 = vld [vmem:[%s420 + $0x1f8] sm:$0xff]
        %v534 = vld [vmem:[%s420 + $0x200] sm:$0xff]
        %v535 = vld [vmem:[%s420 + $0x208] sm:$0xff]
        %v536 = vld [vmem:[%s420 + $0x210] sm:$0xff]
        %v537 = vld [vmem:[%s420 + $0x218] sm:$0xff]
        %v538 = vld [vmem:[%s420 + $0x220] sm:$0xff]
        %v539 = vld [vmem:[%s420 + $0x228] sm:$0xff]
        %v540 = vld [vmem:[%s420 + $0x230] sm:$0xff]
        %v541 = vld [vmem:[%s420 + $0x238] sm:$0xff]
        %v542 = vld [vmem:[%s420 + $0x240] sm:$0xff]
        %v543 = vld [vmem:[%s420 + $0x248] sm:$0xff]
        %v544 = vld [vmem:[%s420 + $0x250] sm:$0xff]
        %v545 = vld [vmem:[%s420 + $0x258] sm:$0xff]
        %v546 = vld [vmem:[%s420 + $0x260] sm:$0xff]
        %v547 = vld [vmem:[%s420 + $0x268] sm:$0xff]
        %v548 = vld [vmem:[%s420 + $0x270] sm:$0xff]
        %v549 = vld [vmem:[%s420 + $0x278] sm:$0xff]
        %v550 = vld [vmem:[%s420 + $0x280] sm:$0xff]
        %v551 = vld [vmem:[%s420 + $0x288] sm:$0xff]
        %v552 = vld [vmem:[%s420 + $0x290] sm:$0xff]
        %v553 = vld [vmem:[%s420 + $0x298] sm:$0xff]
        %v554 = vld [vmem:[%s420 + $0x2a0] sm:$0xff]
        %v555 = vld [vmem:[%s420 + $0x2a8] sm:$0xff]
        %v556 = vld [vmem:[%s420 + $0x2b0] sm:$0xff]
        %v557 = vld [vmem:[%s420 + $0x2b8] sm:$0xff]
        %v558 = vld [vmem:[%s420 + $0x2c0] sm:$0xff]
        %v559 = vld [vmem:[%s420 + $0x2c8] sm:$0xff]
        %v560 = vld [vmem:[%s420 + $0x2d0] sm:$0xff]
        %v561 = vld [vmem:[%s420 + $0x2d8] sm:$0xff]
        %v562 = vld [vmem:[%s420 + $0x2e0] sm:$0xff]
        %v563 = vld [vmem:[%s420 + $0x2e8] sm:$0xff]
        %v564 = vld [vmem:[%s420 + $0x2f0] sm:$0xff]
        %v565 = vld [vmem:[%s420 + $0x2f8] sm:$0xff]
        %v566 = vld [vmem:[%s420 + $0x300] sm:$0xff]
        %v567 = vld [vmem:[%s420 + $0x308] sm:$0xff]
        %v568 = vld [vmem:[%s420 + $0x310] sm:$0xff]
        %v569 = vld [vmem:[%s420 + $0x318] sm:$0xff]
        %v570 = vld [vmem:[%s420 + $0x320] sm:$0xff]
        %v571 = vld [vmem:[%s420 + $0x328] sm:$0xff]
        %v572 = vld [vmem:[%s420 + $0x330] sm:$0xff]
        %v573 = vld [vmem:[%s420 + $0x338] sm:$0xff]
        %v574 = vld [vmem:[%s420 + $0x340] sm:$0xff]
        %v575 = vld [vmem:[%s420 + $0x348] sm:$0xff]
        %v576 = vld [vmem:[%s420 + $0x350] sm:$0xff]
        %v577 = vld [vmem:[%s420 + $0x358] sm:$0xff]
        %v578 = vld [vmem:[%s420 + $0x360] sm:$0xff]
        %v579 = vld [vmem:[%s420 + $0x368] sm:$0xff]
        %v580 = vld [vmem:[%s420 + $0x370] sm:$0xff]
        %v581 = vld [vmem:[%s420 + $0x378] sm:$0xff]
        %v582 = vld [vmem:[%s420 + $0x380] sm:$0xff]
        %v583 = vld [vmem:[%s420 + $0x388] sm:$0xff]
        %v584 = vld [vmem:[%s420 + $0x390] sm:$0xff]
        %v585 = vld [vmem:[%s420 + $0x398] sm:$0xff]
        %v586 = vld [vmem:[%s420 + $0x3a0] sm:$0xff]
        %v587 = vld [vmem:[%s420 + $0x3a8] sm:$0xff]
        %v588 = vld [vmem:[%s420 + $0x3b0] sm:$0xff]
        %v589 = vld [vmem:[%s420 + $0x3b8] sm:$0xff]
        %v590 = vld [vmem:[%s420 + $0x3c0] sm:$0xff]
        %v591 = vld [vmem:[%s420 + $0x3c8] sm:$0xff]
        %v592 = vld [vmem:[%s420 + $0x3d0] sm:$0xff]
        %v593 = vld [vmem:[%s420 + $0x3d8] sm:$0xff]
        %v594 = vld [vmem:[%s420 + $0x3e0] sm:$0xff]
        %v595 = vld [vmem:[%s420 + $0x3e8] sm:$0xff]
        %v596 = vld [vmem:[%s420 + $0x3f0] sm:$0xff]
        %v597 = vld [vmem:[%s420 + $0x3f8] sm:$0xff]
        %v614 = vunpack.c.l.b16 %v454
        %v615 = vunpack.c.h.b16 %v454
        %v616 = vunpack.c.l.b16 %v455
        %v617 = vunpack.c.h.b16 %v455
        %v618 = vunpack.c.l.b16 %v456
        %v619 = vunpack.c.h.b16 %v456
        %v620 = vunpack.c.l.b16 %v457
        %v621 = vunpack.c.h.b16 %v457
        %v622 = vunpack.c.l.b16 %v458
        %v623 = vunpack.c.h.b16 %v458
        %v624 = vunpack.c.l.b16 %v459
        %v625 = vunpack.c.h.b16 %v459
        %v626 = vunpack.c.l.b16 %v460
        %v627 = vunpack.c.h.b16 %v460
        %v628 = vunpack.c.l.b16 %v461
        %v629 = vunpack.c.h.b16 %v461
        %v630 = vunpack.c.l.b16 %v462
        %v631 = vunpack.c.h.b16 %v462
        %v632 = vunpack.c.l.b16 %v463
        %v633 = vunpack.c.h.b16 %v463
        %v634 = vunpack.c.l.b16 %v464
        %v635 = vunpack.c.h.b16 %v464
        %v636 = vunpack.c.l.b16 %v465
        %v637 = vunpack.c.h.b16 %v465
        %v638 = vunpack.c.l.b16 %v466
        %v639 = vunpack.c.h.b16 %v466
        %v640 = vunpack.c.l.b16 %v467
        %v641 = vunpack.c.h.b16 %v467
        %v642 = vunpack.c.l.b16 %v468
        %v643 = vunpack.c.h.b16 %v468
        %v644 = vunpack.c.l.b16 %v469
        %v645 = vunpack.c.h.b16 %v469
        %v646 = vpack.c.b16 %v616, %v614
        %v647 = vpack.c.b16 %v617, %v615
        %v648 = vpack.c.b16 %v620, %v618
        %v649 = vpack.c.b16 %v621, %v619
        %v650 = vpack.c.b16 %v624, %v622
        %v651 = vpack.c.b16 %v625, %v623
        %v652 = vpack.c.b16 %v628, %v626
        %v653 = vpack.c.b16 %v629, %v627
        %v654 = vpack.c.b16 %v632, %v630
        %v655 = vpack.c.b16 %v633, %v631
        %v656 = vpack.c.b16 %v636, %v634
        %v657 = vpack.c.b16 %v637, %v635
        %v658 = vpack.c.b16 %v640, %v638
        %v659 = vpack.c.b16 %v641, %v639
        %v660 = vpack.c.b16 %v644, %v642
        %v661 = vpack.c.b16 %v645, %v643
        %v806 = vunpack.c.l.b16 %v470
        %v807 = vunpack.c.h.b16 %v470
        %v808 = vunpack.c.l.b16 %v471
        %v809 = vunpack.c.h.b16 %v471
        %v810 = vunpack.c.l.b16 %v472
        %v811 = vunpack.c.h.b16 %v472
        %v812 = vunpack.c.l.b16 %v473
        %v813 = vunpack.c.h.b16 %v473
        %v814 = vunpack.c.l.b16 %v474
        %v815 = vunpack.c.h.b16 %v474
        %v816 = vunpack.c.l.b16 %v475
        %v817 = vunpack.c.h.b16 %v475
        %v818 = vunpack.c.l.b16 %v476
        %v819 = vunpack.c.h.b16 %v476
        %v820 = vunpack.c.l.b16 %v477
        %v821 = vunpack.c.h.b16 %v477
        %v822 = vunpack.c.l.b16 %v478
        %v823 = vunpack.c.h.b16 %v478
        %v824 = vunpack.c.l.b16 %v479
        %v825 = vunpack.c.h.b16 %v479
        %v826 = vunpack.c.l.b16 %v480
        %v827 = vunpack.c.h.b16 %v480
        %v828 = vunpack.c.l.b16 %v481
        %v829 = vunpack.c.h.b16 %v481
        %v830 = vunpack.c.l.b16 %v482
        %v831 = vunpack.c.h.b16 %v482
        %v832 = vunpack.c.l.b16 %v483
        %v833 = vunpack.c.h.b16 %v483
        %v834 = vunpack.c.l.b16 %v484
        %v835 = vunpack.c.h.b16 %v484
        %v836 = vunpack.c.l.b16 %v485
        %v837 = vunpack.c.h.b16 %v485
        %v838 = vunpack.c.l.b16 %v486
        %v839 = vunpack.c.h.b16 %v486
        %v840 = vunpack.c.l.b16 %v487
        %v841 = vunpack.c.h.b16 %v487
        %v842 = vunpack.c.l.b16 %v488
        %v843 = vunpack.c.h.b16 %v488
        %v844 = vunpack.c.l.b16 %v489
        %v845 = vunpack.c.h.b16 %v489
        %v846 = vunpack.c.l.b16 %v490
        %v847 = vunpack.c.h.b16 %v490
        %v848 = vunpack.c.l.b16 %v491
        %v849 = vunpack.c.h.b16 %v491
        %v850 = vunpack.c.l.b16 %v492
        %v851 = vunpack.c.h.b16 %v492
        %v852 = vunpack.c.l.b16 %v493
        %v853 = vunpack.c.h.b16 %v493
        %v854 = vunpack.c.l.b16 %v494
        %v855 = vunpack.c.h.b16 %v494
        %v856 = vunpack.c.l.b16 %v495
        %v857 = vunpack.c.h.b16 %v495
        %v858 = vunpack.c.l.b16 %v496
        %v859 = vunpack.c.h.b16 %v496
        %v860 = vunpack.c.l.b16 %v497
        %v861 = vunpack.c.h.b16 %v497
        %v862 = vunpack.c.l.b16 %v498
        %v863 = vunpack.c.h.b16 %v498
        %v864 = vunpack.c.l.b16 %v499
        %v865 = vunpack.c.h.b16 %v499
        %v866 = vunpack.c.l.b16 %v500
        %v867 = vunpack.c.h.b16 %v500
        %v868 = vunpack.c.l.b16 %v501
        %v869 = vunpack.c.h.b16 %v501
        %v870 = vunpack.c.l.b16 %v502
        %v871 = vunpack.c.h.b16 %v502
        %v872 = vunpack.c.l.b16 %v503
        %v873 = vunpack.c.h.b16 %v503
        %v874 = vunpack.c.l.b16 %v504
        %v875 = vunpack.c.h.b16 %v504
        %v876 = vunpack.c.l.b16 %v505
        %v877 = vunpack.c.h.b16 %v505
        %v878 = vunpack.c.l.b16 %v506
        %v879 = vunpack.c.h.b16 %v506
        %v880 = vunpack.c.l.b16 %v507
        %v881 = vunpack.c.h.b16 %v507
        %v882 = vunpack.c.l.b16 %v508
        %v883 = vunpack.c.h.b16 %v508
        %v884 = vunpack.c.l.b16 %v509
        %v885 = vunpack.c.h.b16 %v509
        %v886 = vunpack.c.l.b16 %v510
        %v887 = vunpack.c.h.b16 %v510
        %v888 = vunpack.c.l.b16 %v511
        %v889 = vunpack.c.h.b16 %v511
        %v890 = vunpack.c.l.b16 %v512
        %v891 = vunpack.c.h.b16 %v512
        %v892 = vunpack.c.l.b16 %v513
        %v893 = vunpack.c.h.b16 %v513
        %v894 = vunpack.c.l.b16 %v514
        %v895 = vunpack.c.h.b16 %v514
        %v896 = vunpack.c.l.b16 %v515
        %v897 = vunpack.c.h.b16 %v515
        %v898 = vunpack.c.l.b16 %v516
        %v899 = vunpack.c.h.b16 %v516
        %v900 = vunpack.c.l.b16 %v517
        %v901 = vunpack.c.h.b16 %v517
        %v902 = vunpack.c.l.b16 %v518
        %v903 = vunpack.c.h.b16 %v518
        %v904 = vunpack.c.l.b16 %v519
        %v905 = vunpack.c.h.b16 %v519
        %v906 = vunpack.c.l.b16 %v520
        %v907 = vunpack.c.h.b16 %v520
        %v908 = vunpack.c.l.b16 %v521
        %v909 = vunpack.c.h.b16 %v521
        %v910 = vunpack.c.l.b16 %v522
        %v911 = vunpack.c.h.b16 %v522
        %v912 = vunpack.c.l.b16 %v523
        %v913 = vunpack.c.h.b16 %v523
        %v914 = vunpack.c.l.b16 %v524
        %v915 = vunpack.c.h.b16 %v524
        %v916 = vunpack.c.l.b16 %v525
        %v917 = vunpack.c.h.b16 %v525
        %v918 = vunpack.c.l.b16 %v526
        %v919 = vunpack.c.h.b16 %v526
        %v920 = vunpack.c.l.b16 %v527
        %v921 = vunpack.c.h.b16 %v527
        %v922 = vunpack.c.l.b16 %v528
        %v923 = vunpack.c.h.b16 %v528
        %v924 = vunpack.c.l.b16 %v529
        %v925 = vunpack.c.h.b16 %v529
        %v926 = vunpack.c.l.b16 %v530
        %v927 = vunpack.c.h.b16 %v530
        %v928 = vunpack.c.l.b16 %v531
        %v929 = vunpack.c.h.b16 %v531
        %v930 = vunpack.c.l.b16 %v532
        %v931 = vunpack.c.h.b16 %v532
        %v932 = vunpack.c.l.b16 %v533
        %v933 = vunpack.c.h.b16 %v533
        %v934 = vunpack.c.l.b16 %v534
        %v935 = vunpack.c.h.b16 %v534
        %v936 = vunpack.c.l.b16 %v535
        %v937 = vunpack.c.h.b16 %v535
        %v938 = vunpack.c.l.b16 %v536
        %v939 = vunpack.c.h.b16 %v536
        %v940 = vunpack.c.l.b16 %v537
        %v941 = vunpack.c.h.b16 %v537
        %v942 = vunpack.c.l.b16 %v538
        %v943 = vunpack.c.h.b16 %v538
        %v944 = vunpack.c.l.b16 %v539
        %v945 = vunpack.c.h.b16 %v539
        %v946 = vunpack.c.l.b16 %v540
        %v947 = vunpack.c.h.b16 %v540
        %v948 = vunpack.c.l.b16 %v541
        %v949 = vunpack.c.h.b16 %v541
        %v950 = vunpack.c.l.b16 %v542
        %v951 = vunpack.c.h.b16 %v542
        %v952 = vunpack.c.l.b16 %v543
        %v953 = vunpack.c.h.b16 %v543
        %v954 = vunpack.c.l.b16 %v544
        %v955 = vunpack.c.h.b16 %v544
        %v956 = vunpack.c.l.b16 %v545
        %v957 = vunpack.c.h.b16 %v545
        %v958 = vunpack.c.l.b16 %v546
        %v959 = vunpack.c.h.b16 %v546
        %v960 = vunpack.c.l.b16 %v547
        %v961 = vunpack.c.h.b16 %v547
        %v962 = vunpack.c.l.b16 %v548
        %v963 = vunpack.c.h.b16 %v548
        %v964 = vunpack.c.l.b16 %v549
        %v965 = vunpack.c.h.b16 %v549
        %v966 = vunpack.c.l.b16 %v550
        %v967 = vunpack.c.h.b16 %v550
        %v968 = vunpack.c.l.b16 %v551
        %v969 = vunpack.c.h.b16 %v551
        %v970 = vunpack.c.l.b16 %v552
        %v971 = vunpack.c.h.b16 %v552
        %v972 = vunpack.c.l.b16 %v553
        %v973 = vunpack.c.h.b16 %v553
        %v974 = vunpack.c.l.b16 %v554
        %v975 = vunpack.c.h.b16 %v554
        %v976 = vunpack.c.l.b16 %v555
        %v977 = vunpack.c.h.b16 %v555
        %v978 = vunpack.c.l.b16 %v556
        %v979 = vunpack.c.h.b16 %v556
        %v980 = vunpack.c.l.b16 %v557
        %v981 = vunpack.c.h.b16 %v557
        %v982 = vunpack.c.l.b16 %v558
        %v983 = vunpack.c.h.b16 %v558
        %v984 = vunpack.c.l.b16 %v559
        %v985 = vunpack.c.h.b16 %v559
        %v986 = vunpack.c.l.b16 %v560
        %v987 = vunpack.c.h.b16 %v560
        %v988 = vunpack.c.l.b16 %v561
        %v989 = vunpack.c.h.b16 %v561
        %v990 = vunpack.c.l.b16 %v562
        %v991 = vunpack.c.h.b16 %v562
        %v992 = vunpack.c.l.b16 %v563
        %v993 = vunpack.c.h.b16 %v563
        %v994 = vunpack.c.l.b16 %v564
        %v995 = vunpack.c.h.b16 %v564
        %v996 = vunpack.c.l.b16 %v565
        %v997 = vunpack.c.h.b16 %v565
        %v998 = vunpack.c.l.b16 %v566
        %v999 = vunpack.c.h.b16 %v566
        %v1000 = vunpack.c.l.b16 %v567
        %v1001 = vunpack.c.h.b16 %v567
        %v1002 = vunpack.c.l.b16 %v568
        %v1003 = vunpack.c.h.b16 %v568
        %v1004 = vunpack.c.l.b16 %v569
        %v1005 = vunpack.c.h.b16 %v569
        %v1006 = vunpack.c.l.b16 %v570
        %v1007 = vunpack.c.h.b16 %v570
        %v1008 = vunpack.c.l.b16 %v571
        %v1009 = vunpack.c.h.b16 %v571
        %v1010 = vunpack.c.l.b16 %v572
        %v1011 = vunpack.c.h.b16 %v572
        %v1012 = vunpack.c.l.b16 %v573
        %v1013 = vunpack.c.h.b16 %v573
        %v1014 = vunpack.c.l.b16 %v574
        %v1015 = vunpack.c.h.b16 %v574
        %v1016 = vunpack.c.l.b16 %v575
        %v1017 = vunpack.c.h.b16 %v575
        %v1018 = vunpack.c.l.b16 %v576
        %v1019 = vunpack.c.h.b16 %v576
        %v1020 = vunpack.c.l.b16 %v577
        %v1021 = vunpack.c.h.b16 %v577
        %v1022 = vunpack.c.l.b16 %v578
        %v1023 = vunpack.c.h.b16 %v578
        %v1024 = vunpack.c.l.b16 %v579
        %v1025 = vunpack.c.h.b16 %v579
        %v1026 = vunpack.c.l.b16 %v580
        %v1027 = vunpack.c.h.b16 %v580
        %v1028 = vunpack.c.l.b16 %v581
        %v1029 = vunpack.c.h.b16 %v581
        %v1030 = vunpack.c.l.b16 %v582
        %v1031 = vunpack.c.h.b16 %v582
        %v1032 = vunpack.c.l.b16 %v583
        %v1033 = vunpack.c.h.b16 %v583
        %v1034 = vunpack.c.l.b16 %v584
        %v1035 = vunpack.c.h.b16 %v584
        %v1036 = vunpack.c.l.b16 %v585
        %v1037 = vunpack.c.h.b16 %v585
        %v1038 = vunpack.c.l.b16 %v586
        %v1039 = vunpack.c.h.b16 %v586
        %v1040 = vunpack.c.l.b16 %v587
        %v1041 = vunpack.c.h.b16 %v587
        %v1042 = vunpack.c.l.b16 %v588
        %v1043 = vunpack.c.h.b16 %v588
        %v1044 = vunpack.c.l.b16 %v589
        %v1045 = vunpack.c.h.b16 %v589
        %v1046 = vunpack.c.l.b16 %v590
        %v1047 = vunpack.c.h.b16 %v590
        %v1048 = vunpack.c.l.b16 %v591
        %v1049 = vunpack.c.h.b16 %v591
        %v1050 = vunpack.c.l.b16 %v592
        %v1051 = vunpack.c.h.b16 %v592
        %v1052 = vunpack.c.l.b16 %v593
        %v1053 = vunpack.c.h.b16 %v593
        %v1054 = vunpack.c.l.b16 %v594
        %v1055 = vunpack.c.h.b16 %v594
        %v1056 = vunpack.c.l.b16 %v595
        %v1057 = vunpack.c.h.b16 %v595
        %v1058 = vunpack.c.l.b16 %v596
        %v1059 = vunpack.c.h.b16 %v596
        %v1060 = vunpack.c.l.b16 %v597
        %v1061 = vunpack.c.h.b16 %v597
        %v1062 = vpack.c.b16 %v814, %v806
        %v1063 = vpack.c.b16 %v815, %v807
        %v1064 = vpack.c.b16 %v816, %v808
        %v1065 = vpack.c.b16 %v817, %v809
        %v1066 = vpack.c.b16 %v818, %v810
        %v1067 = vpack.c.b16 %v819, %v811
        %v1068 = vpack.c.b16 %v820, %v812
        %v1069 = vpack.c.b16 %v821, %v813
        %v1070 = vpack.c.b16 %v830, %v822
        %v1071 = vpack.c.b16 %v831, %v823
        %v1072 = vpack.c.b16 %v832, %v824
        %v1073 = vpack.c.b16 %v833, %v825
        %v1074 = vpack.c.b16 %v834, %v826
        %v1075 = vpack.c.b16 %v835, %v827
        %v1076 = vpack.c.b16 %v836, %v828
        %v1077 = vpack.c.b16 %v837, %v829
        %v1078 = vpack.c.b16 %v846, %v838
        %v1079 = vpack.c.b16 %v847, %v839
        %v1080 = vpack.c.b16 %v848, %v840
        %v1081 = vpack.c.b16 %v849, %v841
        %v1082 = vpack.c.b16 %v850, %v842
        %v1083 = vpack.c.b16 %v851, %v843
        %v1084 = vpack.c.b16 %v852, %v844
        %v1085 = vpack.c.b16 %v853, %v845
        %v1086 = vpack.c.b16 %v862, %v854
        %v1087 = vpack.c.b16 %v863, %v855
        %v1088 = vpack.c.b16 %v864, %v856
        %v1089 = vpack.c.b16 %v865, %v857
        %v1090 = vpack.c.b16 %v866, %v858
        %v1091 = vpack.c.b16 %v867, %v859
        %v1092 = vpack.c.b16 %v868, %v860
        %v1093 = vpack.c.b16 %v869, %v861
        %v1094 = vpack.c.b16 %v878, %v870
        %v1095 = vpack.c.b16 %v879, %v871
        %v1096 = vpack.c.b16 %v880, %v872
        %v1097 = vpack.c.b16 %v881, %v873
        %v1098 = vpack.c.b16 %v882, %v874
        %v1099 = vpack.c.b16 %v883, %v875
        %v1100 = vpack.c.b16 %v884, %v876
        %v1101 = vpack.c.b16 %v885, %v877
        %v1102 = vpack.c.b16 %v894, %v886
        %v1103 = vpack.c.b16 %v895, %v887
        %v1104 = vpack.c.b16 %v896, %v888
        %v1105 = vpack.c.b16 %v897, %v889
        %v1106 = vpack.c.b16 %v898, %v890
        %v1107 = vpack.c.b16 %v899, %v891
        %v1108 = vpack.c.b16 %v900, %v892
        %v1109 = vpack.c.b16 %v901, %v893
        %v1110 = vpack.c.b16 %v910, %v902
        %v1111 = vpack.c.b16 %v911, %v903
        %v1112 = vpack.c.b16 %v912, %v904
        %v1113 = vpack.c.b16 %v913, %v905
        %v1114 = vpack.c.b16 %v914, %v906
        %v1115 = vpack.c.b16 %v915, %v907
        %v1116 = vpack.c.b16 %v916, %v908
        %v1117 = vpack.c.b16 %v917, %v909
        %v1118 = vpack.c.b16 %v926, %v918
        %v1119 = vpack.c.b16 %v927, %v919
        %v1120 = vpack.c.b16 %v928, %v920
        %v1121 = vpack.c.b16 %v929, %v921
        %v1122 = vpack.c.b16 %v930, %v922
        %v1123 = vpack.c.b16 %v931, %v923
        %v1124 = vpack.c.b16 %v932, %v924
        %v1125 = vpack.c.b16 %v933, %v925
        %v1126 = vpack.c.b16 %v942, %v934
        %v1127 = vpack.c.b16 %v943, %v935
        %v1128 = vpack.c.b16 %v944, %v936
        %v1129 = vpack.c.b16 %v945, %v937
        %v1130 = vpack.c.b16 %v946, %v938
        %v1131 = vpack.c.b16 %v947, %v939
        %v1132 = vpack.c.b16 %v948, %v940
        %v1133 = vpack.c.b16 %v949, %v941
        %v1134 = vpack.c.b16 %v958, %v950
        %v1135 = vpack.c.b16 %v959, %v951
        %v1136 = vpack.c.b16 %v960, %v952
        %v1137 = vpack.c.b16 %v961, %v953
        %v1138 = vpack.c.b16 %v962, %v954
        %v1139 = vpack.c.b16 %v963, %v955
        %v1140 = vpack.c.b16 %v964, %v956
        %v1141 = vpack.c.b16 %v965, %v957
        %v1142 = vpack.c.b16 %v974, %v966
        %v1143 = vpack.c.b16 %v975, %v967
        %v1144 = vpack.c.b16 %v976, %v968
        %v1145 = vpack.c.b16 %v977, %v969
        %v1146 = vpack.c.b16 %v978, %v970
        %v1147 = vpack.c.b16 %v979, %v971
        %v1148 = vpack.c.b16 %v980, %v972
        %v1149 = vpack.c.b16 %v981, %v973
        %v1150 = vpack.c.b16 %v990, %v982
        %v1151 = vpack.c.b16 %v991, %v983
        %v1152 = vpack.c.b16 %v992, %v984
        %v1153 = vpack.c.b16 %v993, %v985
        %v1154 = vpack.c.b16 %v994, %v986
        %v1155 = vpack.c.b16 %v995, %v987
        %v1156 = vpack.c.b16 %v996, %v988
        %v1157 = vpack.c.b16 %v997, %v989
        %v1158 = vpack.c.b16 %v1006, %v998
        %v1159 = vpack.c.b16 %v1007, %v999
        %v1160 = vpack.c.b16 %v1008, %v1000
        %v1161 = vpack.c.b16 %v1009, %v1001
        %v1162 = vpack.c.b16 %v1010, %v1002
        %v1163 = vpack.c.b16 %v1011, %v1003
        %v1164 = vpack.c.b16 %v1012, %v1004
        %v1165 = vpack.c.b16 %v1013, %v1005
        %v1166 = vpack.c.b16 %v1022, %v1014
        %v1167 = vpack.c.b16 %v1023, %v1015
        %v1168 = vpack.c.b16 %v1024, %v1016
        %v1169 = vpack.c.b16 %v1025, %v1017
        %v1170 = vpack.c.b16 %v1026, %v1018
        %v1171 = vpack.c.b16 %v1027, %v1019
        %v1172 = vpack.c.b16 %v1028, %v1020
        %v1173 = vpack.c.b16 %v1029, %v1021
        %v1174 = vpack.c.b16 %v1038, %v1030
        %v1175 = vpack.c.b16 %v1039, %v1031
        %v1176 = vpack.c.b16 %v1040, %v1032
        %v1177 = vpack.c.b16 %v1041, %v1033
        %v1178 = vpack.c.b16 %v1042, %v1034
        %v1179 = vpack.c.b16 %v1043, %v1035
        %v1180 = vpack.c.b16 %v1044, %v1036
        %v1181 = vpack.c.b16 %v1045, %v1037
        %v1182 = vpack.c.b16 %v1054, %v1046
        %v1183 = vpack.c.b16 %v1055, %v1047
        %v1184 = vpack.c.b16 %v1056, %v1048
        %v1185 = vpack.c.b16 %v1057, %v1049
        %v1186 = vpack.c.b16 %v1058, %v1050
        %v1187 = vpack.c.b16 %v1059, %v1051
        %v1188 = vpack.c.b16 %v1060, %v1052
        %v1189 = vpack.c.b16 %v1061, %v1053
        %1318 = vmatprep.subr.bf16.mxu0 %v1063
        %1319 = vmatpush1.bf16.msra.mxu0 %v1062
        %1320 = vmatprep.subr.bf16.mxu0 %v1071
        %1321 = vmatpush1.bf16.msra.mxu0 %v1070
        %1322 = vmatprep.subr.bf16.mxu0 %v1079
        %1323 = vmatpush1.bf16.msra.mxu0 %v1078
        %1324 = vmatprep.subr.bf16.mxu0 %v1087
        %1325 = vmatpush1.bf16.msra.mxu0 %v1086
        %1326 = vmatprep.subr.bf16.mxu0 %v1095
        %1327 = vmatpush1.bf16.msra.mxu0 %v1094
        %1328 = vmatprep.subr.bf16.mxu0 %v1103
        %1329 = vmatpush1.bf16.msra.mxu0 %v1102
        %1330 = vmatprep.subr.bf16.mxu0 %v1111
        %1331 = vmatpush1.bf16.msra.mxu0 %v1110
        %1332 = vmatprep.subr.bf16.mxu0 %v1119
        %1333 = vmatpush1.bf16.msra.mxu0 %v1118
        %1334 = vmatprep.subr.bf16.mxu0 %v1127
        %1335 = vmatpush1.bf16.msra.mxu0 %v1126
        %1336 = vmatprep.subr.bf16.mxu0 %v1135
        %1337 = vmatpush1.bf16.msra.mxu0 %v1134
        %1338 = vmatprep.subr.bf16.mxu0 %v1143
        %1339 = vmatpush1.bf16.msra.mxu0 %v1142
        %1340 = vmatprep.subr.bf16.mxu0 %v1151
        %1341 = vmatpush1.bf16.msra.mxu0 %v1150
        %1342 = vmatprep.subr.bf16.mxu0 %v1159
        %1343 = vmatpush1.bf16.msra.mxu0 %v1158
        %1344 = vmatprep.subr.bf16.mxu0 %v1167
        %1345 = vmatpush1.bf16.msra.mxu0 %v1166
        %1346 = vmatprep.subr.bf16.mxu0 %v1175
        %1347 = vmatpush1.bf16.msra.mxu0 %v1174
        %1348 = vmatprep.subr.bf16.mxu0 %v1183
        %1349 = vmatpush1.bf16.msra.mxu0 %v1182
        %1350 = vmatprep.mubr.bf16.mxu0 %v647
        %1351 = vmatmul.mubr.bf16.gmra.mrb[0].mxu0 %v646
        %v1352 = vpop.f32.mrb[0].mxu0
        %v1353 = vadd.f32 0.0, %v1352
        %v1354 = vpop.f32.mrb[0].mxu0
        %v1355 = vadd.f32 0.0, %v1354
        %v1356 = vpop.f32.mrb[0].mxu0
        %v1357 = vadd.f32 0.0, %v1356
        %v1358 = vpop.f32.mrb[0].mxu0
        %v1359 = vadd.f32 0.0, %v1358
        %1360 = vmatprep.mubr.bf16.mxu0 %v649
        %1361 = vmatmul.mubr.bf16.gmra.mrb[0].mxu0 %v648
        %v1362 = vpop.f32.mrb[0].mxu0
        %v1363 = vadd.f32 0.0, %v1362
        %v1364 = vpop.f32.mrb[0].mxu0
        %v1365 = vadd.f32 0.0, %v1364
        %v1366 = vpop.f32.mrb[0].mxu0
        %v1367 = vadd.f32 0.0, %v1366
        %v1368 = vpop.f32.mrb[0].mxu0
        %v1369 = vadd.f32 0.0, %v1368
        %1370 = vmatprep.mubr.bf16.mxu0 %v651
        %1371 = vmatmul.mubr.bf16.gmra.mrb[0].mxu0 %v650
        %v1372 = vpop.f32.mrb[0].mxu0
        %v1373 = vadd.f32 0.0, %v1372
        %v1374 = vpop.f32.mrb[0].mxu0
        %v1375 = vadd.f32 0.0, %v1374
        %v1376 = vpop.f32.mrb[0].mxu0
        %v1377 = vadd.f32 0.0, %v1376
        %v1378 = vpop.f32.mrb[0].mxu0
        %v1379 = vadd.f32 0.0, %v1378
        %1380 = vmatprep.mubr.bf16.mxu0 %v653
        %1381 = vmatmul.mubr.bf16.gmra.mrb[0].mxu0 %v652
        %v1382 = vpop.f32.mrb[0].mxu0
        %v1383 = vadd.f32 0.0, %v1382
        %v1384 = vpop.f32.mrb[0].mxu0
        %v1385 = vadd.f32 0.0, %v1384
        %v1386 = vpop.f32.mrb[0].mxu0
        %v1387 = vadd.f32 0.0, %v1386
        %v1388 = vpop.f32.mrb[0].mxu0
        %v1389 = vadd.f32 0.0, %v1388
        %1390 = vmatprep.mubr.bf16.mxu0 %v655
        %1391 = vmatmul.mubr.bf16.gmra.mrb[0].mxu0 %v654
        %v1392 = vpop.f32.mrb[0].mxu0
        %v1393 = vadd.f32 0.0, %v1392
        %v1394 = vpop.f32.mrb[0].mxu0
        %v1395 = vadd.f32 0.0, %v1394
        %v1396 = vpop.f32.mrb[0].mxu0
        %v1397 = vadd.f32 0.0, %v1396
        %v1398 = vpop.f32.mrb[0].mxu0
        %v1399 = vadd.f32 0.0, %v1398
        %1400 = vmatprep.mubr.bf16.mxu0 %v657
        %1401 = vmatmul.mubr.bf16.gmra.mrb[0].mxu0 %v656
        %v1402 = vpop.f32.mrb[0].mxu0
        %v1403 = vadd.f32 0.0, %v1402
        %v1404 = vpop.f32.mrb[0].mxu0
        %v1405 = vadd.f32 0.0, %v1404
        %v1406 = vpop.f32.mrb[0].mxu0
        %v1407 = vadd.f32 0.0, %v1406
        %v1408 = vpop.f32.mrb[0].mxu0
        %v1409 = vadd.f32 0.0, %v1408
        %1410 = vmatprep.mubr.bf16.mxu0 %v659
        %1411 = vmatmul.mubr.bf16.gmra.mrb[0].mxu0 %v658
        %v1412 = vpop.f32.mrb[0].mxu0
        %v1413 = vadd.f32 0.0, %v1412
        %v1414 = vpop.f32.mrb[0].mxu0
        %v1415 = vadd.f32 0.0, %v1414
        %v1416 = vpop.f32.mrb[0].mxu0
        %v1417 = vadd.f32 0.0, %v1416
        %v1418 = vpop.f32.mrb[0].mxu0
        %v1419 = vadd.f32 0.0, %v1418
        %1420 = vmatprep.mubr.bf16.mxu0 %v661
        %1421 = vmatmul.mubr.bf16.gmra.mrb[0].mxu0 %v660
        %v1422 = vpop.f32.mrb[0].mxu0
        %v1423 = vadd.f32 0.0, %v1422
        %v1424 = vpop.f32.mrb[0].mxu0
        %v1425 = vadd.f32 0.0, %v1424
        %v1426 = vpop.f32.mrb[0].mxu0
        %v1427 = vadd.f32 0.0, %v1426
        %v1428 = vpop.f32.mrb[0].mxu0
        %v1429 = vadd.f32 0.0, %v1428
        %1430 = vdwg.mxu0
        %1431 = vmatprep.subr.bf16.mxu0 %v1065
        %1432 = vmatpush1.bf16.msra.mxu0 %v1064
        %1433 = vmatprep.subr.bf16.mxu0 %v1073
        %1434 = vmatpush1.bf16.msra.mxu0 %v1072
        %1435 = vmatprep.subr.bf16.mxu0 %v1081
        %1436 = vmatpush1.bf16.msra.mxu0 %v1080
        %1437 = vmatprep.subr.bf16.mxu0 %v1089
        %1438 = vmatpush1.bf16.msra.mxu0 %v1088
        %1439 = vmatprep.subr.bf16.mxu0 %v1097
        %1440 = vmatpush1.bf16.msra.mxu0 %v1096
        %1441 = vmatprep.subr.bf16.mxu0 %v1105
        %1442 = vmatpush1.bf16.msra.mxu0 %v1104
        %1443 = vmatprep.subr.bf16.mxu0 %v1113
        %1444 = vmatpush1.bf16.msra.mxu0 %v1112
        %1445 = vmatprep.subr.bf16.mxu0 %v1121
        %1446 = vmatpush1.bf16.msra.mxu0 %v1120
        %1447 = vmatprep.subr.bf16.mxu0 %v1129
        %1448 = vmatpush1.bf16.msra.mxu0 %v1128
        %1449 = vmatprep.subr.bf16.mxu0 %v1137
        %1450 = vmatpush1.bf16.msra.mxu0 %v1136
        %1451 = vmatprep.subr.bf16.mxu0 %v1145
        %1452 = vmatpush1.bf16.msra.mxu0 %v1144
        %1453 = vmatprep.subr.bf16.mxu0 %v1153
        %1454 = vmatpush1.bf16.msra.mxu0 %v1152
        %1455 = vmatprep.subr.bf16.mxu0 %v1161
        %1456 = vmatpush1.bf16.msra.mxu0 %v1160
        %1457 = vmatprep.subr.bf16.mxu0 %v1169
        %1458 = vmatpush1.bf16.msra.mxu0 %v1168
        %1459 = vmatprep.subr.bf16.mxu0 %v1177
        %1460 = vmatpush1.bf16.msra.mxu0 %v1176
        %1461 = vmatprep.subr.bf16.mxu0 %v1185
        %1462 = vmatpush1.bf16.msra.mxu0 %v1184
        %1463 = vmatprep.mubr.bf16.mxu0 %v647
        %1464 = vmatmul.mubr.bf16.gmra.mrb[0].mxu0 %v646
        %v1465 = vpop.f32.mrb[0].mxu0
        %v1466 = vadd.f32 0.0, %v1465
        %v1467 = vpop.f32.mrb[0].mxu0
        %v1468 = vadd.f32 0.0, %v1467
        %v1469 = vpop.f32.mrb[0].mxu0
        %v1470 = vadd.f32 0.0, %v1469
        %v1471 = vpop.f32.mrb[0].mxu0
        %v1472 = vadd.f32 0.0, %v1471
        %1473 = vmatprep.mubr.bf16.mxu0 %v649
        %1474 = vmatmul.mubr.bf16.gmra.mrb[0].mxu0 %v648
        %v1475 = vpop.f32.mrb[0].mxu0
        %v1476 = vadd.f32 0.0, %v1475
        %v1477 = vpop.f32.mrb[0].mxu0
        %v1478 = vadd.f32 0.0, %v1477
        %v1479 = vpop.f32.mrb[0].mxu0
        %v1480 = vadd.f32 0.0, %v1479
        %v1481 = vpop.f32.mrb[0].mxu0
        %v1482 = vadd.f32 0.0, %v1481
        %1483 = vmatprep.mubr.bf16.mxu0 %v651
        %1484 = vmatmul.mubr.bf16.gmra.mrb[0].mxu0 %v650
        %v1485 = vpop.f32.mrb[0].mxu0
        %v1486 = vadd.f32 0.0, %v1485
        %v1487 = vpop.f32.mrb[0].mxu0
        %v1488 = vadd.f32 0.0, %v1487
        %v1489 = vpop.f32.mrb[0].mxu0
        %v1490 = vadd.f32 0.0, %v1489
        %v1491 = vpop.f32.mrb[0].mxu0
        %v1492 = vadd.f32 0.0, %v1491
        %1493 = vmatprep.mubr.bf16.mxu0 %v653
        %1494 = vmatmul.mubr.bf16.gmra.mrb[0].mxu0 %v652
        %v1495 = vpop.f32.mrb[0].mxu0
        %v1496 = vadd.f32 0.0, %v1495
        %v1497 = vpop.f32.mrb[0].mxu0
        %v1498 = vadd.f32 0.0, %v1497
        %v1499 = vpop.f32.mrb[0].mxu0
        %v1500 = vadd.f32 0.0, %v1499
        %v1501 = vpop.f32.mrb[0].mxu0
        %v1502 = vadd.f32 0.0, %v1501
        %1503 = vmatprep.mubr.bf16.mxu0 %v655
        %1504 = vmatmul.mubr.bf16.gmra.mrb[0].mxu0 %v654
        %v1505 = vpop.f32.mrb[0].mxu0
        %v1506 = vadd.f32 0.0, %v1505
        %v1507 = vpop.f32.mrb[0].mxu0
        %v1508 = vadd.f32 0.0, %v1507
        %v1509 = vpop.f32.mrb[0].mxu0
        %v1510 = vadd.f32 0.0, %v1509
        %v1511 = vpop.f32.mrb[0].mxu0
        %v1512 = vadd.f32 0.0, %v1511
        %1513 = vmatprep.mubr.bf16.mxu0 %v657
        %1514 = vmatmul.mubr.bf16.gmra.mrb[0].mxu0 %v656
        %v1515 = vpop.f32.mrb[0].mxu0
        %v1516 = vadd.f32 0.0, %v1515
        %v1517 = vpop.f32.mrb[0].mxu0
        %v1518 = vadd.f32 0.0, %v1517
        %v1519 = vpop.f32.mrb[0].mxu0
        %v1520 = vadd.f32 0.0, %v1519
        %v1521 = vpop.f32.mrb[0].mxu0
        %v1522 = vadd.f32 0.0, %v1521
        %1523 = vmatprep.mubr.bf16.mxu0 %v659
        %1524 = vmatmul.mubr.bf16.gmra.mrb[0].mxu0 %v658
        %v1525 = vpop.f32.mrb[0].mxu0
        %v1526 = vadd.f32 0.0, %v1525
        %v1527 = vpop.f32.mrb[0].mxu0
        %v1528 = vadd.f32 0.0, %v1527
        %v1529 = vpop.f32.mrb[0].mxu0
        %v1530 = vadd.f32 0.0, %v1529
        %v1531 = vpop.f32.mrb[0].mxu0
        %v1532 = vadd.f32 0.0, %v1531
        %1533 = vmatprep.mubr.bf16.mxu0 %v661
        %1534 = vmatmul.mubr.bf16.gmra.mrb[0].mxu0 %v660
        %v1535 = vpop.f32.mrb[0].mxu0
        %v1536 = vadd.f32 0.0, %v1535
        %v1537 = vpop.f32.mrb[0].mxu0
        %v1538 = vadd.f32 0.0, %v1537
        %v1539 = vpop.f32.mrb[0].mxu0
        %v1540 = vadd.f32 0.0, %v1539
        %v1541 = vpop.f32.mrb[0].mxu0
        %v1542 = vadd.f32 0.0, %v1541
        %1543 = vdwg.mxu0
        %1544 = vmatprep.subr.bf16.mxu0 %v1067
        %1545 = vmatpush1.bf16.msra.mxu0 %v1066
        %1546 = vmatprep.subr.bf16.mxu0 %v1075
        %1547 = vmatpush1.bf16.msra.mxu0 %v1074
        %1548 = vmatprep.subr.bf16.mxu0 %v1083
        %1549 = vmatpush1.bf16.msra.mxu0 %v1082
        %1550 = vmatprep.subr.bf16.mxu0 %v1091
        %1551 = vmatpush1.bf16.msra.mxu0 %v1090
        %1552 = vmatprep.subr.bf16.mxu0 %v1099
        %1553 = vmatpush1.bf16.msra.mxu0 %v1098
        %1554 = vmatprep.subr.bf16.mxu0 %v1107
        %1555 = vmatpush1.bf16.msra.mxu0 %v1106
        %1556 = vmatprep.subr.bf16.mxu0 %v1115
        %1557 = vmatpush1.bf16.msra.mxu0 %v1114
        %1558 = vmatprep.subr.bf16.mxu0 %v1123
        %1559 = vmatpush1.bf16.msra.mxu0 %v1122
        %1560 = vmatprep.subr.bf16.mxu0 %v1131
        %1561 = vmatpush1.bf16.msra.mxu0 %v1130
        %1562 = vmatprep.subr.bf16.mxu0 %v1139
        %1563 = vmatpush1.bf16.msra.mxu0 %v1138
        %1564 = vmatprep.subr.bf16.mxu0 %v1147
        %1565 = vmatpush1.bf16.msra.mxu0 %v1146
        %1566 = vmatprep.subr.bf16.mxu0 %v1155
        %1567 = vmatpush1.bf16.msra.mxu0 %v1154
        %1568 = vmatprep.subr.bf16.mxu0 %v1163
        %1569 = vmatpush1.bf16.msra.mxu0 %v1162
        %1570 = vmatprep.subr.bf16.mxu0 %v1171
        %1571 = vmatpush1.bf16.msra.mxu0 %v1170
        %1572 = vmatprep.subr.bf16.mxu0 %v1179
        %1573 = vmatpush1.bf16.msra.mxu0 %v1178
        %1574 = vmatprep.subr.bf16.mxu0 %v1187
        %1575 = vmatpush1.bf16.msra.mxu0 %v1186
        %1576 = vmatprep.mubr.bf16.mxu0 %v647
        %1577 = vmatmul.mubr.bf16.gmra.mrb[0].mxu0 %v646
        %v1578 = vpop.f32.mrb[0].mxu0
        %v1579 = vadd.f32 0.0, %v1578
        %v1580 = vpop.f32.mrb[0].mxu0
        %v1581 = vadd.f32 0.0, %v1580
        %v1582 = vpop.f32.mrb[0].mxu0
        %v1583 = vadd.f32 0.0, %v1582
        %v1584 = vpop.f32.mrb[0].mxu0
        %v1585 = vadd.f32 0.0, %v1584
        %1586 = vmatprep.mubr.bf16.mxu0 %v649
        %1587 = vmatmul.mubr.bf16.gmra.mrb[0].mxu0 %v648
        %v1588 = vpop.f32.mrb[0].mxu0
        %v1589 = vadd.f32 0.0, %v1588
        %v1590 = vpop.f32.mrb[0].mxu0
        %v1591 = vadd.f32 0.0, %v1590
        %v1592 = vpop.f32.mrb[0].mxu0
        %v1593 = vadd.f32 0.0, %v1592
        %v1594 = vpop.f32.mrb[0].mxu0
        %v1595 = vadd.f32 0.0, %v1594
        %1596 = vmatprep.mubr.bf16.mxu0 %v651
        %1597 = vmatmul.mubr.bf16.gmra.mrb[0].mxu0 %v650
        %v1598 = vpop.f32.mrb[0].mxu0
        %v1599 = vadd.f32 0.0, %v1598
        %v1600 = vpop.f32.mrb[0].mxu0
        %v1601 = vadd.f32 0.0, %v1600
        %v1602 = vpop.f32.mrb[0].mxu0
        %v1603 = vadd.f32 0.0, %v1602
        %v1604 = vpop.f32.mrb[0].mxu0
        %v1605 = vadd.f32 0.0, %v1604
        %1606 = vmatprep.mubr.bf16.mxu0 %v653
        %1607 = vmatmul.mubr.bf16.gmra.mrb[0].mxu0 %v652
        %v1608 = vpop.f32.mrb[0].mxu0
        %v1609 = vadd.f32 0.0, %v1608
        %v1610 = vpop.f32.mrb[0].mxu0
        %v1611 = vadd.f32 0.0, %v1610
        %v1612 = vpop.f32.mrb[0].mxu0
        %v1613 = vadd.f32 0.0, %v1612
        %v1614 = vpop.f32.mrb[0].mxu0
        %v1615 = vadd.f32 0.0, %v1614
        %1616 = vmatprep.mubr.bf16.mxu0 %v655
        %1617 = vmatmul.mubr.bf16.gmra.mrb[0].mxu0 %v654
        %v1618 = vpop.f32.mrb[0].mxu0
        %v1619 = vadd.f32 0.0, %v1618
        %v1620 = vpop.f32.mrb[0].mxu0
        %v1621 = vadd.f32 0.0, %v1620
        %v1622 = vpop.f32.mrb[0].mxu0
        %v1623 = vadd.f32 0.0, %v1622
        %v1624 = vpop.f32.mrb[0].mxu0
        %v1625 = vadd.f32 0.0, %v1624
        %1626 = vmatprep.mubr.bf16.mxu0 %v657
        %1627 = vmatmul.mubr.bf16.gmra.mrb[0].mxu0 %v656
        %v1628 = vpop.f32.mrb[0].mxu0
        %v1629 = vadd.f32 0.0, %v1628
        %v1630 = vpop.f32.mrb[0].mxu0
        %v1631 = vadd.f32 0.0, %v1630
        %v1632 = vpop.f32.mrb[0].mxu0
        %v1633 = vadd.f32 0.0, %v1632
        %v1634 = vpop.f32.mrb[0].mxu0
        %v1635 = vadd.f32 0.0, %v1634
        %1636 = vmatprep.mubr.bf16.mxu0 %v659
        %1637 = vmatmul.mubr.bf16.gmra.mrb[0].mxu0 %v658
        %v1638 = vpop.f32.mrb[0].mxu0
        %v1639 = vadd.f32 0.0, %v1638
        %v1640 = vpop.f32.mrb[0].mxu0
        %v1641 = vadd.f32 0.0, %v1640
        %v1642 = vpop.f32.mrb[0].mxu0
        %v1643 = vadd.f32 0.0, %v1642
        %v1644 = vpop.f32.mrb[0].mxu0
        %v1645 = vadd.f32 0.0, %v1644
        %1646 = vmatprep.mubr.bf16.mxu0 %v661
        %1647 = vmatmul.mubr.bf16.gmra.mrb[0].mxu0 %v660
        %v1648 = vpop.f32.mrb[0].mxu0
        %v1649 = vadd.f32 0.0, %v1648
        %v1650 = vpop.f32.mrb[0].mxu0
        %v1651 = vadd.f32 0.0, %v1650
        %v1652 = vpop.f32.mrb[0].mxu0
        %v1653 = vadd.f32 0.0, %v1652
        %v1654 = vpop.f32.mrb[0].mxu0
        %v1655 = vadd.f32 0.0, %v1654
        %1656 = vdwg.mxu0
        %1657 = vmatprep.subr.bf16.mxu0 %v1069
        %1658 = vmatpush1.bf16.msra.mxu0 %v1068
        %1659 = vmatprep.subr.bf16.mxu0 %v1077
        %1660 = vmatpush1.bf16.msra.mxu0 %v1076
        %1661 = vmatprep.subr.bf16.mxu0 %v1085
        %1662 = vmatpush1.bf16.msra.mxu0 %v1084
        %1663 = vmatprep.subr.bf16.mxu0 %v1093
        %1664 = vmatpush1.bf16.msra.mxu0 %v1092
        %1665 = vmatprep.subr.bf16.mxu0 %v1101
        %1666 = vmatpush1.bf16.msra.mxu0 %v1100
        %1667 = vmatprep.subr.bf16.mxu0 %v1109
        %1668 = vmatpush1.bf16.msra.mxu0 %v1108
        %1669 = vmatprep.subr.bf16.mxu0 %v1117
        %1670 = vmatpush1.bf16.msra.mxu0 %v1116
        %1671 = vmatprep.subr.bf16.mxu0 %v1125
        %1672 = vmatpush1.bf16.msra.mxu0 %v1124
        %1673 = vmatprep.subr.bf16.mxu0 %v1133
        %1674 = vmatpush1.bf16.msra.mxu0 %v1132
        %1675 = vmatprep.subr.bf16.mxu0 %v1141
        %1676 = vmatpush1.bf16.msra.mxu0 %v1140
        %1677 = vmatprep.subr.bf16.mxu0 %v1149
        %1678 = vmatpush1.bf16.msra.mxu0 %v1148
        %1679 = vmatprep.subr.bf16.mxu0 %v1157
        %1680 = vmatpush1.bf16.msra.mxu0 %v1156
        %1681 = vmatprep.subr.bf16.mxu0 %v1165
        %1682 = vmatpush1.bf16.msra.mxu0 %v1164
        %1683 = vmatprep.subr.bf16.mxu0 %v1173
        %1684 = vmatpush1.bf16.msra.mxu0 %v1172
        %1685 = vmatprep.subr.bf16.mxu0 %v1181
        %1686 = vmatpush1.bf16.msra.mxu0 %v1180
        %1687 = vmatprep.subr.bf16.mxu0 %v1189
        %1688 = vmatpush1.bf16.msra.mxu0 %v1188
        %1689 = vmatprep.mubr.bf16.mxu0 %v647
        %1690 = vmatmul.mubr.bf16.gmra.mrb[0].mxu0 %v646
        %v1691 = vpop.f32.mrb[0].mxu0
        %v1692 = vadd.f32 0.0, %v1691
        %v1693 = vpop.f32.mrb[0].mxu0
        %v1694 = vadd.f32 0.0, %v1693
        %v1695 = vpop.f32.mrb[0].mxu0
        %v1696 = vadd.f32 0.0, %v1695
        %v1697 = vpop.f32.mrb[0].mxu0
        %v1698 = vadd.f32 0.0, %v1697
        %1699 = vmatprep.mubr.bf16.mxu0 %v649
        %1700 = vmatmul.mubr.bf16.gmra.mrb[0].mxu0 %v648
        %v1701 = vpop.f32.mrb[0].mxu0
        %v1702 = vadd.f32 0.0, %v1701
        %v1703 = vpop.f32.mrb[0].mxu0
        %v1704 = vadd.f32 0.0, %v1703
        %v1705 = vpop.f32.mrb[0].mxu0
        %v1706 = vadd.f32 0.0, %v1705
        %v1707 = vpop.f32.mrb[0].mxu0
        %v1708 = vadd.f32 0.0, %v1707
        %1709 = vmatprep.mubr.bf16.mxu0 %v651
        %1710 = vmatmul.mubr.bf16.gmra.mrb[0].mxu0 %v650
        %v1711 = vpop.f32.mrb[0].mxu0
        %v1712 = vadd.f32 0.0, %v1711
        %v1713 = vpop.f32.mrb[0].mxu0
        %v1714 = vadd.f32 0.0, %v1713
        %v1715 = vpop.f32.mrb[0].mxu0
        %v1716 = vadd.f32 0.0, %v1715
        %v1717 = vpop.f32.mrb[0].mxu0
        %v1718 = vadd.f32 0.0, %v1717
        %1719 = vmatprep.mubr.bf16.mxu0 %v653
        %1720 = vmatmul.mubr.bf16.gmra.mrb[0].mxu0 %v652
        %v1721 = vpop.f32.mrb[0].mxu0
        %v1722 = vadd.f32 0.0, %v1721
        %v1723 = vpop.f32.mrb[0].mxu0
        %v1724 = vadd.f32 0.0, %v1723
        %v1725 = vpop.f32.mrb[0].mxu0
        %v1726 = vadd.f32 0.0, %v1725
        %v1727 = vpop.f32.mrb[0].mxu0
        %v1728 = vadd.f32 0.0, %v1727
        %1729 = vmatprep.mubr.bf16.mxu0 %v655
        %1730 = vmatmul.mubr.bf16.gmra.mrb[0].mxu0 %v654
        %v1731 = vpop.f32.mrb[0].mxu0
        %v1732 = vadd.f32 0.0, %v1731
        %v1733 = vpop.f32.mrb[0].mxu0
        %v1734 = vadd.f32 0.0, %v1733
        %v1735 = vpop.f32.mrb[0].mxu0
        %v1736 = vadd.f32 0.0, %v1735
        %v1737 = vpop.f32.mrb[0].mxu0
        %v1738 = vadd.f32 0.0, %v1737
        %1739 = vmatprep.mubr.bf16.mxu0 %v657
        %1740 = vmatmul.mubr.bf16.gmra.mrb[0].mxu0 %v656
        %v1741 = vpop.f32.mrb[0].mxu0
        %v1742 = vadd.f32 0.0, %v1741
        %v1743 = vpop.f32.mrb[0].mxu0
        %v1744 = vadd.f32 0.0, %v1743
        %v1745 = vpop.f32.mrb[0].mxu0
        %v1746 = vadd.f32 0.0, %v1745
        %v1747 = vpop.f32.mrb[0].mxu0
        %v1748 = vadd.f32 0.0, %v1747
        %1749 = vmatprep.mubr.bf16.mxu0 %v659
        %1750 = vmatmul.mubr.bf16.gmra.mrb[0].mxu0 %v658
        %v1751 = vpop.f32.mrb[0].mxu0
        %v1752 = vadd.f32 0.0, %v1751
        %v1753 = vpop.f32.mrb[0].mxu0
        %v1754 = vadd.f32 0.0, %v1753
        %v1755 = vpop.f32.mrb[0].mxu0
        %v1756 = vadd.f32 0.0, %v1755
        %v1757 = vpop.f32.mrb[0].mxu0
        %v1758 = vadd.f32 0.0, %v1757
        %1759 = vmatprep.mubr.bf16.mxu0 %v661
        %1760 = vmatmul.mubr.bf16.gmra.mrb[0].mxu0 %v660
        %v1761 = vpop.f32.mrb[0].mxu0
        %v1762 = vadd.f32 0.0, %v1761
        %v1763 = vpop.f32.mrb[0].mxu0
        %v1764 = vadd.f32 0.0, %v1763
        %v1765 = vpop.f32.mrb[0].mxu0
        %v1766 = vadd.f32 0.0, %v1765
        %v1767 = vpop.f32.mrb[0].mxu0
        %v1768 = vadd.f32 0.0, %v1767
        %1769 = vdwg.mxu0
        %1770 = vst [vmem:[%s443] sm:$0xff] %v1353
        %1771 = vst [vmem:[%s443 + $0x8] sm:$0xff] %v1355
        %1772 = vst [vmem:[%s443 + $0x10] sm:$0xff] %v1466
        %1773 = vst [vmem:[%s443 + $0x18] sm:$0xff] %v1468
        %1774 = vst [vmem:[%s443 + $0x20] sm:$0xff] %v1579
        %1775 = vst [vmem:[%s443 + $0x28] sm:$0xff] %v1581
        %1776 = vst [vmem:[%s443 + $0x30] sm:$0xff] %v1692
        %1777 = vst [vmem:[%s443 + $0x38] sm:$0xff] %v1694
        %1778 = vst [vmem:[%s443 + $0x40] sm:$0xff] %v1357
        %1779 = vst [vmem:[%s443 + $0x48] sm:$0xff] %v1359
        %1780 = vst [vmem:[%s443 + $0x50] sm:$0xff] %v1470
        %1781 = vst [vmem:[%s443 + $0x58] sm:$0xff] %v1472
        %1782 = vst [vmem:[%s443 + $0x60] sm:$0xff] %v1583
        %1783 = vst [vmem:[%s443 + $0x68] sm:$0xff] %v1585
        %1784 = vst [vmem:[%s443 + $0x70] sm:$0xff] %v1696
        %1785 = vst [vmem:[%s443 + $0x78] sm:$0xff] %v1698
        %1786 = vst [vmem:[%s443 + $0x80] sm:$0xff] %v1363
        %1787 = vst [vmem:[%s443 + $0x88] sm:$0xff] %v1365
        %1788 = vst [vmem:[%s443 + $0x90] sm:$0xff] %v1476
        %1789 = vst [vmem:[%s443 + $0x98] sm:$0xff] %v1478
        %1790 = vst [vmem:[%s443 + $0xa0] sm:$0xff] %v1589
        %1791 = vst [vmem:[%s443 + $0xa8] sm:$0xff] %v1591
        %1792 = vst [vmem:[%s443 + $0xb0] sm:$0xff] %v1702
        %1793 = vst [vmem:[%s443 + $0xb8] sm:$0xff] %v1704
        %1794 = vst [vmem:[%s443 + $0xc0] sm:$0xff] %v1367
        %1795 = vst [vmem:[%s443 + $0xc8] sm:$0xff] %v1369
        %1796 = vst [vmem:[%s443 + $0xd0] sm:$0xff] %v1480
        %1797 = vst [vmem:[%s443 + $0xd8] sm:$0xff] %v1482
        %1798 = vst [vmem:[%s443 + $0xe0] sm:$0xff] %v1593
        %1799 = vst [vmem:[%s443 + $0xe8] sm:$0xff] %v1595
        %1800 = vst [vmem:[%s443 + $0xf0] sm:$0xff] %v1706
        %1801 = vst [vmem:[%s443 + $0xf8] sm:$0xff] %v1708
        %1802 = vst [vmem:[%s443 + $0x100] sm:$0xff] %v1373
        %1803 = vst [vmem:[%s443 + $0x108] sm:$0xff] %v1375
        %1804 = vst [vmem:[%s443 + $0x110] sm:$0xff] %v1486
        %1805 = vst [vmem:[%s443 + $0x118] sm:$0xff] %v1488
        %1806 = vst [vmem:[%s443 + $0x120] sm:$0xff] %v1599
        %1807 = vst [vmem:[%s443 + $0x128] sm:$0xff] %v1601
        %1808 = vst [vmem:[%s443 + $0x130] sm:$0xff] %v1712
        %1809 = vst [vmem:[%s443 + $0x138] sm:$0xff] %v1714
        %1810 = vst [vmem:[%s443 + $0x140] sm:$0xff] %v1377
        %1811 = vst [vmem:[%s443 + $0x148] sm:$0xff] %v1379
        %1812 = vst [vmem:[%s443 + $0x150] sm:$0xff] %v1490
        %1813 = vst [vmem:[%s443 + $0x158] sm:$0xff] %v1492
        %1814 = vst [vmem:[%s443 + $0x160] sm:$0xff] %v1603
        %1815 = vst [vmem:[%s443 + $0x168] sm:$0xff] %v1605
        %1816 = vst [vmem:[%s443 + $0x170] sm:$0xff] %v1716
        %1817 = vst [vmem:[%s443 + $0x178] sm:$0xff] %v1718
        %1818 = vst [vmem:[%s443 + $0x180] sm:$0xff] %v1383
        %1819 = vst [vmem:[%s443 + $0x188] sm:$0xff] %v1385
        %1820 = vst [vmem:[%s443 + $0x190] sm:$0xff] %v1496
        %1821 = vst [vmem:[%s443 + $0x198] sm:$0xff] %v1498
        %1822 = vst [vmem:[%s443 + $0x1a0] sm:$0xff] %v1609
        %1823 = vst [vmem:[%s443 + $0x1a8] sm:$0xff] %v1611
        %1824 = vst [vmem:[%s443 + $0x1b0] sm:$0xff] %v1722
        %1825 = vst [vmem:[%s443 + $0x1b8] sm:$0xff] %v1724
        %1826 = vst [vmem:[%s443 + $0x1c0] sm:$0xff] %v1387
        %1827 = vst [vmem:[%s443 + $0x1c8] sm:$0xff] %v1389
        %1828 = vst [vmem:[%s443 + $0x1d0] sm:$0xff] %v1500
        %1829 = vst [vmem:[%s443 + $0x1d8] sm:$0xff] %v1502
        %1830 = vst [vmem:[%s443 + $0x1e0] sm:$0xff] %v1613
        %1831 = vst [vmem:[%s443 + $0x1e8] sm:$0xff] %v1615
        %1832 = vst [vmem:[%s443 + $0x1f0] sm:$0xff] %v1726
        %1833 = vst [vmem:[%s443 + $0x1f8] sm:$0xff] %v1728
        %1834 = vst [vmem:[%s443 + $0x200] sm:$0xff] %v1393
        %1835 = vst [vmem:[%s443 + $0x208] sm:$0xff] %v1395
        %1836 = vst [vmem:[%s443 + $0x210] sm:$0xff] %v1506
        %1837 = vst [vmem:[%s443 + $0x218] sm:$0xff] %v1508
        %1838 = vst [vmem:[%s443 + $0x220] sm:$0xff] %v1619
        %1839 = vst [vmem:[%s443 + $0x228] sm:$0xff] %v1621
        %1840 = vst [vmem:[%s443 + $0x230] sm:$0xff] %v1732
        %1841 = vst [vmem:[%s443 + $0x238] sm:$0xff] %v1734
        %1842 = vst [vmem:[%s443 + $0x240] sm:$0xff] %v1397
        %1843 = vst [vmem:[%s443 + $0x248] sm:$0xff] %v1399
        %1844 = vst [vmem:[%s443 + $0x250] sm:$0xff] %v1510
        %1845 = vst [vmem:[%s443 + $0x258] sm:$0xff] %v1512
        %1846 = vst [vmem:[%s443 + $0x260] sm:$0xff] %v1623
        %1847 = vst [vmem:[%s443 + $0x268] sm:$0xff] %v1625
        %1848 = vst [vmem:[%s443 + $0x270] sm:$0xff] %v1736
        %1849 = vst [vmem:[%s443 + $0x278] sm:$0xff] %v1738
        %1850 = vst [vmem:[%s443 + $0x280] sm:$0xff] %v1403
        %1851 = vst [vmem:[%s443 + $0x288] sm:$0xff] %v1405
        %1852 = vst [vmem:[%s443 + $0x290] sm:$0xff] %v1516
        %1853 = vst [vmem:[%s443 + $0x298] sm:$0xff] %v1518
        %1854 = vst [vmem:[%s443 + $0x2a0] sm:$0xff] %v1629
        %1855 = vst [vmem:[%s443 + $0x2a8] sm:$0xff] %v1631
        %1856 = vst [vmem:[%s443 + $0x2b0] sm:$0xff] %v1742
        %1857 = vst [vmem:[%s443 + $0x2b8] sm:$0xff] %v1744
        %1858 = vst [vmem:[%s443 + $0x2c0] sm:$0xff] %v1407
        %1859 = vst [vmem:[%s443 + $0x2c8] sm:$0xff] %v1409
        %1860 = vst [vmem:[%s443 + $0x2d0] sm:$0xff] %v1520
        %1861 = vst [vmem:[%s443 + $0x2d8] sm:$0xff] %v1522
        %1862 = vst [vmem:[%s443 + $0x2e0] sm:$0xff] %v1633
        %1863 = vst [vmem:[%s443 + $0x2e8] sm:$0xff] %v1635
        %1864 = vst [vmem:[%s443 + $0x2f0] sm:$0xff] %v1746
        %1865 = vst [vmem:[%s443 + $0x2f8] sm:$0xff] %v1748
        %1866 = vst [vmem:[%s443 + $0x300] sm:$0xff] %v1413
        %1867 = vst [vmem:[%s443 + $0x308] sm:$0xff] %v1415
        %1868 = vst [vmem:[%s443 + $0x310] sm:$0xff] %v1526
        %1869 = vst [vmem:[%s443 + $0x318] sm:$0xff] %v1528
        %1870 = vst [vmem:[%s443 + $0x320] sm:$0xff] %v1639
        %1871 = vst [vmem:[%s443 + $0x328] sm:$0xff] %v1641
        %1872 = vst [vmem:[%s443 + $0x330] sm:$0xff] %v1752
        %1873 = vst [vmem:[%s443 + $0x338] sm:$0xff] %v1754
        %1874 = vst [vmem:[%s443 + $0x340] sm:$0xff] %v1417
        %1875 = vst [vmem:[%s443 + $0x348] sm:$0xff] %v1419
        %1876 = vst [vmem:[%s443 + $0x350] sm:$0xff] %v1530
        %1877 = vst [vmem:[%s443 + $0x358] sm:$0xff] %v1532
        %1878 = vst [vmem:[%s443 + $0x360] sm:$0xff] %v1643
        %1879 = vst [vmem:[%s443 + $0x368] sm:$0xff] %v1645
        %1880 = vst [vmem:[%s443 + $0x370] sm:$0xff] %v1756
        %1881 = vst [vmem:[%s443 + $0x378] sm:$0xff] %v1758
        %1882 = vst [vmem:[%s443 + $0x380] sm:$0xff] %v1423
        %1883 = vst [vmem:[%s443 + $0x388] sm:$0xff] %v1425
        %1884 = vst [vmem:[%s443 + $0x390] sm:$0xff] %v1536
        %1885 = vst [vmem:[%s443 + $0x398] sm:$0xff] %v1538
        %1886 = vst [vmem:[%s443 + $0x3a0] sm:$0xff] %v1649
        %1887 = vst [vmem:[%s443 + $0x3a8] sm:$0xff] %v1651
        %1888 = vst [vmem:[%s443 + $0x3b0] sm:$0xff] %v1762
        %1889 = vst [vmem:[%s443 + $0x3b8] sm:$0xff] %v1764
        %1890 = vst [vmem:[%s443 + $0x3c0] sm:$0xff] %v1427
        %1891 = vst [vmem:[%s443 + $0x3c8] sm:$0xff] %v1429
        %1892 = vst [vmem:[%s443 + $0x3d0] sm:$0xff] %v1540
        %1893 = vst [vmem:[%s443 + $0x3d8] sm:$0xff] %v1542
        %1894 = vst [vmem:[%s443 + $0x3e0] sm:$0xff] %v1653
        %1895 = vst [vmem:[%s443 + $0x3e8] sm:$0xff] %v1655
        %1896 = vst [vmem:[%s443 + $0x3f0] sm:$0xff] %v1766
        %1897 = vst [vmem:[%s443 + $0x3f8] sm:$0xff] %v1768
        %s1898 = sand.u32 %s87, 1
        %s1899 = sand.u32 %s87, 1
        %s1900 = smul.addr %s1899, 1024
        %s1901 = scalar_lea.vmem [#allocation3], %s1900
        // Predicated region
        $region52: #{netg_forward.14} parent=46 // pred_check
          %p1902 = pneg %p97
        $region53: #{netg_forward.14} parent=46 // pred_check_branch
          %1904 = sbr.rel (%p1902) target = $region55
        $region54: #{netg_forward.14} parent=46 // pred_region
          %s1905 = smul.u32 16, %s17
          %s1906 = smul.u32 8, %s18
          %s1907 = smul.addr %s1905, 16
          %s1908 = sadd.s32 %s1906, %s1907
          %s1909 = smul.addr %s1908, 8
          %s1910 = scalar_lea.vmem %s2, %s1909
          // Predicated region
          $region56: #{netg_forward.14} parent=54 // pred_check
            _
          $region57: #{netg_forward.14} parent=54 // pred_check_branch
            %1912 = sbr.rel (0) target = $region59
          $region58: #{netg_forward.14} parent=54 // pred_region
            // Predicated region
            $region60: #{netg_forward.14} parent=58 // pred_check
              _
            $region61: #{netg_forward.14} parent=58 // pred_check_branch
              %1914 = sbr.rel (0) target = $region63
            $region62: #{netg_forward.14} parent=58 // pred_region
              loop: start=0, step=1, limit=1
              $region64: #{netg_forward.14} parent=62 // loop_pre_header
                _
              $region65: #{netg_forward.14} parent=62 // loop_header
                %s1916 = sphi 0, %s1920
                %p1917 = scmp.ge.s32.totalorder %s1916, 1
                %s1921 = sphi %s1901, %s1901
                %s1922 = sphi %s1910, %s1910
              $region66: #{netg_forward.14} parent=62 // loop_header_branch
                %1919 = sbr.rel (%p1917) target = $region70
              $region67: #{netg_forward.14} parent=62 // loop_body
                %v1923 = vld [vmem:[%s1921] sm:$0xff]
                %1924 = vst [vmem:[%s1922] sm:$0xff] %v1923
                %v1925 = vld [vmem:[%s1921 + $0x8] sm:$0xff]
                %1926 = vst [vmem:[%s1922 + $0x8] sm:$0xff] %v1925
                %v1927 = vld [vmem:[%s1921 + $0x10] sm:$0xff]
                %1928 = vst [vmem:[%s1922 + $0x10] sm:$0xff] %v1927
                %v1929 = vld [vmem:[%s1921 + $0x18] sm:$0xff]
                %1930 = vst [vmem:[%s1922 + $0x18] sm:$0xff] %v1929
                %v1931 = vld [vmem:[%s1921 + $0x20] sm:$0xff]
                %1932 = vst [vmem:[%s1922 + $0x20] sm:$0xff] %v1931
                %v1933 = vld [vmem:[%s1921 + $0x28] sm:$0xff]
                %1934 = vst [vmem:[%s1922 + $0x28] sm:$0xff] %v1933
                %v1935 = vld [vmem:[%s1921 + $0x30] sm:$0xff]
                %1936 = vst [vmem:[%s1922 + $0x30] sm:$0xff] %v1935
                %v1937 = vld [vmem:[%s1921 + $0x38] sm:$0xff]
                %1938 = vst [vmem:[%s1922 + $0x38] sm:$0xff] %v1937
                %v1939 = vld [vmem:[%s1921 + $0x40] sm:$0xff]
                %1940 = vst [vmem:[%s1922 + $0x80] sm:$0xff] %v1939
                %v1941 = vld [vmem:[%s1921 + $0x48] sm:$0xff]
                %1942 = vst [vmem:[%s1922 + $0x88] sm:$0xff] %v1941
                %v1943 = vld [vmem:[%s1921 + $0x50] sm:$0xff]
                %1944 = vst [vmem:[%s1922 + $0x90] sm:$0xff] %v1943
                %v1945 = vld [vmem:[%s1921 + $0x58] sm:$0xff]
                %1946 = vst [vmem:[%s1922 + $0x98] sm:$0xff] %v1945
                %v1947 = vld [vmem:[%s1921 + $0x60] sm:$0xff]
                %1948 = vst [vmem:[%s1922 + $0xa0] sm:$0xff] %v1947
                %v1949 = vld [vmem:[%s1921 + $0x68] sm:$0xff]
                %1950 = vst [vmem:[%s1922 + $0xa8] sm:$0xff] %v1949
                %v1951 = vld [vmem:[%s1921 + $0x70] sm:$0xff]
                %1952 = vst [vmem:[%s1922 + $0xb0] sm:$0xff] %v1951
                %v1953 = vld [vmem:[%s1921 + $0x78] sm:$0xff]
                %1954 = vst [vmem:[%s1922 + $0xb8] sm:$0xff] %v1953
                %v1955 = vld [vmem:[%s1921 + $0x80] sm:$0xff]
                %1956 = vst [vmem:[%s1922 + $0x100] sm:$0xff] %v1955
                %v1957 = vld [vmem:[%s1921 + $0x88] sm:$0xff]
                %1958 = vst [vmem:[%s1922 + $0x108] sm:$0xff] %v1957
                %v1959 = vld [vmem:[%s1921 + $0x90] sm:$0xff]
                %1960 = vst [vmem:[%s1922 + $0x110] sm:$0xff] %v1959
                %v1961 = vld [vmem:[%s1921 + $0x98] sm:$0xff]
                %1962 = vst [vmem:[%s1922 + $0x118] sm:$0xff] %v1961
                %v1963 = vld [vmem:[%s1921 + $0xa0] sm:$0xff]
                %1964 = vst [vmem:[%s1922 + $0x120] sm:$0xff] %v1963
                %v1965 = vld [vmem:[%s1921 + $0xa8] sm:$0xff]
                %1966 = vst [vmem:[%s1922 + $0x128] sm:$0xff] %v1965
                %v1967 = vld [vmem:[%s1921 + $0xb0] sm:$0xff]
                %1968 = vst [vmem:[%s1922 + $0x130] sm:$0xff] %v1967
                %v1969 = vld [vmem:[%s1921 + $0xb8] sm:$0xff]
                %1970 = vst [vmem:[%s1922 + $0x138] sm:$0xff] %v1969
                %v1971 = vld [vmem:[%s1921 + $0xc0] sm:$0xff]
                %1972 = vst [vmem:[%s1922 + $0x180] sm:$0xff] %v1971
                %v1973 = vld [vmem:[%s1921 + $0xc8] sm:$0xff]
                %1974 = vst [vmem:[%s1922 + $0x188] sm:$0xff] %v1973
                %v1975 = vld [vmem:[%s1921 + $0xd0] sm:$0xff]
                %1976 = vst [vmem:[%s1922 + $0x190] sm:$0xff] %v1975
                %v1977 = vld [vmem:[%s1921 + $0xd8] sm:$0xff]
                %1978 = vst [vmem:[%s1922 + $0x198] sm:$0xff] %v1977
                %v1979 = vld [vmem:[%s1921 + $0xe0] sm:$0xff]
                %1980 = vst [vmem:[%s1922 + $0x1a0] sm:$0xff] %v1979
                %v1981 = vld [vmem:[%s1921 + $0xe8] sm:$0xff]
                %1982 = vst [vmem:[%s1922 + $0x1a8] sm:$0xff] %v1981
                %v1983 = vld [vmem:[%s1921 + $0xf0] sm:$0xff]
                %1984 = vst [vmem:[%s1922 + $0x1b0] sm:$0xff] %v1983
                %v1985 = vld [vmem:[%s1921 + $0xf8] sm:$0xff]
                %1986 = vst [vmem:[%s1922 + $0x1b8] sm:$0xff] %v1985
                %v1987 = vld [vmem:[%s1921 + $0x100] sm:$0xff]
                %1988 = vst [vmem:[%s1922 + $0x200] sm:$0xff] %v1987
                %v1989 = vld [vmem:[%s1921 + $0x108] sm:$0xff]
                %1990 = vst [vmem:[%s1922 + $0x208] sm:$0xff] %v1989
                %v1991 = vld [vmem:[%s1921 + $0x110] sm:$0xff]
                %1992 = vst [vmem:[%s1922 + $0x210] sm:$0xff] %v1991
                %v1993 = vld [vmem:[%s1921 + $0x118] sm:$0xff]
                %1994 = vst [vmem:[%s1922 + $0x218] sm:$0xff] %v1993
                %v1995 = vld [vmem:[%s1921 + $0x120] sm:$0xff]
                %1996 = vst [vmem:[%s1922 + $0x220] sm:$0xff] %v1995
                %v1997 = vld [vmem:[%s1921 + $0x128] sm:$0xff]
                %1998 = vst [vmem:[%s1922 + $0x228] sm:$0xff] %v1997
                %v1999 = vld [vmem:[%s1921 + $0x130] sm:$0xff]
                %2000 = vst [vmem:[%s1922 + $0x230] sm:$0xff] %v1999
                %v2001 = vld [vmem:[%s1921 + $0x138] sm:$0xff]
                %2002 = vst [vmem:[%s1922 + $0x238] sm:$0xff] %v2001
                %v2003 = vld [vmem:[%s1921 + $0x140] sm:$0xff]
                %2004 = vst [vmem:[%s1922 + $0x280] sm:$0xff] %v2003
                %v2005 = vld [vmem:[%s1921 + $0x148] sm:$0xff]
                %2006 = vst [vmem:[%s1922 + $0x288] sm:$0xff] %v2005
                %v2007 = vld [vmem:[%s1921 + $0x150] sm:$0xff]
                %2008 = vst [vmem:[%s1922 + $0x290] sm:$0xff] %v2007
                %v2009 = vld [vmem:[%s1921 + $0x158] sm:$0xff]
                %2010 = vst [vmem:[%s1922 + $0x298] sm:$0xff] %v2009
                %v2011 = vld [vmem:[%s1921 + $0x160] sm:$0xff]
                %2012 = vst [vmem:[%s1922 + $0x2a0] sm:$0xff] %v2011
                %v2013 = vld [vmem:[%s1921 + $0x168] sm:$0xff]
                %2014 = vst [vmem:[%s1922 + $0x2a8] sm:$0xff] %v2013
                %v2015 = vld [vmem:[%s1921 + $0x170] sm:$0xff]
                %2016 = vst [vmem:[%s1922 + $0x2b0] sm:$0xff] %v2015
                %v2017 = vld [vmem:[%s1921 + $0x178] sm:$0xff]
                %2018 = vst [vmem:[%s1922 + $0x2b8] sm:$0xff] %v2017
                %v2019 = vld [vmem:[%s1921 + $0x180] sm:$0xff]
                %2020 = vst [vmem:[%s1922 + $0x300] sm:$0xff] %v2019
                %v2021 = vld [vmem:[%s1921 + $0x188] sm:$0xff]
                %2022 = vst [vmem:[%s1922 + $0x308] sm:$0xff] %v2021
                %v2023 = vld [vmem:[%s1921 + $0x190] sm:$0xff]
                %2024 = vst [vmem:[%s1922 + $0x310] sm:$0xff] %v2023
                %v2025 = vld [vmem:[%s1921 + $0x198] sm:$0xff]
                %2026 = vst [vmem:[%s1922 + $0x318] sm:$0xff] %v2025
                %v2027 = vld [vmem:[%s1921 + $0x1a0] sm:$0xff]
                %2028 = vst [vmem:[%s1922 + $0x320] sm:$0xff] %v2027
                %v2029 = vld [vmem:[%s1921 + $0x1a8] sm:$0xff]
                %2030 = vst [vmem:[%s1922 + $0x328] sm:$0xff] %v2029
                %v2031 = vld [vmem:[%s1921 + $0x1b0] sm:$0xff]
                %2032 = vst [vmem:[%s1922 + $0x330] sm:$0xff] %v2031
                %v2033 = vld [vmem:[%s1921 + $0x1b8] sm:$0xff]
                %2034 = vst [vmem:[%s1922 + $0x338] sm:$0xff] %v2033
                %v2035 = vld [vmem:[%s1921 + $0x1c0] sm:$0xff]
                %2036 = vst [vmem:[%s1922 + $0x380] sm:$0xff] %v2035
                %v2037 = vld [vmem:[%s1921 + $0x1c8] sm:$0xff]
                %2038 = vst [vmem:[%s1922 + $0x388] sm:$0xff] %v2037
                %v2039 = vld [vmem:[%s1921 + $0x1d0] sm:$0xff]
                %2040 = vst [vmem:[%s1922 + $0x390] sm:$0xff] %v2039
                %v2041 = vld [vmem:[%s1921 + $0x1d8] sm:$0xff]
                %2042 = vst [vmem:[%s1922 + $0x398] sm:$0xff] %v2041
                %v2043 = vld [vmem:[%s1921 + $0x1e0] sm:$0xff]
                %2044 = vst [vmem:[%s1922 + $0x3a0] sm:$0xff] %v2043
                %v2045 = vld [vmem:[%s1921 + $0x1e8] sm:$0xff]
                %2046 = vst [vmem:[%s1922 + $0x3a8] sm:$0xff] %v2045
                %v2047 = vld [vmem:[%s1921 + $0x1f0] sm:$0xff]
                %2048 = vst [vmem:[%s1922 + $0x3b0] sm:$0xff] %v2047
                %v2049 = vld [vmem:[%s1921 + $0x1f8] sm:$0xff]
                %2050 = vst [vmem:[%s1922 + $0x3b8] sm:$0xff] %v2049
                %v2051 = vld [vmem:[%s1921 + $0x200] sm:$0xff]
                %2052 = vst [vmem:[%s1922 + $0x400] sm:$0xff] %v2051
                %v2053 = vld [vmem:[%s1921 + $0x208] sm:$0xff]
                %2054 = vst [vmem:[%s1922 + $0x408] sm:$0xff] %v2053
                %v2055 = vld [vmem:[%s1921 + $0x210] sm:$0xff]
                %2056 = vst [vmem:[%s1922 + $0x410] sm:$0xff] %v2055
                %v2057 = vld [vmem:[%s1921 + $0x218] sm:$0xff]
                %2058 = vst [vmem:[%s1922 + $0x418] sm:$0xff] %v2057
                %v2059 = vld [vmem:[%s1921 + $0x220] sm:$0xff]
                %2060 = vst [vmem:[%s1922 + $0x420] sm:$0xff] %v2059
                %v2061 = vld [vmem:[%s1921 + $0x228] sm:$0xff]
                %2062 = vst [vmem:[%s1922 + $0x428] sm:$0xff] %v2061
                %v2063 = vld [vmem:[%s1921 + $0x230] sm:$0xff]
                %2064 = vst [vmem:[%s1922 + $0x430] sm:$0xff] %v2063
                %v2065 = vld [vmem:[%s1921 + $0x238] sm:$0xff]
                %2066 = vst [vmem:[%s1922 + $0x438] sm:$0xff] %v2065
                %v2067 = vld [vmem:[%s1921 + $0x240] sm:$0xff]
                %2068 = vst [vmem:[%s1922 + $0x480] sm:$0xff] %v2067
                %v2069 = vld [vmem:[%s1921 + $0x248] sm:$0xff]
                %2070 = vst [vmem:[%s1922 + $0x488] sm:$0xff] %v2069
                %v2071 = vld [vmem:[%s1921 + $0x250] sm:$0xff]
                %2072 = vst [vmem:[%s1922 + $0x490] sm:$0xff] %v2071
                %v2073 = vld [vmem:[%s1921 + $0x258] sm:$0xff]
                %2074 = vst [vmem:[%s1922 + $0x498] sm:$0xff] %v2073
                %v2075 = vld [vmem:[%s1921 + $0x260] sm:$0xff]
                %2076 = vst [vmem:[%s1922 + $0x4a0] sm:$0xff] %v2075
                %v2077 = vld [vmem:[%s1921 + $0x268] sm:$0xff]
                %2078 = vst [vmem:[%s1922 + $0x4a8] sm:$0xff] %v2077
                %v2079 = vld [vmem:[%s1921 + $0x270] sm:$0xff]
                %2080 = vst [vmem:[%s1922 + $0x4b0] sm:$0xff] %v2079
                %v2081 = vld [vmem:[%s1921 + $0x278] sm:$0xff]
                %2082 = vst [vmem:[%s1922 + $0x4b8] sm:$0xff] %v2081
                %v2083 = vld [vmem:[%s1921 + $0x280] sm:$0xff]
                %2084 = vst [vmem:[%s1922 + $0x500] sm:$0xff] %v2083
                %v2085 = vld [vmem:[%s1921 + $0x288] sm:$0xff]
                %2086 = vst [vmem:[%s1922 + $0x508] sm:$0xff] %v2085
                %v2087 = vld [vmem:[%s1921 + $0x290] sm:$0xff]
                %2088 = vst [vmem:[%s1922 + $0x510] sm:$0xff] %v2087
                %v2089 = vld [vmem:[%s1921 + $0x298] sm:$0xff]
                %2090 = vst [vmem:[%s1922 + $0x518] sm:$0xff] %v2089
                %v2091 = vld [vmem:[%s1921 + $0x2a0] sm:$0xff]
                %2092 = vst [vmem:[%s1922 + $0x520] sm:$0xff] %v2091
                %v2093 = vld [vmem:[%s1921 + $0x2a8] sm:$0xff]
                %2094 = vst [vmem:[%s1922 + $0x528] sm:$0xff] %v2093
                %v2095 = vld [vmem:[%s1921 + $0x2b0] sm:$0xff]
                %2096 = vst [vmem:[%s1922 + $0x530] sm:$0xff] %v2095
                %v2097 = vld [vmem:[%s1921 + $0x2b8] sm:$0xff]
                %2098 = vst [vmem:[%s1922 + $0x538] sm:$0xff] %v2097
                %v2099 = vld [vmem:[%s1921 + $0x2c0] sm:$0xff]
                %2100 = vst [vmem:[%s1922 + $0x580] sm:$0xff] %v2099
                %v2101 = vld [vmem:[%s1921 + $0x2c8] sm:$0xff]
                %2102 = vst [vmem:[%s1922 + $0x588] sm:$0xff] %v2101
                %v2103 = vld [vmem:[%s1921 + $0x2d0] sm:$0xff]
                %2104 = vst [vmem:[%s1922 + $0x590] sm:$0xff] %v2103
                %v2105 = vld [vmem:[%s1921 + $0x2d8] sm:$0xff]
                %2106 = vst [vmem:[%s1922 + $0x598] sm:$0xff] %v2105
                %v2107 = vld [vmem:[%s1921 + $0x2e0] sm:$0xff]
                %2108 = vst [vmem:[%s1922 + $0x5a0] sm:$0xff] %v2107
                %v2109 = vld [vmem:[%s1921 + $0x2e8] sm:$0xff]
                %2110 = vst [vmem:[%s1922 + $0x5a8] sm:$0xff] %v2109
                %v2111 = vld [vmem:[%s1921 + $0x2f0] sm:$0xff]
                %2112 = vst [vmem:[%s1922 + $0x5b0] sm:$0xff] %v2111
                %v2113 = vld [vmem:[%s1921 + $0x2f8] sm:$0xff]
                %2114 = vst [vmem:[%s1922 + $0x5b8] sm:$0xff] %v2113
                %v2115 = vld [vmem:[%s1921 + $0x300] sm:$0xff]
                %2116 = vst [vmem:[%s1922 + $0x600] sm:$0xff] %v2115
                %v2117 = vld [vmem:[%s1921 + $0x308] sm:$0xff]
                %2118 = vst [vmem:[%s1922 + $0x608] sm:$0xff] %v2117
                %v2119 = vld [vmem:[%s1921 + $0x310] sm:$0xff]
                %2120 = vst [vmem:[%s1922 + $0x610] sm:$0xff] %v2119
                %v2121 = vld [vmem:[%s1921 + $0x318] sm:$0xff]
                %2122 = vst [vmem:[%s1922 + $0x618] sm:$0xff] %v2121
                %v2123 = vld [vmem:[%s1921 + $0x320] sm:$0xff]
                %2124 = vst [vmem:[%s1922 + $0x620] sm:$0xff] %v2123
                %v2125 = vld [vmem:[%s1921 + $0x328] sm:$0xff]
                %2126 = vst [vmem:[%s1922 + $0x628] sm:$0xff] %v2125
                %v2127 = vld [vmem:[%s1921 + $0x330] sm:$0xff]
                %2128 = vst [vmem:[%s1922 + $0x630] sm:$0xff] %v2127
                %v2129 = vld [vmem:[%s1921 + $0x338] sm:$0xff]
                %2130 = vst [vmem:[%s1922 + $0x638] sm:$0xff] %v2129
                %v2131 = vld [vmem:[%s1921 + $0x340] sm:$0xff]
                %2132 = vst [vmem:[%s1922 + $0x680] sm:$0xff] %v2131
                %v2133 = vld [vmem:[%s1921 + $0x348] sm:$0xff]
                %2134 = vst [vmem:[%s1922 + $0x688] sm:$0xff] %v2133
                %v2135 = vld [vmem:[%s1921 + $0x350] sm:$0xff]
                %2136 = vst [vmem:[%s1922 + $0x690] sm:$0xff] %v2135
                %v2137 = vld [vmem:[%s1921 + $0x358] sm:$0xff]
                %2138 = vst [vmem:[%s1922 + $0x698] sm:$0xff] %v2137
                %v2139 = vld [vmem:[%s1921 + $0x360] sm:$0xff]
                %2140 = vst [vmem:[%s1922 + $0x6a0] sm:$0xff] %v2139
                %v2141 = vld [vmem:[%s1921 + $0x368] sm:$0xff]
                %2142 = vst [vmem:[%s1922 + $0x6a8] sm:$0xff] %v2141
                %v2143 = vld [vmem:[%s1921 + $0x370] sm:$0xff]
                %2144 = vst [vmem:[%s1922 + $0x6b0] sm:$0xff] %v2143
                %v2145 = vld [vmem:[%s1921 + $0x378] sm:$0xff]
                %2146 = vst [vmem:[%s1922 + $0x6b8] sm:$0xff] %v2145
                %v2147 = vld [vmem:[%s1921 + $0x380] sm:$0xff]
                %2148 = vst [vmem:[%s1922 + $0x700] sm:$0xff] %v2147
                %v2149 = vld [vmem:[%s1921 + $0x388] sm:$0xff]
                %2150 = vst [vmem:[%s1922 + $0x708] sm:$0xff] %v2149
                %v2151 = vld [vmem:[%s1921 + $0x390] sm:$0xff]
                %2152 = vst [vmem:[%s1922 + $0x710] sm:$0xff] %v2151
                %v2153 = vld [vmem:[%s1921 + $0x398] sm:$0xff]
                %2154 = vst [vmem:[%s1922 + $0x718] sm:$0xff] %v2153
                %v2155 = vld [vmem:[%s1921 + $0x3a0] sm:$0xff]
                %2156 = vst [vmem:[%s1922 + $0x720] sm:$0xff] %v2155
                %v2157 = vld [vmem:[%s1921 + $0x3a8] sm:$0xff]
                %2158 = vst [vmem:[%s1922 + $0x728] sm:$0xff] %v2157
                %v2159 = vld [vmem:[%s1921 + $0x3b0] sm:$0xff]
                %2160 = vst [vmem:[%s1922 + $0x730] sm:$0xff] %v2159
                %v2161 = vld [vmem:[%s1921 + $0x3b8] sm:$0xff]
                %2162 = vst [vmem:[%s1922 + $0x738] sm:$0xff] %v2161
                %v2163 = vld [vmem:[%s1921 + $0x3c0] sm:$0xff]
                %2164 = vst [vmem:[%s1922 + $0x780] sm:$0xff] %v2163
                %v2165 = vld [vmem:[%s1921 + $0x3c8] sm:$0xff]
                %2166 = vst [vmem:[%s1922 + $0x788] sm:$0xff] %v2165
                %v2167 = vld [vmem:[%s1921 + $0x3d0] sm:$0xff]
                %2168 = vst [vmem:[%s1922 + $0x790] sm:$0xff] %v2167
                %v2169 = vld [vmem:[%s1921 + $0x3d8] sm:$0xff]
                %2170 = vst [vmem:[%s1922 + $0x798] sm:$0xff] %v2169
                %v2171 = vld [vmem:[%s1921 + $0x3e0] sm:$0xff]
                %2172 = vst [vmem:[%s1922 + $0x7a0] sm:$0xff] %v2171
                %v2173 = vld [vmem:[%s1921 + $0x3e8] sm:$0xff]
                %2174 = vst [vmem:[%s1922 + $0x7a8] sm:$0xff] %v2173
                %v2175 = vld [vmem:[%s1921 + $0x3f0] sm:$0xff]
                %2176 = vst [vmem:[%s1922 + $0x7b0] sm:$0xff] %v2175
                %v2177 = vld [vmem:[%s1921 + $0x3f8] sm:$0xff]
                %2178 = vst [vmem:[%s1922 + $0x7b8] sm:$0xff] %v2177
              $region68: #{netg_forward.14} parent=62 // loop_footer
                %s1920 = sadd.s32 1, %s1916
              $region69: #{netg_forward.14} parent=62 // loop_footer_branch
                %1915 = sbr.rel target = $region65
              $region70: #{netg_forward.14} parent=62 // loop_exit
                _
            $region63: #{netg_forward.14} parent=58 // pred_fallthru
              _
            // Predicated region
            $region71: #{netg_forward.14} parent=58 // pred_check
              _
            $region72: #{netg_forward.14} parent=58 // pred_check_branch
              %2180 = sbr.rel target = $region74
            $region73: #{netg_forward.14} parent=58 // pred_region
              _
            $region74: #{netg_forward.14} parent=58 // pred_fallthru
              _
          $region59: #{netg_forward.14} parent=54 // pred_fallthru
            _
          %2181 = vnop
        $region55: #{netg_forward.14} parent=46 // pred_fallthru
          _
      $region47: #{netg_forward.14} parent=5 // pred_fallthru
        _
      %p2182 = scmp.le.s32.totalorder 2, %s8
      // Predicated region
      $region75: #{netg_forward.14} parent=5 // pred_check
        %p2183 = pneg %p2182
      $region76: #{netg_forward.14} parent=5 // pred_check_branch
        %2185 = sbr.rel (%p2183) target = $region78
      $region77: #{netg_forward.14} parent=5 // pred_region
        %s2186 = ssub.s32 %s8, 2
        // Predicated region
        $region79: #{netg_forward.14} parent=77 // pred_check
          %p2187 = pneg %p103
        $region80: #{netg_forward.14} parent=77 // pred_check_branch
          %2189 = sbr.rel (%p2187) target = $region82
        $region81: #{netg_forward.14} parent=77 // pred_region
          %s2190 = sand.u32 %s88, 1
          %s2191 = sand.u32 %s88, 1
          %s2192 = smul.addr %s2191, 1024
          %s2193 = scalar_lea.vmem [#allocation3], %s2192
        $region82: #{netg_forward.14} parent=77 // pred_fallthru
          _
      $region78: #{netg_forward.14} parent=5 // pred_fallthru
        _
    $region6: #{netg_forward.14} parent=1 // loop_footer
      %s12 = sadd.s32 1, %s8
    $region7: #{netg_forward.14} parent=1 // loop_footer_branch
      %7 = sbr.rel target = $region3
    $region8: #{netg_forward.14} parent=1 // loop_exit
      _

// kernel: netg_forward.15
$region0: #{netg_forward.15}
  #allocation0 [shape = 'u32[]', space=smem, size = 0x4, offset = 0x4, fixed_abs, tag = 'smem constant byte address 0x4 - core index']
  #allocation1 [shape = 'u32[144,128]{1,0:T(1,128)}', space=vmem, size = 0x12000, scoped, tag = 'internal scratch']
  %s0 = inlined_call_operand.vmem [shape: f32[512,128], index: 0, kind: input, shape index: {}]
  %s1 = inlined_call_operand.vmem [shape: f32[1,128], index: 1, kind: input, shape index: {}]
  %s2 = inlined_call_operand.vmem [shape: f32[1,128], index: 2, kind: input, shape index: {}]
  %s3 = inlined_call_operand.vmem [shape: f32[512,128], index: 3, kind: output, shape index: {}]
  %s4 = sld [smem:[#allocation0]]
  $region22: #{netg_forward.15} parent=0
    _
  %s6 = ssub.s32 1, %s4
  %s7 = scalar_select 0, %s6, %s4
  // Predicated region
  $region2: #{netg_forward.15} parent=0 // pred_check
    _
  $region3: #{netg_forward.15} parent=0 // pred_check_branch
    %9 = sbr.rel (0) target = $region5
  $region4: #{netg_forward.15} parent=0 // pred_region
    _
  $region5: #{netg_forward.15} parent=0 // pred_fallthru
    _
  // Predicated region
  $region6: #{netg_forward.15} parent=0 // pred_check
    _
  $region7: #{netg_forward.15} parent=0 // pred_check_branch
    %11 = sbr.rel (0) target = $region9
  $region8: #{netg_forward.15} parent=0 // pred_region
    _
  $region9: #{netg_forward.15} parent=0 // pred_fallthru
    _
  // Predicated region
  $region10: #{netg_forward.15} parent=0 // pred_check
    _
  $region11: #{netg_forward.15} parent=0 // pred_check_branch
    %13 = sbr.rel (0) target = $region13
  $region12: #{netg_forward.15} parent=0 // pred_region
    _
  $region13: #{netg_forward.15} parent=0 // pred_fallthru
    _
  %v14 = vld [vmem:[%s0] sm:$0xff]
  %v15 = vld [vmem:[%s0 + $0x8] sm:$0xff]
  %v16 = vld [vmem:[%s0 + $0x10] sm:$0xff]
  %v17 = vld [vmem:[%s0 + $0x18] sm:$0xff]
  %v18 = vld [vmem:[%s0 + $0x20] sm:$0xff]
  %v19 = vld [vmem:[%s0 + $0x28] sm:$0xff]
  %v20 = vld [vmem:[%s0 + $0x30] sm:$0xff]
  %v21 = vld [vmem:[%s0 + $0x38] sm:$0xff]
  %v22 = vld [vmem:[%s0 + $0x40] sm:$0xff]
  %v23 = vld [vmem:[%s0 + $0x48] sm:$0xff]
  %v24 = vld [vmem:[%s0 + $0x50] sm:$0xff]
  %v25 = vld [vmem:[%s0 + $0x58] sm:$0xff]
  %v26 = vld [vmem:[%s0 + $0x60] sm:$0xff]
  %v27 = vld [vmem:[%s0 + $0x68] sm:$0xff]
  %v28 = vld [vmem:[%s0 + $0x70] sm:$0xff]
  %v29 = vld [vmem:[%s0 + $0x78] sm:$0xff]
  %v30 = vld [vmem:[%s0 + $0x80] sm:$0xff]
  %v31 = vld [vmem:[%s0 + $0x88] sm:$0xff]
  %v32 = vld [vmem:[%s0 + $0x90] sm:$0xff]
  %v33 = vld [vmem:[%s0 + $0x98] sm:$0xff]
  %v34 = vld [vmem:[%s0 + $0xa0] sm:$0xff]
  %v35 = vld [vmem:[%s0 + $0xa8] sm:$0xff]
  %v36 = vld [vmem:[%s0 + $0xb0] sm:$0xff]
  %v37 = vld [vmem:[%s0 + $0xb8] sm:$0xff]
  %v38 = vld [vmem:[%s0 + $0xc0] sm:$0xff]
  %v39 = vld [vmem:[%s0 + $0xc8] sm:$0xff]
  %v40 = vld [vmem:[%s0 + $0xd0] sm:$0xff]
  %v41 = vld [vmem:[%s0 + $0xd8] sm:$0xff]
  %v42 = vld [vmem:[%s0 + $0xe0] sm:$0xff]
  %v43 = vld [vmem:[%s0 + $0xe8] sm:$0xff]
  %v44 = vld [vmem:[%s0 + $0xf0] sm:$0xff]
  %v45 = vld [vmem:[%s0 + $0xf8] sm:$0xff]
  %v46 = vld [vmem:[%s0 + $0x100] sm:$0xff]
  %v47 = vld [vmem:[%s0 + $0x108] sm:$0xff]
  %v48 = vld [vmem:[%s0 + $0x110] sm:$0xff]
  %v49 = vld [vmem:[%s0 + $0x118] sm:$0xff]
  %v50 = vld [vmem:[%s0 + $0x120] sm:$0xff]
  %v51 = vld [vmem:[%s0 + $0x128] sm:$0xff]
  %v52 = vld [vmem:[%s0 + $0x130] sm:$0xff]
  %v53 = vld [vmem:[%s0 + $0x138] sm:$0xff]
  %v54 = vld [vmem:[%s0 + $0x140] sm:$0xff]
  %v55 = vld [vmem:[%s0 + $0x148] sm:$0xff]
  %v56 = vld [vmem:[%s0 + $0x150] sm:$0xff]
  %v57 = vld [vmem:[%s0 + $0x158] sm:$0xff]
  %v58 = vld [vmem:[%s0 + $0x160] sm:$0xff]
  %v59 = vld [vmem:[%s0 + $0x168] sm:$0xff]
  %v60 = vld [vmem:[%s0 + $0x170] sm:$0xff]
  %v61 = vld [vmem:[%s0 + $0x178] sm:$0xff]
  %v62 = vld [vmem:[%s0 + $0x180] sm:$0xff]
  %v63 = vld [vmem:[%s0 + $0x188] sm:$0xff]
  %v64 = vld [vmem:[%s0 + $0x190] sm:$0xff]
  %v65 = vld [vmem:[%s0 + $0x198] sm:$0xff]
  %v66 = vld [vmem:[%s0 + $0x1a0] sm:$0xff]
  %v67 = vld [vmem:[%s0 + $0x1a8] sm:$0xff]
  %v68 = vld [vmem:[%s0 + $0x1b0] sm:$0xff]
  %v69 = vld [vmem:[%s0 + $0x1b8] sm:$0xff]
  %v70 = vld [vmem:[%s0 + $0x1c0] sm:$0xff]
  %v71 = vld [vmem:[%s0 + $0x1c8] sm:$0xff]
  %v72 = vld [vmem:[%s0 + $0x1d0] sm:$0xff]
  %v73 = vld [vmem:[%s0 + $0x1d8] sm:$0xff]
  %v74 = vld [vmem:[%s0 + $0x1e0] sm:$0xff]
  %v75 = vld [vmem:[%s0 + $0x1e8] sm:$0xff]
  %v76 = vld [vmem:[%s0 + $0x1f0] sm:$0xff]
  %v77 = vld [vmem:[%s0 + $0x1f8] sm:$0xff]
  %v78 = vld [vmem:[%s1] sm:$0x1]
  %v80 = vlaneseq
  %v81 = vshrl.u32 %v80, 7
  %v82 = vsub.s32 0, %v81
  %v83 = vrot.slane %v78, %v82
  %v85 = vmul.f32 %v14, %v83
  %v86 = vmul.f32 %v15, %v83
  %v87 = vmul.f32 %v16, %v83
  %v88 = vmul.f32 %v17, %v83
  %v89 = vmul.f32 %v18, %v83
  %v90 = vmul.f32 %v19, %v83
  %v91 = vmul.f32 %v20, %v83
  %v92 = vmul.f32 %v21, %v83
  %v93 = vmul.f32 %v22, %v83
  %v94 = vmul.f32 %v23, %v83
  %v95 = vmul.f32 %v24, %v83
  %v96 = vmul.f32 %v25, %v83
  %v97 = vmul.f32 %v26, %v83
  %v98 = vmul.f32 %v27, %v83
  %v99 = vmul.f32 %v28, %v83
  %v100 = vmul.f32 %v29, %v83
  %v101 = vmul.f32 %v30, %v83
  %v102 = vmul.f32 %v31, %v83
  %v103 = vmul.f32 %v32, %v83
  %v104 = vmul.f32 %v33, %v83
  %v105 = vmul.f32 %v34, %v83
  %v106 = vmul.f32 %v35, %v83
  %v107 = vmul.f32 %v36, %v83
  %v108 = vmul.f32 %v37, %v83
  %v109 = vmul.f32 %v38, %v83
  %v110 = vmul.f32 %v39, %v83
  %v111 = vmul.f32 %v40, %v83
  %v112 = vmul.f32 %v41, %v83
  %v113 = vmul.f32 %v42, %v83
  %v114 = vmul.f32 %v43, %v83
  %v115 = vmul.f32 %v44, %v83
  %v116 = vmul.f32 %v45, %v83
  %v117 = vmul.f32 %v46, %v83
  %v118 = vmul.f32 %v47, %v83
  %v119 = vmul.f32 %v48, %v83
  %v120 = vmul.f32 %v49, %v83
  %v121 = vmul.f32 %v50, %v83
  %v122 = vmul.f32 %v51, %v83
  %v123 = vmul.f32 %v52, %v83
  %v124 = vmul.f32 %v53, %v83
  %v125 = vmul.f32 %v54, %v83
  %v126 = vmul.f32 %v55, %v83
  %v127 = vmul.f32 %v56, %v83
  %v128 = vmul.f32 %v57, %v83
  %v129 = vmul.f32 %v58, %v83
  %v130 = vmul.f32 %v59, %v83
  %v131 = vmul.f32 %v60, %v83
  %v132 = vmul.f32 %v61, %v83
  %v133 = vmul.f32 %v62, %v83
  %v134 = vmul.f32 %v63, %v83
  %v135 = vmul.f32 %v64, %v83
  %v136 = vmul.f32 %v65, %v83
  %v137 = vmul.f32 %v66, %v83
  %v138 = vmul.f32 %v67, %v83
  %v139 = vmul.f32 %v68, %v83
  %v140 = vmul.f32 %v69, %v83
  %v141 = vmul.f32 %v70, %v83
  %v142 = vmul.f32 %v71, %v83
  %v143 = vmul.f32 %v72, %v83
  %v144 = vmul.f32 %v73, %v83
  %v145 = vmul.f32 %v74, %v83
  %v146 = vmul.f32 %v75, %v83
  %v147 = vmul.f32 %v76, %v83
  %v148 = vmul.f32 %v77, %v83
  %v149 = vld [vmem:[%s2] sm:$0x1]
  %v151 = vlaneseq
  %v152 = vshrl.u32 %v151, 7
  %v153 = vsub.s32 0, %v152
  %v154 = vrot.slane %v149, %v153
  %v156 = vadd.f32 %v85, %v154
  %v157 = vadd.f32 %v86, %v154
  %v158 = vadd.f32 %v87, %v154
  %v159 = vadd.f32 %v88, %v154
  %v160 = vadd.f32 %v89, %v154
  %v161 = vadd.f32 %v90, %v154
  %v162 = vadd.f32 %v91, %v154
  %v163 = vadd.f32 %v92, %v154
  %v164 = vadd.f32 %v93, %v154
  %v165 = vadd.f32 %v94, %v154
  %v166 = vadd.f32 %v95, %v154
  %v167 = vadd.f32 %v96, %v154
  %v168 = vadd.f32 %v97, %v154
  %v169 = vadd.f32 %v98, %v154
  %v170 = vadd.f32 %v99, %v154
  %v171 = vadd.f32 %v100, %v154
  %v172 = vadd.f32 %v101, %v154
  %v173 = vadd.f32 %v102, %v154
  %v174 = vadd.f32 %v103, %v154
  %v175 = vadd.f32 %v104, %v154
  %v176 = vadd.f32 %v105, %v154
  %v177 = vadd.f32 %v106, %v154
  %v178 = vadd.f32 %v107, %v154
  %v179 = vadd.f32 %v108, %v154
  %v180 = vadd.f32 %v109, %v154
  %v181 = vadd.f32 %v110, %v154
  %v182 = vadd.f32 %v111, %v154
  %v183 = vadd.f32 %v112, %v154
  %v184 = vadd.f32 %v113, %v154
  %v185 = vadd.f32 %v114, %v154
  %v186 = vadd.f32 %v115, %v154
  %v187 = vadd.f32 %v116, %v154
  %v188 = vadd.f32 %v117, %v154
  %v189 = vadd.f32 %v118, %v154
  %v190 = vadd.f32 %v119, %v154
  %v191 = vadd.f32 %v120, %v154
  %v192 = vadd.f32 %v121, %v154
  %v193 = vadd.f32 %v122, %v154
  %v194 = vadd.f32 %v123, %v154
  %v195 = vadd.f32 %v124, %v154
  %v196 = vadd.f32 %v125, %v154
  %v197 = vadd.f32 %v126, %v154
  %v198 = vadd.f32 %v127, %v154
  %v199 = vadd.f32 %v128, %v154
  %v200 = vadd.f32 %v129, %v154
  %v201 = vadd.f32 %v130, %v154
  %v202 = vadd.f32 %v131, %v154
  %v203 = vadd.f32 %v132, %v154
  %v204 = vadd.f32 %v133, %v154
  %v205 = vadd.f32 %v134, %v154
  %v206 = vadd.f32 %v135, %v154
  %v207 = vadd.f32 %v136, %v154
  %v208 = vadd.f32 %v137, %v154
  %v209 = vadd.f32 %v138, %v154
  %v210 = vadd.f32 %v139, %v154
  %v211 = vadd.f32 %v140, %v154
  %v212 = vadd.f32 %v141, %v154
  %v213 = vadd.f32 %v142, %v154
  %v214 = vadd.f32 %v143, %v154
  %v215 = vadd.f32 %v144, %v154
  %v216 = vadd.f32 %v145, %v154
  %v217 = vadd.f32 %v146, %v154
  %v218 = vadd.f32 %v147, %v154
  %v219 = vadd.f32 %v148, %v154
  %v220 = vmax.f32 %v156, 0.0
  %v221 = vmax.f32 %v157, 0.0
  %v222 = vmax.f32 %v158, 0.0
  %v223 = vmax.f32 %v159, 0.0
  %v224 = vmax.f32 %v160, 0.0
  %v225 = vmax.f32 %v161, 0.0
  %v226 = vmax.f32 %v162, 0.0
  %v227 = vmax.f32 %v163, 0.0
  %v228 = vmax.f32 %v164, 0.0
  %v229 = vmax.f32 %v165, 0.0
  %v230 = vmax.f32 %v166, 0.0
  %v231 = vmax.f32 %v167, 0.0
  %v232 = vmax.f32 %v168, 0.0
  %v233 = vmax.f32 %v169, 0.0
  %v234 = vmax.f32 %v170, 0.0
  %v235 = vmax.f32 %v171, 0.0
  %v236 = vmax.f32 %v172, 0.0
  %v237 = vmax.f32 %v173, 0.0
  %v238 = vmax.f32 %v174, 0.0
  %v239 = vmax.f32 %v175, 0.0
  %v240 = vmax.f32 %v176, 0.0
  %v241 = vmax.f32 %v177, 0.0
  %v242 = vmax.f32 %v178, 0.0
  %v243 = vmax.f32 %v179, 0.0
  %v244 = vmax.f32 %v180, 0.0
  %v245 = vmax.f32 %v181, 0.0
  %v246 = vmax.f32 %v182, 0.0
  %v247 = vmax.f32 %v183, 0.0
  %v248 = vmax.f32 %v184, 0.0
  %v249 = vmax.f32 %v185, 0.0
  %v250 = vmax.f32 %v186, 0.0
  %v251 = vmax.f32 %v187, 0.0
  %v252 = vmax.f32 %v188, 0.0
  %v253 = vmax.f32 %v189, 0.0
  %v254 = vmax.f32 %v190, 0.0
  %v255 = vmax.f32 %v191, 0.0
  %v256 = vmax.f32 %v192, 0.0
  %v257 = vmax.f32 %v193, 0.0
  %v258 = vmax.f32 %v194, 0.0
  %v259 = vmax.f32 %v195, 0.0
  %v260 = vmax.f32 %v196, 0.0
  %v261 = vmax.f32 %v197, 0.0
  %v262 = vmax.f32 %v198, 0.0
  %v263 = vmax.f32 %v199, 0.0
  %v264 = vmax.f32 %v200, 0.0
  %v265 = vmax.f32 %v201, 0.0
  %v266 = vmax.f32 %v202, 0.0
  %v267 = vmax.f32 %v203, 0.0
  %v268 = vmax.f32 %v204, 0.0
  %v269 = vmax.f32 %v205, 0.0
  %v270 = vmax.f32 %v206, 0.0
  %v271 = vmax.f32 %v207, 0.0
  %v272 = vmax.f32 %v208, 0.0
  %v273 = vmax.f32 %v209, 0.0
  %v274 = vmax.f32 %v210, 0.0
  %v275 = vmax.f32 %v211, 0.0
  %v276 = vmax.f32 %v212, 0.0
  %v277 = vmax.f32 %v213, 0.0
  %v278 = vmax.f32 %v214, 0.0
  %v279 = vmax.f32 %v215, 0.0
  %v280 = vmax.f32 %v216, 0.0
  %v281 = vmax.f32 %v217, 0.0
  %v282 = vmax.f32 %v218, 0.0
  %v283 = vmax.f32 %v219, 0.0
  %284 = vst [vmem:[%s3] sm:$0xff] %v220
  %285 = vst [vmem:[%s3 + $0x8] sm:$0xff] %v221
  %286 = vst [vmem:[%s3 + $0x10] sm:$0xff] %v222
  %287 = vst [vmem:[%s3 + $0x18] sm:$0xff] %v223
  %288 = vst [vmem:[%s3 + $0x20] sm:$0xff] %v224
  %289 = vst [vmem:[%s3 + $0x28] sm:$0xff] %v225
  %290 = vst [vmem:[%s3 + $0x30] sm:$0xff] %v226
  %291 = vst [vmem:[%s3 + $0x38] sm:$0xff] %v227
  %292 = vst [vmem:[%s3 + $0x40] sm:$0xff] %v228
  %293 = vst [vmem:[%s3 + $0x48] sm:$0xff] %v229
  %294 = vst [vmem:[%s3 + $0x50] sm:$0xff] %v230
  %295 = vst [vmem:[%s3 + $0x58] sm:$0xff] %v231
  %296 = vst [vmem:[%s3 + $0x60] sm:$0xff] %v232
  %297 = vst [vmem:[%s3 + $0x68] sm:$0xff] %v233
  %298 = vst [vmem:[%s3 + $0x70] sm:$0xff] %v234
  %299 = vst [vmem:[%s3 + $0x78] sm:$0xff] %v235
  %300 = vst [vmem:[%s3 + $0x80] sm:$0xff] %v236
  %301 = vst [vmem:[%s3 + $0x88] sm:$0xff] %v237
  %302 = vst [vmem:[%s3 + $0x90] sm:$0xff] %v238
  %303 = vst [vmem:[%s3 + $0x98] sm:$0xff] %v239
  %304 = vst [vmem:[%s3 + $0xa0] sm:$0xff] %v240
  %305 = vst [vmem:[%s3 + $0xa8] sm:$0xff] %v241
  %306 = vst [vmem:[%s3 + $0xb0] sm:$0xff] %v242
  %307 = vst [vmem:[%s3 + $0xb8] sm:$0xff] %v243
  %308 = vst [vmem:[%s3 + $0xc0] sm:$0xff] %v244
  %309 = vst [vmem:[%s3 + $0xc8] sm:$0xff] %v245
  %310 = vst [vmem:[%s3 + $0xd0] sm:$0xff] %v246
  %311 = vst [vmem:[%s3 + $0xd8] sm:$0xff] %v247
  %312 = vst [vmem:[%s3 + $0xe0] sm:$0xff] %v248
  %313 = vst [vmem:[%s3 + $0xe8] sm:$0xff] %v249
  %314 = vst [vmem:[%s3 + $0xf0] sm:$0xff] %v250
  %315 = vst [vmem:[%s3 + $0xf8] sm:$0xff] %v251
  %316 = vst [vmem:[%s3 + $0x100] sm:$0xff] %v252
  %317 = vst [vmem:[%s3 + $0x108] sm:$0xff] %v253
  %318 = vst [vmem:[%s3 + $0x110] sm:$0xff] %v254
  %319 = vst [vmem:[%s3 + $0x118] sm:$0xff] %v255
  %320 = vst [vmem:[%s3 + $0x120] sm:$0xff] %v256
  %321 = vst [vmem:[%s3 + $0x128] sm:$0xff] %v257
  %322 = vst [vmem:[%s3 + $0x130] sm:$0xff] %v258
  %323 = vst [vmem:[%s3 + $0x138] sm:$0xff] %v259
  %324 = vst [vmem:[%s3 + $0x140] sm:$0xff] %v260
  %325 = vst [vmem:[%s3 + $0x148] sm:$0xff] %v261
  %326 = vst [vmem:[%s3 + $0x150] sm:$0xff] %v262
  %327 = vst [vmem:[%s3 + $0x158] sm:$0xff] %v263
  %328 = vst [vmem:[%s3 + $0x160] sm:$0xff] %v264
  %329 = vst [vmem:[%s3 + $0x168] sm:$0xff] %v265
  %330 = vst [vmem:[%s3 + $0x170] sm:$0xff] %v266
  %331 = vst [vmem:[%s3 + $0x178] sm:$0xff] %v267
  %332 = vst [vmem:[%s3 + $0x180] sm:$0xff] %v268
  %333 = vst [vmem:[%s3 + $0x188] sm:$0xff] %v269
  %334 = vst [vmem:[%s3 + $0x190] sm:$0xff] %v270
  %335 = vst [vmem:[%s3 + $0x198] sm:$0xff] %v271
  %336 = vst [vmem:[%s3 + $0x1a0] sm:$0xff] %v272
  %337 = vst [vmem:[%s3 + $0x1a8] sm:$0xff] %v273
  %338 = vst [vmem:[%s3 + $0x1b0] sm:$0xff] %v274
  %339 = vst [vmem:[%s3 + $0x1b8] sm:$0xff] %v275
  %340 = vst [vmem:[%s3 + $0x1c0] sm:$0xff] %v276
  %341 = vst [vmem:[%s3 + $0x1c8] sm:$0xff] %v277
  %342 = vst [vmem:[%s3 + $0x1d0] sm:$0xff] %v278
  %343 = vst [vmem:[%s3 + $0x1d8] sm:$0xff] %v279
  %344 = vst [vmem:[%s3 + $0x1e0] sm:$0xff] %v280
  %345 = vst [vmem:[%s3 + $0x1e8] sm:$0xff] %v281
  %346 = vst [vmem:[%s3 + $0x1f0] sm:$0xff] %v282
  %347 = vst [vmem:[%s3 + $0x1f8] sm:$0xff] %v283
  // Predicated region
  $region14: #{netg_forward.15} parent=0 // pred_check
    _
  $region15: #{netg_forward.15} parent=0 // pred_check_branch
    %349 = sbr.rel (0) target = $region17
  $region16: #{netg_forward.15} parent=0 // pred_region
    _
  $region17: #{netg_forward.15} parent=0 // pred_fallthru
    _
  // Predicated region
  $region18: #{netg_forward.15} parent=0 // pred_check
    _
  $region19: #{netg_forward.15} parent=0 // pred_check_branch
    %351 = sbr.rel (0) target = $region21
  $region20: #{netg_forward.15} parent=0 // pred_region
    _
  $region21: #{netg_forward.15} parent=0 // pred_fallthru
    _

// kernel: netg_forward.16
$region0: #{netg_forward.16}
  #allocation0 [shape = 'u32[]', space=smem, size = 0x4, offset = 0x4, fixed_abs, tag = 'smem constant byte address 0x4 - core index']
  #allocation1 [shape = 'u32[144,128]{1,0:T(1,128)}', space=vmem, size = 0x12000, scoped, tag = 'internal scratch']
  %s0 = inlined_call_operand.vmem [shape: bf16[512,128], index: 0, kind: input, shape index: {}]
  %s1 = inlined_call_operand.vmem [shape: bf16[128,1024], index: 1, kind: input, shape index: {}]
  %s2 = inlined_call_operand.vmem [shape: f32[512,1024], index: 2, kind: output, shape index: {}]
  %s3 = sld [smem:[#allocation0]]
  $region41: #{netg_forward.16} parent=0
    _
  %s5 = ssub.s32 1, %s3
  %s6 = scalar_select 0, %s5, %s3
  loop: start=0, step=1, limit=4
  $region2: #{netg_forward.16} parent=0 // loop_pre_header
    _
  $region3: #{netg_forward.16} parent=0 // loop_header
    %s8 = sphi 0, %s12
    %p9 = scmp.ge.s32.totalorder %s8, 4
    %s15 = sphi 0, %s27
    %s16 = sphi 0, %s23
    %s17 = sphi 0, %s15
    %s18 = sphi 0, %s16
    %s19 = sphi 0, %s17
    %s20 = sphi 0, %s18
    %s30 = sphi 0, %s32
    %s33 = sphi 0, %s30
    %s34 = sphi 0, %s33
    %s50 = sphi 0, %s34
    %s56 = sphi 0, %s58
    %s59 = sphi 0, %s56
    %s60 = sphi 0, %s59
    %s76 = sphi 0, %s60
    %s84 = sphi 0, %s86
    %s87 = sphi 0, %s84
    %s88 = sphi 0, %s87
    %s104 = sphi 0, %s88
  $region4: #{netg_forward.16} parent=0 // loop_header_branch
    %11 = sbr.rel (%p9) target = $region8
  $region5: #{netg_forward.16} parent=0 // loop_body
    %s13 = ssub.s32 %s8, 1
    %s14 = ssub.s32 %s8, 2
    %s21 = sadd.s32 1, %s16
    %p22 = scmp.ge.s32.totalorder %s21, 1
    %s23 = scalar_select %p22, 0, %s21
    %s24 = sadd.s32 1, %s15
    %s25 = scalar_select %p22, %s24, %s15
    %p26 = scmp.ge.s32.totalorder %s25, 2
    %s27 = scalar_select %p26, 0, %s25
    %s28 = ssub.s32 %s15, %s27
    %p29 = scmp.eq.s32.totalorder %s28, 0
    %s31 = sadd.s32 %s30, 1
    %s32 = scalar_select %p29, %s30, %s31
    %p35 = pneg %p29
    %p36 = scmp.eq.s32.totalorder %s8, 1
    %p37 = por %p35, %p36
    %p38 = scmp.ne.s32.totalorder %s30, %s33
    %p39 = scmp.eq.s32.totalorder %s8, 0
    %p40 = por %p38, %p39
    %p41 = scmp.ne.s32.totalorder %s30, %s33
    %p42 = scmp.eq.s32.totalorder %s13, 1
    %p43 = por %p41, %p42
    %p44 = scmp.ne.s32.totalorder %s33, %s34
    %p45 = scmp.eq.s32.totalorder %s13, 0
    %p46 = por %p44, %p45
    %p47 = scmp.ne.s32.totalorder %s33, %s34
    %p48 = scmp.eq.s32.totalorder %s14, 1
    %p49 = por %p47, %p48
    %p51 = scmp.ne.s32.totalorder %s34, %s50
    %p52 = scmp.eq.s32.totalorder %s14, 0
    %p53 = por %p51, %p52
    %s54 = ssub.s32 %s16, %s23
    %p55 = scmp.eq.s32.totalorder %s54, 0
    %s57 = sadd.s32 %s56, 1
    %s58 = scalar_select %p55, %s56, %s57
    %p61 = pneg %p55
    %p62 = scmp.eq.s32.totalorder %s8, 1
    %p63 = por %p61, %p62
    %p64 = scmp.ne.s32.totalorder %s56, %s59
    %p65 = scmp.eq.s32.totalorder %s8, 0
    %p66 = por %p64, %p65
    %p67 = scmp.ne.s32.totalorder %s56, %s59
    %p68 = scmp.eq.s32.totalorder %s13, 1
    %p69 = por %p67, %p68
    %p70 = scmp.ne.s32.totalorder %s59, %s60
    %p71 = scmp.eq.s32.totalorder %s13, 0
    %p72 = por %p70, %p71
    %p73 = scmp.ne.s32.totalorder %s59, %s60
    %p74 = scmp.eq.s32.totalorder %s14, 1
    %p75 = por %p73, %p74
    %p77 = scmp.ne.s32.totalorder %s60, %s76
    %p78 = scmp.eq.s32.totalorder %s14, 0
    %p79 = por %p77, %p78
    %s80 = ssub.s32 %s15, %s27
    %s81 = ssub.s32 %s16, %s23
    %s82 = sor.u32 %s80, %s81
    %p83 = scmp.eq.s32.totalorder %s82, 0
    %s85 = sadd.s32 %s84, 1
    %s86 = scalar_select %p83, %s84, %s85
    %p89 = pneg %p83
    %p90 = scmp.eq.s32.totalorder %s8, 1
    %p91 = por %p89, %p90
    %p92 = scmp.ne.s32.totalorder %s84, %s87
    %p93 = scmp.eq.s32.totalorder %s8, 0
    %p94 = por %p92, %p93
    %p95 = scmp.ne.s32.totalorder %s84, %s87
    %p96 = scmp.eq.s32.totalorder %s13, 1
    %p97 = por %p95, %p96
    %p98 = scmp.ne.s32.totalorder %s87, %s88
    %p99 = scmp.eq.s32.totalorder %s13, 0
    %p100 = por %p98, %p99
    %p101 = scmp.ne.s32.totalorder %s87, %s88
    %p102 = scmp.eq.s32.totalorder %s14, 1
    %p103 = por %p101, %p102
    %p105 = scmp.ne.s32.totalorder %s88, %s104
    %p106 = scmp.eq.s32.totalorder %s14, 0
    %p107 = por %p105, %p106
    %p108 = scmp.le.s32.totalorder 1, %s8
    %p109 = scmp.lt.s32.totalorder %s8, 3
    %p110 = pnand %p108, %p109
    %p111 = pneg %p110
    // Predicated region
    $region9: #{netg_forward.16} parent=5 // pred_check
      _
    $region10: #{netg_forward.16} parent=5 // pred_check_branch
      %113 = sbr.rel (%p110) target = $region12
    $region11: #{netg_forward.16} parent=5 // pred_region
      %s114 = ssub.s32 %s8, 1
      // Predicated region
      $region13: #{netg_forward.16} parent=11 // pred_check
        %p115 = pneg %p72
      $region14: #{netg_forward.16} parent=11 // pred_check_branch
        %117 = sbr.rel (%p115) target = $region16
      $region15: #{netg_forward.16} parent=11 // pred_region
        %s118 = smul.u32 8, %s18
        %p119 = scmp.lt.s32.totalorder %s118, 7
        %s120 = scalar_select %p119, %s118, 7
        %s121 = smul.addr %s120, 4
        %s122 = scalar_lea.vmem %s1, %s121
        %s123 = smul.u32 8, %s18
      $region16: #{netg_forward.16} parent=11 // pred_fallthru
        _
    $region12: #{netg_forward.16} parent=5 // pred_fallthru
      _
    %p124 = scmp.lt.s32.totalorder %s8, 2
    // Predicated region
    $region17: #{netg_forward.16} parent=5 // pred_check
      %p125 = pneg %p124
    $region18: #{netg_forward.16} parent=5 // pred_check_branch
      %127 = sbr.rel (%p125) target = $region20
    $region19: #{netg_forward.16} parent=5 // pred_region
      // Predicated region
      $region21: #{netg_forward.16} parent=19 // pred_check
        %p128 = pneg %p40
      $region22: #{netg_forward.16} parent=19 // pred_check_branch
        %130 = sbr.rel (%p128) target = $region24
      $region23: #{netg_forward.16} parent=19 // pred_region
        %s131 = smul.u32 32, %s15
        %p132 = scmp.lt.s32.totalorder %s131, 63
        %s133 = scalar_select %p132, %s131, 63
        %s134 = smul.addr %s133, 4
        %s135 = scalar_lea.vmem %s0, %s134
        %s136 = smul.u32 32, %s15
      $region24: #{netg_forward.16} parent=19 // pred_fallthru
        _
    $region20: #{netg_forward.16} parent=5 // pred_fallthru
      _
    %p137 = scmp.le.s32.totalorder 1, %s8
    %p138 = scmp.lt.s32.totalorder %s8, 3
    %p139 = pnand %p137, %p138
    %p140 = pneg %p139
    // Predicated region
    $region25: #{netg_forward.16} parent=5 // pred_check
      _
    $region26: #{netg_forward.16} parent=5 // pred_check_branch
      %142 = sbr.rel (%p139) target = $region28
    $region27: #{netg_forward.16} parent=5 // pred_region
      %s143 = ssub.s32 %s8, 1
      %s144 = smul.u32 32, %s17
      %p145 = scmp.lt.s32.totalorder %s144, 63
      %s146 = scalar_select %p145, %s144, 63
      %s147 = smul.addr %s146, 4
      %s148 = scalar_lea.vmem %s0, %s147
      %p149 = pneg %p46
      %p150 = pneg %p43
      %s151 = smul.u32 8, %s18
      %p152 = scmp.lt.s32.totalorder %s151, 7
      %s153 = scalar_select %p152, %s151, 7
      %s154 = smul.addr %s153, 4
      %s155 = scalar_lea.vmem %s1, %s154
      %p156 = pneg %p72
      %p157 = pneg %p69
      %p158 = pneg %p100
      %p159 = pneg %p97
      %s160 = smul.u32 32, %s17
      %s161 = smul.u32 8, %s18
      %p162 = scmp.lt.s32.totalorder %s160, 63
      %s163 = scalar_select %p162, %s160, 63
      %p164 = scmp.lt.s32.totalorder %s161, 7
      %s165 = scalar_select %p164, %s161, 7
      %s166 = smul.addr %s163, 8
      %s167 = sadd.s32 %s165, %s166
      %s168 = smul.addr %s167, 8
      %s169 = scalar_lea.vmem %s2, %s168
      %s170 = smul.u32 32, %s17
      %p171 = scmp.lt.s32.totalorder %s170, 63
      %s172 = scalar_select %p171, %s170, 63
      %s173 = smul.addr %s172, 4
      %s174 = scalar_lea.vmem %s0, %s173
      %s175 = smul.u32 32, %s17
      %s176 = smul.u32 8, %s18
      %p177 = scmp.lt.s32.totalorder %s176, 7
      %s178 = scalar_select %p177, %s176, 7
      %s179 = smul.addr %s178, 4
      %s180 = scalar_lea.vmem %s1, %s179
      %s181 = smul.u32 8, %s18
      %s182 = smul.u32 32, %s17
      %s183 = smul.u32 8, %s18
      %p184 = scmp.lt.s32.totalorder %s182, 63
      %s185 = scalar_select %p184, %s182, 63
      %p186 = scmp.lt.s32.totalorder %s183, 7
      %s187 = scalar_select %p186, %s183, 7
      %s188 = smul.addr %s185, 8
      %s189 = sadd.s32 %s187, %s188
      %s190 = smul.addr %s189, 8
      %s191 = scalar_lea.vmem %s2, %s190
      %s192 = smul.u32 32, %s17
      %s193 = smul.u32 8, %s18
      %v195 = vld [vmem:[%s174] sm:$0xf]
      %v196 = vld [vmem:[%s174 + $0x4] sm:$0xf]
      %v197 = vld [vmem:[%s174 + $0x8] sm:$0xf]
      %v198 = vld [vmem:[%s174 + $0xc] sm:$0xf]
      %v199 = vld [vmem:[%s174 + $0x10] sm:$0xf]
      %v200 = vld [vmem:[%s174 + $0x14] sm:$0xf]
      %v201 = vld [vmem:[%s174 + $0x18] sm:$0xf]
      %v202 = vld [vmem:[%s174 + $0x1c] sm:$0xf]
      %v203 = vld [vmem:[%s174 + $0x20] sm:$0xf]
      %v204 = vld [vmem:[%s174 + $0x24] sm:$0xf]
      %v205 = vld [vmem:[%s174 + $0x28] sm:$0xf]
      %v206 = vld [vmem:[%s174 + $0x2c] sm:$0xf]
      %v207 = vld [vmem:[%s174 + $0x30] sm:$0xf]
      %v208 = vld [vmem:[%s174 + $0x34] sm:$0xf]
      %v209 = vld [vmem:[%s174 + $0x38] sm:$0xf]
      %v210 = vld [vmem:[%s174 + $0x3c] sm:$0xf]
      %v211 = vld [vmem:[%s174 + $0x40] sm:$0xf]
      %v212 = vld [vmem:[%s174 + $0x44] sm:$0xf]
      %v213 = vld [vmem:[%s174 + $0x48] sm:$0xf]
      %v214 = vld [vmem:[%s174 + $0x4c] sm:$0xf]
      %v215 = vld [vmem:[%s174 + $0x50] sm:$0xf]
      %v216 = vld [vmem:[%s174 + $0x54] sm:$0xf]
      %v217 = vld [vmem:[%s174 + $0x58] sm:$0xf]
      %v218 = vld [vmem:[%s174 + $0x5c] sm:$0xf]
      %v219 = vld [vmem:[%s174 + $0x60] sm:$0xf]
      %v220 = vld [vmem:[%s174 + $0x64] sm:$0xf]
      %v221 = vld [vmem:[%s174 + $0x68] sm:$0xf]
      %v222 = vld [vmem:[%s174 + $0x6c] sm:$0xf]
      %v223 = vld [vmem:[%s174 + $0x70] sm:$0xf]
      %v224 = vld [vmem:[%s174 + $0x74] sm:$0xf]
      %v225 = vld [vmem:[%s174 + $0x78] sm:$0xf]
      %v226 = vld [vmem:[%s174 + $0x7c] sm:$0xf]
      %v227 = vld [vmem:[%s180] sm:$0xff]
      %v228 = vld [vmem:[%s180 + $0x8] sm:$0xff]
      %v229 = vld [vmem:[%s180 + $0x10] sm:$0xff]
      %v230 = vld [vmem:[%s180 + $0x18] sm:$0xff]
      %v231 = vld [vmem:[%s180 + $0x20] sm:$0xff]
      %v232 = vld [vmem:[%s180 + $0x28] sm:$0xff]
      %v233 = vld [vmem:[%s180 + $0x30] sm:$0xff]
      %v234 = vld [vmem:[%s180 + $0x38] sm:$0xff]
      %v235 = vld [vmem:[%s180 + $0x40] sm:$0xff]
      %v236 = vld [vmem:[%s180 + $0x48] sm:$0xff]
      %v237 = vld [vmem:[%s180 + $0x50] sm:$0xff]
      %v238 = vld [vmem:[%s180 + $0x58] sm:$0xff]
      %v239 = vld [vmem:[%s180 + $0x60] sm:$0xff]
      %v240 = vld [vmem:[%s180 + $0x68] sm:$0xff]
      %v241 = vld [vmem:[%s180 + $0x70] sm:$0xff]
      %v242 = vld [vmem:[%s180 + $0x78] sm:$0xff]
      %v243 = vld [vmem:[%s180 + $0x80] sm:$0xff]
      %v244 = vld [vmem:[%s180 + $0x88] sm:$0xff]
      %v245 = vld [vmem:[%s180 + $0x90] sm:$0xff]
      %v246 = vld [vmem:[%s180 + $0x98] sm:$0xff]
      %v247 = vld [vmem:[%s180 + $0xa0] sm:$0xff]
      %v248 = vld [vmem:[%s180 + $0xa8] sm:$0xff]
      %v249 = vld [vmem:[%s180 + $0xb0] sm:$0xff]
      %v250 = vld [vmem:[%s180 + $0xb8] sm:$0xff]
      %v251 = vld [vmem:[%s180 + $0xc0] sm:$0xff]
      %v252 = vld [vmem:[%s180 + $0xc8] sm:$0xff]
      %v253 = vld [vmem:[%s180 + $0xd0] sm:$0xff]
      %v254 = vld [vmem:[%s180 + $0xd8] sm:$0xff]
      %v255 = vld [vmem:[%s180 + $0xe0] sm:$0xff]
      %v256 = vld [vmem:[%s180 + $0xe8] sm:$0xff]
      %v257 = vld [vmem:[%s180 + $0xf0] sm:$0xff]
      %v258 = vld [vmem:[%s180 + $0xf8] sm:$0xff]
      %v259 = vld [vmem:[%s180 + $0x100] sm:$0xff]
      %v260 = vld [vmem:[%s180 + $0x108] sm:$0xff]
      %v261 = vld [vmem:[%s180 + $0x110] sm:$0xff]
      %v262 = vld [vmem:[%s180 + $0x118] sm:$0xff]
      %v263 = vld [vmem:[%s180 + $0x120] sm:$0xff]
      %v264 = vld [vmem:[%s180 + $0x128] sm:$0xff]
      %v265 = vld [vmem:[%s180 + $0x130] sm:$0xff]
      %v266 = vld [vmem:[%s180 + $0x138] sm:$0xff]
      %v267 = vld [vmem:[%s180 + $0x140] sm:$0xff]
      %v268 = vld [vmem:[%s180 + $0x148] sm:$0xff]
      %v269 = vld [vmem:[%s180 + $0x150] sm:$0xff]
      %v270 = vld [vmem:[%s180 + $0x158] sm:$0xff]
      %v271 = vld [vmem:[%s180 + $0x160] sm:$0xff]
      %v272 = vld [vmem:[%s180 + $0x168] sm:$0xff]
      %v273 = vld [vmem:[%s180 + $0x170] sm:$0xff]
      %v274 = vld [vmem:[%s180 + $0x178] sm:$0xff]
      %v275 = vld [vmem:[%s180 + $0x180] sm:$0xff]
      %v276 = vld [vmem:[%s180 + $0x188] sm:$0xff]
      %v277 = vld [vmem:[%s180 + $0x190] sm:$0xff]
      %v278 = vld [vmem:[%s180 + $0x198] sm:$0xff]
      %v279 = vld [vmem:[%s180 + $0x1a0] sm:$0xff]
      %v280 = vld [vmem:[%s180 + $0x1a8] sm:$0xff]
      %v281 = vld [vmem:[%s180 + $0x1b0] sm:$0xff]
      %v282 = vld [vmem:[%s180 + $0x1b8] sm:$0xff]
      %v283 = vld [vmem:[%s180 + $0x1c0] sm:$0xff]
      %v284 = vld [vmem:[%s180 + $0x1c8] sm:$0xff]
      %v285 = vld [vmem:[%s180 + $0x1d0] sm:$0xff]
      %v286 = vld [vmem:[%s180 + $0x1d8] sm:$0xff]
      %v287 = vld [vmem:[%s180 + $0x1e0] sm:$0xff]
      %v288 = vld [vmem:[%s180 + $0x1e8] sm:$0xff]
      %v289 = vld [vmem:[%s180 + $0x1f0] sm:$0xff]
      %v290 = vld [vmem:[%s180 + $0x1f8] sm:$0xff]
      %v323 = vunpack.c.l.b16 %v195
      %v324 = vunpack.c.l.b16 %v196
      %v325 = vunpack.c.l.b16 %v197
      %v326 = vunpack.c.l.b16 %v198
      %v327 = vunpack.c.l.b16 %v199
      %v328 = vunpack.c.l.b16 %v200
      %v329 = vunpack.c.l.b16 %v201
      %v330 = vunpack.c.l.b16 %v202
      %v331 = vunpack.c.l.b16 %v203
      %v332 = vunpack.c.l.b16 %v204
      %v333 = vunpack.c.l.b16 %v205
      %v334 = vunpack.c.l.b16 %v206
      %v335 = vunpack.c.l.b16 %v207
      %v336 = vunpack.c.l.b16 %v208
      %v337 = vunpack.c.l.b16 %v209
      %v338 = vunpack.c.l.b16 %v210
      %v339 = vunpack.c.l.b16 %v211
      %v340 = vunpack.c.l.b16 %v212
      %v341 = vunpack.c.l.b16 %v213
      %v342 = vunpack.c.l.b16 %v214
      %v343 = vunpack.c.l.b16 %v215
      %v344 = vunpack.c.l.b16 %v216
      %v345 = vunpack.c.l.b16 %v217
      %v346 = vunpack.c.l.b16 %v218
      %v347 = vunpack.c.l.b16 %v219
      %v348 = vunpack.c.l.b16 %v220
      %v349 = vunpack.c.l.b16 %v221
      %v350 = vunpack.c.l.b16 %v222
      %v351 = vunpack.c.l.b16 %v223
      %v352 = vunpack.c.l.b16 %v224
      %v353 = vunpack.c.l.b16 %v225
      %v354 = vunpack.c.l.b16 %v226
      %v355 = vpack.c.b16 %v324, %v323
      %v356 = vpack.c.b16 %v326, %v325
      %v357 = vpack.c.b16 %v328, %v327
      %v358 = vpack.c.b16 %v330, %v329
      %v359 = vpack.c.b16 %v332, %v331
      %v360 = vpack.c.b16 %v334, %v333
      %v361 = vpack.c.b16 %v336, %v335
      %v362 = vpack.c.b16 %v338, %v337
      %v363 = vpack.c.b16 %v340, %v339
      %v364 = vpack.c.b16 %v342, %v341
      %v365 = vpack.c.b16 %v344, %v343
      %v366 = vpack.c.b16 %v346, %v345
      %v367 = vpack.c.b16 %v348, %v347
      %v368 = vpack.c.b16 %v350, %v349
      %v369 = vpack.c.b16 %v352, %v351
      %v370 = vpack.c.b16 %v354, %v353
      %v451 = vunpack.c.l.b16 %v227
      %v452 = vunpack.c.h.b16 %v227
      %v453 = vunpack.c.l.b16 %v228
      %v454 = vunpack.c.h.b16 %v228
      %v455 = vunpack.c.l.b16 %v229
      %v456 = vunpack.c.h.b16 %v229
      %v457 = vunpack.c.l.b16 %v230
      %v458 = vunpack.c.h.b16 %v230
      %v459 = vunpack.c.l.b16 %v231
      %v460 = vunpack.c.h.b16 %v231
      %v461 = vunpack.c.l.b16 %v232
      %v462 = vunpack.c.h.b16 %v232
      %v463 = vunpack.c.l.b16 %v233
      %v464 = vunpack.c.h.b16 %v233
      %v465 = vunpack.c.l.b16 %v234
      %v466 = vunpack.c.h.b16 %v234
      %v467 = vunpack.c.l.b16 %v235
      %v468 = vunpack.c.h.b16 %v235
      %v469 = vunpack.c.l.b16 %v236
      %v470 = vunpack.c.h.b16 %v236
      %v471 = vunpack.c.l.b16 %v237
      %v472 = vunpack.c.h.b16 %v237
      %v473 = vunpack.c.l.b16 %v238
      %v474 = vunpack.c.h.b16 %v238
      %v475 = vunpack.c.l.b16 %v239
      %v476 = vunpack.c.h.b16 %v239
      %v477 = vunpack.c.l.b16 %v240
      %v478 = vunpack.c.h.b16 %v240
      %v479 = vunpack.c.l.b16 %v241
      %v480 = vunpack.c.h.b16 %v241
      %v481 = vunpack.c.l.b16 %v242
      %v482 = vunpack.c.h.b16 %v242
      %v483 = vunpack.c.l.b16 %v243
      %v484 = vunpack.c.h.b16 %v243
      %v485 = vunpack.c.l.b16 %v244
      %v486 = vunpack.c.h.b16 %v244
      %v487 = vunpack.c.l.b16 %v245
      %v488 = vunpack.c.h.b16 %v245
      %v489 = vunpack.c.l.b16 %v246
      %v490 = vunpack.c.h.b16 %v246
      %v491 = vunpack.c.l.b16 %v247
      %v492 = vunpack.c.h.b16 %v247
      %v493 = vunpack.c.l.b16 %v248
      %v494 = vunpack.c.h.b16 %v248
      %v495 = vunpack.c.l.b16 %v249
      %v496 = vunpack.c.h.b16 %v249
      %v497 = vunpack.c.l.b16 %v250
      %v498 = vunpack.c.h.b16 %v250
      %v499 = vunpack.c.l.b16 %v251
      %v500 = vunpack.c.h.b16 %v251
      %v501 = vunpack.c.l.b16 %v252
      %v502 = vunpack.c.h.b16 %v252
      %v503 = vunpack.c.l.b16 %v253
      %v504 = vunpack.c.h.b16 %v253
      %v505 = vunpack.c.l.b16 %v254
      %v506 = vunpack.c.h.b16 %v254
      %v507 = vunpack.c.l.b16 %v255
      %v508 = vunpack.c.h.b16 %v255
      %v509 = vunpack.c.l.b16 %v256
      %v510 = vunpack.c.h.b16 %v256
      %v511 = vunpack.c.l.b16 %v257
      %v512 = vunpack.c.h.b16 %v257
      %v513 = vunpack.c.l.b16 %v258
      %v514 = vunpack.c.h.b16 %v258
      %v515 = vunpack.c.l.b16 %v259
      %v516 = vunpack.c.h.b16 %v259
      %v517 = vunpack.c.l.b16 %v260
      %v518 = vunpack.c.h.b16 %v260
      %v519 = vunpack.c.l.b16 %v261
      %v520 = vunpack.c.h.b16 %v261
      %v521 = vunpack.c.l.b16 %v262
      %v522 = vunpack.c.h.b16 %v262
      %v523 = vunpack.c.l.b16 %v263
      %v524 = vunpack.c.h.b16 %v263
      %v525 = vunpack.c.l.b16 %v264
      %v526 = vunpack.c.h.b16 %v264
      %v527 = vunpack.c.l.b16 %v265
      %v528 = vunpack.c.h.b16 %v265
      %v529 = vunpack.c.l.b16 %v266
      %v530 = vunpack.c.h.b16 %v266
      %v531 = vunpack.c.l.b16 %v267
      %v532 = vunpack.c.h.b16 %v267
      %v533 = vunpack.c.l.b16 %v268
      %v534 = vunpack.c.h.b16 %v268
      %v535 = vunpack.c.l.b16 %v269
      %v536 = vunpack.c.h.b16 %v269
      %v537 = vunpack.c.l.b16 %v270
      %v538 = vunpack.c.h.b16 %v270
      %v539 = vunpack.c.l.b16 %v271
      %v540 = vunpack.c.h.b16 %v271
      %v541 = vunpack.c.l.b16 %v272
      %v542 = vunpack.c.h.b16 %v272
      %v543 = vunpack.c.l.b16 %v273
      %v544 = vunpack.c.h.b16 %v273
      %v545 = vunpack.c.l.b16 %v274
      %v546 = vunpack.c.h.b16 %v274
      %v547 = vunpack.c.l.b16 %v275
      %v548 = vunpack.c.h.b16 %v275
      %v549 = vunpack.c.l.b16 %v276
      %v550 = vunpack.c.h.b16 %v276
      %v551 = vunpack.c.l.b16 %v277
      %v552 = vunpack.c.h.b16 %v277
      %v553 = vunpack.c.l.b16 %v278
      %v554 = vunpack.c.h.b16 %v278
      %v555 = vunpack.c.l.b16 %v279
      %v556 = vunpack.c.h.b16 %v279
      %v557 = vunpack.c.l.b16 %v280
      %v558 = vunpack.c.h.b16 %v280
      %v559 = vunpack.c.l.b16 %v281
      %v560 = vunpack.c.h.b16 %v281
      %v561 = vunpack.c.l.b16 %v282
      %v562 = vunpack.c.h.b16 %v282
      %v563 = vunpack.c.l.b16 %v283
      %v564 = vunpack.c.h.b16 %v283
      %v565 = vunpack.c.l.b16 %v284
      %v566 = vunpack.c.h.b16 %v284
      %v567 = vunpack.c.l.b16 %v285
      %v568 = vunpack.c.h.b16 %v285
      %v569 = vunpack.c.l.b16 %v286
      %v570 = vunpack.c.h.b16 %v286
      %v571 = vunpack.c.l.b16 %v287
      %v572 = vunpack.c.h.b16 %v287
      %v573 = vunpack.c.l.b16 %v288
      %v574 = vunpack.c.h.b16 %v288
      %v575 = vunpack.c.l.b16 %v289
      %v576 = vunpack.c.h.b16 %v289
      %v577 = vunpack.c.l.b16 %v290
      %v578 = vunpack.c.h.b16 %v290
      %v579 = vpack.c.b16 %v459, %v451
      %v580 = vpack.c.b16 %v460, %v452
      %v581 = vpack.c.b16 %v461, %v453
      %v582 = vpack.c.b16 %v462, %v454
      %v583 = vpack.c.b16 %v463, %v455
      %v584 = vpack.c.b16 %v464, %v456
      %v585 = vpack.c.b16 %v465, %v457
      %v586 = vpack.c.b16 %v466, %v458
      %v587 = vpack.c.b16 %v475, %v467
      %v588 = vpack.c.b16 %v476, %v468
      %v589 = vpack.c.b16 %v477, %v469
      %v590 = vpack.c.b16 %v478, %v470
      %v591 = vpack.c.b16 %v479, %v471
      %v592 = vpack.c.b16 %v480, %v472
      %v593 = vpack.c.b16 %v481, %v473
      %v594 = vpack.c.b16 %v482, %v474
      %v595 = vpack.c.b16 %v491, %v483
      %v596 = vpack.c.b16 %v492, %v484
      %v597 = vpack.c.b16 %v493, %v485
      %v598 = vpack.c.b16 %v494, %v486
      %v599 = vpack.c.b16 %v495, %v487
      %v600 = vpack.c.b16 %v496, %v488
      %v601 = vpack.c.b16 %v497, %v489
      %v602 = vpack.c.b16 %v498, %v490
      %v603 = vpack.c.b16 %v507, %v499
      %v604 = vpack.c.b16 %v508, %v500
      %v605 = vpack.c.b16 %v509, %v501
      %v606 = vpack.c.b16 %v510, %v502
      %v607 = vpack.c.b16 %v511, %v503
      %v608 = vpack.c.b16 %v512, %v504
      %v609 = vpack.c.b16 %v513, %v505
      %v610 = vpack.c.b16 %v514, %v506
      %v611 = vpack.c.b16 %v523, %v515
      %v612 = vpack.c.b16 %v524, %v516
      %v613 = vpack.c.b16 %v525, %v517
      %v614 = vpack.c.b16 %v526, %v518
      %v615 = vpack.c.b16 %v527, %v519
      %v616 = vpack.c.b16 %v528, %v520
      %v617 = vpack.c.b16 %v529, %v521
      %v618 = vpack.c.b16 %v530, %v522
      %v619 = vpack.c.b16 %v539, %v531
      %v620 = vpack.c.b16 %v540, %v532
      %v621 = vpack.c.b16 %v541, %v533
      %v622 = vpack.c.b16 %v542, %v534
      %v623 = vpack.c.b16 %v543, %v535
      %v624 = vpack.c.b16 %v544, %v536
      %v625 = vpack.c.b16 %v545, %v537
      %v626 = vpack.c.b16 %v546, %v538
      %v627 = vpack.c.b16 %v555, %v547
      %v628 = vpack.c.b16 %v556, %v548
      %v629 = vpack.c.b16 %v557, %v549
      %v630 = vpack.c.b16 %v558, %v550
      %v631 = vpack.c.b16 %v559, %v551
      %v632 = vpack.c.b16 %v560, %v552
      %v633 = vpack.c.b16 %v561, %v553
      %v634 = vpack.c.b16 %v562, %v554
      %v635 = vpack.c.b16 %v571, %v563
      %v636 = vpack.c.b16 %v572, %v564
      %v637 = vpack.c.b16 %v573, %v565
      %v638 = vpack.c.b16 %v574, %v566
      %v639 = vpack.c.b16 %v575, %v567
      %v640 = vpack.c.b16 %v576, %v568
      %v641 = vpack.c.b16 %v577, %v569
      %v642 = vpack.c.b16 %v578, %v570
      %707 = vmatprep.subr.bf16.mxu0 %v580
      %708 = vmatpush1.bf16.msra.mxu0 %v579
      %709 = vmatprep.subr.bf16.mxu0 %v588
      %710 = vmatpush1.bf16.msra.mxu0 %v587
      %711 = vmatprep.subr.bf16.mxu0 %v596
      %712 = vmatpush1.bf16.msra.mxu0 %v595
      %713 = vmatprep.subr.bf16.mxu0 %v604
      %714 = vmatpush1.bf16.msra.mxu0 %v603
      %715 = vmatprep.subr.bf16.mxu0 %v612
      %716 = vmatpush1.bf16.msra.mxu0 %v611
      %717 = vmatprep.subr.bf16.mxu0 %v620
      %718 = vmatpush1.bf16.msra.mxu0 %v619
      %719 = vmatprep.subr.bf16.mxu0 %v628
      %720 = vmatpush1.bf16.msra.mxu0 %v627
      %721 = vmatprep.subr.bf16.mxu0 %v636
      %722 = vmatpush1.bf16.msra.mxu0 %v635
      %723 = vmatprep.subr.bf16.mxu0 0
      %724 = vmatpush1.bf16.msra.mxu0 0
      %725 = vmatprep.subr.bf16.mxu0 0
      %726 = vmatpush1.bf16.msra.mxu0 0
      %727 = vmatprep.subr.bf16.mxu0 0
      %728 = vmatpush1.bf16.msra.mxu0 0
      %729 = vmatprep.subr.bf16.mxu0 0
      %730 = vmatpush1.bf16.msra.mxu0 0
      %731 = vmatprep.subr.bf16.mxu0 0
      %732 = vmatpush1.bf16.msra.mxu0 0
      %733 = vmatprep.subr.bf16.mxu0 0
      %734 = vmatpush1.bf16.msra.mxu0 0
      %735 = vmatprep.subr.bf16.mxu0 0
      %736 = vmatpush1.bf16.msra.mxu0 0
      %737 = vmatprep.subr.bf16.mxu0 0
      %738 = vmatpush1.bf16.msra.mxu0 0
      %739 = vmatprep.mubr.bf16.mxu0 0
      %740 = vmatmul.mubr.bf16.gmra.mrb[0].mxu0 %v355
      %v741 = vpop.f32.mrb[0].mxu0
      %v742 = vadd.f32 0.0, %v741
      %v743 = vpop.f32.mrb[0].mxu0
      %v744 = vadd.f32 0.0, %v743
      %v745 = vpop.f32.mrb[0].mxu0
      %v746 = vadd.f32 0.0, %v745
      %v747 = vpop.f32.mrb[0].mxu0
      %v748 = vadd.f32 0.0, %v747
      %749 = vmatprep.mubr.bf16.mxu0 0
      %750 = vmatmul.mubr.bf16.gmra.mrb[0].mxu0 %v356
      %v751 = vpop.f32.mrb[0].mxu0
      %v752 = vadd.f32 0.0, %v751
      %v753 = vpop.f32.mrb[0].mxu0
      %v754 = vadd.f32 0.0, %v753
      %v755 = vpop.f32.mrb[0].mxu0
      %v756 = vadd.f32 0.0, %v755
      %v757 = vpop.f32.mrb[0].mxu0
      %v758 = vadd.f32 0.0, %v757
      %759 = vmatprep.mubr.bf16.mxu0 0
      %760 = vmatmul.mubr.bf16.gmra.mrb[0].mxu0 %v357
      %v761 = vpop.f32.mrb[0].mxu0
      %v762 = vadd.f32 0.0, %v761
      %v763 = vpop.f32.mrb[0].mxu0
      %v764 = vadd.f32 0.0, %v763
      %v765 = vpop.f32.mrb[0].mxu0
      %v766 = vadd.f32 0.0, %v765
      %v767 = vpop.f32.mrb[0].mxu0
      %v768 = vadd.f32 0.0, %v767
      %769 = vmatprep.mubr.bf16.mxu0 0
      %770 = vmatmul.mubr.bf16.gmra.mrb[0].mxu0 %v358
      %v771 = vpop.f32.mrb[0].mxu0
      %v772 = vadd.f32 0.0, %v771
      %v773 = vpop.f32.mrb[0].mxu0
      %v774 = vadd.f32 0.0, %v773
      %v775 = vpop.f32.mrb[0].mxu0
      %v776 = vadd.f32 0.0, %v775
      %v777 = vpop.f32.mrb[0].mxu0
      %v778 = vadd.f32 0.0, %v777
      %779 = vmatprep.mubr.bf16.mxu0 0
      %780 = vmatmul.mubr.bf16.gmra.mrb[0].mxu0 %v359
      %v781 = vpop.f32.mrb[0].mxu0
      %v782 = vadd.f32 0.0, %v781
      %v783 = vpop.f32.mrb[0].mxu0
      %v784 = vadd.f32 0.0, %v783
      %v785 = vpop.f32.mrb[0].mxu0
      %v786 = vadd.f32 0.0, %v785
      %v787 = vpop.f32.mrb[0].mxu0
      %v788 = vadd.f32 0.0, %v787
      %789 = vmatprep.mubr.bf16.mxu0 0
      %790 = vmatmul.mubr.bf16.gmra.mrb[0].mxu0 %v360
      %v791 = vpop.f32.mrb[0].mxu0
      %v792 = vadd.f32 0.0, %v791
      %v793 = vpop.f32.mrb[0].mxu0
      %v794 = vadd.f32 0.0, %v793
      %v795 = vpop.f32.mrb[0].mxu0
      %v796 = vadd.f32 0.0, %v795
      %v797 = vpop.f32.mrb[0].mxu0
      %v798 = vadd.f32 0.0, %v797
      %799 = vmatprep.mubr.bf16.mxu0 0
      %800 = vmatmul.mubr.bf16.gmra.mrb[0].mxu0 %v361
      %v801 = vpop.f32.mrb[0].mxu0
      %v802 = vadd.f32 0.0, %v801
      %v803 = vpop.f32.mrb[0].mxu0
      %v804 = vadd.f32 0.0, %v803
      %v805 = vpop.f32.mrb[0].mxu0
      %v806 = vadd.f32 0.0, %v805
      %v807 = vpop.f32.mrb[0].mxu0
      %v808 = vadd.f32 0.0, %v807
      %809 = vmatprep.mubr.bf16.mxu0 0
      %810 = vmatmul.mubr.bf16.gmra.mrb[0].mxu0 %v362
      %v811 = vpop.f32.mrb[0].mxu0
      %v812 = vadd.f32 0.0, %v811
      %v813 = vpop.f32.mrb[0].mxu0
      %v814 = vadd.f32 0.0, %v813
      %v815 = vpop.f32.mrb[0].mxu0
      %v816 = vadd.f32 0.0, %v815
      %v817 = vpop.f32.mrb[0].mxu0
      %v818 = vadd.f32 0.0, %v817
      %819 = vmatprep.mubr.bf16.mxu0 0
      %820 = vmatmul.mubr.bf16.gmra.mrb[0].mxu0 %v363
      %v821 = vpop.f32.mrb[0].mxu0
      %v822 = vadd.f32 0.0, %v821
      %v823 = vpop.f32.mrb[0].mxu0
      %v824 = vadd.f32 0.0, %v823
      %v825 = vpop.f32.mrb[0].mxu0
      %v826 = vadd.f32 0.0, %v825
      %v827 = vpop.f32.mrb[0].mxu0
      %v828 = vadd.f32 0.0, %v827
      %829 = vmatprep.mubr.bf16.mxu0 0
      %830 = vmatmul.mubr.bf16.gmra.mrb[0].mxu0 %v364
      %v831 = vpop.f32.mrb[0].mxu0
      %v832 = vadd.f32 0.0, %v831
      %v833 = vpop.f32.mrb[0].mxu0
      %v834 = vadd.f32 0.0, %v833
      %v835 = vpop.f32.mrb[0].mxu0
      %v836 = vadd.f32 0.0, %v835
      %v837 = vpop.f32.mrb[0].mxu0
      %v838 = vadd.f32 0.0, %v837
      %839 = vmatprep.mubr.bf16.mxu0 0
      %840 = vmatmul.mubr.bf16.gmra.mrb[0].mxu0 %v365
      %v841 = vpop.f32.mrb[0].mxu0
      %v842 = vadd.f32 0.0, %v841
      %v843 = vpop.f32.mrb[0].mxu0
      %v844 = vadd.f32 0.0, %v843
      %v845 = vpop.f32.mrb[0].mxu0
      %v846 = vadd.f32 0.0, %v845
      %v847 = vpop.f32.mrb[0].mxu0
      %v848 = vadd.f32 0.0, %v847
      %849 = vmatprep.mubr.bf16.mxu0 0
      %850 = vmatmul.mubr.bf16.gmra.mrb[0].mxu0 %v366
      %v851 = vpop.f32.mrb[0].mxu0
      %v852 = vadd.f32 0.0, %v851
      %v853 = vpop.f32.mrb[0].mxu0
      %v854 = vadd.f32 0.0, %v853
      %v855 = vpop.f32.mrb[0].mxu0
      %v856 = vadd.f32 0.0, %v855
      %v857 = vpop.f32.mrb[0].mxu0
      %v858 = vadd.f32 0.0, %v857
      %859 = vmatprep.mubr.bf16.mxu0 0
      %860 = vmatmul.mubr.bf16.gmra.mrb[0].mxu0 %v367
      %v861 = vpop.f32.mrb[0].mxu0
      %v862 = vadd.f32 0.0, %v861
      %v863 = vpop.f32.mrb[0].mxu0
      %v864 = vadd.f32 0.0, %v863
      %v865 = vpop.f32.mrb[0].mxu0
      %v866 = vadd.f32 0.0, %v865
      %v867 = vpop.f32.mrb[0].mxu0
      %v868 = vadd.f32 0.0, %v867
      %869 = vmatprep.mubr.bf16.mxu0 0
      %870 = vmatmul.mubr.bf16.gmra.mrb[0].mxu0 %v368
      %v871 = vpop.f32.mrb[0].mxu0
      %v872 = vadd.f32 0.0, %v871
      %v873 = vpop.f32.mrb[0].mxu0
      %v874 = vadd.f32 0.0, %v873
      %v875 = vpop.f32.mrb[0].mxu0
      %v876 = vadd.f32 0.0, %v875
      %v877 = vpop.f32.mrb[0].mxu0
      %v878 = vadd.f32 0.0, %v877
      %879 = vmatprep.mubr.bf16.mxu0 0
      %880 = vmatmul.mubr.bf16.gmra.mrb[0].mxu0 %v369
      %v881 = vpop.f32.mrb[0].mxu0
      %v882 = vadd.f32 0.0, %v881
      %v883 = vpop.f32.mrb[0].mxu0
      %v884 = vadd.f32 0.0, %v883
      %v885 = vpop.f32.mrb[0].mxu0
      %v886 = vadd.f32 0.0, %v885
      %v887 = vpop.f32.mrb[0].mxu0
      %v888 = vadd.f32 0.0, %v887
      %889 = vmatprep.mubr.bf16.mxu0 0
      %890 = vmatmul.mubr.bf16.gmra.mrb[0].mxu0 %v370
      %v891 = vpop.f32.mrb[0].mxu0
      %v892 = vadd.f32 0.0, %v891
      %v893 = vpop.f32.mrb[0].mxu0
      %v894 = vadd.f32 0.0, %v893
      %v895 = vpop.f32.mrb[0].mxu0
      %v896 = vadd.f32 0.0, %v895
      %v897 = vpop.f32.mrb[0].mxu0
      %v898 = vadd.f32 0.0, %v897
      %899 = vdwg.mxu0
      %900 = vmatprep.subr.bf16.mxu0 %v582
      %901 = vmatpush1.bf16.msra.mxu0 %v581
      %902 = vmatprep.subr.bf16.mxu0 %v590
      %903 = vmatpush1.bf16.msra.mxu0 %v589
      %904 = vmatprep.subr.bf16.mxu0 %v598
      %905 = vmatpush1.bf16.msra.mxu0 %v597
      %906 = vmatprep.subr.bf16.mxu0 %v606
      %907 = vmatpush1.bf16.msra.mxu0 %v605
      %908 = vmatprep.subr.bf16.mxu0 %v614
      %909 = vmatpush1.bf16.msra.mxu0 %v613
      %910 = vmatprep.subr.bf16.mxu0 %v622
      %911 = vmatpush1.bf16.msra.mxu0 %v621
      %912 = vmatprep.subr.bf16.mxu0 %v630
      %913 = vmatpush1.bf16.msra.mxu0 %v629
      %914 = vmatprep.subr.bf16.mxu0 %v638
      %915 = vmatpush1.bf16.msra.mxu0 %v637
      %916 = vmatprep.subr.bf16.mxu0 0
      %917 = vmatpush1.bf16.msra.mxu0 0
      %918 = vmatprep.subr.bf16.mxu0 0
      %919 = vmatpush1.bf16.msra.mxu0 0
      %920 = vmatprep.subr.bf16.mxu0 0
      %921 = vmatpush1.bf16.msra.mxu0 0
      %922 = vmatprep.subr.bf16.mxu0 0
      %923 = vmatpush1.bf16.msra.mxu0 0
      %924 = vmatprep.subr.bf16.mxu0 0
      %925 = vmatpush1.bf16.msra.mxu0 0
      %926 = vmatprep.subr.bf16.mxu0 0
      %927 = vmatpush1.bf16.msra.mxu0 0
      %928 = vmatprep.subr.bf16.mxu0 0
      %929 = vmatpush1.bf16.msra.mxu0 0
      %930 = vmatprep.subr.bf16.mxu0 0
      %931 = vmatpush1.bf16.msra.mxu0 0
      %932 = vmatprep.mubr.bf16.mxu0 0
      %933 = vmatmul.mubr.bf16.gmra.mrb[0].mxu0 %v355
      %v934 = vpop.f32.mrb[0].mxu0
      %v935 = vadd.f32 0.0, %v934
      %v936 = vpop.f32.mrb[0].mxu0
      %v937 = vadd.f32 0.0, %v936
      %v938 = vpop.f32.mrb[0].mxu0
      %v939 = vadd.f32 0.0, %v938
      %v940 = vpop.f32.mrb[0].mxu0
      %v941 = vadd.f32 0.0, %v940
      %942 = vmatprep.mubr.bf16.mxu0 0
      %943 = vmatmul.mubr.bf16.gmra.mrb[0].mxu0 %v356
      %v944 = vpop.f32.mrb[0].mxu0
      %v945 = vadd.f32 0.0, %v944
      %v946 = vpop.f32.mrb[0].mxu0
      %v947 = vadd.f32 0.0, %v946
      %v948 = vpop.f32.mrb[0].mxu0
      %v949 = vadd.f32 0.0, %v948
      %v950 = vpop.f32.mrb[0].mxu0
      %v951 = vadd.f32 0.0, %v950
      %952 = vmatprep.mubr.bf16.mxu0 0
      %953 = vmatmul.mubr.bf16.gmra.mrb[0].mxu0 %v357
      %v954 = vpop.f32.mrb[0].mxu0
      %v955 = vadd.f32 0.0, %v954
      %v956 = vpop.f32.mrb[0].mxu0
      %v957 = vadd.f32 0.0, %v956
      %v958 = vpop.f32.mrb[0].mxu0
      %v959 = vadd.f32 0.0, %v958
      %v960 = vpop.f32.mrb[0].mxu0
      %v961 = vadd.f32 0.0, %v960
      %962 = vmatprep.mubr.bf16.mxu0 0
      %963 = vmatmul.mubr.bf16.gmra.mrb[0].mxu0 %v358
      %v964 = vpop.f32.mrb[0].mxu0
      %v965 = vadd.f32 0.0, %v964
      %v966 = vpop.f32.mrb[0].mxu0
      %v967 = vadd.f32 0.0, %v966
      %v968 = vpop.f32.mrb[0].mxu0
      %v969 = vadd.f32 0.0, %v968
      %v970 = vpop.f32.mrb[0].mxu0
      %v971 = vadd.f32 0.0, %v970
      %972 = vmatprep.mubr.bf16.mxu0 0
      %973 = vmatmul.mubr.bf16.gmra.mrb[0].mxu0 %v359
      %v974 = vpop.f32.mrb[0].mxu0
      %v975 = vadd.f32 0.0, %v974
      %v976 = vpop.f32.mrb[0].mxu0
      %v977 = vadd.f32 0.0, %v976
      %v978 = vpop.f32.mrb[0].mxu0
      %v979 = vadd.f32 0.0, %v978
      %v980 = vpop.f32.mrb[0].mxu0
      %v981 = vadd.f32 0.0, %v980
      %982 = vmatprep.mubr.bf16.mxu0 0
      %983 = vmatmul.mubr.bf16.gmra.mrb[0].mxu0 %v360
      %v984 = vpop.f32.mrb[0].mxu0
      %v985 = vadd.f32 0.0, %v984
      %v986 = vpop.f32.mrb[0].mxu0
      %v987 = vadd.f32 0.0, %v986
      %v988 = vpop.f32.mrb[0].mxu0
      %v989 = vadd.f32 0.0, %v988
      %v990 = vpop.f32.mrb[0].mxu0
      %v991 = vadd.f32 0.0, %v990
      %992 = vmatprep.mubr.bf16.mxu0 0
      %993 = vmatmul.mubr.bf16.gmra.mrb[0].mxu0 %v361
      %v994 = vpop.f32.mrb[0].mxu0
      %v995 = vadd.f32 0.0, %v994
      %v996 = vpop.f32.mrb[0].mxu0
      %v997 = vadd.f32 0.0, %v996
      %v998 = vpop.f32.mrb[0].mxu0
      %v999 = vadd.f32 0.0, %v998
      %v1000 = vpop.f32.mrb[0].mxu0
      %v1001 = vadd.f32 0.0, %v1000
      %1002 = vmatprep.mubr.bf16.mxu0 0
      %1003 = vmatmul.mubr.bf16.gmra.mrb[0].mxu0 %v362
      %v1004 = vpop.f32.mrb[0].mxu0
      %v1005 = vadd.f32 0.0, %v1004
      %v1006 = vpop.f32.mrb[0].mxu0
      %v1007 = vadd.f32 0.0, %v1006
      %v1008 = vpop.f32.mrb[0].mxu0
      %v1009 = vadd.f32 0.0, %v1008
      %v1010 = vpop.f32.mrb[0].mxu0
      %v1011 = vadd.f32 0.0, %v1010
      %1012 = vmatprep.mubr.bf16.mxu0 0
      %1013 = vmatmul.mubr.bf16.gmra.mrb[0].mxu0 %v363
      %v1014 = vpop.f32.mrb[0].mxu0
      %v1015 = vadd.f32 0.0, %v1014
      %v1016 = vpop.f32.mrb[0].mxu0
      %v1017 = vadd.f32 0.0, %v1016
      %v1018 = vpop.f32.mrb[0].mxu0
      %v1019 = vadd.f32 0.0, %v1018
      %v1020 = vpop.f32.mrb[0].mxu0
      %v1021 = vadd.f32 0.0, %v1020
      %1022 = vmatprep.mubr.bf16.mxu0 0
      %1023 = vmatmul.mubr.bf16.gmra.mrb[0].mxu0 %v364
      %v1024 = vpop.f32.mrb[0].mxu0
      %v1025 = vadd.f32 0.0, %v1024
      %v1026 = vpop.f32.mrb[0].mxu0
      %v1027 = vadd.f32 0.0, %v1026
      %v1028 = vpop.f32.mrb[0].mxu0
      %v1029 = vadd.f32 0.0, %v1028
      %v1030 = vpop.f32.mrb[0].mxu0
      %v1031 = vadd.f32 0.0, %v1030
      %1032 = vmatprep.mubr.bf16.mxu0 0
      %1033 = vmatmul.mubr.bf16.gmra.mrb[0].mxu0 %v365
      %v1034 = vpop.f32.mrb[0].mxu0
      %v1035 = vadd.f32 0.0, %v1034
      %v1036 = vpop.f32.mrb[0].mxu0
      %v1037 = vadd.f32 0.0, %v1036
      %v1038 = vpop.f32.mrb[0].mxu0
      %v1039 = vadd.f32 0.0, %v1038
      %v1040 = vpop.f32.mrb[0].mxu0
      %v1041 = vadd.f32 0.0, %v1040
      %1042 = vmatprep.mubr.bf16.mxu0 0
      %1043 = vmatmul.mubr.bf16.gmra.mrb[0].mxu0 %v366
      %v1044 = vpop.f32.mrb[0].mxu0
      %v1045 = vadd.f32 0.0, %v1044
      %v1046 = vpop.f32.mrb[0].mxu0
      %v1047 = vadd.f32 0.0, %v1046
      %v1048 = vpop.f32.mrb[0].mxu0
      %v1049 = vadd.f32 0.0, %v1048
      %v1050 = vpop.f32.mrb[0].mxu0
      %v1051 = vadd.f32 0.0, %v1050
      %1052 = vmatprep.mubr.bf16.mxu0 0
      %1053 = vmatmul.mubr.bf16.gmra.mrb[0].mxu0 %v367
      %v1054 = vpop.f32.mrb[0].mxu0
      %v1055 = vadd.f32 0.0, %v1054
      %v1056 = vpop.f32.mrb[0].mxu0
      %v1057 = vadd.f32 0.0, %v1056
      %v1058 = vpop.f32.mrb[0].mxu0
      %v1059 = vadd.f32 0.0, %v1058
      %v1060 = vpop.f32.mrb[0].mxu0
      %v1061 = vadd.f32 0.0, %v1060
      %1062 = vmatprep.mubr.bf16.mxu0 0
      %1063 = vmatmul.mubr.bf16.gmra.mrb[0].mxu0 %v368
      %v1064 = vpop.f32.mrb[0].mxu0
      %v1065 = vadd.f32 0.0, %v1064
      %v1066 = vpop.f32.mrb[0].mxu0
      %v1067 = vadd.f32 0.0, %v1066
      %v1068 = vpop.f32.mrb[0].mxu0
      %v1069 = vadd.f32 0.0, %v1068
      %v1070 = vpop.f32.mrb[0].mxu0
      %v1071 = vadd.f32 0.0, %v1070
      %1072 = vmatprep.mubr.bf16.mxu0 0
      %1073 = vmatmul.mubr.bf16.gmra.mrb[0].mxu0 %v369
      %v1074 = vpop.f32.mrb[0].mxu0
      %v1075 = vadd.f32 0.0, %v1074
      %v1076 = vpop.f32.mrb[0].mxu0
      %v1077 = vadd.f32 0.0, %v1076
      %v1078 = vpop.f32.mrb[0].mxu0
      %v1079 = vadd.f32 0.0, %v1078
      %v1080 = vpop.f32.mrb[0].mxu0
      %v1081 = vadd.f32 0.0, %v1080
      %1082 = vmatprep.mubr.bf16.mxu0 0
      %1083 = vmatmul.mubr.bf16.gmra.mrb[0].mxu0 %v370
      %v1084 = vpop.f32.mrb[0].mxu0
      %v1085 = vadd.f32 0.0, %v1084
      %v1086 = vpop.f32.mrb[0].mxu0
      %v1087 = vadd.f32 0.0, %v1086
      %v1088 = vpop.f32.mrb[0].mxu0
      %v1089 = vadd.f32 0.0, %v1088
      %v1090 = vpop.f32.mrb[0].mxu0
      %v1091 = vadd.f32 0.0, %v1090
      %1092 = vdwg.mxu0
      %1093 = vmatprep.subr.bf16.mxu0 %v584
      %1094 = vmatpush1.bf16.msra.mxu0 %v583
      %1095 = vmatprep.subr.bf16.mxu0 %v592
      %1096 = vmatpush1.bf16.msra.mxu0 %v591
      %1097 = vmatprep.subr.bf16.mxu0 %v600
      %1098 = vmatpush1.bf16.msra.mxu0 %v599
      %1099 = vmatprep.subr.bf16.mxu0 %v608
      %1100 = vmatpush1.bf16.msra.mxu0 %v607
      %1101 = vmatprep.subr.bf16.mxu0 %v616
      %1102 = vmatpush1.bf16.msra.mxu0 %v615
      %1103 = vmatprep.subr.bf16.mxu0 %v624
      %1104 = vmatpush1.bf16.msra.mxu0 %v623
      %1105 = vmatprep.subr.bf16.mxu0 %v632
      %1106 = vmatpush1.bf16.msra.mxu0 %v631
      %1107 = vmatprep.subr.bf16.mxu0 %v640
      %1108 = vmatpush1.bf16.msra.mxu0 %v639
      %1109 = vmatprep.subr.bf16.mxu0 0
      %1110 = vmatpush1.bf16.msra.mxu0 0
      %1111 = vmatprep.subr.bf16.mxu0 0
      %1112 = vmatpush1.bf16.msra.mxu0 0
      %1113 = vmatprep.subr.bf16.mxu0 0
      %1114 = vmatpush1.bf16.msra.mxu0 0
      %1115 = vmatprep.subr.bf16.mxu0 0
      %1116 = vmatpush1.bf16.msra.mxu0 0
      %1117 = vmatprep.subr.bf16.mxu0 0
      %1118 = vmatpush1.bf16.msra.mxu0 0
      %1119 = vmatprep.subr.bf16.mxu0 0
      %1120 = vmatpush1.bf16.msra.mxu0 0
      %1121 = vmatprep.subr.bf16.mxu0 0
      %1122 = vmatpush1.bf16.msra.mxu0 0
      %1123 = vmatprep.subr.bf16.mxu0 0
      %1124 = vmatpush1.bf16.msra.mxu0 0
      %1125 = vmatprep.mubr.bf16.mxu0 0
      %1126 = vmatmul.mubr.bf16.gmra.mrb[0].mxu0 %v355
      %v1127 = vpop.f32.mrb[0].mxu0
      %v1128 = vadd.f32 0.0, %v1127
      %v1129 = vpop.f32.mrb[0].mxu0
      %v1130 = vadd.f32 0.0, %v1129
      %v1131 = vpop.f32.mrb[0].mxu0
      %v1132 = vadd.f32 0.0, %v1131
      %v1133 = vpop.f32.mrb[0].mxu0
      %v1134 = vadd.f32 0.0, %v1133
      %1135 = vmatprep.mubr.bf16.mxu0 0
      %1136 = vmatmul.mubr.bf16.gmra.mrb[0].mxu0 %v356
      %v1137 = vpop.f32.mrb[0].mxu0
      %v1138 = vadd.f32 0.0, %v1137
      %v1139 = vpop.f32.mrb[0].mxu0
      %v1140 = vadd.f32 0.0, %v1139
      %v1141 = vpop.f32.mrb[0].mxu0
      %v1142 = vadd.f32 0.0, %v1141
      %v1143 = vpop.f32.mrb[0].mxu0
      %v1144 = vadd.f32 0.0, %v1143
      %1145 = vmatprep.mubr.bf16.mxu0 0
      %1146 = vmatmul.mubr.bf16.gmra.mrb[0].mxu0 %v357
      %v1147 = vpop.f32.mrb[0].mxu0
      %v1148 = vadd.f32 0.0, %v1147
      %v1149 = vpop.f32.mrb[0].mxu0
      %v1150 = vadd.f32 0.0, %v1149
      %v1151 = vpop.f32.mrb[0].mxu0
      %v1152 = vadd.f32 0.0, %v1151
      %v1153 = vpop.f32.mrb[0].mxu0
      %v1154 = vadd.f32 0.0, %v1153
      %1155 = vmatprep.mubr.bf16.mxu0 0
      %1156 = vmatmul.mubr.bf16.gmra.mrb[0].mxu0 %v358
      %v1157 = vpop.f32.mrb[0].mxu0
      %v1158 = vadd.f32 0.0, %v1157
      %v1159 = vpop.f32.mrb[0].mxu0
      %v1160 = vadd.f32 0.0, %v1159
      %v1161 = vpop.f32.mrb[0].mxu0
      %v1162 = vadd.f32 0.0, %v1161
      %v1163 = vpop.f32.mrb[0].mxu0
      %v1164 = vadd.f32 0.0, %v1163
      %1165 = vmatprep.mubr.bf16.mxu0 0
      %1166 = vmatmul.mubr.bf16.gmra.mrb[0].mxu0 %v359
      %v1167 = vpop.f32.mrb[0].mxu0
      %v1168 = vadd.f32 0.0, %v1167
      %v1169 = vpop.f32.mrb[0].mxu0
      %v1170 = vadd.f32 0.0, %v1169
      %v1171 = vpop.f32.mrb[0].mxu0
      %v1172 = vadd.f32 0.0, %v1171
      %v1173 = vpop.f32.mrb[0].mxu0
      %v1174 = vadd.f32 0.0, %v1173
      %1175 = vmatprep.mubr.bf16.mxu0 0
      %1176 = vmatmul.mubr.bf16.gmra.mrb[0].mxu0 %v360
      %v1177 = vpop.f32.mrb[0].mxu0
      %v1178 = vadd.f32 0.0, %v1177
      %v1179 = vpop.f32.mrb[0].mxu0
      %v1180 = vadd.f32 0.0, %v1179
      %v1181 = vpop.f32.mrb[0].mxu0
      %v1182 = vadd.f32 0.0, %v1181
      %v1183 = vpop.f32.mrb[0].mxu0
      %v1184 = vadd.f32 0.0, %v1183
      %1185 = vmatprep.mubr.bf16.mxu0 0
      %1186 = vmatmul.mubr.bf16.gmra.mrb[0].mxu0 %v361
      %v1187 = vpop.f32.mrb[0].mxu0
      %v1188 = vadd.f32 0.0, %v1187
      %v1189 = vpop.f32.mrb[0].mxu0
      %v1190 = vadd.f32 0.0, %v1189
      %v1191 = vpop.f32.mrb[0].mxu0
      %v1192 = vadd.f32 0.0, %v1191
      %v1193 = vpop.f32.mrb[0].mxu0
      %v1194 = vadd.f32 0.0, %v1193
      %1195 = vmatprep.mubr.bf16.mxu0 0
      %1196 = vmatmul.mubr.bf16.gmra.mrb[0].mxu0 %v362
      %v1197 = vpop.f32.mrb[0].mxu0
      %v1198 = vadd.f32 0.0, %v1197
      %v1199 = vpop.f32.mrb[0].mxu0
      %v1200 = vadd.f32 0.0, %v1199
      %v1201 = vpop.f32.mrb[0].mxu0
      %v1202 = vadd.f32 0.0, %v1201
      %v1203 = vpop.f32.mrb[0].mxu0
      %v1204 = vadd.f32 0.0, %v1203
      %1205 = vmatprep.mubr.bf16.mxu0 0
      %1206 = vmatmul.mubr.bf16.gmra.mrb[0].mxu0 %v363
      %v1207 = vpop.f32.mrb[0].mxu0
      %v1208 = vadd.f32 0.0, %v1207
      %v1209 = vpop.f32.mrb[0].mxu0
      %v1210 = vadd.f32 0.0, %v1209
      %v1211 = vpop.f32.mrb[0].mxu0
      %v1212 = vadd.f32 0.0, %v1211
      %v1213 = vpop.f32.mrb[0].mxu0
      %v1214 = vadd.f32 0.0, %v1213
      %1215 = vmatprep.mubr.bf16.mxu0 0
      %1216 = vmatmul.mubr.bf16.gmra.mrb[0].mxu0 %v364
      %v1217 = vpop.f32.mrb[0].mxu0
      %v1218 = vadd.f32 0.0, %v1217
      %v1219 = vpop.f32.mrb[0].mxu0
      %v1220 = vadd.f32 0.0, %v1219
      %v1221 = vpop.f32.mrb[0].mxu0
      %v1222 = vadd.f32 0.0, %v1221
      %v1223 = vpop.f32.mrb[0].mxu0
      %v1224 = vadd.f32 0.0, %v1223
      %1225 = vmatprep.mubr.bf16.mxu0 0
      %1226 = vmatmul.mubr.bf16.gmra.mrb[0].mxu0 %v365
      %v1227 = vpop.f32.mrb[0].mxu0
      %v1228 = vadd.f32 0.0, %v1227
      %v1229 = vpop.f32.mrb[0].mxu0
      %v1230 = vadd.f32 0.0, %v1229
      %v1231 = vpop.f32.mrb[0].mxu0
      %v1232 = vadd.f32 0.0, %v1231
      %v1233 = vpop.f32.mrb[0].mxu0
      %v1234 = vadd.f32 0.0, %v1233
      %1235 = vmatprep.mubr.bf16.mxu0 0
      %1236 = vmatmul.mubr.bf16.gmra.mrb[0].mxu0 %v366
      %v1237 = vpop.f32.mrb[0].mxu0
      %v1238 = vadd.f32 0.0, %v1237
      %v1239 = vpop.f32.mrb[0].mxu0
      %v1240 = vadd.f32 0.0, %v1239
      %v1241 = vpop.f32.mrb[0].mxu0
      %v1242 = vadd.f32 0.0, %v1241
      %v1243 = vpop.f32.mrb[0].mxu0
      %v1244 = vadd.f32 0.0, %v1243
      %1245 = vmatprep.mubr.bf16.mxu0 0
      %1246 = vmatmul.mubr.bf16.gmra.mrb[0].mxu0 %v367
      %v1247 = vpop.f32.mrb[0].mxu0
      %v1248 = vadd.f32 0.0, %v1247
      %v1249 = vpop.f32.mrb[0].mxu0
      %v1250 = vadd.f32 0.0, %v1249
      %v1251 = vpop.f32.mrb[0].mxu0
      %v1252 = vadd.f32 0.0, %v1251
      %v1253 = vpop.f32.mrb[0].mxu0
      %v1254 = vadd.f32 0.0, %v1253
      %1255 = vmatprep.mubr.bf16.mxu0 0
      %1256 = vmatmul.mubr.bf16.gmra.mrb[0].mxu0 %v368
      %v1257 = vpop.f32.mrb[0].mxu0
      %v1258 = vadd.f32 0.0, %v1257
      %v1259 = vpop.f32.mrb[0].mxu0
      %v1260 = vadd.f32 0.0, %v1259
      %v1261 = vpop.f32.mrb[0].mxu0
      %v1262 = vadd.f32 0.0, %v1261
      %v1263 = vpop.f32.mrb[0].mxu0
      %v1264 = vadd.f32 0.0, %v1263
      %1265 = vmatprep.mubr.bf16.mxu0 0
      %1266 = vmatmul.mubr.bf16.gmra.mrb[0].mxu0 %v369
      %v1267 = vpop.f32.mrb[0].mxu0
      %v1268 = vadd.f32 0.0, %v1267
      %v1269 = vpop.f32.mrb[0].mxu0
      %v1270 = vadd.f32 0.0, %v1269
      %v1271 = vpop.f32.mrb[0].mxu0
      %v1272 = vadd.f32 0.0, %v1271
      %v1273 = vpop.f32.mrb[0].mxu0
      %v1274 = vadd.f32 0.0, %v1273
      %1275 = vmatprep.mubr.bf16.mxu0 0
      %1276 = vmatmul.mubr.bf16.gmra.mrb[0].mxu0 %v370
      %v1277 = vpop.f32.mrb[0].mxu0
      %v1278 = vadd.f32 0.0, %v1277
      %v1279 = vpop.f32.mrb[0].mxu0
      %v1280 = vadd.f32 0.0, %v1279
      %v1281 = vpop.f32.mrb[0].mxu0
      %v1282 = vadd.f32 0.0, %v1281
      %v1283 = vpop.f32.mrb[0].mxu0
      %v1284 = vadd.f32 0.0, %v1283
      %1285 = vdwg.mxu0
      %1286 = vmatprep.subr.bf16.mxu0 %v586
      %1287 = vmatpush1.bf16.msra.mxu0 %v585
      %1288 = vmatprep.subr.bf16.mxu0 %v594
      %1289 = vmatpush1.bf16.msra.mxu0 %v593
      %1290 = vmatprep.subr.bf16.mxu0 %v602
      %1291 = vmatpush1.bf16.msra.mxu0 %v601
      %1292 = vmatprep.subr.bf16.mxu0 %v610
      %1293 = vmatpush1.bf16.msra.mxu0 %v609
      %1294 = vmatprep.subr.bf16.mxu0 %v618
      %1295 = vmatpush1.bf16.msra.mxu0 %v617
      %1296 = vmatprep.subr.bf16.mxu0 %v626
      %1297 = vmatpush1.bf16.msra.mxu0 %v625
      %1298 = vmatprep.subr.bf16.mxu0 %v634
      %1299 = vmatpush1.bf16.msra.mxu0 %v633
      %1300 = vmatprep.subr.bf16.mxu0 %v642
      %1301 = vmatpush1.bf16.msra.mxu0 %v641
      %1302 = vmatprep.subr.bf16.mxu0 0
      %1303 = vmatpush1.bf16.msra.mxu0 0
      %1304 = vmatprep.subr.bf16.mxu0 0
      %1305 = vmatpush1.bf16.msra.mxu0 0
      %1306 = vmatprep.subr.bf16.mxu0 0
      %1307 = vmatpush1.bf16.msra.mxu0 0
      %1308 = vmatprep.subr.bf16.mxu0 0
      %1309 = vmatpush1.bf16.msra.mxu0 0
      %1310 = vmatprep.subr.bf16.mxu0 0
      %1311 = vmatpush1.bf16.msra.mxu0 0
      %1312 = vmatprep.subr.bf16.mxu0 0
      %1313 = vmatpush1.bf16.msra.mxu0 0
      %1314 = vmatprep.subr.bf16.mxu0 0
      %1315 = vmatpush1.bf16.msra.mxu0 0
      %1316 = vmatprep.subr.bf16.mxu0 0
      %1317 = vmatpush1.bf16.msra.mxu0 0
      %1318 = vmatprep.mubr.bf16.mxu0 0
      %1319 = vmatmul.mubr.bf16.gmra.mrb[0].mxu0 %v355
      %v1320 = vpop.f32.mrb[0].mxu0
      %v1321 = vadd.f32 0.0, %v1320
      %v1322 = vpop.f32.mrb[0].mxu0
      %v1323 = vadd.f32 0.0, %v1322
      %v1324 = vpop.f32.mrb[0].mxu0
      %v1325 = vadd.f32 0.0, %v1324
      %v1326 = vpop.f32.mrb[0].mxu0
      %v1327 = vadd.f32 0.0, %v1326
      %1328 = vmatprep.mubr.bf16.mxu0 0
      %1329 = vmatmul.mubr.bf16.gmra.mrb[0].mxu0 %v356
      %v1330 = vpop.f32.mrb[0].mxu0
      %v1331 = vadd.f32 0.0, %v1330
      %v1332 = vpop.f32.mrb[0].mxu0
      %v1333 = vadd.f32 0.0, %v1332
      %v1334 = vpop.f32.mrb[0].mxu0
      %v1335 = vadd.f32 0.0, %v1334
      %v1336 = vpop.f32.mrb[0].mxu0
      %v1337 = vadd.f32 0.0, %v1336
      %1338 = vmatprep.mubr.bf16.mxu0 0
      %1339 = vmatmul.mubr.bf16.gmra.mrb[0].mxu0 %v357
      %v1340 = vpop.f32.mrb[0].mxu0
      %v1341 = vadd.f32 0.0, %v1340
      %v1342 = vpop.f32.mrb[0].mxu0
      %v1343 = vadd.f32 0.0, %v1342
      %v1344 = vpop.f32.mrb[0].mxu0
      %v1345 = vadd.f32 0.0, %v1344
      %v1346 = vpop.f32.mrb[0].mxu0
      %v1347 = vadd.f32 0.0, %v1346
      %1348 = vmatprep.mubr.bf16.mxu0 0
      %1349 = vmatmul.mubr.bf16.gmra.mrb[0].mxu0 %v358
      %v1350 = vpop.f32.mrb[0].mxu0
      %v1351 = vadd.f32 0.0, %v1350
      %v1352 = vpop.f32.mrb[0].mxu0
      %v1353 = vadd.f32 0.0, %v1352
      %v1354 = vpop.f32.mrb[0].mxu0
      %v1355 = vadd.f32 0.0, %v1354
      %v1356 = vpop.f32.mrb[0].mxu0
      %v1357 = vadd.f32 0.0, %v1356
      %1358 = vmatprep.mubr.bf16.mxu0 0
      %1359 = vmatmul.mubr.bf16.gmra.mrb[0].mxu0 %v359
      %v1360 = vpop.f32.mrb[0].mxu0
      %v1361 = vadd.f32 0.0, %v1360
      %v1362 = vpop.f32.mrb[0].mxu0
      %v1363 = vadd.f32 0.0, %v1362
      %v1364 = vpop.f32.mrb[0].mxu0
      %v1365 = vadd.f32 0.0, %v1364
      %v1366 = vpop.f32.mrb[0].mxu0
      %v1367 = vadd.f32 0.0, %v1366
      %1368 = vmatprep.mubr.bf16.mxu0 0
      %1369 = vmatmul.mubr.bf16.gmra.mrb[0].mxu0 %v360
      %v1370 = vpop.f32.mrb[0].mxu0
      %v1371 = vadd.f32 0.0, %v1370
      %v1372 = vpop.f32.mrb[0].mxu0
      %v1373 = vadd.f32 0.0, %v1372
      %v1374 = vpop.f32.mrb[0].mxu0
      %v1375 = vadd.f32 0.0, %v1374
      %v1376 = vpop.f32.mrb[0].mxu0
      %v1377 = vadd.f32 0.0, %v1376
      %1378 = vmatprep.mubr.bf16.mxu0 0
      %1379 = vmatmul.mubr.bf16.gmra.mrb[0].mxu0 %v361
      %v1380 = vpop.f32.mrb[0].mxu0
      %v1381 = vadd.f32 0.0, %v1380
      %v1382 = vpop.f32.mrb[0].mxu0
      %v1383 = vadd.f32 0.0, %v1382
      %v1384 = vpop.f32.mrb[0].mxu0
      %v1385 = vadd.f32 0.0, %v1384
      %v1386 = vpop.f32.mrb[0].mxu0
      %v1387 = vadd.f32 0.0, %v1386
      %1388 = vmatprep.mubr.bf16.mxu0 0
      %1389 = vmatmul.mubr.bf16.gmra.mrb[0].mxu0 %v362
      %v1390 = vpop.f32.mrb[0].mxu0
      %v1391 = vadd.f32 0.0, %v1390
      %v1392 = vpop.f32.mrb[0].mxu0
      %v1393 = vadd.f32 0.0, %v1392
      %v1394 = vpop.f32.mrb[0].mxu0
      %v1395 = vadd.f32 0.0, %v1394
      %v1396 = vpop.f32.mrb[0].mxu0
      %v1397 = vadd.f32 0.0, %v1396
      %1398 = vmatprep.mubr.bf16.mxu0 0
      %1399 = vmatmul.mubr.bf16.gmra.mrb[0].mxu0 %v363
      %v1400 = vpop.f32.mrb[0].mxu0
      %v1401 = vadd.f32 0.0, %v1400
      %v1402 = vpop.f32.mrb[0].mxu0
      %v1403 = vadd.f32 0.0, %v1402
      %v1404 = vpop.f32.mrb[0].mxu0
      %v1405 = vadd.f32 0.0, %v1404
      %v1406 = vpop.f32.mrb[0].mxu0
      %v1407 = vadd.f32 0.0, %v1406
      %1408 = vmatprep.mubr.bf16.mxu0 0
      %1409 = vmatmul.mubr.bf16.gmra.mrb[0].mxu0 %v364
      %v1410 = vpop.f32.mrb[0].mxu0
      %v1411 = vadd.f32 0.0, %v1410
      %v1412 = vpop.f32.mrb[0].mxu0
      %v1413 = vadd.f32 0.0, %v1412
      %v1414 = vpop.f32.mrb[0].mxu0
      %v1415 = vadd.f32 0.0, %v1414
      %v1416 = vpop.f32.mrb[0].mxu0
      %v1417 = vadd.f32 0.0, %v1416
      %1418 = vmatprep.mubr.bf16.mxu0 0
      %1419 = vmatmul.mubr.bf16.gmra.mrb[0].mxu0 %v365
      %v1420 = vpop.f32.mrb[0].mxu0
      %v1421 = vadd.f32 0.0, %v1420
      %v1422 = vpop.f32.mrb[0].mxu0
      %v1423 = vadd.f32 0.0, %v1422
      %v1424 = vpop.f32.mrb[0].mxu0
      %v1425 = vadd.f32 0.0, %v1424
      %v1426 = vpop.f32.mrb[0].mxu0
      %v1427 = vadd.f32 0.0, %v1426
      %1428 = vmatprep.mubr.bf16.mxu0 0
      %1429 = vmatmul.mubr.bf16.gmra.mrb[0].mxu0 %v366
      %v1430 = vpop.f32.mrb[0].mxu0
      %v1431 = vadd.f32 0.0, %v1430
      %v1432 = vpop.f32.mrb[0].mxu0
      %v1433 = vadd.f32 0.0, %v1432
      %v1434 = vpop.f32.mrb[0].mxu0
      %v1435 = vadd.f32 0.0, %v1434
      %v1436 = vpop.f32.mrb[0].mxu0
      %v1437 = vadd.f32 0.0, %v1436
      %1438 = vmatprep.mubr.bf16.mxu0 0
      %1439 = vmatmul.mubr.bf16.gmra.mrb[0].mxu0 %v367
      %v1440 = vpop.f32.mrb[0].mxu0
      %v1441 = vadd.f32 0.0, %v1440
      %v1442 = vpop.f32.mrb[0].mxu0
      %v1443 = vadd.f32 0.0, %v1442
      %v1444 = vpop.f32.mrb[0].mxu0
      %v1445 = vadd.f32 0.0, %v1444
      %v1446 = vpop.f32.mrb[0].mxu0
      %v1447 = vadd.f32 0.0, %v1446
      %1448 = vmatprep.mubr.bf16.mxu0 0
      %1449 = vmatmul.mubr.bf16.gmra.mrb[0].mxu0 %v368
      %v1450 = vpop.f32.mrb[0].mxu0
      %v1451 = vadd.f32 0.0, %v1450
      %v1452 = vpop.f32.mrb[0].mxu0
      %v1453 = vadd.f32 0.0, %v1452
      %v1454 = vpop.f32.mrb[0].mxu0
      %v1455 = vadd.f32 0.0, %v1454
      %v1456 = vpop.f32.mrb[0].mxu0
      %v1457 = vadd.f32 0.0, %v1456
      %1458 = vmatprep.mubr.bf16.mxu0 0
      %1459 = vmatmul.mubr.bf16.gmra.mrb[0].mxu0 %v369
      %v1460 = vpop.f32.mrb[0].mxu0
      %v1461 = vadd.f32 0.0, %v1460
      %v1462 = vpop.f32.mrb[0].mxu0
      %v1463 = vadd.f32 0.0, %v1462
      %v1464 = vpop.f32.mrb[0].mxu0
      %v1465 = vadd.f32 0.0, %v1464
      %v1466 = vpop.f32.mrb[0].mxu0
      %v1467 = vadd.f32 0.0, %v1466
      %1468 = vmatprep.mubr.bf16.mxu0 0
      %1469 = vmatmul.mubr.bf16.gmra.mrb[0].mxu0 %v370
      %v1470 = vpop.f32.mrb[0].mxu0
      %v1471 = vadd.f32 0.0, %v1470
      %v1472 = vpop.f32.mrb[0].mxu0
      %v1473 = vadd.f32 0.0, %v1472
      %v1474 = vpop.f32.mrb[0].mxu0
      %v1475 = vadd.f32 0.0, %v1474
      %v1476 = vpop.f32.mrb[0].mxu0
      %v1477 = vadd.f32 0.0, %v1476
      %1478 = vdwg.mxu0
      %1479 = vst [vmem:[%s191] sm:$0xff] %v742
      %1480 = vst [vmem:[%s191 + $0x8] sm:$0xff] %v744
      %1481 = vst [vmem:[%s191 + $0x10] sm:$0xff] %v935
      %1482 = vst [vmem:[%s191 + $0x18] sm:$0xff] %v937
      %1483 = vst [vmem:[%s191 + $0x20] sm:$0xff] %v1128
      %1484 = vst [vmem:[%s191 + $0x28] sm:$0xff] %v1130
      %1485 = vst [vmem:[%s191 + $0x30] sm:$0xff] %v1321
      %1486 = vst [vmem:[%s191 + $0x38] sm:$0xff] %v1323
      %1487 = vst [vmem:[%s191 + $0x40] sm:$0xff] %v746
      %1488 = vst [vmem:[%s191 + $0x48] sm:$0xff] %v748
      %1489 = vst [vmem:[%s191 + $0x50] sm:$0xff] %v939
      %1490 = vst [vmem:[%s191 + $0x58] sm:$0xff] %v941
      %1491 = vst [vmem:[%s191 + $0x60] sm:$0xff] %v1132
      %1492 = vst [vmem:[%s191 + $0x68] sm:$0xff] %v1134
      %1493 = vst [vmem:[%s191 + $0x70] sm:$0xff] %v1325
      %1494 = vst [vmem:[%s191 + $0x78] sm:$0xff] %v1327
      %1495 = vst [vmem:[%s191 + $0x80] sm:$0xff] %v752
      %1496 = vst [vmem:[%s191 + $0x88] sm:$0xff] %v754
      %1497 = vst [vmem:[%s191 + $0x90] sm:$0xff] %v945
      %1498 = vst [vmem:[%s191 + $0x98] sm:$0xff] %v947
      %1499 = vst [vmem:[%s191 + $0xa0] sm:$0xff] %v1138
      %1500 = vst [vmem:[%s191 + $0xa8] sm:$0xff] %v1140
      %1501 = vst [vmem:[%s191 + $0xb0] sm:$0xff] %v1331
      %1502 = vst [vmem:[%s191 + $0xb8] sm:$0xff] %v1333
      %1503 = vst [vmem:[%s191 + $0xc0] sm:$0xff] %v756
      %1504 = vst [vmem:[%s191 + $0xc8] sm:$0xff] %v758
      %1505 = vst [vmem:[%s191 + $0xd0] sm:$0xff] %v949
      %1506 = vst [vmem:[%s191 + $0xd8] sm:$0xff] %v951
      %1507 = vst [vmem:[%s191 + $0xe0] sm:$0xff] %v1142
      %1508 = vst [vmem:[%s191 + $0xe8] sm:$0xff] %v1144
      %1509 = vst [vmem:[%s191 + $0xf0] sm:$0xff] %v1335
      %1510 = vst [vmem:[%s191 + $0xf8] sm:$0xff] %v1337
      %1511 = vst [vmem:[%s191 + $0x100] sm:$0xff] %v762
      %1512 = vst [vmem:[%s191 + $0x108] sm:$0xff] %v764
      %1513 = vst [vmem:[%s191 + $0x110] sm:$0xff] %v955
      %1514 = vst [vmem:[%s191 + $0x118] sm:$0xff] %v957
      %1515 = vst [vmem:[%s191 + $0x120] sm:$0xff] %v1148
      %1516 = vst [vmem:[%s191 + $0x128] sm:$0xff] %v1150
      %1517 = vst [vmem:[%s191 + $0x130] sm:$0xff] %v1341
      %1518 = vst [vmem:[%s191 + $0x138] sm:$0xff] %v1343
      %1519 = vst [vmem:[%s191 + $0x140] sm:$0xff] %v766
      %1520 = vst [vmem:[%s191 + $0x148] sm:$0xff] %v768
      %1521 = vst [vmem:[%s191 + $0x150] sm:$0xff] %v959
      %1522 = vst [vmem:[%s191 + $0x158] sm:$0xff] %v961
      %1523 = vst [vmem:[%s191 + $0x160] sm:$0xff] %v1152
      %1524 = vst [vmem:[%s191 + $0x168] sm:$0xff] %v1154
      %1525 = vst [vmem:[%s191 + $0x170] sm:$0xff] %v1345
      %1526 = vst [vmem:[%s191 + $0x178] sm:$0xff] %v1347
      %1527 = vst [vmem:[%s191 + $0x180] sm:$0xff] %v772
      %1528 = vst [vmem:[%s191 + $0x188] sm:$0xff] %v774
      %1529 = vst [vmem:[%s191 + $0x190] sm:$0xff] %v965
      %1530 = vst [vmem:[%s191 + $0x198] sm:$0xff] %v967
      %1531 = vst [vmem:[%s191 + $0x1a0] sm:$0xff] %v1158
      %1532 = vst [vmem:[%s191 + $0x1a8] sm:$0xff] %v1160
      %1533 = vst [vmem:[%s191 + $0x1b0] sm:$0xff] %v1351
      %1534 = vst [vmem:[%s191 + $0x1b8] sm:$0xff] %v1353
      %1535 = vst [vmem:[%s191 + $0x1c0] sm:$0xff] %v776
      %1536 = vst [vmem:[%s191 + $0x1c8] sm:$0xff] %v778
      %1537 = vst [vmem:[%s191 + $0x1d0] sm:$0xff] %v969
      %1538 = vst [vmem:[%s191 + $0x1d8] sm:$0xff] %v971
      %1539 = vst [vmem:[%s191 + $0x1e0] sm:$0xff] %v1162
      %1540 = vst [vmem:[%s191 + $0x1e8] sm:$0xff] %v1164
      %1541 = vst [vmem:[%s191 + $0x1f0] sm:$0xff] %v1355
      %1542 = vst [vmem:[%s191 + $0x1f8] sm:$0xff] %v1357
      %1543 = vst [vmem:[%s191 + $0x200] sm:$0xff] %v782
      %1544 = vst [vmem:[%s191 + $0x208] sm:$0xff] %v784
      %1545 = vst [vmem:[%s191 + $0x210] sm:$0xff] %v975
      %1546 = vst [vmem:[%s191 + $0x218] sm:$0xff] %v977
      %1547 = vst [vmem:[%s191 + $0x220] sm:$0xff] %v1168
      %1548 = vst [vmem:[%s191 + $0x228] sm:$0xff] %v1170
      %1549 = vst [vmem:[%s191 + $0x230] sm:$0xff] %v1361
      %1550 = vst [vmem:[%s191 + $0x238] sm:$0xff] %v1363
      %1551 = vst [vmem:[%s191 + $0x240] sm:$0xff] %v786
      %1552 = vst [vmem:[%s191 + $0x248] sm:$0xff] %v788
      %1553 = vst [vmem:[%s191 + $0x250] sm:$0xff] %v979
      %1554 = vst [vmem:[%s191 + $0x258] sm:$0xff] %v981
      %1555 = vst [vmem:[%s191 + $0x260] sm:$0xff] %v1172
      %1556 = vst [vmem:[%s191 + $0x268] sm:$0xff] %v1174
      %1557 = vst [vmem:[%s191 + $0x270] sm:$0xff] %v1365
      %1558 = vst [vmem:[%s191 + $0x278] sm:$0xff] %v1367
      %1559 = vst [vmem:[%s191 + $0x280] sm:$0xff] %v792
      %1560 = vst [vmem:[%s191 + $0x288] sm:$0xff] %v794
      %1561 = vst [vmem:[%s191 + $0x290] sm:$0xff] %v985
      %1562 = vst [vmem:[%s191 + $0x298] sm:$0xff] %v987
      %1563 = vst [vmem:[%s191 + $0x2a0] sm:$0xff] %v1178
      %1564 = vst [vmem:[%s191 + $0x2a8] sm:$0xff] %v1180
      %1565 = vst [vmem:[%s191 + $0x2b0] sm:$0xff] %v1371
      %1566 = vst [vmem:[%s191 + $0x2b8] sm:$0xff] %v1373
      %1567 = vst [vmem:[%s191 + $0x2c0] sm:$0xff] %v796
      %1568 = vst [vmem:[%s191 + $0x2c8] sm:$0xff] %v798
      %1569 = vst [vmem:[%s191 + $0x2d0] sm:$0xff] %v989
      %1570 = vst [vmem:[%s191 + $0x2d8] sm:$0xff] %v991
      %1571 = vst [vmem:[%s191 + $0x2e0] sm:$0xff] %v1182
      %1572 = vst [vmem:[%s191 + $0x2e8] sm:$0xff] %v1184
      %1573 = vst [vmem:[%s191 + $0x2f0] sm:$0xff] %v1375
      %1574 = vst [vmem:[%s191 + $0x2f8] sm:$0xff] %v1377
      %1575 = vst [vmem:[%s191 + $0x300] sm:$0xff] %v802
      %1576 = vst [vmem:[%s191 + $0x308] sm:$0xff] %v804
      %1577 = vst [vmem:[%s191 + $0x310] sm:$0xff] %v995
      %1578 = vst [vmem:[%s191 + $0x318] sm:$0xff] %v997
      %1579 = vst [vmem:[%s191 + $0x320] sm:$0xff] %v1188
      %1580 = vst [vmem:[%s191 + $0x328] sm:$0xff] %v1190
      %1581 = vst [vmem:[%s191 + $0x330] sm:$0xff] %v1381
      %1582 = vst [vmem:[%s191 + $0x338] sm:$0xff] %v1383
      %1583 = vst [vmem:[%s191 + $0x340] sm:$0xff] %v806
      %1584 = vst [vmem:[%s191 + $0x348] sm:$0xff] %v808
      %1585 = vst [vmem:[%s191 + $0x350] sm:$0xff] %v999
      %1586 = vst [vmem:[%s191 + $0x358] sm:$0xff] %v1001
      %1587 = vst [vmem:[%s191 + $0x360] sm:$0xff] %v1192
      %1588 = vst [vmem:[%s191 + $0x368] sm:$0xff] %v1194
      %1589 = vst [vmem:[%s191 + $0x370] sm:$0xff] %v1385
      %1590 = vst [vmem:[%s191 + $0x378] sm:$0xff] %v1387
      %1591 = vst [vmem:[%s191 + $0x380] sm:$0xff] %v812
      %1592 = vst [vmem:[%s191 + $0x388] sm:$0xff] %v814
      %1593 = vst [vmem:[%s191 + $0x390] sm:$0xff] %v1005
      %1594 = vst [vmem:[%s191 + $0x398] sm:$0xff] %v1007
      %1595 = vst [vmem:[%s191 + $0x3a0] sm:$0xff] %v1198
      %1596 = vst [vmem:[%s191 + $0x3a8] sm:$0xff] %v1200
      %1597 = vst [vmem:[%s191 + $0x3b0] sm:$0xff] %v1391
      %1598 = vst [vmem:[%s191 + $0x3b8] sm:$0xff] %v1393
      %1599 = vst [vmem:[%s191 + $0x3c0] sm:$0xff] %v816
      %1600 = vst [vmem:[%s191 + $0x3c8] sm:$0xff] %v818
      %1601 = vst [vmem:[%s191 + $0x3d0] sm:$0xff] %v1009
      %1602 = vst [vmem:[%s191 + $0x3d8] sm:$0xff] %v1011
      %1603 = vst [vmem:[%s191 + $0x3e0] sm:$0xff] %v1202
      %1604 = vst [vmem:[%s191 + $0x3e8] sm:$0xff] %v1204
      %1605 = vst [vmem:[%s191 + $0x3f0] sm:$0xff] %v1395
      %1606 = vst [vmem:[%s191 + $0x3f8] sm:$0xff] %v1397
      %1607 = vst [vmem:[%s191 + $0x400] sm:$0xff] %v822
      %1608 = vst [vmem:[%s191 + $0x408] sm:$0xff] %v824
      %1609 = vst [vmem:[%s191 + $0x410] sm:$0xff] %v1015
      %1610 = vst [vmem:[%s191 + $0x418] sm:$0xff] %v1017
      %1611 = vst [vmem:[%s191 + $0x420] sm:$0xff] %v1208
      %1612 = vst [vmem:[%s191 + $0x428] sm:$0xff] %v1210
      %1613 = vst [vmem:[%s191 + $0x430] sm:$0xff] %v1401
      %1614 = vst [vmem:[%s191 + $0x438] sm:$0xff] %v1403
      %1615 = vst [vmem:[%s191 + $0x440] sm:$0xff] %v826
      %1616 = vst [vmem:[%s191 + $0x448] sm:$0xff] %v828
      %1617 = vst [vmem:[%s191 + $0x450] sm:$0xff] %v1019
      %1618 = vst [vmem:[%s191 + $0x458] sm:$0xff] %v1021
      %1619 = vst [vmem:[%s191 + $0x460] sm:$0xff] %v1212
      %1620 = vst [vmem:[%s191 + $0x468] sm:$0xff] %v1214
      %1621 = vst [vmem:[%s191 + $0x470] sm:$0xff] %v1405
      %1622 = vst [vmem:[%s191 + $0x478] sm:$0xff] %v1407
      %1623 = vst [vmem:[%s191 + $0x480] sm:$0xff] %v832
      %1624 = vst [vmem:[%s191 + $0x488] sm:$0xff] %v834
      %1625 = vst [vmem:[%s191 + $0x490] sm:$0xff] %v1025
      %1626 = vst [vmem:[%s191 + $0x498] sm:$0xff] %v1027
      %1627 = vst [vmem:[%s191 + $0x4a0] sm:$0xff] %v1218
      %1628 = vst [vmem:[%s191 + $0x4a8] sm:$0xff] %v1220
      %1629 = vst [vmem:[%s191 + $0x4b0] sm:$0xff] %v1411
      %1630 = vst [vmem:[%s191 + $0x4b8] sm:$0xff] %v1413
      %1631 = vst [vmem:[%s191 + $0x4c0] sm:$0xff] %v836
      %1632 = vst [vmem:[%s191 + $0x4c8] sm:$0xff] %v838
      %1633 = vst [vmem:[%s191 + $0x4d0] sm:$0xff] %v1029
      %1634 = vst [vmem:[%s191 + $0x4d8] sm:$0xff] %v1031
      %1635 = vst [vmem:[%s191 + $0x4e0] sm:$0xff] %v1222
      %1636 = vst [vmem:[%s191 + $0x4e8] sm:$0xff] %v1224
      %1637 = vst [vmem:[%s191 + $0x4f0] sm:$0xff] %v1415
      %1638 = vst [vmem:[%s191 + $0x4f8] sm:$0xff] %v1417
      %1639 = vst [vmem:[%s191 + $0x500] sm:$0xff] %v842
      %1640 = vst [vmem:[%s191 + $0x508] sm:$0xff] %v844
      %1641 = vst [vmem:[%s191 + $0x510] sm:$0xff] %v1035
      %1642 = vst [vmem:[%s191 + $0x518] sm:$0xff] %v1037
      %1643 = vst [vmem:[%s191 + $0x520] sm:$0xff] %v1228
      %1644 = vst [vmem:[%s191 + $0x528] sm:$0xff] %v1230
      %1645 = vst [vmem:[%s191 + $0x530] sm:$0xff] %v1421
      %1646 = vst [vmem:[%s191 + $0x538] sm:$0xff] %v1423
      %1647 = vst [vmem:[%s191 + $0x540] sm:$0xff] %v846
      %1648 = vst [vmem:[%s191 + $0x548] sm:$0xff] %v848
      %1649 = vst [vmem:[%s191 + $0x550] sm:$0xff] %v1039
      %1650 = vst [vmem:[%s191 + $0x558] sm:$0xff] %v1041
      %1651 = vst [vmem:[%s191 + $0x560] sm:$0xff] %v1232
      %1652 = vst [vmem:[%s191 + $0x568] sm:$0xff] %v1234
      %1653 = vst [vmem:[%s191 + $0x570] sm:$0xff] %v1425
      %1654 = vst [vmem:[%s191 + $0x578] sm:$0xff] %v1427
      %1655 = vst [vmem:[%s191 + $0x580] sm:$0xff] %v852
      %1656 = vst [vmem:[%s191 + $0x588] sm:$0xff] %v854
      %1657 = vst [vmem:[%s191 + $0x590] sm:$0xff] %v1045
      %1658 = vst [vmem:[%s191 + $0x598] sm:$0xff] %v1047
      %1659 = vst [vmem:[%s191 + $0x5a0] sm:$0xff] %v1238
      %1660 = vst [vmem:[%s191 + $0x5a8] sm:$0xff] %v1240
      %1661 = vst [vmem:[%s191 + $0x5b0] sm:$0xff] %v1431
      %1662 = vst [vmem:[%s191 + $0x5b8] sm:$0xff] %v1433
      %1663 = vst [vmem:[%s191 + $0x5c0] sm:$0xff] %v856
      %1664 = vst [vmem:[%s191 + $0x5c8] sm:$0xff] %v858
      %1665 = vst [vmem:[%s191 + $0x5d0] sm:$0xff] %v1049
      %1666 = vst [vmem:[%s191 + $0x5d8] sm:$0xff] %v1051
      %1667 = vst [vmem:[%s191 + $0x5e0] sm:$0xff] %v1242
      %1668 = vst [vmem:[%s191 + $0x5e8] sm:$0xff] %v1244
      %1669 = vst [vmem:[%s191 + $0x5f0] sm:$0xff] %v1435
      %1670 = vst [vmem:[%s191 + $0x5f8] sm:$0xff] %v1437
      %1671 = vst [vmem:[%s191 + $0x600] sm:$0xff] %v862
      %1672 = vst [vmem:[%s191 + $0x608] sm:$0xff] %v864
      %1673 = vst [vmem:[%s191 + $0x610] sm:$0xff] %v1055
      %1674 = vst [vmem:[%s191 + $0x618] sm:$0xff] %v1057
      %1675 = vst [vmem:[%s191 + $0x620] sm:$0xff] %v1248
      %1676 = vst [vmem:[%s191 + $0x628] sm:$0xff] %v1250
      %1677 = vst [vmem:[%s191 + $0x630] sm:$0xff] %v1441
      %1678 = vst [vmem:[%s191 + $0x638] sm:$0xff] %v1443
      %1679 = vst [vmem:[%s191 + $0x640] sm:$0xff] %v866
      %1680 = vst [vmem:[%s191 + $0x648] sm:$0xff] %v868
      %1681 = vst [vmem:[%s191 + $0x650] sm:$0xff] %v1059
      %1682 = vst [vmem:[%s191 + $0x658] sm:$0xff] %v1061
      %1683 = vst [vmem:[%s191 + $0x660] sm:$0xff] %v1252
      %1684 = vst [vmem:[%s191 + $0x668] sm:$0xff] %v1254
      %1685 = vst [vmem:[%s191 + $0x670] sm:$0xff] %v1445
      %1686 = vst [vmem:[%s191 + $0x678] sm:$0xff] %v1447
      %1687 = vst [vmem:[%s191 + $0x680] sm:$0xff] %v872
      %1688 = vst [vmem:[%s191 + $0x688] sm:$0xff] %v874
      %1689 = vst [vmem:[%s191 + $0x690] sm:$0xff] %v1065
      %1690 = vst [vmem:[%s191 + $0x698] sm:$0xff] %v1067
      %1691 = vst [vmem:[%s191 + $0x6a0] sm:$0xff] %v1258
      %1692 = vst [vmem:[%s191 + $0x6a8] sm:$0xff] %v1260
      %1693 = vst [vmem:[%s191 + $0x6b0] sm:$0xff] %v1451
      %1694 = vst [vmem:[%s191 + $0x6b8] sm:$0xff] %v1453
      %1695 = vst [vmem:[%s191 + $0x6c0] sm:$0xff] %v876
      %1696 = vst [vmem:[%s191 + $0x6c8] sm:$0xff] %v878
      %1697 = vst [vmem:[%s191 + $0x6d0] sm:$0xff] %v1069
      %1698 = vst [vmem:[%s191 + $0x6d8] sm:$0xff] %v1071
      %1699 = vst [vmem:[%s191 + $0x6e0] sm:$0xff] %v1262
      %1700 = vst [vmem:[%s191 + $0x6e8] sm:$0xff] %v1264
      %1701 = vst [vmem:[%s191 + $0x6f0] sm:$0xff] %v1455
      %1702 = vst [vmem:[%s191 + $0x6f8] sm:$0xff] %v1457
      %1703 = vst [vmem:[%s191 + $0x700] sm:$0xff] %v882
      %1704 = vst [vmem:[%s191 + $0x708] sm:$0xff] %v884
      %1705 = vst [vmem:[%s191 + $0x710] sm:$0xff] %v1075
      %1706 = vst [vmem:[%s191 + $0x718] sm:$0xff] %v1077
      %1707 = vst [vmem:[%s191 + $0x720] sm:$0xff] %v1268
      %1708 = vst [vmem:[%s191 + $0x728] sm:$0xff] %v1270
      %1709 = vst [vmem:[%s191 + $0x730] sm:$0xff] %v1461
      %1710 = vst [vmem:[%s191 + $0x738] sm:$0xff] %v1463
      %1711 = vst [vmem:[%s191 + $0x740] sm:$0xff] %v886
      %1712 = vst [vmem:[%s191 + $0x748] sm:$0xff] %v888
      %1713 = vst [vmem:[%s191 + $0x750] sm:$0xff] %v1079
      %1714 = vst [vmem:[%s191 + $0x758] sm:$0xff] %v1081
      %1715 = vst [vmem:[%s191 + $0x760] sm:$0xff] %v1272
      %1716 = vst [vmem:[%s191 + $0x768] sm:$0xff] %v1274
      %1717 = vst [vmem:[%s191 + $0x770] sm:$0xff] %v1465
      %1718 = vst [vmem:[%s191 + $0x778] sm:$0xff] %v1467
      %1719 = vst [vmem:[%s191 + $0x780] sm:$0xff] %v892
      %1720 = vst [vmem:[%s191 + $0x788] sm:$0xff] %v894
      %1721 = vst [vmem:[%s191 + $0x790] sm:$0xff] %v1085
      %1722 = vst [vmem:[%s191 + $0x798] sm:$0xff] %v1087
      %1723 = vst [vmem:[%s191 + $0x7a0] sm:$0xff] %v1278
      %1724 = vst [vmem:[%s191 + $0x7a8] sm:$0xff] %v1280
      %1725 = vst [vmem:[%s191 + $0x7b0] sm:$0xff] %v1471
      %1726 = vst [vmem:[%s191 + $0x7b8] sm:$0xff] %v1473
      %1727 = vst [vmem:[%s191 + $0x7c0] sm:$0xff] %v896
      %1728 = vst [vmem:[%s191 + $0x7c8] sm:$0xff] %v898
      %1729 = vst [vmem:[%s191 + $0x7d0] sm:$0xff] %v1089
      %1730 = vst [vmem:[%s191 + $0x7d8] sm:$0xff] %v1091
      %1731 = vst [vmem:[%s191 + $0x7e0] sm:$0xff] %v1282
      %1732 = vst [vmem:[%s191 + $0x7e8] sm:$0xff] %v1284
      %1733 = vst [vmem:[%s191 + $0x7f0] sm:$0xff] %v1475
      %1734 = vst [vmem:[%s191 + $0x7f8] sm:$0xff] %v1477
      %s1735 = smul.u32 32, %s17
      %s1736 = smul.u32 8, %s18
      %p1737 = scmp.lt.s32.totalorder %s1735, 63
      %s1738 = scalar_select %p1737, %s1735, 63
      %p1739 = scmp.lt.s32.totalorder %s1736, 7
      %s1740 = scalar_select %p1739, %s1736, 7
      %s1741 = smul.addr %s1738, 8
      %s1742 = sadd.s32 %s1740, %s1741
      %s1743 = smul.addr %s1742, 8
      %s1744 = scalar_lea.vmem %s2, %s1743
      // Predicated region
      $region29: #{netg_forward.16} parent=27 // pred_check
        %p1745 = pneg %p97
      $region30: #{netg_forward.16} parent=27 // pred_check_branch
        %1747 = sbr.rel (%p1745) target = $region32
      $region31: #{netg_forward.16} parent=27 // pred_region
        %s1748 = smul.u32 32, %s17
        %s1749 = smul.u32 8, %s18
      $region32: #{netg_forward.16} parent=27 // pred_fallthru
        _
    $region28: #{netg_forward.16} parent=5 // pred_fallthru
      _
    %p1750 = scmp.le.s32.totalorder 2, %s8
    // Predicated region
    $region33: #{netg_forward.16} parent=5 // pred_check
      %p1751 = pneg %p1750
    $region34: #{netg_forward.16} parent=5 // pred_check_branch
      %1753 = sbr.rel (%p1751) target = $region36
    $region35: #{netg_forward.16} parent=5 // pred_region
      %s1754 = ssub.s32 %s8, 2
      // Predicated region
      $region37: #{netg_forward.16} parent=35 // pred_check
        %p1755 = pneg %p103
      $region38: #{netg_forward.16} parent=35 // pred_check_branch
        %1757 = sbr.rel (%p1755) target = $region40
      $region39: #{netg_forward.16} parent=35 // pred_region
        %s1758 = smul.u32 32, %s19
        %s1759 = smul.u32 8, %s20
        %p1760 = scmp.lt.s32.totalorder %s1758, 63
        %s1761 = scalar_select %p1760, %s1758, 63
        %p1762 = scmp.lt.s32.totalorder %s1759, 7
        %s1763 = scalar_select %p1762, %s1759, 7
        %s1764 = smul.addr %s1761, 8
        %s1765 = sadd.s32 %s1763, %s1764
        %s1766 = smul.addr %s1765, 8
        %s1767 = scalar_lea.vmem %s2, %s1766
      $region40: #{netg_forward.16} parent=35 // pred_fallthru
        _
    $region36: #{netg_forward.16} parent=5 // pred_fallthru
      _
  $region6: #{netg_forward.16} parent=0 // loop_footer
    %s12 = sadd.s32 1, %s8
  $region7: #{netg_forward.16} parent=0 // loop_footer_branch
    %7 = sbr.rel target = $region3
  $region8: #{netg_forward.16} parent=0 // loop_exit
    _

// kernel: netg_forward.17
$region0: #{netg_forward.17}
  #allocation0 [shape = 'u32[]', space=smem, size = 0x4, offset = 0x4, fixed_abs, tag = 'smem constant byte address 0x4 - core index']
  #allocation1 [shape = 'u32[144,128]{1,0:T(1,128)}', space=vmem, size = 0x12000, scoped, tag = 'internal scratch']
  %s0 = inlined_call_operand.vmem [shape: f32[1024,128], index: 0, kind: input, shape index: {}]
  %s1 = inlined_call_operand.vmem [shape: f32[1,128], index: 1, kind: input, shape index: {}]
  %s2 = inlined_call_operand.vmem [shape: f32[1,128], index: 2, kind: input, shape index: {}]
  %s3 = inlined_call_operand.vmem [shape: f32[1024,128], index: 3, kind: output, shape index: {}]
  %s4 = sld [smem:[#allocation0]]
  $region45: #{netg_forward.17} parent=0
    _
  %s6 = ssub.s32 1, %s4
  %s7 = scalar_select 0, %s6, %s4
  loop: start=0, step=1, limit=4
  $region2: #{netg_forward.17} parent=0 // loop_pre_header
    _
  $region3: #{netg_forward.17} parent=0 // loop_header
    %s9 = sphi 0, %s13
    %p10 = scmp.ge.s32.totalorder %s9, 4
    %s19 = sphi 0, %s21
    %s22 = sphi 0, %s19
    %s23 = sphi 0, %s22
    %s39 = sphi 0, %s23
    %s43 = sphi 0, %s43
    %s45 = sphi 0, %s43
    %s46 = sphi 0, %s45
    %s60 = sphi 0, %s46
    %s64 = sphi 0, %s64
    %s66 = sphi 0, %s64
    %s67 = sphi 0, %s66
    %s81 = sphi 0, %s67
    %s87 = sphi 0, %s89
    %s90 = sphi 0, %s87
    %s91 = sphi 0, %s90
    %s107 = sphi 0, %s91
  $region4: #{netg_forward.17} parent=0 // loop_header_branch
    %12 = sbr.rel (%p10) target = $region8
  $region5: #{netg_forward.17} parent=0 // loop_body
    %s14 = ssub.s32 %s9, 1
    %s15 = ssub.s32 %s9, 2
    %s16 = sadd.s32 %s9, 1
    %s17 = ssub.s32 %s9, %s16
    %p18 = scmp.eq.s32.totalorder %s17, 0
    %s20 = sadd.s32 %s19, 1
    %s21 = scalar_select %p18, %s19, %s20
    %p24 = pneg %p18
    %p25 = scmp.eq.s32.totalorder %s9, 1
    %p26 = por %p24, %p25
    %p27 = scmp.ne.s32.totalorder %s19, %s22
    %p28 = scmp.eq.s32.totalorder %s9, 0
    %p29 = por %p27, %p28
    %p30 = scmp.ne.s32.totalorder %s19, %s22
    %p31 = scmp.eq.s32.totalorder %s14, 1
    %p32 = por %p30, %p31
    %p33 = scmp.ne.s32.totalorder %s22, %s23
    %p34 = scmp.eq.s32.totalorder %s14, 0
    %p35 = por %p33, %p34
    %p36 = scmp.ne.s32.totalorder %s22, %s23
    %p37 = scmp.eq.s32.totalorder %s15, 1
    %p38 = por %p36, %p37
    %p40 = scmp.ne.s32.totalorder %s23, %s39
    %p41 = scmp.eq.s32.totalorder %s15, 0
    %p42 = por %p40, %p41
    %s44 = sadd.s32 %s43, 1
    %p47 = scmp.eq.s32.totalorder %s9, 1
    %p48 = scmp.ne.s32.totalorder %s43, %s45
    %p49 = scmp.eq.s32.totalorder %s9, 0
    %p50 = por %p48, %p49
    %p51 = scmp.ne.s32.totalorder %s43, %s45
    %p52 = scmp.eq.s32.totalorder %s14, 1
    %p53 = por %p51, %p52
    %p54 = scmp.ne.s32.totalorder %s45, %s46
    %p55 = scmp.eq.s32.totalorder %s14, 0
    %p56 = por %p54, %p55
    %p57 = scmp.ne.s32.totalorder %s45, %s46
    %p58 = scmp.eq.s32.totalorder %s15, 1
    %p59 = por %p57, %p58
    %p61 = scmp.ne.s32.totalorder %s46, %s60
    %p62 = scmp.eq.s32.totalorder %s15, 0
    %p63 = por %p61, %p62
    %s65 = sadd.s32 %s64, 1
    %p68 = scmp.eq.s32.totalorder %s9, 1
    %p69 = scmp.ne.s32.totalorder %s64, %s66
    %p70 = scmp.eq.s32.totalorder %s9, 0
    %p71 = por %p69, %p70
    %p72 = scmp.ne.s32.totalorder %s64, %s66
    %p73 = scmp.eq.s32.totalorder %s14, 1
    %p74 = por %p72, %p73
    %p75 = scmp.ne.s32.totalorder %s66, %s67
    %p76 = scmp.eq.s32.totalorder %s14, 0
    %p77 = por %p75, %p76
    %p78 = scmp.ne.s32.totalorder %s66, %s67
    %p79 = scmp.eq.s32.totalorder %s15, 1
    %p80 = por %p78, %p79
    %p82 = scmp.ne.s32.totalorder %s67, %s81
    %p83 = scmp.eq.s32.totalorder %s15, 0
    %p84 = por %p82, %p83
    %s85 = ssub.s32 %s9, %s16
    %p86 = scmp.eq.s32.totalorder %s85, 0
    %s88 = sadd.s32 %s87, 1
    %s89 = scalar_select %p86, %s87, %s88
    %p92 = pneg %p86
    %p93 = scmp.eq.s32.totalorder %s9, 1
    %p94 = por %p92, %p93
    %p95 = scmp.ne.s32.totalorder %s87, %s90
    %p96 = scmp.eq.s32.totalorder %s9, 0
    %p97 = por %p95, %p96
    %p98 = scmp.ne.s32.totalorder %s87, %s90
    %p99 = scmp.eq.s32.totalorder %s14, 1
    %p100 = por %p98, %p99
    %p101 = scmp.ne.s32.totalorder %s90, %s91
    %p102 = scmp.eq.s32.totalorder %s14, 0
    %p103 = por %p101, %p102
    %p104 = scmp.ne.s32.totalorder %s90, %s91
    %p105 = scmp.eq.s32.totalorder %s15, 1
    %p106 = por %p104, %p105
    %p108 = scmp.ne.s32.totalorder %s91, %s107
    %p109 = scmp.eq.s32.totalorder %s15, 0
    %p110 = por %p108, %p109
    %p111 = scmp.le.s32.totalorder 1, %s9
    %p112 = scmp.lt.s32.totalorder %s9, 3
    %p113 = pnand %p111, %p112
    %p114 = pneg %p113
    // Predicated region
    $region9: #{netg_forward.17} parent=5 // pred_check
      _
    $region10: #{netg_forward.17} parent=5 // pred_check_branch
      %116 = sbr.rel (%p113) target = $region12
    $region11: #{netg_forward.17} parent=5 // pred_region
      %s117 = ssub.s32 %s9, 1
      // Predicated region
      $region13: #{netg_forward.17} parent=11 // pred_check
        %p118 = pneg %p56
      $region14: #{netg_forward.17} parent=11 // pred_check_branch
        %120 = sbr.rel (%p118) target = $region16
      $region15: #{netg_forward.17} parent=11 // pred_region
        _
      $region16: #{netg_forward.17} parent=11 // pred_fallthru
        _
      // Predicated region
      $region17: #{netg_forward.17} parent=11 // pred_check
        %p121 = pneg %p77
      $region18: #{netg_forward.17} parent=11 // pred_check_branch
        %123 = sbr.rel (%p121) target = $region20
      $region19: #{netg_forward.17} parent=11 // pred_region
        _
      $region20: #{netg_forward.17} parent=11 // pred_fallthru
        _
    $region12: #{netg_forward.17} parent=5 // pred_fallthru
      _
    %p124 = scmp.lt.s32.totalorder %s9, 2
    // Predicated region
    $region21: #{netg_forward.17} parent=5 // pred_check
      %p125 = pneg %p124
    $region22: #{netg_forward.17} parent=5 // pred_check_branch
      %127 = sbr.rel (%p125) target = $region24
    $region23: #{netg_forward.17} parent=5 // pred_region
      // Predicated region
      $region25: #{netg_forward.17} parent=23 // pred_check
        %p128 = pneg %p29
      $region26: #{netg_forward.17} parent=23 // pred_check_branch
        %130 = sbr.rel (%p128) target = $region28
      $region27: #{netg_forward.17} parent=23 // pred_region
        %s131 = smul.u32 64, %s9
        %p132 = scmp.lt.s32.totalorder %s131, 127
        %s133 = scalar_select %p132, %s131, 127
        %s134 = smul.addr %s133, 8
        %s135 = scalar_lea.vmem %s0, %s134
        %s136 = smul.u32 64, %s9
      $region28: #{netg_forward.17} parent=23 // pred_fallthru
        _
    $region24: #{netg_forward.17} parent=5 // pred_fallthru
      _
    %p137 = scmp.le.s32.totalorder 1, %s9
    %p138 = scmp.lt.s32.totalorder %s9, 3
    %p139 = pnand %p137, %p138
    %p140 = pneg %p139
    // Predicated region
    $region29: #{netg_forward.17} parent=5 // pred_check
      _
    $region30: #{netg_forward.17} parent=5 // pred_check_branch
      %142 = sbr.rel (%p139) target = $region32
    $region31: #{netg_forward.17} parent=5 // pred_region
      %s143 = ssub.s32 %s9, 1
      %s144 = smul.u32 64, %s14
      %p145 = scmp.lt.s32.totalorder %s144, 127
      %s146 = scalar_select %p145, %s144, 127
      %s147 = smul.addr %s146, 8
      %s148 = scalar_lea.vmem %s0, %s147
      %p149 = pneg %p35
      %p150 = pneg %p32
      %p151 = pneg %p56
      %p152 = pneg %p53
      %p153 = pneg %p77
      %p154 = pneg %p74
      %p155 = pneg %p103
      %p156 = pneg %p100
      %s157 = smul.u32 64, %s14
      %p158 = scmp.lt.s32.totalorder %s157, 127
      %s159 = scalar_select %p158, %s157, 127
      %s160 = smul.addr %s159, 8
      %s161 = scalar_lea.vmem %s3, %s160
      %s162 = smul.u32 64, %s14
      %p163 = scmp.lt.s32.totalorder %s162, 127
      %s164 = scalar_select %p163, %s162, 127
      %s165 = smul.addr %s164, 8
      %s166 = scalar_lea.vmem %s0, %s165
      %s167 = smul.u32 64, %s14
      %s168 = smul.u32 64, %s14
      %p169 = scmp.lt.s32.totalorder %s168, 127
      %s170 = scalar_select %p169, %s168, 127
      %s171 = smul.addr %s170, 8
      %s172 = scalar_lea.vmem %s3, %s171
      %s173 = smul.u32 64, %s14
      %v174 = vld [vmem:[%s166] sm:$0xff]
      %v175 = vld [vmem:[%s166 + $0x8] sm:$0xff]
      %v176 = vld [vmem:[%s166 + $0x10] sm:$0xff]
      %v177 = vld [vmem:[%s166 + $0x18] sm:$0xff]
      %v178 = vld [vmem:[%s166 + $0x20] sm:$0xff]
      %v179 = vld [vmem:[%s166 + $0x28] sm:$0xff]
      %v180 = vld [vmem:[%s166 + $0x30] sm:$0xff]
      %v181 = vld [vmem:[%s166 + $0x38] sm:$0xff]
      %v182 = vld [vmem:[%s166 + $0x40] sm:$0xff]
      %v183 = vld [vmem:[%s166 + $0x48] sm:$0xff]
      %v184 = vld [vmem:[%s166 + $0x50] sm:$0xff]
      %v185 = vld [vmem:[%s166 + $0x58] sm:$0xff]
      %v186 = vld [vmem:[%s166 + $0x60] sm:$0xff]
      %v187 = vld [vmem:[%s166 + $0x68] sm:$0xff]
      %v188 = vld [vmem:[%s166 + $0x70] sm:$0xff]
      %v189 = vld [vmem:[%s166 + $0x78] sm:$0xff]
      %v190 = vld [vmem:[%s166 + $0x80] sm:$0xff]
      %v191 = vld [vmem:[%s166 + $0x88] sm:$0xff]
      %v192 = vld [vmem:[%s166 + $0x90] sm:$0xff]
      %v193 = vld [vmem:[%s166 + $0x98] sm:$0xff]
      %v194 = vld [vmem:[%s166 + $0xa0] sm:$0xff]
      %v195 = vld [vmem:[%s166 + $0xa8] sm:$0xff]
      %v196 = vld [vmem:[%s166 + $0xb0] sm:$0xff]
      %v197 = vld [vmem:[%s166 + $0xb8] sm:$0xff]
      %v198 = vld [vmem:[%s166 + $0xc0] sm:$0xff]
      %v199 = vld [vmem:[%s166 + $0xc8] sm:$0xff]
      %v200 = vld [vmem:[%s166 + $0xd0] sm:$0xff]
      %v201 = vld [vmem:[%s166 + $0xd8] sm:$0xff]
      %v202 = vld [vmem:[%s166 + $0xe0] sm:$0xff]
      %v203 = vld [vmem:[%s166 + $0xe8] sm:$0xff]
      %v204 = vld [vmem:[%s166 + $0xf0] sm:$0xff]
      %v205 = vld [vmem:[%s166 + $0xf8] sm:$0xff]
      %v206 = vld [vmem:[%s166 + $0x100] sm:$0xff]
      %v207 = vld [vmem:[%s166 + $0x108] sm:$0xff]
      %v208 = vld [vmem:[%s166 + $0x110] sm:$0xff]
      %v209 = vld [vmem:[%s166 + $0x118] sm:$0xff]
      %v210 = vld [vmem:[%s166 + $0x120] sm:$0xff]
      %v211 = vld [vmem:[%s166 + $0x128] sm:$0xff]
      %v212 = vld [vmem:[%s166 + $0x130] sm:$0xff]
      %v213 = vld [vmem:[%s166 + $0x138] sm:$0xff]
      %v214 = vld [vmem:[%s166 + $0x140] sm:$0xff]
      %v215 = vld [vmem:[%s166 + $0x148] sm:$0xff]
      %v216 = vld [vmem:[%s166 + $0x150] sm:$0xff]
      %v217 = vld [vmem:[%s166 + $0x158] sm:$0xff]
      %v218 = vld [vmem:[%s166 + $0x160] sm:$0xff]
      %v219 = vld [vmem:[%s166 + $0x168] sm:$0xff]
      %v220 = vld [vmem:[%s166 + $0x170] sm:$0xff]
      %v221 = vld [vmem:[%s166 + $0x178] sm:$0xff]
      %v222 = vld [vmem:[%s166 + $0x180] sm:$0xff]
      %v223 = vld [vmem:[%s166 + $0x188] sm:$0xff]
      %v224 = vld [vmem:[%s166 + $0x190] sm:$0xff]
      %v225 = vld [vmem:[%s166 + $0x198] sm:$0xff]
      %v226 = vld [vmem:[%s166 + $0x1a0] sm:$0xff]
      %v227 = vld [vmem:[%s166 + $0x1a8] sm:$0xff]
      %v228 = vld [vmem:[%s166 + $0x1b0] sm:$0xff]
      %v229 = vld [vmem:[%s166 + $0x1b8] sm:$0xff]
      %v230 = vld [vmem:[%s166 + $0x1c0] sm:$0xff]
      %v231 = vld [vmem:[%s166 + $0x1c8] sm:$0xff]
      %v232 = vld [vmem:[%s166 + $0x1d0] sm:$0xff]
      %v233 = vld [vmem:[%s166 + $0x1d8] sm:$0xff]
      %v234 = vld [vmem:[%s166 + $0x1e0] sm:$0xff]
      %v235 = vld [vmem:[%s166 + $0x1e8] sm:$0xff]
      %v236 = vld [vmem:[%s166 + $0x1f0] sm:$0xff]
      %v237 = vld [vmem:[%s166 + $0x1f8] sm:$0xff]
      %v238 = vld [vmem:[%s1] sm:$0x1]
      %v240 = vlaneseq
      %v241 = vshrl.u32 %v240, 7
      %v242 = vsub.s32 0, %v241
      %v243 = vrot.slane %v238, %v242
      %v245 = vmul.f32 %v174, %v243
      %v246 = vmul.f32 %v175, %v243
      %v247 = vmul.f32 %v176, %v243
      %v248 = vmul.f32 %v177, %v243
      %v249 = vmul.f32 %v178, %v243
      %v250 = vmul.f32 %v179, %v243
      %v251 = vmul.f32 %v180, %v243
      %v252 = vmul.f32 %v181, %v243
      %v253 = vmul.f32 %v182, %v243
      %v254 = vmul.f32 %v183, %v243
      %v255 = vmul.f32 %v184, %v243
      %v256 = vmul.f32 %v185, %v243
      %v257 = vmul.f32 %v186, %v243
      %v258 = vmul.f32 %v187, %v243
      %v259 = vmul.f32 %v188, %v243
      %v260 = vmul.f32 %v189, %v243
      %v261 = vmul.f32 %v190, %v243
      %v262 = vmul.f32 %v191, %v243
      %v263 = vmul.f32 %v192, %v243
      %v264 = vmul.f32 %v193, %v243
      %v265 = vmul.f32 %v194, %v243
      %v266 = vmul.f32 %v195, %v243
      %v267 = vmul.f32 %v196, %v243
      %v268 = vmul.f32 %v197, %v243
      %v269 = vmul.f32 %v198, %v243
      %v270 = vmul.f32 %v199, %v243
      %v271 = vmul.f32 %v200, %v243
      %v272 = vmul.f32 %v201, %v243
      %v273 = vmul.f32 %v202, %v243
      %v274 = vmul.f32 %v203, %v243
      %v275 = vmul.f32 %v204, %v243
      %v276 = vmul.f32 %v205, %v243
      %v277 = vmul.f32 %v206, %v243
      %v278 = vmul.f32 %v207, %v243
      %v279 = vmul.f32 %v208, %v243
      %v280 = vmul.f32 %v209, %v243
      %v281 = vmul.f32 %v210, %v243
      %v282 = vmul.f32 %v211, %v243
      %v283 = vmul.f32 %v212, %v243
      %v284 = vmul.f32 %v213, %v243
      %v285 = vmul.f32 %v214, %v243
      %v286 = vmul.f32 %v215, %v243
      %v287 = vmul.f32 %v216, %v243
      %v288 = vmul.f32 %v217, %v243
      %v289 = vmul.f32 %v218, %v243
      %v290 = vmul.f32 %v219, %v243
      %v291 = vmul.f32 %v220, %v243
      %v292 = vmul.f32 %v221, %v243
      %v293 = vmul.f32 %v222, %v243
      %v294 = vmul.f32 %v223, %v243
      %v295 = vmul.f32 %v224, %v243
      %v296 = vmul.f32 %v225, %v243
      %v297 = vmul.f32 %v226, %v243
      %v298 = vmul.f32 %v227, %v243
      %v299 = vmul.f32 %v228, %v243
      %v300 = vmul.f32 %v229, %v243
      %v301 = vmul.f32 %v230, %v243
      %v302 = vmul.f32 %v231, %v243
      %v303 = vmul.f32 %v232, %v243
      %v304 = vmul.f32 %v233, %v243
      %v305 = vmul.f32 %v234, %v243
      %v306 = vmul.f32 %v235, %v243
      %v307 = vmul.f32 %v236, %v243
      %v308 = vmul.f32 %v237, %v243
      %v309 = vld [vmem:[%s2] sm:$0x1]
      %v311 = vlaneseq
      %v312 = vshrl.u32 %v311, 7
      %v313 = vsub.s32 0, %v312
      %v314 = vrot.slane %v309, %v313
      %v316 = vadd.f32 %v245, %v314
      %v317 = vadd.f32 %v246, %v314
      %v318 = vadd.f32 %v247, %v314
      %v319 = vadd.f32 %v248, %v314
      %v320 = vadd.f32 %v249, %v314
      %v321 = vadd.f32 %v250, %v314
      %v322 = vadd.f32 %v251, %v314
      %v323 = vadd.f32 %v252, %v314
      %v324 = vadd.f32 %v253, %v314
      %v325 = vadd.f32 %v254, %v314
      %v326 = vadd.f32 %v255, %v314
      %v327 = vadd.f32 %v256, %v314
      %v328 = vadd.f32 %v257, %v314
      %v329 = vadd.f32 %v258, %v314
      %v330 = vadd.f32 %v259, %v314
      %v331 = vadd.f32 %v260, %v314
      %v332 = vadd.f32 %v261, %v314
      %v333 = vadd.f32 %v262, %v314
      %v334 = vadd.f32 %v263, %v314
      %v335 = vadd.f32 %v264, %v314
      %v336 = vadd.f32 %v265, %v314
      %v337 = vadd.f32 %v266, %v314
      %v338 = vadd.f32 %v267, %v314
      %v339 = vadd.f32 %v268, %v314
      %v340 = vadd.f32 %v269, %v314
      %v341 = vadd.f32 %v270, %v314
      %v342 = vadd.f32 %v271, %v314
      %v343 = vadd.f32 %v272, %v314
      %v344 = vadd.f32 %v273, %v314
      %v345 = vadd.f32 %v274, %v314
      %v346 = vadd.f32 %v275, %v314
      %v347 = vadd.f32 %v276, %v314
      %v348 = vadd.f32 %v277, %v314
      %v349 = vadd.f32 %v278, %v314
      %v350 = vadd.f32 %v279, %v314
      %v351 = vadd.f32 %v280, %v314
      %v352 = vadd.f32 %v281, %v314
      %v353 = vadd.f32 %v282, %v314
      %v354 = vadd.f32 %v283, %v314
      %v355 = vadd.f32 %v284, %v314
      %v356 = vadd.f32 %v285, %v314
      %v357 = vadd.f32 %v286, %v314
      %v358 = vadd.f32 %v287, %v314
      %v359 = vadd.f32 %v288, %v314
      %v360 = vadd.f32 %v289, %v314
      %v361 = vadd.f32 %v290, %v314
      %v362 = vadd.f32 %v291, %v314
      %v363 = vadd.f32 %v292, %v314
      %v364 = vadd.f32 %v293, %v314
      %v365 = vadd.f32 %v294, %v314
      %v366 = vadd.f32 %v295, %v314
      %v367 = vadd.f32 %v296, %v314
      %v368 = vadd.f32 %v297, %v314
      %v369 = vadd.f32 %v298, %v314
      %v370 = vadd.f32 %v299, %v314
      %v371 = vadd.f32 %v300, %v314
      %v372 = vadd.f32 %v301, %v314
      %v373 = vadd.f32 %v302, %v314
      %v374 = vadd.f32 %v303, %v314
      %v375 = vadd.f32 %v304, %v314
      %v376 = vadd.f32 %v305, %v314
      %v377 = vadd.f32 %v306, %v314
      %v378 = vadd.f32 %v307, %v314
      %v379 = vadd.f32 %v308, %v314
      %v380 = vmax.f32 %v316, 0.0
      %v381 = vmax.f32 %v317, 0.0
      %v382 = vmax.f32 %v318, 0.0
      %v383 = vmax.f32 %v319, 0.0
      %v384 = vmax.f32 %v320, 0.0
      %v385 = vmax.f32 %v321, 0.0
      %v386 = vmax.f32 %v322, 0.0
      %v387 = vmax.f32 %v323, 0.0
      %v388 = vmax.f32 %v324, 0.0
      %v389 = vmax.f32 %v325, 0.0
      %v390 = vmax.f32 %v326, 0.0
      %v391 = vmax.f32 %v327, 0.0
      %v392 = vmax.f32 %v328, 0.0
      %v393 = vmax.f32 %v329, 0.0
      %v394 = vmax.f32 %v330, 0.0
      %v395 = vmax.f32 %v331, 0.0
      %v396 = vmax.f32 %v332, 0.0
      %v397 = vmax.f32 %v333, 0.0
      %v398 = vmax.f32 %v334, 0.0
      %v399 = vmax.f32 %v335, 0.0
      %v400 = vmax.f32 %v336, 0.0
      %v401 = vmax.f32 %v337, 0.0
      %v402 = vmax.f32 %v338, 0.0
      %v403 = vmax.f32 %v339, 0.0
      %v404 = vmax.f32 %v340, 0.0
      %v405 = vmax.f32 %v341, 0.0
      %v406 = vmax.f32 %v342, 0.0
      %v407 = vmax.f32 %v343, 0.0
      %v408 = vmax.f32 %v344, 0.0
      %v409 = vmax.f32 %v345, 0.0
      %v410 = vmax.f32 %v346, 0.0
      %v411 = vmax.f32 %v347, 0.0
      %v412 = vmax.f32 %v348, 0.0
      %v413 = vmax.f32 %v349, 0.0
      %v414 = vmax.f32 %v350, 0.0
      %v415 = vmax.f32 %v351, 0.0
      %v416 = vmax.f32 %v352, 0.0
      %v417 = vmax.f32 %v353, 0.0
      %v418 = vmax.f32 %v354, 0.0
      %v419 = vmax.f32 %v355, 0.0
      %v420 = vmax.f32 %v356, 0.0
      %v421 = vmax.f32 %v357, 0.0
      %v422 = vmax.f32 %v358, 0.0
      %v423 = vmax.f32 %v359, 0.0
      %v424 = vmax.f32 %v360, 0.0
      %v425 = vmax.f32 %v361, 0.0
      %v426 = vmax.f32 %v362, 0.0
      %v427 = vmax.f32 %v363, 0.0
      %v428 = vmax.f32 %v364, 0.0
      %v429 = vmax.f32 %v365, 0.0
      %v430 = vmax.f32 %v366, 0.0
      %v431 = vmax.f32 %v367, 0.0
      %v432 = vmax.f32 %v368, 0.0
      %v433 = vmax.f32 %v369, 0.0
      %v434 = vmax.f32 %v370, 0.0
      %v435 = vmax.f32 %v371, 0.0
      %v436 = vmax.f32 %v372, 0.0
      %v437 = vmax.f32 %v373, 0.0
      %v438 = vmax.f32 %v374, 0.0
      %v439 = vmax.f32 %v375, 0.0
      %v440 = vmax.f32 %v376, 0.0
      %v441 = vmax.f32 %v377, 0.0
      %v442 = vmax.f32 %v378, 0.0
      %v443 = vmax.f32 %v379, 0.0
      %444 = vst [vmem:[%s172] sm:$0xff] %v380
      %445 = vst [vmem:[%s172 + $0x8] sm:$0xff] %v381
      %446 = vst [vmem:[%s172 + $0x10] sm:$0xff] %v382
      %447 = vst [vmem:[%s172 + $0x18] sm:$0xff] %v383
      %448 = vst [vmem:[%s172 + $0x20] sm:$0xff] %v384
      %449 = vst [vmem:[%s172 + $0x28] sm:$0xff] %v385
      %450 = vst [vmem:[%s172 + $0x30] sm:$0xff] %v386
      %451 = vst [vmem:[%s172 + $0x38] sm:$0xff] %v387
      %452 = vst [vmem:[%s172 + $0x40] sm:$0xff] %v388
      %453 = vst [vmem:[%s172 + $0x48] sm:$0xff] %v389
      %454 = vst [vmem:[%s172 + $0x50] sm:$0xff] %v390
      %455 = vst [vmem:[%s172 + $0x58] sm:$0xff] %v391
      %456 = vst [vmem:[%s172 + $0x60] sm:$0xff] %v392
      %457 = vst [vmem:[%s172 + $0x68] sm:$0xff] %v393
      %458 = vst [vmem:[%s172 + $0x70] sm:$0xff] %v394
      %459 = vst [vmem:[%s172 + $0x78] sm:$0xff] %v395
      %460 = vst [vmem:[%s172 + $0x80] sm:$0xff] %v396
      %461 = vst [vmem:[%s172 + $0x88] sm:$0xff] %v397
      %462 = vst [vmem:[%s172 + $0x90] sm:$0xff] %v398
      %463 = vst [vmem:[%s172 + $0x98] sm:$0xff] %v399
      %464 = vst [vmem:[%s172 + $0xa0] sm:$0xff] %v400
      %465 = vst [vmem:[%s172 + $0xa8] sm:$0xff] %v401
      %466 = vst [vmem:[%s172 + $0xb0] sm:$0xff] %v402
      %467 = vst [vmem:[%s172 + $0xb8] sm:$0xff] %v403
      %468 = vst [vmem:[%s172 + $0xc0] sm:$0xff] %v404
      %469 = vst [vmem:[%s172 + $0xc8] sm:$0xff] %v405
      %470 = vst [vmem:[%s172 + $0xd0] sm:$0xff] %v406
      %471 = vst [vmem:[%s172 + $0xd8] sm:$0xff] %v407
      %472 = vst [vmem:[%s172 + $0xe0] sm:$0xff] %v408
      %473 = vst [vmem:[%s172 + $0xe8] sm:$0xff] %v409
      %474 = vst [vmem:[%s172 + $0xf0] sm:$0xff] %v410
      %475 = vst [vmem:[%s172 + $0xf8] sm:$0xff] %v411
      %476 = vst [vmem:[%s172 + $0x100] sm:$0xff] %v412
      %477 = vst [vmem:[%s172 + $0x108] sm:$0xff] %v413
      %478 = vst [vmem:[%s172 + $0x110] sm:$0xff] %v414
      %479 = vst [vmem:[%s172 + $0x118] sm:$0xff] %v415
      %480 = vst [vmem:[%s172 + $0x120] sm:$0xff] %v416
      %481 = vst [vmem:[%s172 + $0x128] sm:$0xff] %v417
      %482 = vst [vmem:[%s172 + $0x130] sm:$0xff] %v418
      %483 = vst [vmem:[%s172 + $0x138] sm:$0xff] %v419
      %484 = vst [vmem:[%s172 + $0x140] sm:$0xff] %v420
      %485 = vst [vmem:[%s172 + $0x148] sm:$0xff] %v421
      %486 = vst [vmem:[%s172 + $0x150] sm:$0xff] %v422
      %487 = vst [vmem:[%s172 + $0x158] sm:$0xff] %v423
      %488 = vst [vmem:[%s172 + $0x160] sm:$0xff] %v424
      %489 = vst [vmem:[%s172 + $0x168] sm:$0xff] %v425
      %490 = vst [vmem:[%s172 + $0x170] sm:$0xff] %v426
      %491 = vst [vmem:[%s172 + $0x178] sm:$0xff] %v427
      %492 = vst [vmem:[%s172 + $0x180] sm:$0xff] %v428
      %493 = vst [vmem:[%s172 + $0x188] sm:$0xff] %v429
      %494 = vst [vmem:[%s172 + $0x190] sm:$0xff] %v430
      %495 = vst [vmem:[%s172 + $0x198] sm:$0xff] %v431
      %496 = vst [vmem:[%s172 + $0x1a0] sm:$0xff] %v432
      %497 = vst [vmem:[%s172 + $0x1a8] sm:$0xff] %v433
      %498 = vst [vmem:[%s172 + $0x1b0] sm:$0xff] %v434
      %499 = vst [vmem:[%s172 + $0x1b8] sm:$0xff] %v435
      %500 = vst [vmem:[%s172 + $0x1c0] sm:$0xff] %v436
      %501 = vst [vmem:[%s172 + $0x1c8] sm:$0xff] %v437
      %502 = vst [vmem:[%s172 + $0x1d0] sm:$0xff] %v438
      %503 = vst [vmem:[%s172 + $0x1d8] sm:$0xff] %v439
      %504 = vst [vmem:[%s172 + $0x1e0] sm:$0xff] %v440
      %505 = vst [vmem:[%s172 + $0x1e8] sm:$0xff] %v441
      %506 = vst [vmem:[%s172 + $0x1f0] sm:$0xff] %v442
      %507 = vst [vmem:[%s172 + $0x1f8] sm:$0xff] %v443
      %s508 = smul.u32 64, %s14
      %p509 = scmp.lt.s32.totalorder %s508, 127
      %s510 = scalar_select %p509, %s508, 127
      %s511 = smul.addr %s510, 8
      %s512 = scalar_lea.vmem %s3, %s511
      // Predicated region
      $region33: #{netg_forward.17} parent=31 // pred_check
        %p513 = pneg %p100
      $region34: #{netg_forward.17} parent=31 // pred_check_branch
        %515 = sbr.rel (%p513) target = $region36
      $region35: #{netg_forward.17} parent=31 // pred_region
        %s516 = smul.u32 64, %s14
      $region36: #{netg_forward.17} parent=31 // pred_fallthru
        _
    $region32: #{netg_forward.17} parent=5 // pred_fallthru
      _
    %p517 = scmp.le.s32.totalorder 2, %s9
    // Predicated region
    $region37: #{netg_forward.17} parent=5 // pred_check
      %p518 = pneg %p517
    $region38: #{netg_forward.17} parent=5 // pred_check_branch
      %520 = sbr.rel (%p518) target = $region40
    $region39: #{netg_forward.17} parent=5 // pred_region
      %s521 = ssub.s32 %s9, 2
      // Predicated region
      $region41: #{netg_forward.17} parent=39 // pred_check
        %p522 = pneg %p106
      $region42: #{netg_forward.17} parent=39 // pred_check_branch
        %524 = sbr.rel (%p522) target = $region44
      $region43: #{netg_forward.17} parent=39 // pred_region
        %s525 = smul.u32 64, %s15
        %p526 = scmp.lt.s32.totalorder %s525, 127
        %s527 = scalar_select %p526, %s525, 127
        %s528 = smul.addr %s527, 8
        %s529 = scalar_lea.vmem %s3, %s528
      $region44: #{netg_forward.17} parent=39 // pred_fallthru
        _
    $region40: #{netg_forward.17} parent=5 // pred_fallthru
      _
  $region6: #{netg_forward.17} parent=0 // loop_footer
    %s13 = sadd.s32 1, %s9
  $region7: #{netg_forward.17} parent=0 // loop_footer_branch
    %8 = sbr.rel target = $region3
  $region8: #{netg_forward.17} parent=0 // loop_exit
    _

// kernel: netg_forward.18
$region0: #{netg_forward.18}
  #allocation0 [shape = 'u32[]', space=smem, size = 0x4, offset = 0x4, fixed_abs, tag = 'smem constant byte address 0x4 - core index']
  #allocation1 [shape = 'u32[144,128]{1,0:T(1,128)}', space=vmem, size = 0x12000, scoped, tag = 'internal scratch']
  %s0 = inlined_call_operand.vmem [shape: bf16[2048,128], index: 0, kind: input, shape index: {}]
  %s1 = inlined_call_operand.vmem [shape: bf16[128,128], index: 1, kind: input, shape index: {}]
  %s2 = inlined_call_operand.vmem [shape: f32[2048,128], index: 2, kind: output, shape index: {}]
  %s3 = sld [smem:[#allocation0]]
  $region41: #{netg_forward.18} parent=0
    _
  %s5 = ssub.s32 1, %s3
  %s6 = scalar_select 0, %s5, %s3
  loop: start=0, step=1, limit=10
  $region2: #{netg_forward.18} parent=0 // loop_pre_header
    _
  $region3: #{netg_forward.18} parent=0 // loop_header
    %s8 = sphi 0, %s12
    %p9 = scmp.ge.s32.totalorder %s8, 10
    %s15 = sphi 0, %s27
    %s16 = sphi 0, %s23
    %s17 = sphi 0, %s15
    %s18 = sphi 0, %s16
    %s19 = sphi 0, %s17
    %s20 = sphi 0, %s18
    %s30 = sphi 0, %s32
    %s33 = sphi 0, %s30
    %s34 = sphi 0, %s33
    %s50 = sphi 0, %s34
    %s56 = sphi 0, %s58
    %s59 = sphi 0, %s56
    %s60 = sphi 0, %s59
    %s76 = sphi 0, %s60
    %s84 = sphi 0, %s86
    %s87 = sphi 0, %s84
    %s88 = sphi 0, %s87
    %s104 = sphi 0, %s88
  $region4: #{netg_forward.18} parent=0 // loop_header_branch
    %11 = sbr.rel (%p9) target = $region8
  $region5: #{netg_forward.18} parent=0 // loop_body
    %s13 = ssub.s32 %s8, 1
    %s14 = ssub.s32 %s8, 2
    %s21 = sadd.s32 1, %s16
    %p22 = scmp.ge.s32.totalorder %s21, 1
    %s23 = scalar_select %p22, 0, %s21
    %s24 = sadd.s32 1, %s15
    %s25 = scalar_select %p22, %s24, %s15
    %p26 = scmp.ge.s32.totalorder %s25, 8
    %s27 = scalar_select %p26, 0, %s25
    %s28 = ssub.s32 %s15, %s27
    %p29 = scmp.eq.s32.totalorder %s28, 0
    %s31 = sadd.s32 %s30, 1
    %s32 = scalar_select %p29, %s30, %s31
    %p35 = pneg %p29
    %p36 = scmp.eq.s32.totalorder %s8, 7
    %p37 = por %p35, %p36
    %p38 = scmp.ne.s32.totalorder %s30, %s33
    %p39 = scmp.eq.s32.totalorder %s8, 0
    %p40 = por %p38, %p39
    %p41 = scmp.ne.s32.totalorder %s30, %s33
    %p42 = scmp.eq.s32.totalorder %s13, 7
    %p43 = por %p41, %p42
    %p44 = scmp.ne.s32.totalorder %s33, %s34
    %p45 = scmp.eq.s32.totalorder %s13, 0
    %p46 = por %p44, %p45
    %p47 = scmp.ne.s32.totalorder %s33, %s34
    %p48 = scmp.eq.s32.totalorder %s14, 7
    %p49 = por %p47, %p48
    %p51 = scmp.ne.s32.totalorder %s34, %s50
    %p52 = scmp.eq.s32.totalorder %s14, 0
    %p53 = por %p51, %p52
    %s54 = ssub.s32 %s16, %s23
    %p55 = scmp.eq.s32.totalorder %s54, 0
    %s57 = sadd.s32 %s56, 1
    %s58 = scalar_select %p55, %s56, %s57
    %p61 = pneg %p55
    %p62 = scmp.eq.s32.totalorder %s8, 7
    %p63 = por %p61, %p62
    %p64 = scmp.ne.s32.totalorder %s56, %s59
    %p65 = scmp.eq.s32.totalorder %s8, 0
    %p66 = por %p64, %p65
    %p67 = scmp.ne.s32.totalorder %s56, %s59
    %p68 = scmp.eq.s32.totalorder %s13, 7
    %p69 = por %p67, %p68
    %p70 = scmp.ne.s32.totalorder %s59, %s60
    %p71 = scmp.eq.s32.totalorder %s13, 0
    %p72 = por %p70, %p71
    %p73 = scmp.ne.s32.totalorder %s59, %s60
    %p74 = scmp.eq.s32.totalorder %s14, 7
    %p75 = por %p73, %p74
    %p77 = scmp.ne.s32.totalorder %s60, %s76
    %p78 = scmp.eq.s32.totalorder %s14, 0
    %p79 = por %p77, %p78
    %s80 = ssub.s32 %s15, %s27
    %s81 = ssub.s32 %s16, %s23
    %s82 = sor.u32 %s80, %s81
    %p83 = scmp.eq.s32.totalorder %s82, 0
    %s85 = sadd.s32 %s84, 1
    %s86 = scalar_select %p83, %s84, %s85
    %p89 = pneg %p83
    %p90 = scmp.eq.s32.totalorder %s8, 7
    %p91 = por %p89, %p90
    %p92 = scmp.ne.s32.totalorder %s84, %s87
    %p93 = scmp.eq.s32.totalorder %s8, 0
    %p94 = por %p92, %p93
    %p95 = scmp.ne.s32.totalorder %s84, %s87
    %p96 = scmp.eq.s32.totalorder %s13, 7
    %p97 = por %p95, %p96
    %p98 = scmp.ne.s32.totalorder %s87, %s88
    %p99 = scmp.eq.s32.totalorder %s13, 0
    %p100 = por %p98, %p99
    %p101 = scmp.ne.s32.totalorder %s87, %s88
    %p102 = scmp.eq.s32.totalorder %s14, 7
    %p103 = por %p101, %p102
    %p105 = scmp.ne.s32.totalorder %s88, %s104
    %p106 = scmp.eq.s32.totalorder %s14, 0
    %p107 = por %p105, %p106
    %p108 = scmp.le.s32.totalorder 1, %s8
    %p109 = scmp.lt.s32.totalorder %s8, 9
    %p110 = pnand %p108, %p109
    %p111 = pneg %p110
    // Predicated region
    $region9: #{netg_forward.18} parent=5 // pred_check
      _
    $region10: #{netg_forward.18} parent=5 // pred_check_branch
      %113 = sbr.rel (%p110) target = $region12
    $region11: #{netg_forward.18} parent=5 // pred_region
      %s114 = ssub.s32 %s8, 1
      // Predicated region
      $region13: #{netg_forward.18} parent=11 // pred_check
        %p115 = pneg %p72
      $region14: #{netg_forward.18} parent=11 // pred_check_branch
        %117 = sbr.rel (%p115) target = $region16
      $region15: #{netg_forward.18} parent=11 // pred_region
        %p118 = scmp.lt.s32.totalorder %s18, 0
        %s119 = scalar_select %p118, %s18, 0
        %s120 = smul.addr %s119, 4
        %s121 = scalar_lea.vmem %s1, %s120
      $region16: #{netg_forward.18} parent=11 // pred_fallthru
        _
    $region12: #{netg_forward.18} parent=5 // pred_fallthru
      _
    %p122 = scmp.lt.s32.totalorder %s8, 8
    // Predicated region
    $region17: #{netg_forward.18} parent=5 // pred_check
      %p123 = pneg %p122
    $region18: #{netg_forward.18} parent=5 // pred_check_branch
      %125 = sbr.rel (%p123) target = $region20
    $region19: #{netg_forward.18} parent=5 // pred_region
      // Predicated region
      $region21: #{netg_forward.18} parent=19 // pred_check
        %p126 = pneg %p40
      $region22: #{netg_forward.18} parent=19 // pred_check_branch
        %128 = sbr.rel (%p126) target = $region24
      $region23: #{netg_forward.18} parent=19 // pred_region
        %s129 = smul.u32 32, %s15
        %p130 = scmp.lt.s32.totalorder %s129, 255
        %s131 = scalar_select %p130, %s129, 255
        %s132 = smul.addr %s131, 4
        %s133 = scalar_lea.vmem %s0, %s132
        %s134 = smul.u32 32, %s15
      $region24: #{netg_forward.18} parent=19 // pred_fallthru
        _
    $region20: #{netg_forward.18} parent=5 // pred_fallthru
      _
    %p135 = scmp.le.s32.totalorder 1, %s8
    %p136 = scmp.lt.s32.totalorder %s8, 9
    %p137 = pnand %p135, %p136
    %p138 = pneg %p137
    // Predicated region
    $region25: #{netg_forward.18} parent=5 // pred_check
      _
    $region26: #{netg_forward.18} parent=5 // pred_check_branch
      %140 = sbr.rel (%p137) target = $region28
    $region27: #{netg_forward.18} parent=5 // pred_region
      %s141 = ssub.s32 %s8, 1
      %s142 = smul.u32 32, %s17
      %p143 = scmp.lt.s32.totalorder %s142, 255
      %s144 = scalar_select %p143, %s142, 255
      %s145 = smul.addr %s144, 4
      %s146 = scalar_lea.vmem %s0, %s145
      %p147 = pneg %p46
      %p148 = pneg %p43
      %p149 = scmp.lt.s32.totalorder %s18, 0
      %s150 = scalar_select %p149, %s18, 0
      %s151 = smul.addr %s150, 4
      %s152 = scalar_lea.vmem %s1, %s151
      %p153 = pneg %p72
      %p154 = pneg %p69
      %p155 = pneg %p100
      %p156 = pneg %p97
      %s157 = smul.u32 32, %s17
      %p158 = scmp.lt.s32.totalorder %s157, 255
      %s159 = scalar_select %p158, %s157, 255
      %p160 = scmp.lt.s32.totalorder %s18, 0
      %s161 = scalar_select %p160, %s18, 0
      %s162 = sadd.s32 %s161, %s159
      %s163 = smul.addr %s162, 8
      %s164 = scalar_lea.vmem %s2, %s163
      %s165 = smul.u32 32, %s17
      %p166 = scmp.lt.s32.totalorder %s165, 255
      %s167 = scalar_select %p166, %s165, 255
      %s168 = smul.addr %s167, 4
      %s169 = scalar_lea.vmem %s0, %s168
      %s170 = smul.u32 32, %s17
      %p171 = scmp.lt.s32.totalorder %s18, 0
      %s172 = scalar_select %p171, %s18, 0
      %s173 = smul.addr %s172, 4
      %s174 = scalar_lea.vmem %s1, %s173
      %s175 = smul.u32 32, %s17
      %p176 = scmp.lt.s32.totalorder %s175, 255
      %s177 = scalar_select %p176, %s175, 255
      %p178 = scmp.lt.s32.totalorder %s18, 0
      %s179 = scalar_select %p178, %s18, 0
      %s180 = sadd.s32 %s179, %s177
      %s181 = smul.addr %s180, 8
      %s182 = scalar_lea.vmem %s2, %s181
      %s183 = smul.u32 32, %s17
      %v185 = vld [vmem:[%s169] sm:$0xf]
      %v186 = vld [vmem:[%s169 + $0x4] sm:$0xf]
      %v187 = vld [vmem:[%s169 + $0x8] sm:$0xf]
      %v188 = vld [vmem:[%s169 + $0xc] sm:$0xf]
      %v189 = vld [vmem:[%s169 + $0x10] sm:$0xf]
      %v190 = vld [vmem:[%s169 + $0x14] sm:$0xf]
      %v191 = vld [vmem:[%s169 + $0x18] sm:$0xf]
      %v192 = vld [vmem:[%s169 + $0x1c] sm:$0xf]
      %v193 = vld [vmem:[%s169 + $0x20] sm:$0xf]
      %v194 = vld [vmem:[%s169 + $0x24] sm:$0xf]
      %v195 = vld [vmem:[%s169 + $0x28] sm:$0xf]
      %v196 = vld [vmem:[%s169 + $0x2c] sm:$0xf]
      %v197 = vld [vmem:[%s169 + $0x30] sm:$0xf]
      %v198 = vld [vmem:[%s169 + $0x34] sm:$0xf]
      %v199 = vld [vmem:[%s169 + $0x38] sm:$0xf]
      %v200 = vld [vmem:[%s169 + $0x3c] sm:$0xf]
      %v201 = vld [vmem:[%s169 + $0x40] sm:$0xf]
      %v202 = vld [vmem:[%s169 + $0x44] sm:$0xf]
      %v203 = vld [vmem:[%s169 + $0x48] sm:$0xf]
      %v204 = vld [vmem:[%s169 + $0x4c] sm:$0xf]
      %v205 = vld [vmem:[%s169 + $0x50] sm:$0xf]
      %v206 = vld [vmem:[%s169 + $0x54] sm:$0xf]
      %v207 = vld [vmem:[%s169 + $0x58] sm:$0xf]
      %v208 = vld [vmem:[%s169 + $0x5c] sm:$0xf]
      %v209 = vld [vmem:[%s169 + $0x60] sm:$0xf]
      %v210 = vld [vmem:[%s169 + $0x64] sm:$0xf]
      %v211 = vld [vmem:[%s169 + $0x68] sm:$0xf]
      %v212 = vld [vmem:[%s169 + $0x6c] sm:$0xf]
      %v213 = vld [vmem:[%s169 + $0x70] sm:$0xf]
      %v214 = vld [vmem:[%s169 + $0x74] sm:$0xf]
      %v215 = vld [vmem:[%s169 + $0x78] sm:$0xf]
      %v216 = vld [vmem:[%s169 + $0x7c] sm:$0xf]
      %v217 = vld [vmem:[%s174] sm:$0xf]
      %v218 = vld [vmem:[%s174 + $0x4] sm:$0xf]
      %v219 = vld [vmem:[%s174 + $0x8] sm:$0xf]
      %v220 = vld [vmem:[%s174 + $0xc] sm:$0xf]
      %v221 = vld [vmem:[%s174 + $0x10] sm:$0xf]
      %v222 = vld [vmem:[%s174 + $0x14] sm:$0xf]
      %v223 = vld [vmem:[%s174 + $0x18] sm:$0xf]
      %v224 = vld [vmem:[%s174 + $0x1c] sm:$0xf]
      %v225 = vld [vmem:[%s174 + $0x20] sm:$0xf]
      %v226 = vld [vmem:[%s174 + $0x24] sm:$0xf]
      %v227 = vld [vmem:[%s174 + $0x28] sm:$0xf]
      %v228 = vld [vmem:[%s174 + $0x2c] sm:$0xf]
      %v229 = vld [vmem:[%s174 + $0x30] sm:$0xf]
      %v230 = vld [vmem:[%s174 + $0x34] sm:$0xf]
      %v231 = vld [vmem:[%s174 + $0x38] sm:$0xf]
      %v232 = vld [vmem:[%s174 + $0x3c] sm:$0xf]
      %v265 = vunpack.c.l.b16 %v185
      %v266 = vunpack.c.l.b16 %v186
      %v267 = vunpack.c.l.b16 %v187
      %v268 = vunpack.c.l.b16 %v188
      %v269 = vunpack.c.l.b16 %v189
      %v270 = vunpack.c.l.b16 %v190
      %v271 = vunpack.c.l.b16 %v191
      %v272 = vunpack.c.l.b16 %v192
      %v273 = vunpack.c.l.b16 %v193
      %v274 = vunpack.c.l.b16 %v194
      %v275 = vunpack.c.l.b16 %v195
      %v276 = vunpack.c.l.b16 %v196
      %v277 = vunpack.c.l.b16 %v197
      %v278 = vunpack.c.l.b16 %v198
      %v279 = vunpack.c.l.b16 %v199
      %v280 = vunpack.c.l.b16 %v200
      %v281 = vunpack.c.l.b16 %v201
      %v282 = vunpack.c.l.b16 %v202
      %v283 = vunpack.c.l.b16 %v203
      %v284 = vunpack.c.l.b16 %v204
      %v285 = vunpack.c.l.b16 %v205
      %v286 = vunpack.c.l.b16 %v206
      %v287 = vunpack.c.l.b16 %v207
      %v288 = vunpack.c.l.b16 %v208
      %v289 = vunpack.c.l.b16 %v209
      %v290 = vunpack.c.l.b16 %v210
      %v291 = vunpack.c.l.b16 %v211
      %v292 = vunpack.c.l.b16 %v212
      %v293 = vunpack.c.l.b16 %v213
      %v294 = vunpack.c.l.b16 %v214
      %v295 = vunpack.c.l.b16 %v215
      %v296 = vunpack.c.l.b16 %v216
      %v297 = vpack.c.b16 %v266, %v265
      %v298 = vpack.c.b16 %v268, %v267
      %v299 = vpack.c.b16 %v270, %v269
      %v300 = vpack.c.b16 %v272, %v271
      %v301 = vpack.c.b16 %v274, %v273
      %v302 = vpack.c.b16 %v276, %v275
      %v303 = vpack.c.b16 %v278, %v277
      %v304 = vpack.c.b16 %v280, %v279
      %v305 = vpack.c.b16 %v282, %v281
      %v306 = vpack.c.b16 %v284, %v283
      %v307 = vpack.c.b16 %v286, %v285
      %v308 = vpack.c.b16 %v288, %v287
      %v309 = vpack.c.b16 %v290, %v289
      %v310 = vpack.c.b16 %v292, %v291
      %v311 = vpack.c.b16 %v294, %v293
      %v312 = vpack.c.b16 %v296, %v295
      %v345 = vunpack.c.l.b16 %v217
      %v346 = vunpack.c.l.b16 %v218
      %v347 = vunpack.c.l.b16 %v219
      %v348 = vunpack.c.l.b16 %v220
      %v349 = vunpack.c.l.b16 %v221
      %v350 = vunpack.c.l.b16 %v222
      %v351 = vunpack.c.l.b16 %v223
      %v352 = vunpack.c.l.b16 %v224
      %v353 = vunpack.c.l.b16 %v225
      %v354 = vunpack.c.l.b16 %v226
      %v355 = vunpack.c.l.b16 %v227
      %v356 = vunpack.c.l.b16 %v228
      %v357 = vunpack.c.l.b16 %v229
      %v358 = vunpack.c.l.b16 %v230
      %v359 = vunpack.c.l.b16 %v231
      %v360 = vunpack.c.l.b16 %v232
      %v361 = vpack.c.b16 %v346, %v345
      %v362 = vpack.c.b16 %v348, %v347
      %v363 = vpack.c.b16 %v350, %v349
      %v364 = vpack.c.b16 %v352, %v351
      %v365 = vpack.c.b16 %v354, %v353
      %v366 = vpack.c.b16 %v356, %v355
      %v367 = vpack.c.b16 %v358, %v357
      %v368 = vpack.c.b16 %v360, %v359
      %377 = vmatprep.subr.bf16.mxu0 0
      %378 = vmatpush1.bf16.msra.mxu0 %v361
      %379 = vmatprep.subr.bf16.mxu0 0
      %380 = vmatpush1.bf16.msra.mxu0 %v362
      %381 = vmatprep.subr.bf16.mxu0 0
      %382 = vmatpush1.bf16.msra.mxu0 %v363
      %383 = vmatprep.subr.bf16.mxu0 0
      %384 = vmatpush1.bf16.msra.mxu0 %v364
      %385 = vmatprep.subr.bf16.mxu0 0
      %386 = vmatpush1.bf16.msra.mxu0 %v365
      %387 = vmatprep.subr.bf16.mxu0 0
      %388 = vmatpush1.bf16.msra.mxu0 %v366
      %389 = vmatprep.subr.bf16.mxu0 0
      %390 = vmatpush1.bf16.msra.mxu0 %v367
      %391 = vmatprep.subr.bf16.mxu0 0
      %392 = vmatpush1.bf16.msra.mxu0 %v368
      %393 = vmatprep.subr.bf16.mxu0 0
      %394 = vmatpush1.bf16.msra.mxu0 0
      %395 = vmatprep.subr.bf16.mxu0 0
      %396 = vmatpush1.bf16.msra.mxu0 0
      %397 = vmatprep.subr.bf16.mxu0 0
      %398 = vmatpush1.bf16.msra.mxu0 0
      %399 = vmatprep.subr.bf16.mxu0 0
      %400 = vmatpush1.bf16.msra.mxu0 0
      %401 = vmatprep.subr.bf16.mxu0 0
      %402 = vmatpush1.bf16.msra.mxu0 0
      %403 = vmatprep.subr.bf16.mxu0 0
      %404 = vmatpush1.bf16.msra.mxu0 0
      %405 = vmatprep.subr.bf16.mxu0 0
      %406 = vmatpush1.bf16.msra.mxu0 0
      %407 = vmatprep.subr.bf16.mxu0 0
      %408 = vmatpush1.bf16.msra.mxu0 0
      %409 = vmatprep.mubr.bf16.mxu0 0
      %410 = vmatmul.mubr.bf16.gmra.mrb[0].mxu0 %v297
      %v411 = vpop.f32.mrb[0].mxu0
      %v412 = vadd.f32 0.0, %v411
      %v413 = vpop.f32.mrb[0].mxu0
      %v414 = vpop.f32.mrb[0].mxu0
      %v415 = vadd.f32 0.0, %v414
      %v416 = vpop.f32.mrb[0].mxu0
      %417 = vmatprep.mubr.bf16.mxu0 0
      %418 = vmatmul.mubr.bf16.gmra.mrb[0].mxu0 %v298
      %v419 = vpop.f32.mrb[0].mxu0
      %v420 = vadd.f32 0.0, %v419
      %v421 = vpop.f32.mrb[0].mxu0
      %v422 = vpop.f32.mrb[0].mxu0
      %v423 = vadd.f32 0.0, %v422
      %v424 = vpop.f32.mrb[0].mxu0
      %425 = vmatprep.mubr.bf16.mxu0 0
      %426 = vmatmul.mubr.bf16.gmra.mrb[0].mxu0 %v299
      %v427 = vpop.f32.mrb[0].mxu0
      %v428 = vadd.f32 0.0, %v427
      %v429 = vpop.f32.mrb[0].mxu0
      %v430 = vpop.f32.mrb[0].mxu0
      %v431 = vadd.f32 0.0, %v430
      %v432 = vpop.f32.mrb[0].mxu0
      %433 = vmatprep.mubr.bf16.mxu0 0
      %434 = vmatmul.mubr.bf16.gmra.mrb[0].mxu0 %v300
      %v435 = vpop.f32.mrb[0].mxu0
      %v436 = vadd.f32 0.0, %v435
      %v437 = vpop.f32.mrb[0].mxu0
      %v438 = vpop.f32.mrb[0].mxu0
      %v439 = vadd.f32 0.0, %v438
      %v440 = vpop.f32.mrb[0].mxu0
      %441 = vmatprep.mubr.bf16.mxu0 0
      %442 = vmatmul.mubr.bf16.gmra.mrb[0].mxu0 %v301
      %v443 = vpop.f32.mrb[0].mxu0
      %v444 = vadd.f32 0.0, %v443
      %v445 = vpop.f32.mrb[0].mxu0
      %v446 = vpop.f32.mrb[0].mxu0
      %v447 = vadd.f32 0.0, %v446
      %v448 = vpop.f32.mrb[0].mxu0
      %449 = vmatprep.mubr.bf16.mxu0 0
      %450 = vmatmul.mubr.bf16.gmra.mrb[0].mxu0 %v302
      %v451 = vpop.f32.mrb[0].mxu0
      %v452 = vadd.f32 0.0, %v451
      %v453 = vpop.f32.mrb[0].mxu0
      %v454 = vpop.f32.mrb[0].mxu0
      %v455 = vadd.f32 0.0, %v454
      %v456 = vpop.f32.mrb[0].mxu0
      %457 = vmatprep.mubr.bf16.mxu0 0
      %458 = vmatmul.mubr.bf16.gmra.mrb[0].mxu0 %v303
      %v459 = vpop.f32.mrb[0].mxu0
      %v460 = vadd.f32 0.0, %v459
      %v461 = vpop.f32.mrb[0].mxu0
      %v462 = vpop.f32.mrb[0].mxu0
      %v463 = vadd.f32 0.0, %v462
      %v464 = vpop.f32.mrb[0].mxu0
      %465 = vmatprep.mubr.bf16.mxu0 0
      %466 = vmatmul.mubr.bf16.gmra.mrb[0].mxu0 %v304
      %v467 = vpop.f32.mrb[0].mxu0
      %v468 = vadd.f32 0.0, %v467
      %v469 = vpop.f32.mrb[0].mxu0
      %v470 = vpop.f32.mrb[0].mxu0
      %v471 = vadd.f32 0.0, %v470
      %v472 = vpop.f32.mrb[0].mxu0
      %473 = vmatprep.mubr.bf16.mxu0 0
      %474 = vmatmul.mubr.bf16.gmra.mrb[0].mxu0 %v305
      %v475 = vpop.f32.mrb[0].mxu0
      %v476 = vadd.f32 0.0, %v475
      %v477 = vpop.f32.mrb[0].mxu0
      %v478 = vpop.f32.mrb[0].mxu0
      %v479 = vadd.f32 0.0, %v478
      %v480 = vpop.f32.mrb[0].mxu0
      %481 = vmatprep.mubr.bf16.mxu0 0
      %482 = vmatmul.mubr.bf16.gmra.mrb[0].mxu0 %v306
      %v483 = vpop.f32.mrb[0].mxu0
      %v484 = vadd.f32 0.0, %v483
      %v485 = vpop.f32.mrb[0].mxu0
      %v486 = vpop.f32.mrb[0].mxu0
      %v487 = vadd.f32 0.0, %v486
      %v488 = vpop.f32.mrb[0].mxu0
      %489 = vmatprep.mubr.bf16.mxu0 0
      %490 = vmatmul.mubr.bf16.gmra.mrb[0].mxu0 %v307
      %v491 = vpop.f32.mrb[0].mxu0
      %v492 = vadd.f32 0.0, %v491
      %v493 = vpop.f32.mrb[0].mxu0
      %v494 = vpop.f32.mrb[0].mxu0
      %v495 = vadd.f32 0.0, %v494
      %v496 = vpop.f32.mrb[0].mxu0
      %497 = vmatprep.mubr.bf16.mxu0 0
      %498 = vmatmul.mubr.bf16.gmra.mrb[0].mxu0 %v308
      %v499 = vpop.f32.mrb[0].mxu0
      %v500 = vadd.f32 0.0, %v499
      %v501 = vpop.f32.mrb[0].mxu0
      %v502 = vpop.f32.mrb[0].mxu0
      %v503 = vadd.f32 0.0, %v502
      %v504 = vpop.f32.mrb[0].mxu0
      %505 = vmatprep.mubr.bf16.mxu0 0
      %506 = vmatmul.mubr.bf16.gmra.mrb[0].mxu0 %v309
      %v507 = vpop.f32.mrb[0].mxu0
      %v508 = vadd.f32 0.0, %v507
      %v509 = vpop.f32.mrb[0].mxu0
      %v510 = vpop.f32.mrb[0].mxu0
      %v511 = vadd.f32 0.0, %v510
      %v512 = vpop.f32.mrb[0].mxu0
      %513 = vmatprep.mubr.bf16.mxu0 0
      %514 = vmatmul.mubr.bf16.gmra.mrb[0].mxu0 %v310
      %v515 = vpop.f32.mrb[0].mxu0
      %v516 = vadd.f32 0.0, %v515
      %v517 = vpop.f32.mrb[0].mxu0
      %v518 = vpop.f32.mrb[0].mxu0
      %v519 = vadd.f32 0.0, %v518
      %v520 = vpop.f32.mrb[0].mxu0
      %521 = vmatprep.mubr.bf16.mxu0 0
      %522 = vmatmul.mubr.bf16.gmra.mrb[0].mxu0 %v311
      %v523 = vpop.f32.mrb[0].mxu0
      %v524 = vadd.f32 0.0, %v523
      %v525 = vpop.f32.mrb[0].mxu0
      %v526 = vpop.f32.mrb[0].mxu0
      %v527 = vadd.f32 0.0, %v526
      %v528 = vpop.f32.mrb[0].mxu0
      %529 = vmatprep.mubr.bf16.mxu0 0
      %530 = vmatmul.mubr.bf16.gmra.mrb[0].mxu0 %v312
      %v531 = vpop.f32.mrb[0].mxu0
      %v532 = vadd.f32 0.0, %v531
      %v533 = vpop.f32.mrb[0].mxu0
      %v534 = vpop.f32.mrb[0].mxu0
      %v535 = vadd.f32 0.0, %v534
      %v536 = vpop.f32.mrb[0].mxu0
      %537 = vdwg.mxu0
      %538 = vst [vmem:[%s182] sm:$0xff] %v412
      %539 = vst [vmem:[%s182 + $0x8] sm:$0xff] %v415
      %540 = vst [vmem:[%s182 + $0x10] sm:$0xff] %v420
      %541 = vst [vmem:[%s182 + $0x18] sm:$0xff] %v423
      %542 = vst [vmem:[%s182 + $0x20] sm:$0xff] %v428
      %543 = vst [vmem:[%s182 + $0x28] sm:$0xff] %v431
      %544 = vst [vmem:[%s182 + $0x30] sm:$0xff] %v436
      %545 = vst [vmem:[%s182 + $0x38] sm:$0xff] %v439
      %546 = vst [vmem:[%s182 + $0x40] sm:$0xff] %v444
      %547 = vst [vmem:[%s182 + $0x48] sm:$0xff] %v447
      %548 = vst [vmem:[%s182 + $0x50] sm:$0xff] %v452
      %549 = vst [vmem:[%s182 + $0x58] sm:$0xff] %v455
      %550 = vst [vmem:[%s182 + $0x60] sm:$0xff] %v460
      %551 = vst [vmem:[%s182 + $0x68] sm:$0xff] %v463
      %552 = vst [vmem:[%s182 + $0x70] sm:$0xff] %v468
      %553 = vst [vmem:[%s182 + $0x78] sm:$0xff] %v471
      %554 = vst [vmem:[%s182 + $0x80] sm:$0xff] %v476
      %555 = vst [vmem:[%s182 + $0x88] sm:$0xff] %v479
      %556 = vst [vmem:[%s182 + $0x90] sm:$0xff] %v484
      %557 = vst [vmem:[%s182 + $0x98] sm:$0xff] %v487
      %558 = vst [vmem:[%s182 + $0xa0] sm:$0xff] %v492
      %559 = vst [vmem:[%s182 + $0xa8] sm:$0xff] %v495
      %560 = vst [vmem:[%s182 + $0xb0] sm:$0xff] %v500
      %561 = vst [vmem:[%s182 + $0xb8] sm:$0xff] %v503
      %562 = vst [vmem:[%s182 + $0xc0] sm:$0xff] %v508
      %563 = vst [vmem:[%s182 + $0xc8] sm:$0xff] %v511
      %564 = vst [vmem:[%s182 + $0xd0] sm:$0xff] %v516
      %565 = vst [vmem:[%s182 + $0xd8] sm:$0xff] %v519
      %566 = vst [vmem:[%s182 + $0xe0] sm:$0xff] %v524
      %567 = vst [vmem:[%s182 + $0xe8] sm:$0xff] %v527
      %568 = vst [vmem:[%s182 + $0xf0] sm:$0xff] %v532
      %569 = vst [vmem:[%s182 + $0xf8] sm:$0xff] %v535
      %s570 = smul.u32 32, %s17
      %p571 = scmp.lt.s32.totalorder %s570, 255
      %s572 = scalar_select %p571, %s570, 255
      %p573 = scmp.lt.s32.totalorder %s18, 0
      %s574 = scalar_select %p573, %s18, 0
      %s575 = sadd.s32 %s574, %s572
      %s576 = smul.addr %s575, 8
      %s577 = scalar_lea.vmem %s2, %s576
      // Predicated region
      $region29: #{netg_forward.18} parent=27 // pred_check
        %p578 = pneg %p97
      $region30: #{netg_forward.18} parent=27 // pred_check_branch
        %580 = sbr.rel (%p578) target = $region32
      $region31: #{netg_forward.18} parent=27 // pred_region
        %s581 = smul.u32 32, %s17
      $region32: #{netg_forward.18} parent=27 // pred_fallthru
        _
    $region28: #{netg_forward.18} parent=5 // pred_fallthru
      _
    %p582 = scmp.le.s32.totalorder 2, %s8
    // Predicated region
    $region33: #{netg_forward.18} parent=5 // pred_check
      %p583 = pneg %p582
    $region34: #{netg_forward.18} parent=5 // pred_check_branch
      %585 = sbr.rel (%p583) target = $region36
    $region35: #{netg_forward.18} parent=5 // pred_region
      %s586 = ssub.s32 %s8, 2
      // Predicated region
      $region37: #{netg_forward.18} parent=35 // pred_check
        %p587 = pneg %p103
      $region38: #{netg_forward.18} parent=35 // pred_check_branch
        %589 = sbr.rel (%p587) target = $region40
      $region39: #{netg_forward.18} parent=35 // pred_region
        %s590 = smul.u32 32, %s19
        %p591 = scmp.lt.s32.totalorder %s590, 255
        %s592 = scalar_select %p591, %s590, 255
        %p593 = scmp.lt.s32.totalorder %s20, 0
        %s594 = scalar_select %p593, %s20, 0
        %s595 = sadd.s32 %s594, %s592
        %s596 = smul.addr %s595, 8
        %s597 = scalar_lea.vmem %s2, %s596
      $region40: #{netg_forward.18} parent=35 // pred_fallthru
        _
    $region36: #{netg_forward.18} parent=5 // pred_fallthru
      _
  $region6: #{netg_forward.18} parent=0 // loop_footer
    %s12 = sadd.s32 1, %s8
  $region7: #{netg_forward.18} parent=0 // loop_footer_branch
    %7 = sbr.rel target = $region3
  $region8: #{netg_forward.18} parent=0 // loop_exit
    _

// kernel: netg_forward.19
$region0: #{netg_forward.19}
  #allocation0 [shape = 'u32[]', space=smem, size = 0x4, offset = 0x4, fixed_abs, tag = 'smem constant byte address 0x4 - core index']
  #allocation1 [shape = 'u32[144,128]{1,0:T(1,128)}', space=vmem, size = 0x12000, scoped, tag = 'internal scratch']
  %s0 = inlined_call_operand.vmem [shape: f32[432,128], index: 0, kind: input, shape index: {}]
  %s1 = inlined_call_operand.vmem [shape: f32[432,128], index: 1, kind: output, shape index: {}]
  %s2 = sld [smem:[#allocation0]]
  $region14: #{netg_forward.19} parent=0
    _
  %s4 = ssub.s32 1, %s2
  %s5 = scalar_select 0, %s4, %s2
  // Predicated region
  $region2: #{netg_forward.19} parent=0 // pred_check
    _
  $region3: #{netg_forward.19} parent=0 // pred_check_branch
    %7 = sbr.rel (0) target = $region5
  $region4: #{netg_forward.19} parent=0 // pred_region
    _
  $region5: #{netg_forward.19} parent=0 // pred_fallthru
    _
  %v8 = vld [vmem:[%s0] sm:$0xff]
  %v9 = vld [vmem:[%s0 + $0x8] sm:$0xff]
  %v10 = vld [vmem:[%s0 + $0x10] sm:$0xff]
  %v11 = vld [vmem:[%s0 + $0x18] sm:$0xff]
  %v12 = vld [vmem:[%s0 + $0x20] sm:$0xff]
  %v13 = vld [vmem:[%s0 + $0x28] sm:$0xff]
  %v14 = vld [vmem:[%s0 + $0x30] sm:$0xff]
  %v15 = vld [vmem:[%s0 + $0x38] sm:$0xff]
  %v16 = vld [vmem:[%s0 + $0x40] sm:$0xff]
  %v17 = vld [vmem:[%s0 + $0x48] sm:$0xff]
  %v18 = vld [vmem:[%s0 + $0x50] sm:$0xff]
  %v19 = vld [vmem:[%s0 + $0x58] sm:$0xff]
  %v20 = vld [vmem:[%s0 + $0x60] sm:$0xff]
  %v21 = vld [vmem:[%s0 + $0x68] sm:$0xff]
  %v22 = vld [vmem:[%s0 + $0x70] sm:$0xff]
  %v23 = vld [vmem:[%s0 + $0x78] sm:$0xff]
  %v24 = vld [vmem:[%s0 + $0x80] sm:$0xff]
  %v25 = vld [vmem:[%s0 + $0x88] sm:$0xff]
  %v26 = vld [vmem:[%s0 + $0x90] sm:$0xff]
  %v27 = vld [vmem:[%s0 + $0x98] sm:$0xff]
  %v28 = vld [vmem:[%s0 + $0xa0] sm:$0xff]
  %v29 = vld [vmem:[%s0 + $0xa8] sm:$0xff]
  %v30 = vld [vmem:[%s0 + $0xb0] sm:$0xff]
  %v31 = vld [vmem:[%s0 + $0xb8] sm:$0xff]
  %v32 = vld [vmem:[%s0 + $0xc0] sm:$0xff]
  %v33 = vld [vmem:[%s0 + $0xc8] sm:$0xff]
  %v34 = vld [vmem:[%s0 + $0xd0] sm:$0xff]
  %v35 = vld [vmem:[%s0 + $0xd8] sm:$0xff]
  %v36 = vld [vmem:[%s0 + $0xe0] sm:$0xff]
  %v37 = vld [vmem:[%s0 + $0xe8] sm:$0xff]
  %v38 = vld [vmem:[%s0 + $0xf0] sm:$0xff]
  %v39 = vld [vmem:[%s0 + $0xf8] sm:$0xff]
  %v40 = vld [vmem:[%s0 + $0x100] sm:$0xff]
  %v41 = vld [vmem:[%s0 + $0x108] sm:$0xff]
  %v42 = vld [vmem:[%s0 + $0x110] sm:$0xff]
  %v43 = vld [vmem:[%s0 + $0x118] sm:$0xff]
  %v44 = vld [vmem:[%s0 + $0x120] sm:$0xff]
  %v45 = vld [vmem:[%s0 + $0x128] sm:$0xff]
  %v46 = vld [vmem:[%s0 + $0x130] sm:$0xff]
  %v47 = vld [vmem:[%s0 + $0x138] sm:$0xff]
  %v48 = vld [vmem:[%s0 + $0x140] sm:$0xff]
  %v49 = vld [vmem:[%s0 + $0x148] sm:$0xff]
  %v50 = vld [vmem:[%s0 + $0x150] sm:$0xff]
  %v51 = vld [vmem:[%s0 + $0x158] sm:$0xff]
  %v52 = vld [vmem:[%s0 + $0x160] sm:$0xff]
  %v53 = vld [vmem:[%s0 + $0x168] sm:$0xff]
  %v54 = vld [vmem:[%s0 + $0x170] sm:$0xff]
  %v55 = vld [vmem:[%s0 + $0x178] sm:$0xff]
  %v56 = vld [vmem:[%s0 + $0x180] sm:$0xff]
  %v57 = vld [vmem:[%s0 + $0x188] sm:$0xff]
  %v58 = vld [vmem:[%s0 + $0x190] sm:$0xff]
  %v59 = vld [vmem:[%s0 + $0x198] sm:$0xff]
  %v60 = vld [vmem:[%s0 + $0x1a0] sm:$0xff]
  %v61 = vld [vmem:[%s0 + $0x1a8] sm:$0xff]
  %v62 = vtanh.pop %v8
  %v63 = vtanh.pop %v9
  %v64 = vtanh.pop %v10
  %v65 = vtanh.pop %v11
  %v66 = vtanh.pop %v12
  %v67 = vtanh.pop %v13
  %v68 = vtanh.pop %v14
  %v69 = vtanh.pop %v15
  %v70 = vtanh.pop %v16
  %v71 = vtanh.pop %v17
  %v72 = vtanh.pop %v18
  %v73 = vtanh.pop %v19
  %v74 = vtanh.pop %v20
  %v75 = vtanh.pop %v21
  %v76 = vtanh.pop %v22
  %v77 = vtanh.pop %v23
  %v78 = vtanh.pop %v24
  %v79 = vtanh.pop %v25
  %v80 = vtanh.pop %v26
  %v81 = vtanh.pop %v27
  %v82 = vtanh.pop %v28
  %v83 = vtanh.pop %v29
  %v84 = vtanh.pop %v30
  %v85 = vtanh.pop %v31
  %v86 = vtanh.pop %v32
  %v87 = vtanh.pop %v33
  %v88 = vtanh.pop %v34
  %v89 = vtanh.pop %v35
  %v90 = vtanh.pop %v36
  %v91 = vtanh.pop %v37
  %v92 = vtanh.pop %v38
  %v93 = vtanh.pop %v39
  %v94 = vtanh.pop %v40
  %v95 = vtanh.pop %v41
  %v96 = vtanh.pop %v42
  %v97 = vtanh.pop %v43
  %v98 = vtanh.pop %v44
  %v99 = vtanh.pop %v45
  %v100 = vtanh.pop %v46
  %v101 = vtanh.pop %v47
  %v102 = vtanh.pop %v48
  %v103 = vtanh.pop %v49
  %v104 = vtanh.pop %v50
  %v105 = vtanh.pop %v51
  %v106 = vtanh.pop %v52
  %v107 = vtanh.pop %v53
  %v108 = vtanh.pop %v54
  %v109 = vtanh.pop %v55
  %v110 = vtanh.pop %v56
  %v111 = vtanh.pop %v57
  %v112 = vtanh.pop %v58
  %v113 = vtanh.pop %v59
  %v114 = vtanh.pop %v60
  %v115 = vtanh.pop %v61
  %116 = vst [vmem:[%s1] sm:$0xff] %v62
  %117 = vst [vmem:[%s1 + $0x8] sm:$0xff] %v63
  %118 = vst [vmem:[%s1 + $0x10] sm:$0xff] %v64
  %119 = vst [vmem:[%s1 + $0x18] sm:$0xff] %v65
  %120 = vst [vmem:[%s1 + $0x20] sm:$0xff] %v66
  %121 = vst [vmem:[%s1 + $0x28] sm:$0xff] %v67
  %122 = vst [vmem:[%s1 + $0x30] sm:$0xff] %v68
  %123 = vst [vmem:[%s1 + $0x38] sm:$0xff] %v69
  %124 = vst [vmem:[%s1 + $0x40] sm:$0xff] %v70
  %125 = vst [vmem:[%s1 + $0x48] sm:$0xff] %v71
  %126 = vst [vmem:[%s1 + $0x50] sm:$0xff] %v72
  %127 = vst [vmem:[%s1 + $0x58] sm:$0xff] %v73
  %128 = vst [vmem:[%s1 + $0x60] sm:$0xff] %v74
  %129 = vst [vmem:[%s1 + $0x68] sm:$0xff] %v75
  %130 = vst [vmem:[%s1 + $0x70] sm:$0xff] %v76
  %131 = vst [vmem:[%s1 + $0x78] sm:$0xff] %v77
  %132 = vst [vmem:[%s1 + $0x80] sm:$0xff] %v78
  %133 = vst [vmem:[%s1 + $0x88] sm:$0xff] %v79
  %134 = vst [vmem:[%s1 + $0x90] sm:$0xff] %v80
  %135 = vst [vmem:[%s1 + $0x98] sm:$0xff] %v81
  %136 = vst [vmem:[%s1 + $0xa0] sm:$0xff] %v82
  %137 = vst [vmem:[%s1 + $0xa8] sm:$0xff] %v83
  %138 = vst [vmem:[%s1 + $0xb0] sm:$0xff] %v84
  %139 = vst [vmem:[%s1 + $0xb8] sm:$0xff] %v85
  %140 = vst [vmem:[%s1 + $0xc0] sm:$0xff] %v86
  %141 = vst [vmem:[%s1 + $0xc8] sm:$0xff] %v87
  %142 = vst [vmem:[%s1 + $0xd0] sm:$0xff] %v88
  %143 = vst [vmem:[%s1 + $0xd8] sm:$0xff] %v89
  %144 = vst [vmem:[%s1 + $0xe0] sm:$0xff] %v90
  %145 = vst [vmem:[%s1 + $0xe8] sm:$0xff] %v91
  %146 = vst [vmem:[%s1 + $0xf0] sm:$0xff] %v92
  %147 = vst [vmem:[%s1 + $0xf8] sm:$0xff] %v93
  %148 = vst [vmem:[%s1 + $0x100] sm:$0xff] %v94
  %149 = vst [vmem:[%s1 + $0x108] sm:$0xff] %v95
  %150 = vst [vmem:[%s1 + $0x110] sm:$0xff] %v96
  %151 = vst [vmem:[%s1 + $0x118] sm:$0xff] %v97
  %152 = vst [vmem:[%s1 + $0x120] sm:$0xff] %v98
  %153 = vst [vmem:[%s1 + $0x128] sm:$0xff] %v99
  %154 = vst [vmem:[%s1 + $0x130] sm:$0xff] %v100
  %155 = vst [vmem:[%s1 + $0x138] sm:$0xff] %v101
  %156 = vst [vmem:[%s1 + $0x140] sm:$0xff] %v102
  %157 = vst [vmem:[%s1 + $0x148] sm:$0xff] %v103
  %158 = vst [vmem:[%s1 + $0x150] sm:$0xff] %v104
  %159 = vst [vmem:[%s1 + $0x158] sm:$0xff] %v105
  %160 = vst [vmem:[%s1 + $0x160] sm:$0xff] %v106
  %161 = vst [vmem:[%s1 + $0x168] sm:$0xff] %v107
  %162 = vst [vmem:[%s1 + $0x170] sm:$0xff] %v108
  %163 = vst [vmem:[%s1 + $0x178] sm:$0xff] %v109
  %164 = vst [vmem:[%s1 + $0x180] sm:$0xff] %v110
  %165 = vst [vmem:[%s1 + $0x188] sm:$0xff] %v111
  %166 = vst [vmem:[%s1 + $0x190] sm:$0xff] %v112
  %167 = vst [vmem:[%s1 + $0x198] sm:$0xff] %v113
  %168 = vst [vmem:[%s1 + $0x1a0] sm:$0xff] %v114
  %169 = vst [vmem:[%s1 + $0x1a8] sm:$0xff] %v115
  // Predicated region
  $region6: #{netg_forward.19} parent=0 // pred_check
    _
  $region7: #{netg_forward.19} parent=0 // pred_check_branch
    %171 = sbr.rel (0) target = $region9
  $region8: #{netg_forward.19} parent=0 // pred_region
    _
  $region9: #{netg_forward.19} parent=0 // pred_fallthru
    _
  // Predicated region
  $region10: #{netg_forward.19} parent=0 // pred_check
    _
  $region11: #{netg_forward.19} parent=0 // pred_check_branch
    %173 = sbr.rel (0) target = $region13
  $region12: #{netg_forward.19} parent=0 // pred_region
    _
  $region13: #{netg_forward.19} parent=0 // pred_fallthru
    _

</llo_original>
